<compile_context>
chip_gen: v5e
topology: v5e:2x2
jax: 0.10.0
libtpu: 0.0.40
codegen_flags: <defaults>
</compile_context>

<pallas_src>
import functools

import jax
import jax.numpy as jnp
from jax.experimental import pallas as pl
from jax.experimental.pallas import tpu as pltpu


def _layer_norm(x, gamma, beta, eps=1e-5):
    mean = jnp.mean(x, axis=-1, keepdims=True)
    var = jnp.mean(jnp.square(x - mean), axis=-1, keepdims=True)
    return (x - mean) * jax.lax.rsqrt(var + eps) * gamma + beta


def _gelu(x):
    # 0.5 * x * (1 + tanh(0.7978845608 * (x + 0.044715 * x^3)))  -- matches reference
    return 0.5 * x * (1.0 + jnp.tanh(0.7978845608 * (x + 0.044715 * x * x * x)))


def encoder_kernel(x_ref, mask_ref,
                   wqkv_ref, bqkv_ref, wo_ref, bo_ref,
                   g1_ref, be1_ref, w1_ref, b1_ref, w2_ref, b2_ref,
                   g2_ref, be2_ref,
                   out_ref, *, n_heads):
    """Grid = (batch_block, transformer_block).  The activation of the current batch
    block is carried in out_ref's resident VMEM block across the block axis."""
    l = pl.program_id(1)

    # First transformer block of this batch block: seed the carried activation.
    @pl.when(l == 0)
    def _():
        out_ref[...] = x_ref[...]

    xb = out_ref[...]                       # (Bb, S, D) f32 carried activation
    Bb, S, D = xb.shape
    H = n_heads
    Dh = D // H

    x2 = xb.reshape(Bb * S, D)              # flatten batch block for the big matmuls
    x_bf = x2.astype(jnp.bfloat16)

    # Additive mask bias built in-kernel from the compact bf16 {0,1} mask
    # (masked_fill_(mask, -1e32): adding -1e32 to O(1) scores is exactly -1e32 in f32).
    bias = mask_ref[...].astype(jnp.float32) * jnp.float32(-1e32)   # (Bb, S, S)

    # ---- fused QKV projection: one lane-dense (Bb*S, D) @ (D, 3D) matmul ----
    # 1/sqrt(Dh) is pre-folded into the Q columns of wqkv / bqkv on the host.
    qkv = jnp.dot(x_bf, wqkv_ref[0], preferred_element_type=jnp.float32) + bqkv_ref[0]
    q = qkv[:, 0 * D:1 * D].astype(jnp.bfloat16)   # casts hoisted out of the head loop
    k = qkv[:, 1 * D:2 * D].astype(jnp.bfloat16)
    v = qkv[:, 2 * D:3 * D].astype(jnp.bfloat16)

    # ---- per-head attention, batched over the Bb batch block ----
    # Softmax / mask math in f32; matmul operands bf16 with f32 accumulation.
    ctx_heads = []
    for h in range(H):                               # static, small unroll
        sl = slice(h * Dh, (h + 1) * Dh)
        q_h = q[:, sl].reshape(Bb, S, Dh)
        k_h = k[:, sl].reshape(Bb, S, Dh)
        v_h = v[:, sl].reshape(Bb, S, Dh)
        # scores = q @ k^T (scale already folded into q's weights), batched over Bb
        s = jax.lax.dot_general(q_h, k_h, (((2,), (2,)), ((0,), (0,))),
                                preferred_element_type=jnp.float32)      # (Bb, S, S)
        s = s + bias
        s = s - jnp.max(s, axis=-1, keepdims=True)
        e = jnp.exp(s)
        p = e * pl.reciprocal(jnp.sum(e, axis=-1, keepdims=True), approx=True)
        ctx_h = jax.lax.dot_general(p.astype(jnp.bfloat16), v_h,
                                    (((2,), (1,)), ((0,), (0,))),
                                    preferred_element_type=jnp.float32)  # (Bb, S, Dh)
        ctx_heads.append(ctx_h.reshape(Bb * S, Dh))
    ctx = jnp.concatenate(ctx_heads, axis=-1)        # (Bb*S, D)

    # ---- fused output projection ----
    attn_out = jnp.dot(ctx.astype(jnp.bfloat16), wo_ref[0],
                       preferred_element_type=jnp.float32) + bo_ref[0]

    # ---- residual + LayerNorm (attention sublayer), f32 ----
    h1 = _layer_norm(x2 + attn_out, g1_ref[0], be1_ref[0])

    # ---- feed-forward: w2(gelu(w1(h1))) ----
    ffh = _gelu(jnp.dot(h1.astype(jnp.bfloat16), w1_ref[0],
                        preferred_element_type=jnp.float32) + b1_ref[0]
                ).astype(jnp.bfloat16)               # half-width live intermediate
    ff = jnp.dot(ffh, w2_ref[0], preferred_element_type=jnp.float32) + b2_ref[0]

    # ---- residual + LayerNorm (feed-forward sublayer), f32 ----
    h2 = _layer_norm(h1 + ff, g2_ref[0], be2_ref[0])

    out_ref[...] = h2.reshape(Bb, S, D).astype(out_ref.dtype)


def _pick_vmem_limit_bytes():
    """~75% of this generation's physical VMEM (capped at 100 MiB), with a safe
    fallback.  v5e/v6e (128 MiB) -> 96 MiB; v7x (64 MiB per TC) -> 48 MiB."""
    try:
        cap = int(pltpu.get_tpu_info().vmem_capacity_bytes)
    except Exception:
        cap = 64 * 1024 * 1024
    return min(100 * 1024 * 1024, (cap * 3) // 4)


def pick_batch_block(batch, seq, target_rows=256):
    """Largest divisor Bb of `batch` keeping Bb*seq near the MXU-native row count and
    leaving at least two batch grid steps (so both v7x TensorCores get work)."""
    best = 1
    for d in range(1, batch + 1):
        if batch % d:
            continue
        if d * seq > max(target_rows, seq):
            continue
        if batch // d < 2 and batch > 1:
            continue
        best = d
    return best


@functools.partial(jax.jit, static_argnums=(3, 4))
def encoder_forward(x, mask, stacked_params, n_heads, batch_block):
    """Run the whole encoder stack in a single pallas_call."""
    B, S, D = x.shape
    L = stacked_params[0].shape[0]
    Bb = batch_block
    assert B % Bb == 0

    # Compact {0,1} mask in bf16 (works for float or bool inputs); the -1e32 additive
    # bias is reconstructed in f32 inside the kernel.
    mask_bf = mask.astype(jnp.bfloat16)

    act_spec = pl.BlockSpec((Bb, S, D), lambda b, l: (b, 0, 0))
    mask_spec = pl.BlockSpec((Bb, S, S), lambda b, l: (b, 0, 0))

    def w_spec(p):
        return pl.BlockSpec((1,) + p.shape[1:],
                            lambda b, l, _nd=p.ndim: (l,) + (0,) * (_nd - 1))

    in_specs = [act_spec, mask_spec] + [w_spec(p) for p in stacked_params]

    return pl.pallas_call(
        functools.partial(encoder_kernel, n_heads=n_heads),
        grid=(B // Bb, L),
        in_specs=in_specs,
        out_specs=act_spec,
        out_shape=jax.ShapeDtypeStruct((B, S, D), x.dtype),
        compiler_params=pltpu.CompilerParams(
            dimension_semantics=("parallel", "arbitrary"),
            vmem_limit_bytes=_pick_vmem_limit_bytes()),
    )(x, mask_bf, *stacked_params)


def init_block_params(key, D, F, H):
    """Deterministic init for one TransformerBlock (D features, F ff-hidden, H heads)."""
    del H  # head split is handled inside the kernel; weights are stored fused
    ks = jax.random.split(key, 8)

    def w(k, shape, fan_in):
        return jax.random.normal(k, shape, jnp.float32) / jnp.sqrt(float(fan_in))

    return dict(
        wqkv=w(ks[0], (D, 3 * D), D),
        bqkv=0.01 * jax.random.normal(ks[1], (1, 3 * D), jnp.float32),
        wo=w(ks[2], (D, D), D),
        bo=0.01 * jax.random.normal(ks[3], (1, D), jnp.float32),
        g1=jnp.ones((1, D), jnp.float32),
        be1=jnp.zeros((1, D), jnp.float32),
        w1=w(ks[4], (D, F), D),
        b1=0.01 * jax.random.normal(ks[5], (1, F), jnp.float32),
        w2=w(ks[6], (F, D), F),
        b2=0.01 * jax.random.normal(ks[7], (1, D), jnp.float32),
        g2=jnp.ones((1, D), jnp.float32),
        be2=jnp.zeros((1, D), jnp.float32),
    )


def stack_block_params(blocks, n_heads):
    """Stack per-block params along a leading block axis; fold the 1/sqrt(Dh) attention
    scale into the Q columns of wqkv/bqkv; pad the FF width to the max (zero padding is
    mathematically exact); store matmul weights in bf16."""
    D = blocks[0]["wqkv"].shape[0]
    Dh = D // n_heads
    scale = jnp.float32(1.0 / (float(Dh) ** 0.5))
    Fmax = max(b["w1"].shape[1] for b in blocks)

    def fold_q(a):  # scale the Q third (columns 0:D) of a (.., 3D) array
        return jnp.concatenate([a[..., :D] * scale, a[..., D:]], axis=-1)

    def pad_to(a, axis, size):
        if a.shape[axis] == size:
            return a
        widths = [(0, 0)] * a.ndim
        widths[axis] = (0, size - a.shape[axis])
        return jnp.pad(a, widths)

    def stk(name, pad_axis=None, dtype=None, fold=False):
        arrs = [b[name] for b in blocks]
        if fold:
            arrs = [fold_q(a) for a in arrs]
        if pad_axis is not None:
            arrs = [pad_to(a, pad_axis, Fmax) for a in arrs]
        s = jnp.stack(arrs, axis=0)
        return s.astype(dtype) if dtype is not None else s

    bf = jnp.bfloat16
    return (
        stk("wqkv", dtype=bf, fold=True), stk("bqkv", fold=True),
        stk("wo", dtype=bf), stk("bo"),
        stk("g1"), stk("be1"),
        stk("w1", pad_axis=1, dtype=bf), stk("b1", pad_axis=1),
        stk("w2", pad_axis=0, dtype=bf), stk("b2"),
        stk("g2"), stk("be2"),
    )


if __name__ == "__main__":
    # Small but lane-dense configuration:
    #   input_dimension = hidden_dimension = 128 (block I/O dim is fixed),
    #   output_dimension = 256 (FF hidden width of the final block),
    #   3 blocks (input, middle, output), 8 attention heads, seq=128, batch=2.
    B, S = 2, 128
    input_dim = 128
    hidden_dim = 128
    output_dim = 256
    n_blocks = 3
    n_heads = 8

    key = jax.random.PRNGKey(0)
    kx, kp = jax.random.split(key)

    x = jax.random.normal(kx, (B, S, input_dim), jnp.float32)

    # Padding-style mask: mask out the last 16 key positions of batch element 1.
    mask = jnp.zeros((B, S, S), jnp.float32)
    mask = mask.at[1, :, S - 16:].set(1.0)

    # Per-block feed-forward hidden widths (block I/O dim is always input_dim).
    ff_dims = [hidden_dim] + [hidden_dim] * (n_blocks - 2) + [output_dim]
    block_keys = jax.random.split(kp, n_blocks)
    blocks = [init_block_params(k, input_dim, F, n_heads)
              for k, F in zip(block_keys, ff_dims)]
    params = stack_block_params(blocks, n_heads)

    Bb = pick_batch_block(B, S)
    out = encoder_forward(x, mask, params, n_heads, Bb)
    jax.block_until_ready(out)
    assert out.shape == (B, S, input_dim) and out.dtype == jnp.float32
    assert bool(jnp.all(jnp.isfinite(out)))
    print("KERNEL_OK")
</pallas_src>

<mosaic_0001>
module attributes {stable_mosaic.version = 11 : i64} {
  func.func @encoder_kernel(%arg0: i32, %arg1: i32, %arg2: memref<1x128x128xf32, #tpu.memory_space<vmem>>, %arg3: memref<1x128x128xbf16, #tpu.memory_space<vmem>>, %arg4: memref<1x128x384xbf16, #tpu.memory_space<vmem>>, %arg5: memref<1x1x384xf32, #tpu.memory_space<vmem>>, %arg6: memref<1x128x128xbf16, #tpu.memory_space<vmem>>, %arg7: memref<1x1x128xf32, #tpu.memory_space<vmem>>, %arg8: memref<1x1x128xf32, #tpu.memory_space<vmem>>, %arg9: memref<1x1x128xf32, #tpu.memory_space<vmem>>, %arg10: memref<1x128x256xbf16, #tpu.memory_space<vmem>>, %arg11: memref<1x1x256xf32, #tpu.memory_space<vmem>>, %arg12: memref<1x256x128xbf16, #tpu.memory_space<vmem>>, %arg13: memref<1x1x128xf32, #tpu.memory_space<vmem>>, %arg14: memref<1x1x128xf32, #tpu.memory_space<vmem>>, %arg15: memref<1x1x128xf32, #tpu.memory_space<vmem>>, %arg16: memref<1x128x128xf32, #tpu.memory_space<vmem>>) attributes {dimension_semantics = [#tpu.dimension_semantics<parallel>, #tpu.dimension_semantics<arbitrary>], iteration_bounds = array<i64: 2, 3>, scalar_prefetch = 0 : i64, scratch_operands = 0 : i64, tpu.core_type = #tpu.core_type<tc>, window_params = [{transform_indices = @transform_0, window_bounds = array<i64: 1, 128, 128>}, {transform_indices = @transform_1, window_bounds = array<i64: 1, 128, 128>}, {transform_indices = @transform_2, window_bounds = array<i64: 1, 128, 384>}, {transform_indices = @transform_3, window_bounds = array<i64: 1, 1, 384>}, {transform_indices = @transform_4, window_bounds = array<i64: 1, 128, 128>}, {transform_indices = @transform_5, window_bounds = array<i64: 1, 1, 128>}, {transform_indices = @transform_6, window_bounds = array<i64: 1, 1, 128>}, {transform_indices = @transform_7, window_bounds = array<i64: 1, 1, 128>}, {transform_indices = @transform_8, window_bounds = array<i64: 1, 128, 256>}, {transform_indices = @transform_9, window_bounds = array<i64: 1, 1, 256>}, {transform_indices = @transform_10, window_bounds = array<i64: 1, 256, 128>}, {transform_indices = @transform_11, window_bounds = array<i64: 1, 1, 128>}, {transform_indices = @transform_12, window_bounds = array<i64: 1, 1, 128>}, {transform_indices = @transform_13, window_bounds = array<i64: 1, 1, 128>}, {transform_indices = @transform_14, window_bounds = array<i64: 1, 128, 128>}]} {
    %c0_i32 = arith.constant 0 : i32
    %0 = arith.cmpi eq, %arg1, %c0_i32 : i32
    %1 = arith.extui %0 : i1 to i32
    %c0_i32_0 = arith.constant 0 : i32
    %2 = arith.cmpi ne, %1, %c0_i32_0 : i32
    scf.if %2 {
      %c0_95 = arith.constant 0 : index
      %c0_96 = arith.constant 0 : index
      %c0_97 = arith.constant 0 : index
      %285 = vector.load %arg2[%c0_95, %c0_96, %c0_97] : memref<1x128x128xf32, #tpu.memory_space<vmem>>, vector<1x128x128xf32>
      %c0_98 = arith.constant 0 : index
      %c0_99 = arith.constant 0 : index
      %c0_100 = arith.constant 0 : index
      %286 = vector.load %arg16[%c0_98, %c0_99, %c0_100] : memref<1x128x128xf32, #tpu.memory_space<vmem>>, vector<1x128x128xf32>
      tpu.vector_store %arg16[%c0_98, %c0_99, %c0_100], %285 {strides = array<i32>} : memref<1x128x128xf32, #tpu.memory_space<vmem>>, vector<1x128x128xf32>,
    } else {
    }
    %c0 = arith.constant 0 : index
    %c0_1 = arith.constant 0 : index
    %c0_2 = arith.constant 0 : index
    %3 = vector.load %arg16[%c0, %c0_1, %c0_2] : memref<1x128x128xf32, #tpu.memory_space<vmem>>, vector<1x128x128xf32>
    %4 = vector.shape_cast %3 : vector<1x128x128xf32> to vector<128x128xf32>
    %5 = arith.truncf %4 : vector<128x128xf32> to vector<128x128xbf16>
    %c0_3 = arith.constant 0 : index
    %c0_4 = arith.constant 0 : index
    %c0_5 = arith.constant 0 : index
    %6 = vector.load %arg3[%c0_3, %c0_4, %c0_5] : memref<1x128x128xbf16, #tpu.memory_space<vmem>>, vector<1x128x128xbf16>
    %7 = arith.extf %6 : vector<1x128x128xbf16> to vector<1x128x128xf32>
    %cst = arith.constant -1.000000e+32 : f32
    %8 = vector.broadcast %cst : f32 to vector<1x128x128xf32>
    %9 = arith.mulf %7, %8 : vector<1x128x128xf32>
    %c0_6 = arith.constant 0 : index
    %c0_7 = arith.constant 0 : index
    %c0_8 = arith.constant 0 : index
    %10 = vector.load %arg4[%c0_6, %c0_7, %c0_8] : memref<1x128x384xbf16, #tpu.memory_space<vmem>>, vector<1x128x384xbf16>
    %11 = vector.shape_cast %10 : vector<1x128x384xbf16> to vector<128x384xbf16>
    %cst_9 = arith.constant dense<0.000000e+00> : vector<128x384xf32>
    %12 = tpu.matmul %5, %11, %cst_9 {dimension_numbers = #tpu.dot_dimension_numbers<[1], [0], [0], [1], [0, 0, 1, 1], [], []>} : vector<128x128xbf16>, vector<128x384xbf16>, vector<128x384xf32> -> vector<128x384xf32>
    %c0_10 = arith.constant 0 : index
    %c0_11 = arith.constant 0 : index
    %c0_12 = arith.constant 0 : index
    %13 = vector.load %arg5[%c0_10, %c0_11, %c0_12] : memref<1x1x384xf32, #tpu.memory_space<vmem>>, vector<1x1x384xf32>
    %14 = vector.shape_cast %13 : vector<1x1x384xf32> to vector<1x384xf32>
    %15 = vector.broadcast %14 : vector<1x384xf32> to vector<128x384xf32>
    %16 = arith.addf %12, %15 : vector<128x384xf32>
    %17 = vector.extract_strided_slice %16 {offsets = [0, 0], sizes = [128, 128], strides = [1, 1]} : vector<128x384xf32> to vector<128x128xf32>
    %18 = arith.truncf %17 : vector<128x128xf32> to vector<128x128xbf16>
    %19 = vector.extract_strided_slice %16 {offsets = [0, 128], sizes = [128, 128], strides = [1, 1]} : vector<128x384xf32> to vector<128x128xf32>
    %20 = arith.truncf %19 : vector<128x128xf32> to vector<128x128xbf16>
    %21 = vector.extract_strided_slice %16 {offsets = [0, 256], sizes = [128, 128], strides = [1, 1]} : vector<128x384xf32> to vector<128x128xf32>
    %22 = arith.truncf %21 : vector<128x128xf32> to vector<128x128xbf16>
    %23 = vector.extract_strided_slice %18 {offsets = [0, 0], sizes = [128, 16], strides = [1, 1]} : vector<128x128xbf16> to vector<128x16xbf16>
    %24 = vector.shape_cast %23 : vector<128x16xbf16> to vector<1x128x16xbf16>
    %25 = vector.extract_strided_slice %20 {offsets = [0, 0], sizes = [128, 16], strides = [1, 1]} : vector<128x128xbf16> to vector<128x16xbf16>
    %26 = vector.shape_cast %25 : vector<128x16xbf16> to vector<1x128x16xbf16>
    %27 = vector.extract_strided_slice %22 {offsets = [0, 0], sizes = [128, 16], strides = [1, 1]} : vector<128x128xbf16> to vector<128x16xbf16>
    %28 = vector.shape_cast %27 : vector<128x16xbf16> to vector<1x128x16xbf16>
    %cst_13 = arith.constant dense<0.000000e+00> : vector<1x128x128xf32>
    %29 = tpu.matmul %24, %26, %cst_13 {dimension_numbers = #tpu.dot_dimension_numbers<[2], [2], [1], [1], [0, 0, 0, 1, 1, 1], [0], [0]>} : vector<1x128x16xbf16>, vector<1x128x16xbf16>, vector<1x128x128xf32> -> vector<1x128x128xf32>
    %30 = arith.addf %29, %9 : vector<1x128x128xf32>
    %cst_14 = arith.constant dense<0xFF800000> : vector<1x128xf32>
    %31 = vector.multi_reduction <maximumf>, %30, %cst_14 [2] : vector<1x128x128xf32> to vector<1x128xf32>
    %32 = vector.shape_cast %31 : vector<1x128xf32> to vector<1x128x1xf32>
    %33 = vector.broadcast %32 : vector<1x128x1xf32> to vector<1x128x128xf32>
    %34 = arith.subf %30, %33 : vector<1x128x128xf32>
    %35 = math.exp %34 : vector<1x128x128xf32>
    %cst_15 = arith.constant dense<0.000000e+00> : vector<1x128xf32>
    %36 = vector.multi_reduction <add>, %35, %cst_15 [2] : vector<1x128x128xf32> to vector<1x128xf32>
    %37 = vector.shape_cast %36 : vector<1x128xf32> to vector<1x128x1xf32>
    %38 = tpu.reciprocal %37 {approx = true} : vector<1x128x1xf32> -> vector<1x128x1xf32>
    %39 = vector.broadcast %38 : vector<1x128x1xf32> to vector<1x128x128xf32>
    %40 = arith.mulf %35, %39 : vector<1x128x128xf32>
    %41 = arith.truncf %40 : vector<1x128x128xf32> to vector<1x128x128xbf16>
    %cst_16 = arith.constant dense<0.000000e+00> : vector<1x128x16xf32>
    %42 = tpu.matmul %41, %28, %cst_16 {dimension_numbers = #tpu.dot_dimension_numbers<[2], [1], [1], [2], [0, 0, 0, 1, 1, 2], [0], [0]>} : vector<1x128x128xbf16>, vector<1x128x16xbf16>, vector<1x128x16xf32> -> vector<1x128x16xf32>
    %43 = vector.shape_cast %42 : vector<1x128x16xf32> to vector<128x16xf32>
    %44 = vector.extract_strided_slice %18 {offsets = [0, 16], sizes = [128, 16], strides = [1, 1]} : vector<128x128xbf16> to vector<128x16xbf16>
    %45 = vector.shape_cast %44 : vector<128x16xbf16> to vector<1x128x16xbf16>
    %46 = vector.extract_strided_slice %20 {offsets = [0, 16], sizes = [128, 16], strides = [1, 1]} : vector<128x128xbf16> to vector<128x16xbf16>
    %47 = vector.shape_cast %46 : vector<128x16xbf16> to vector<1x128x16xbf16>
    %48 = vector.extract_strided_slice %22 {offsets = [0, 16], sizes = [128, 16], strides = [1, 1]} : vector<128x128xbf16> to vector<128x16xbf16>
    %49 = vector.shape_cast %48 : vector<128x16xbf16> to vector<1x128x16xbf16>
    %cst_17 = arith.constant dense<0.000000e+00> : vector<1x128x128xf32>
    %50 = tpu.matmul %45, %47, %cst_17 {dimension_numbers = #tpu.dot_dimension_numbers<[2], [2], [1], [1], [0, 0, 0, 1, 1, 1], [0], [0]>} : vector<1x128x16xbf16>, vector<1x128x16xbf16>, vector<1x128x128xf32> -> vector<1x128x128xf32>
    %51 = arith.addf %50, %9 : vector<1x128x128xf32>
    %cst_18 = arith.constant dense<0xFF800000> : vector<1x128xf32>
    %52 = vector.multi_reduction <maximumf>, %51, %cst_18 [2] : vector<1x128x128xf32> to vector<1x128xf32>
    %53 = vector.shape_cast %52 : vector<1x128xf32> to vector<1x128x1xf32>
    %54 = vector.broadcast %53 : vector<1x128x1xf32> to vector<1x128x128xf32>
    %55 = arith.subf %51, %54 : vector<1x128x128xf32>
    %56 = math.exp %55 : vector<1x128x128xf32>
    %cst_19 = arith.constant dense<0.000000e+00> : vector<1x128xf32>
    %57 = vector.multi_reduction <add>, %56, %cst_19 [2] : vector<1x128x128xf32> to vector<1x128xf32>
    %58 = vector.shape_cast %57 : vector<1x128xf32> to vector<1x128x1xf32>
    %59 = tpu.reciprocal %58 {approx = true} : vector<1x128x1xf32> -> vector<1x128x1xf32>
    %60 = vector.broadcast %59 : vector<1x128x1xf32> to vector<1x128x128xf32>
    %61 = arith.mulf %56, %60 : vector<1x128x128xf32>
    %62 = arith.truncf %61 : vector<1x128x128xf32> to vector<1x128x128xbf16>
    %cst_20 = arith.constant dense<0.000000e+00> : vector<1x128x16xf32>
    %63 = tpu.matmul %62, %49, %cst_20 {dimension_numbers = #tpu.dot_dimension_numbers<[2], [1], [1], [2], [0, 0, 0, 1, 1, 2], [0], [0]>} : vector<1x128x128xbf16>, vector<1x128x16xbf16>, vector<1x128x16xf32> -> vector<1x128x16xf32>
    %64 = vector.shape_cast %63 : vector<1x128x16xf32> to vector<128x16xf32>
    %65 = vector.extract_strided_slice %18 {offsets = [0, 32], sizes = [128, 16], strides = [1, 1]} : vector<128x128xbf16> to vector<128x16xbf16>
    %66 = vector.shape_cast %65 : vector<128x16xbf16> to vector<1x128x16xbf16>
    %67 = vector.extract_strided_slice %20 {offsets = [0, 32], sizes = [128, 16], strides = [1, 1]} : vector<128x128xbf16> to vector<128x16xbf16>
    %68 = vector.shape_cast %67 : vector<128x16xbf16> to vector<1x128x16xbf16>
    %69 = vector.extract_strided_slice %22 {offsets = [0, 32], sizes = [128, 16], strides = [1, 1]} : vector<128x128xbf16> to vector<128x16xbf16>
    %70 = vector.shape_cast %69 : vector<128x16xbf16> to vector<1x128x16xbf16>
    %cst_21 = arith.constant dense<0.000000e+00> : vector<1x128x128xf32>
    %71 = tpu.matmul %66, %68, %cst_21 {dimension_numbers = #tpu.dot_dimension_numbers<[2], [2], [1], [1], [0, 0, 0, 1, 1, 1], [0], [0]>} : vector<1x128x16xbf16>, vector<1x128x16xbf16>, vector<1x128x128xf32> -> vector<1x128x128xf32>
    %72 = arith.addf %71, %9 : vector<1x128x128xf32>
    %cst_22 = arith.constant dense<0xFF800000> : vector<1x128xf32>
    %73 = vector.multi_reduction <maximumf>, %72, %cst_22 [2] : vector<1x128x128xf32> to vector<1x128xf32>
    %74 = vector.shape_cast %73 : vector<1x128xf32> to vector<1x128x1xf32>
    %75 = vector.broadcast %74 : vector<1x128x1xf32> to vector<1x128x128xf32>
    %76 = arith.subf %72, %75 : vector<1x128x128xf32>
    %77 = math.exp %76 : vector<1x128x128xf32>
    %cst_23 = arith.constant dense<0.000000e+00> : vector<1x128xf32>
    %78 = vector.multi_reduction <add>, %77, %cst_23 [2] : vector<1x128x128xf32> to vector<1x128xf32>
    %79 = vector.shape_cast %78 : vector<1x128xf32> to vector<1x128x1xf32>
    %80 = tpu.reciprocal %79 {approx = true} : vector<1x128x1xf32> -> vector<1x128x1xf32>
    %81 = vector.broadcast %80 : vector<1x128x1xf32> to vector<1x128x128xf32>
    %82 = arith.mulf %77, %81 : vector<1x128x128xf32>
    %83 = arith.truncf %82 : vector<1x128x128xf32> to vector<1x128x128xbf16>
    %cst_24 = arith.constant dense<0.000000e+00> : vector<1x128x16xf32>
    %84 = tpu.matmul %83, %70, %cst_24 {dimension_numbers = #tpu.dot_dimension_numbers<[2], [1], [1], [2], [0, 0, 0, 1, 1, 2], [0], [0]>} : vector<1x128x128xbf16>, vector<1x128x16xbf16>, vector<1x128x16xf32> -> vector<1x128x16xf32>
    %85 = vector.shape_cast %84 : vector<1x128x16xf32> to vector<128x16xf32>
    %86 = vector.extract_strided_slice %18 {offsets = [0, 48], sizes = [128, 16], strides = [1, 1]} : vector<128x128xbf16> to vector<128x16xbf16>
    %87 = vector.shape_cast %86 : vector<128x16xbf16> to vector<1x128x16xbf16>
    %88 = vector.extract_strided_slice %20 {offsets = [0, 48], sizes = [128, 16], strides = [1, 1]} : vector<128x128xbf16> to vector<128x16xbf16>
    %89 = vector.shape_cast %88 : vector<128x16xbf16> to vector<1x128x16xbf16>
    %90 = vector.extract_strided_slice %22 {offsets = [0, 48], sizes = [128, 16], strides = [1, 1]} : vector<128x128xbf16> to vector<128x16xbf16>
    %91 = vector.shape_cast %90 : vector<128x16xbf16> to vector<1x128x16xbf16>
    %cst_25 = arith.constant dense<0.000000e+00> : vector<1x128x128xf32>
    %92 = tpu.matmul %87, %89, %cst_25 {dimension_numbers = #tpu.dot_dimension_numbers<[2], [2], [1], [1], [0, 0, 0, 1, 1, 1], [0], [0]>} : vector<1x128x16xbf16>, vector<1x128x16xbf16>, vector<1x128x128xf32> -> vector<1x128x128xf32>
    %93 = arith.addf %92, %9 : vector<1x128x128xf32>
    %cst_26 = arith.constant dense<0xFF800000> : vector<1x128xf32>
    %94 = vector.multi_reduction <maximumf>, %93, %cst_26 [2] : vector<1x128x128xf32> to vector<1x128xf32>
    %95 = vector.shape_cast %94 : vector<1x128xf32> to vector<1x128x1xf32>
    %96 = vector.broadcast %95 : vector<1x128x1xf32> to vector<1x128x128xf32>
    %97 = arith.subf %93, %96 : vector<1x128x128xf32>
    %98 = math.exp %97 : vector<1x128x128xf32>
    %cst_27 = arith.constant dense<0.000000e+00> : vector<1x128xf32>
    %99 = vector.multi_reduction <add>, %98, %cst_27 [2] : vector<1x128x128xf32> to vector<1x128xf32>
    %100 = vector.shape_cast %99 : vector<1x128xf32> to vector<1x128x1xf32>
    %101 = tpu.reciprocal %100 {approx = true} : vector<1x128x1xf32> -> vector<1x128x1xf32>
    %102 = vector.broadcast %101 : vector<1x128x1xf32> to vector<1x128x128xf32>
    %103 = arith.mulf %98, %102 : vector<1x128x128xf32>
    %104 = arith.truncf %103 : vector<1x128x128xf32> to vector<1x128x128xbf16>
    %cst_28 = arith.constant dense<0.000000e+00> : vector<1x128x16xf32>
    %105 = tpu.matmul %104, %91, %cst_28 {dimension_numbers = #tpu.dot_dimension_numbers<[2], [1], [1], [2], [0, 0, 0, 1, 1, 2], [0], [0]>} : vector<1x128x128xbf16>, vector<1x128x16xbf16>, vector<1x128x16xf32> -> vector<1x128x16xf32>
    %106 = vector.shape_cast %105 : vector<1x128x16xf32> to vector<128x16xf32>
    %107 = vector.extract_strided_slice %18 {offsets = [0, 64], sizes = [128, 16], strides = [1, 1]} : vector<128x128xbf16> to vector<128x16xbf16>
    %108 = vector.shape_cast %107 : vector<128x16xbf16> to vector<1x128x16xbf16>
    %109 = vector.extract_strided_slice %20 {offsets = [0, 64], sizes = [128, 16], strides = [1, 1]} : vector<128x128xbf16> to vector<128x16xbf16>
    %110 = vector.shape_cast %109 : vector<128x16xbf16> to vector<1x128x16xbf16>
    %111 = vector.extract_strided_slice %22 {offsets = [0, 64], sizes = [128, 16], strides = [1, 1]} : vector<128x128xbf16> to vector<128x16xbf16>
    %112 = vector.shape_cast %111 : vector<128x16xbf16> to vector<1x128x16xbf16>
    %cst_29 = arith.constant dense<0.000000e+00> : vector<1x128x128xf32>
    %113 = tpu.matmul %108, %110, %cst_29 {dimension_numbers = #tpu.dot_dimension_numbers<[2], [2], [1], [1], [0, 0, 0, 1, 1, 1], [0], [0]>} : vector<1x128x16xbf16>, vector<1x128x16xbf16>, vector<1x128x128xf32> -> vector<1x128x128xf32>
    %114 = arith.addf %113, %9 : vector<1x128x128xf32>
    %cst_30 = arith.constant dense<0xFF800000> : vector<1x128xf32>
    %115 = vector.multi_reduction <maximumf>, %114, %cst_30 [2] : vector<1x128x128xf32> to vector<1x128xf32>
    %116 = vector.shape_cast %115 : vector<1x128xf32> to vector<1x128x1xf32>
    %117 = vector.broadcast %116 : vector<1x128x1xf32> to vector<1x128x128xf32>
    %118 = arith.subf %114, %117 : vector<1x128x128xf32>
    %119 = math.exp %118 : vector<1x128x128xf32>
    %cst_31 = arith.constant dense<0.000000e+00> : vector<1x128xf32>
    %120 = vector.multi_reduction <add>, %119, %cst_31 [2] : vector<1x128x128xf32> to vector<1x128xf32>
    %121 = vector.shape_cast %120 : vector<1x128xf32> to vector<1x128x1xf32>
    %122 = tpu.reciprocal %121 {approx = true} : vector<1x128x1xf32> -> vector<1x128x1xf32>
    %123 = vector.broadcast %122 : vector<1x128x1xf32> to vector<1x128x128xf32>
    %124 = arith.mulf %119, %123 : vector<1x128x128xf32>
    %125 = arith.truncf %124 : vector<1x128x128xf32> to vector<1x128x128xbf16>
    %cst_32 = arith.constant dense<0.000000e+00> : vector<1x128x16xf32>
    %126 = tpu.matmul %125, %112, %cst_32 {dimension_numbers = #tpu.dot_dimension_numbers<[2], [1], [1], [2], [0, 0, 0, 1, 1, 2], [0], [0]>} : vector<1x128x128xbf16>, vector<1x128x16xbf16>, vector<1x128x16xf32> -> vector<1x128x16xf32>
    %127 = vector.shape_cast %126 : vector<1x128x16xf32> to vector<128x16xf32>
    %128 = vector.extract_strided_slice %18 {offsets = [0, 80], sizes = [128, 16], strides = [1, 1]} : vector<128x128xbf16> to vector<128x16xbf16>
    %129 = vector.shape_cast %128 : vector<128x16xbf16> to vector<1x128x16xbf16>
    %130 = vector.extract_strided_slice %20 {offsets = [0, 80], sizes = [128, 16], strides = [1, 1]} : vector<128x128xbf16> to vector<128x16xbf16>
    %131 = vector.shape_cast %130 : vector<128x16xbf16> to vector<1x128x16xbf16>
    %132 = vector.extract_strided_slice %22 {offsets = [0, 80], sizes = [128, 16], strides = [1, 1]} : vector<128x128xbf16> to vector<128x16xbf16>
    %133 = vector.shape_cast %132 : vector<128x16xbf16> to vector<1x128x16xbf16>
    %cst_33 = arith.constant dense<0.000000e+00> : vector<1x128x128xf32>
    %134 = tpu.matmul %129, %131, %cst_33 {dimension_numbers = #tpu.dot_dimension_numbers<[2], [2], [1], [1], [0, 0, 0, 1, 1, 1], [0], [0]>} : vector<1x128x16xbf16>, vector<1x128x16xbf16>, vector<1x128x128xf32> -> vector<1x128x128xf32>
    %135 = arith.addf %134, %9 : vector<1x128x128xf32>
    %cst_34 = arith.constant dense<0xFF800000> : vector<1x128xf32>
    %136 = vector.multi_reduction <maximumf>, %135, %cst_34 [2] : vector<1x128x128xf32> to vector<1x128xf32>
    %137 = vector.shape_cast %136 : vector<1x128xf32> to vector<1x128x1xf32>
    %138 = vector.broadcast %137 : vector<1x128x1xf32> to vector<1x128x128xf32>
    %139 = arith.subf %135, %138 : vector<1x128x128xf32>
    %140 = math.exp %139 : vector<1x128x128xf32>
    %cst_35 = arith.constant dense<0.000000e+00> : vector<1x128xf32>
    %141 = vector.multi_reduction <add>, %140, %cst_35 [2] : vector<1x128x128xf32> to vector<1x128xf32>
    %142 = vector.shape_cast %141 : vector<1x128xf32> to vector<1x128x1xf32>
    %143 = tpu.reciprocal %142 {approx = true} : vector<1x128x1xf32> -> vector<1x128x1xf32>
    %144 = vector.broadcast %143 : vector<1x128x1xf32> to vector<1x128x128xf32>
    %145 = arith.mulf %140, %144 : vector<1x128x128xf32>
    %146 = arith.truncf %145 : vector<1x128x128xf32> to vector<1x128x128xbf16>
    %cst_36 = arith.constant dense<0.000000e+00> : vector<1x128x16xf32>
    %147 = tpu.matmul %146, %133, %cst_36 {dimension_numbers = #tpu.dot_dimension_numbers<[2], [1], [1], [2], [0, 0, 0, 1, 1, 2], [0], [0]>} : vector<1x128x128xbf16>, vector<1x128x16xbf16>, vector<1x128x16xf32> -> vector<1x128x16xf32>
    %148 = vector.shape_cast %147 : vector<1x128x16xf32> to vector<128x16xf32>
    %149 = vector.extract_strided_slice %18 {offsets = [0, 96], sizes = [128, 16], strides = [1, 1]} : vector<128x128xbf16> to vector<128x16xbf16>
    %150 = vector.shape_cast %149 : vector<128x16xbf16> to vector<1x128x16xbf16>
    %151 = vector.extract_strided_slice %20 {offsets = [0, 96], sizes = [128, 16], strides = [1, 1]} : vector<128x128xbf16> to vector<128x16xbf16>
    %152 = vector.shape_cast %151 : vector<128x16xbf16> to vector<1x128x16xbf16>
    %153 = vector.extract_strided_slice %22 {offsets = [0, 96], sizes = [128, 16], strides = [1, 1]} : vector<128x128xbf16> to vector<128x16xbf16>
    %154 = vector.shape_cast %153 : vector<128x16xbf16> to vector<1x128x16xbf16>
    %cst_37 = arith.constant dense<0.000000e+00> : vector<1x128x128xf32>
    %155 = tpu.matmul %150, %152, %cst_37 {dimension_numbers = #tpu.dot_dimension_numbers<[2], [2], [1], [1], [0, 0, 0, 1, 1, 1], [0], [0]>} : vector<1x128x16xbf16>, vector<1x128x16xbf16>, vector<1x128x128xf32> -> vector<1x128x128xf32>
    %156 = arith.addf %155, %9 : vector<1x128x128xf32>
    %cst_38 = arith.constant dense<0xFF800000> : vector<1x128xf32>
    %157 = vector.multi_reduction <maximumf>, %156, %cst_38 [2] : vector<1x128x128xf32> to vector<1x128xf32>
    %158 = vector.shape_cast %157 : vector<1x128xf32> to vector<1x128x1xf32>
    %159 = vector.broadcast %158 : vector<1x128x1xf32> to vector<1x128x128xf32>
    %160 = arith.subf %156, %159 : vector<1x128x128xf32>
    %161 = math.exp %160 : vector<1x128x128xf32>
    %cst_39 = arith.constant dense<0.000000e+00> : vector<1x128xf32>
    %162 = vector.multi_reduction <add>, %161, %cst_39 [2] : vector<1x128x128xf32> to vector<1x128xf32>
    %163 = vector.shape_cast %162 : vector<1x128xf32> to vector<1x128x1xf32>
    %164 = tpu.reciprocal %163 {approx = true} : vector<1x128x1xf32> -> vector<1x128x1xf32>
    %165 = vector.broadcast %164 : vector<1x128x1xf32> to vector<1x128x128xf32>
    %166 = arith.mulf %161, %165 : vector<1x128x128xf32>
    %167 = arith.truncf %166 : vector<1x128x128xf32> to vector<1x128x128xbf16>
    %cst_40 = arith.constant dense<0.000000e+00> : vector<1x128x16xf32>
    %168 = tpu.matmul %167, %154, %cst_40 {dimension_numbers = #tpu.dot_dimension_numbers<[2], [1], [1], [2], [0, 0, 0, 1, 1, 2], [0], [0]>} : vector<1x128x128xbf16>, vector<1x128x16xbf16>, vector<1x128x16xf32> -> vector<1x128x16xf32>
    %169 = vector.shape_cast %168 : vector<1x128x16xf32> to vector<128x16xf32>
    %170 = vector.extract_strided_slice %18 {offsets = [0, 112], sizes = [128, 16], strides = [1, 1]} : vector<128x128xbf16> to vector<128x16xbf16>
    %171 = vector.shape_cast %170 : vector<128x16xbf16> to vector<1x128x16xbf16>
    %172 = vector.extract_strided_slice %20 {offsets = [0, 112], sizes = [128, 16], strides = [1, 1]} : vector<128x128xbf16> to vector<128x16xbf16>
    %173 = vector.shape_cast %172 : vector<128x16xbf16> to vector<1x128x16xbf16>
    %174 = vector.extract_strided_slice %22 {offsets = [0, 112], sizes = [128, 16], strides = [1, 1]} : vector<128x128xbf16> to vector<128x16xbf16>
    %175 = vector.shape_cast %174 : vector<128x16xbf16> to vector<1x128x16xbf16>
    %cst_41 = arith.constant dense<0.000000e+00> : vector<1x128x128xf32>
    %176 = tpu.matmul %171, %173, %cst_41 {dimension_numbers = #tpu.dot_dimension_numbers<[2], [2], [1], [1], [0, 0, 0, 1, 1, 1], [0], [0]>} : vector<1x128x16xbf16>, vector<1x128x16xbf16>, vector<1x128x128xf32> -> vector<1x128x128xf32>
    %177 = arith.addf %176, %9 : vector<1x128x128xf32>
    %cst_42 = arith.constant dense<0xFF800000> : vector<1x128xf32>
    %178 = vector.multi_reduction <maximumf>, %177, %cst_42 [2] : vector<1x128x128xf32> to vector<1x128xf32>
    %179 = vector.shape_cast %178 : vector<1x128xf32> to vector<1x128x1xf32>
    %180 = vector.broadcast %179 : vector<1x128x1xf32> to vector<1x128x128xf32>
    %181 = arith.subf %177, %180 : vector<1x128x128xf32>
    %182 = math.exp %181 : vector<1x128x128xf32>
    %cst_43 = arith.constant dense<0.000000e+00> : vector<1x128xf32>
    %183 = vector.multi_reduction <add>, %182, %cst_43 [2] : vector<1x128x128xf32> to vector<1x128xf32>
    %184 = vector.shape_cast %183 : vector<1x128xf32> to vector<1x128x1xf32>
    %185 = tpu.reciprocal %184 {approx = true} : vector<1x128x1xf32> -> vector<1x128x1xf32>
    %186 = vector.broadcast %185 : vector<1x128x1xf32> to vector<1x128x128xf32>
    %187 = arith.mulf %182, %186 : vector<1x128x128xf32>
    %188 = arith.truncf %187 : vector<1x128x128xf32> to vector<1x128x128xbf16>
    %cst_44 = arith.constant dense<0.000000e+00> : vector<1x128x16xf32>
    %189 = tpu.matmul %188, %175, %cst_44 {dimension_numbers = #tpu.dot_dimension_numbers<[2], [1], [1], [2], [0, 0, 0, 1, 1, 2], [0], [0]>} : vector<1x128x128xbf16>, vector<1x128x16xbf16>, vector<1x128x16xf32> -> vector<1x128x16xf32>
    %190 = vector.shape_cast %189 : vector<1x128x16xf32> to vector<128x16xf32>
    %191 = tpu.concatenate %43, %64, %85, %106, %127, %148, %169, %190 in 1 : vector<128x16xf32>, vector<128x16xf32>, vector<128x16xf32>, vector<128x16xf32>, vector<128x16xf32>, vector<128x16xf32>, vector<128x16xf32>, vector<128x16xf32> -> vector<128x128xf32>
    %192 = arith.truncf %191 : vector<128x128xf32> to vector<128x128xbf16>
    %c0_45 = arith.constant 0 : index
    %c0_46 = arith.constant 0 : index
    %c0_47 = arith.constant 0 : index
    %193 = vector.load %arg6[%c0_45, %c0_46, %c0_47] : memref<1x128x128xbf16, #tpu.memory_space<vmem>>, vector<1x128x128xbf16>
    %194 = vector.shape_cast %193 : vector<1x128x128xbf16> to vector<128x128xbf16>
    %cst_48 = arith.constant dense<0.000000e+00> : vector<128x128xf32>
    %195 = tpu.matmul %192, %194, %cst_48 {dimension_numbers = #tpu.dot_dimension_numbers<[1], [0], [0], [1], [0, 0, 1, 1], [], []>} : vector<128x128xbf16>, vector<128x128xbf16>, vector<128x128xf32> -> vector<128x128xf32>
    %c0_49 = arith.constant 0 : index
    %c0_50 = arith.constant 0 : index
    %c0_51 = arith.constant 0 : index
    %196 = vector.load %arg7[%c0_49, %c0_50, %c0_51] : memref<1x1x128xf32, #tpu.memory_space<vmem>>, vector<1x1x128xf32>
    %197 = vector.shape_cast %196 : vector<1x1x128xf32> to vector<1x128xf32>
    %198 = vector.broadcast %197 : vector<1x128xf32> to vector<128x128xf32>
    %199 = arith.addf %195, %198 : vector<128x128xf32>
    %200 = arith.addf %4, %199 : vector<128x128xf32>
    %c0_52 = arith.constant 0 : index
    %c0_53 = arith.constant 0 : index
    %c0_54 = arith.constant 0 : index
    %201 = vector.load %arg8[%c0_52, %c0_53, %c0_54] : memref<1x1x128xf32, #tpu.memory_space<vmem>>, vector<1x1x128xf32>
    %202 = vector.shape_cast %201 : vector<1x1x128xf32> to vector<1x128xf32>
    %c0_55 = arith.constant 0 : index
    %c0_56 = arith.constant 0 : index
    %c0_57 = arith.constant 0 : index
    %203 = vector.load %arg9[%c0_55, %c0_56, %c0_57] : memref<1x1x128xf32, #tpu.memory_space<vmem>>, vector<1x1x128xf32>
    %204 = vector.shape_cast %203 : vector<1x1x128xf32> to vector<1x128xf32>
    %cst_58 = arith.constant dense<0.000000e+00> : vector<128xf32>
    %205 = vector.multi_reduction <add>, %200, %cst_58 [1] : vector<128x128xf32> to vector<128xf32>
    %206 = vector.shape_cast %205 : vector<128xf32> to vector<128x1xf32>
    %cst_59 = arith.constant 1.280000e+02 : f32
    %207 = vector.broadcast %cst_59 : f32 to vector<128x1xf32>
    %208 = arith.divf %206, %207 : vector<128x1xf32>
    %209 = vector.broadcast %208 : vector<128x1xf32> to vector<128x128xf32>
    %210 = arith.subf %200, %209 : vector<128x128xf32>
    %211 = arith.mulf %210, %210 : vector<128x128xf32>
    %cst_60 = arith.constant dense<0.000000e+00> : vector<128xf32>
    %212 = vector.multi_reduction <add>, %211, %cst_60 [1] : vector<128x128xf32> to vector<128xf32>
    %213 = vector.shape_cast %212 : vector<128xf32> to vector<128x1xf32>
    %cst_61 = arith.constant 1.280000e+02 : f32
    %214 = vector.broadcast %cst_61 : f32 to vector<128x1xf32>
    %215 = arith.divf %213, %214 : vector<128x1xf32>
    %216 = vector.broadcast %208 : vector<128x1xf32> to vector<128x128xf32>
    %217 = arith.subf %200, %216 : vector<128x128xf32>
    %cst_62 = arith.constant 9.99999974E-6 : f32
    %218 = vector.broadcast %cst_62 : f32 to vector<128x1xf32>
    %219 = arith.addf %215, %218 : vector<128x1xf32>
    %220 = math.rsqrt %219 : vector<128x1xf32>
    %221 = vector.broadcast %220 : vector<128x1xf32> to vector<128x128xf32>
    %222 = arith.mulf %217, %221 : vector<128x128xf32>
    %223 = vector.broadcast %202 : vector<1x128xf32> to vector<128x128xf32>
    %224 = arith.mulf %222, %223 : vector<128x128xf32>
    %225 = vector.broadcast %204 : vector<1x128xf32> to vector<128x128xf32>
    %226 = arith.addf %224, %225 : vector<128x128xf32>
    %227 = arith.truncf %226 : vector<128x128xf32> to vector<128x128xbf16>
    %c0_63 = arith.constant 0 : index
    %c0_64 = arith.constant 0 : index
    %c0_65 = arith.constant 0 : index
    %228 = vector.load %arg10[%c0_63, %c0_64, %c0_65] : memref<1x128x256xbf16, #tpu.memory_space<vmem>>, vector<1x128x256xbf16>
    %229 = vector.shape_cast %228 : vector<1x128x256xbf16> to vector<128x256xbf16>
    %cst_66 = arith.constant dense<0.000000e+00> : vector<128x256xf32>
    %230 = tpu.matmul %227, %229, %cst_66 {dimension_numbers = #tpu.dot_dimension_numbers<[1], [0], [0], [1], [0, 0, 1, 1], [], []>} : vector<128x128xbf16>, vector<128x256xbf16>, vector<128x256xf32> -> vector<128x256xf32>
    %c0_67 = arith.constant 0 : index
    %c0_68 = arith.constant 0 : index
    %c0_69 = arith.constant 0 : index
    %231 = vector.load %arg11[%c0_67, %c0_68, %c0_69] : memref<1x1x256xf32, #tpu.memory_space<vmem>>, vector<1x1x256xf32>
    %232 = vector.shape_cast %231 : vector<1x1x256xf32> to vector<1x256xf32>
    %233 = vector.broadcast %232 : vector<1x256xf32> to vector<128x256xf32>
    %234 = arith.addf %230, %233 : vector<128x256xf32>
    %cst_70 = arith.constant 5.000000e-01 : f32
    %235 = vector.broadcast %cst_70 : f32 to vector<128x256xf32>
    %236 = arith.mulf %235, %234 : vector<128x256xf32>
    %cst_71 = arith.constant 4.471500e-02 : f32
    %237 = vector.broadcast %cst_71 : f32 to vector<128x256xf32>
    %238 = arith.mulf %237, %234 : vector<128x256xf32>
    %239 = arith.mulf %238, %234 : vector<128x256xf32>
    %240 = arith.mulf %239, %234 : vector<128x256xf32>
    %241 = arith.addf %234, %240 : vector<128x256xf32>
    %cst_72 = arith.constant 0.797884583 : f32
    %242 = vector.broadcast %cst_72 : f32 to vector<128x256xf32>
    %243 = arith.mulf %242, %241 : vector<128x256xf32>
    %244 = math.tanh %243 : vector<128x256xf32>
    %cst_73 = arith.constant 1.000000e+00 : f32
    %245 = vector.broadcast %cst_73 : f32 to vector<128x256xf32>
    %246 = arith.addf %245, %244 : vector<128x256xf32>
    %247 = arith.mulf %236, %246 : vector<128x256xf32>
    %248 = arith.truncf %247 : vector<128x256xf32> to vector<128x256xbf16>
    %c0_74 = arith.constant 0 : index
    %c0_75 = arith.constant 0 : index
    %c0_76 = arith.constant 0 : index
    %249 = vector.load %arg12[%c0_74, %c0_75, %c0_76] : memref<1x256x128xbf16, #tpu.memory_space<vmem>>, vector<1x256x128xbf16>
    %250 = vector.shape_cast %249 : vector<1x256x128xbf16> to vector<256x128xbf16>
    %cst_77 = arith.constant dense<0.000000e+00> : vector<128x128xf32>
    %251 = tpu.matmul %248, %250, %cst_77 {dimension_numbers = #tpu.dot_dimension_numbers<[1], [0], [0], [1], [0, 0, 1, 1], [], []>} : vector<128x256xbf16>, vector<256x128xbf16>, vector<128x128xf32> -> vector<128x128xf32>
    %c0_78 = arith.constant 0 : index
    %c0_79 = arith.constant 0 : index
    %c0_80 = arith.constant 0 : index
    %252 = vector.load %arg13[%c0_78, %c0_79, %c0_80] : memref<1x1x128xf32, #tpu.memory_space<vmem>>, vector<1x1x128xf32>
    %253 = vector.shape_cast %252 : vector<1x1x128xf32> to vector<1x128xf32>
    %254 = vector.broadcast %253 : vector<1x128xf32> to vector<128x128xf32>
    %255 = arith.addf %251, %254 : vector<128x128xf32>
    %256 = arith.addf %226, %255 : vector<128x128xf32>
    %c0_81 = arith.constant 0 : index
    %c0_82 = arith.constant 0 : index
    %c0_83 = arith.constant 0 : index
    %257 = vector.load %arg14[%c0_81, %c0_82, %c0_83] : memref<1x1x128xf32, #tpu.memory_space<vmem>>, vector<1x1x128xf32>
    %258 = vector.shape_cast %257 : vector<1x1x128xf32> to vector<1x128xf32>
    %c0_84 = arith.constant 0 : index
    %c0_85 = arith.constant 0 : index
    %c0_86 = arith.constant 0 : index
    %259 = vector.load %arg15[%c0_84, %c0_85, %c0_86] : memref<1x1x128xf32, #tpu.memory_space<vmem>>, vector<1x1x128xf32>
    %260 = vector.shape_cast %259 : vector<1x1x128xf32> to vector<1x128xf32>
    %cst_87 = arith.constant dense<0.000000e+00> : vector<128xf32>
    %261 = vector.multi_reduction <add>, %256, %cst_87 [1] : vector<128x128xf32> to vector<128xf32>
    %262 = vector.shape_cast %261 : vector<128xf32> to vector<128x1xf32>
    %cst_88 = arith.constant 1.280000e+02 : f32
    %263 = vector.broadcast %cst_88 : f32 to vector<128x1xf32>
    %264 = arith.divf %262, %263 : vector<128x1xf32>
    %265 = vector.broadcast %264 : vector<128x1xf32> to vector<128x128xf32>
    %266 = arith.subf %256, %265 : vector<128x128xf32>
    %267 = arith.mulf %266, %266 : vector<128x128xf32>
    %cst_89 = arith.constant dense<0.000000e+00> : vector<128xf32>
    %268 = vector.multi_reduction <add>, %267, %cst_89 [1] : vector<128x128xf32> to vector<128xf32>
    %269 = vector.shape_cast %268 : vector<128xf32> to vector<128x1xf32>
    %cst_90 = arith.constant 1.280000e+02 : f32
    %270 = vector.broadcast %cst_90 : f32 to vector<128x1xf32>
    %271 = arith.divf %269, %270 : vector<128x1xf32>
    %272 = vector.broadcast %264 : vector<128x1xf32> to vector<128x128xf32>
    %273 = arith.subf %256, %272 : vector<128x128xf32>
    %cst_91 = arith.constant 9.99999974E-6 : f32
    %274 = vector.broadcast %cst_91 : f32 to vector<128x1xf32>
    %275 = arith.addf %271, %274 : vector<128x1xf32>
    %276 = math.rsqrt %275 : vector<128x1xf32>
    %277 = vector.broadcast %276 : vector<128x1xf32> to vector<128x128xf32>
    %278 = arith.mulf %273, %277 : vector<128x128xf32>
    %279 = vector.broadcast %258 : vector<1x128xf32> to vector<128x128xf32>
    %280 = arith.mulf %278, %279 : vector<128x128xf32>
    %281 = vector.broadcast %260 : vector<1x128xf32> to vector<128x128xf32>
    %282 = arith.addf %280, %281 : vector<128x128xf32>
    %283 = vector.shape_cast %282 : vector<128x128xf32> to vector<1x128x128xf32>
    %c0_92 = arith.constant 0 : index
    %c0_93 = arith.constant 0 : index
    %c0_94 = arith.constant 0 : index
    %284 = vector.load %arg16[%c0_92, %c0_93, %c0_94] : memref<1x128x128xf32, #tpu.memory_space<vmem>>, vector<1x128x128xf32>
    tpu.vector_store %arg16[%c0_92, %c0_93, %c0_94], %283 {strides = array<i32>} : memref<1x128x128xf32, #tpu.memory_space<vmem>>, vector<1x128x128xf32>,
    return
  }
  func.func @transform_0(%arg0: i32, %arg1: i32) -> (i32, i32, i32) {
    %c0_i32 = arith.constant 0 : i32
    %c0_i32_0 = arith.constant 0 : i32
    %c0_i32_1 = arith.constant 0 : i32
    return %arg0, %c0_i32, %c0_i32_0 : i32, i32, i32
  }
  func.func @transform_1(%arg0: i32, %arg1: i32) -> (i32, i32, i32) {
    %c0_i32 = arith.constant 0 : i32
    %c0_i32_0 = arith.constant 0 : i32
    %c0_i32_1 = arith.constant 0 : i32
    return %arg0, %c0_i32, %c0_i32_0 : i32, i32, i32
  }
  func.func @transform_2(%arg0: i32, %arg1: i32) -> (i32, i32, i32) {
    %c0_i32 = arith.constant 0 : i32
    %c0_i32_0 = arith.constant 0 : i32
    %c0_i32_1 = arith.constant 0 : i32
    return %arg1, %c0_i32, %c0_i32_0 : i32, i32, i32
  }
  func.func @transform_3(%arg0: i32, %arg1: i32) -> (i32, i32, i32) {
    %c0_i32 = arith.constant 0 : i32
    %c0_i32_0 = arith.constant 0 : i32
    %c0_i32_1 = arith.constant 0 : i32
    return %arg1, %c0_i32, %c0_i32_0 : i32, i32, i32
  }
  func.func @transform_4(%arg0: i32, %arg1: i32) -> (i32, i32, i32) {
    %c0_i32 = arith.constant 0 : i32
    %c0_i32_0 = arith.constant 0 : i32
    %c0_i32_1 = arith.constant 0 : i32
    return %arg1, %c0_i32, %c0_i32_0 : i32, i32, i32
  }
  func.func @transform_5(%arg0: i32, %arg1: i32) -> (i32, i32, i32) {
    %c0_i32 = arith.constant 0 : i32
    %c0_i32_0 = arith.constant 0 : i32
    %c0_i32_1 = arith.constant 0 : i32
    return %arg1, %c0_i32, %c0_i32_0 : i32, i32, i32
  }
  func.func @transform_6(%arg0: i32, %arg1: i32) -> (i32, i32, i32) {
    %c0_i32 = arith.constant 0 : i32
    %c0_i32_0 = arith.constant 0 : i32
    %c0_i32_1 = arith.constant 0 : i32
    return %arg1, %c0_i32, %c0_i32_0 : i32, i32, i32
  }
  func.func @transform_7(%arg0: i32, %arg1: i32) -> (i32, i32, i32) {
    %c0_i32 = arith.constant 0 : i32
    %c0_i32_0 = arith.constant 0 : i32
    %c0_i32_1 = arith.constant 0 : i32
    return %arg1, %c0_i32, %c0_i32_0 : i32, i32, i32
  }
  func.func @transform_8(%arg0: i32, %arg1: i32) -> (i32, i32, i32) {
    %c0_i32 = arith.constant 0 : i32
    %c0_i32_0 = arith.constant 0 : i32
    %c0_i32_1 = arith.constant 0 : i32
    return %arg1, %c0_i32, %c0_i32_0 : i32, i32, i32
  }
  func.func @transform_9(%arg0: i32, %arg1: i32) -> (i32, i32, i32) {
    %c0_i32 = arith.constant 0 : i32
    %c0_i32_0 = arith.constant 0 : i32
    %c0_i32_1 = arith.constant 0 : i32
    return %arg1, %c0_i32, %c0_i32_0 : i32, i32, i32
  }
  func.func @transform_10(%arg0: i32, %arg1: i32) -> (i32, i32, i32) {
    %c0_i32 = arith.constant 0 : i32
    %c0_i32_0 = arith.constant 0 : i32
    %c0_i32_1 = arith.constant 0 : i32
    return %arg1, %c0_i32, %c0_i32_0 : i32, i32, i32
  }
  func.func @transform_11(%arg0: i32, %arg1: i32) -> (i32, i32, i32) {
    %c0_i32 = arith.constant 0 : i32
    %c0_i32_0 = arith.constant 0 : i32
    %c0_i32_1 = arith.constant 0 : i32
    return %arg1, %c0_i32, %c0_i32_0 : i32, i32, i32
  }
  func.func @transform_12(%arg0: i32, %arg1: i32) -> (i32, i32, i32) {
    %c0_i32 = arith.constant 0 : i32
    %c0_i32_0 = arith.constant 0 : i32
    %c0_i32_1 = arith.constant 0 : i32
    return %arg1, %c0_i32, %c0_i32_0 : i32, i32, i32
  }
  func.func @transform_13(%arg0: i32, %arg1: i32) -> (i32, i32, i32) {
    %c0_i32 = arith.constant 0 : i32
    %c0_i32_0 = arith.constant 0 : i32
    %c0_i32_1 = arith.constant 0 : i32
    return %arg1, %c0_i32, %c0_i32_0 : i32, i32, i32
  }
  func.func @transform_14(%arg0: i32, %arg1: i32) -> (i32, i32, i32) {
    %c0_i32 = arith.constant 0 : i32
    %c0_i32_0 = arith.constant 0 : i32
    %c0_i32_1 = arith.constant 0 : i32
    return %arg0, %c0_i32, %c0_i32_0 : i32, i32, i32
  }
}

</mosaic_0001>

<llo_original>
// kernel: encoder_forward.1
$region0: #{encoder_forward.1}
  #allocation0 [shape = 'u32[]', space=smem, size = 0x4, offset = 0x4, fixed_abs, tag = 'smem constant byte address 0x4 - core index']
  #allocation1 [shape = 'u32[72,128]{1,0:T(1,128)}', space=vmem, size = 0x9000, scoped, tag = 'internal scratch']
  %s0 = inlined_call_operand.hbm [shape: f32[2,128,128], index: 0, kind: input, shape index: {}]
  %s1 = inlined_call_operand.vmem [shape: bf16[2,128,128], index: 1, kind: input, shape index: {}]
  %s2 = inlined_call_operand.hbm [shape: bf16[3,128,384], index: 2, kind: input, shape index: {}]
  %s3 = inlined_call_operand.hbm [shape: f32[3,1,384], index: 3, kind: input, shape index: {}]
  %s4 = inlined_call_operand.hbm [shape: bf16[3,128,128], index: 4, kind: input, shape index: {}]
  %s5 = inlined_call_operand.hbm [shape: f32[3,1,128], index: 5, kind: input, shape index: {}]
  %s6 = inlined_call_operand.hbm [shape: f32[3,1,128], index: 6, kind: input, shape index: {}]
  %s7 = inlined_call_operand.hbm [shape: f32[3,1,128], index: 7, kind: input, shape index: {}]
  %s8 = inlined_call_operand.vmem [shape: bf16[3,128,256], index: 8, kind: input, shape index: {}]
  %s9 = inlined_call_operand.vmem [shape: f32[3,1,256], index: 9, kind: input, shape index: {}]
  %s10 = inlined_call_operand.hbm [shape: bf16[3,256,128], index: 10, kind: input, shape index: {}]
  %s11 = inlined_call_operand.vmem [shape: f32[3,1,128], index: 11, kind: input, shape index: {}]
  %s12 = inlined_call_operand.hbm [shape: f32[3,1,128], index: 12, kind: input, shape index: {}]
  %s13 = inlined_call_operand.hbm [shape: f32[3,1,128], index: 13, kind: input, shape index: {}]
  %s14 = inlined_call_operand.hbm [shape: f32[2,128,128], index: 14, kind: output, shape index: {}]
  %s15 = sld [smem:[#allocation0]]
  $region133: #{encoder_forward.1} parent=0
    _
  %s17 = ssub.s32 1, %s15
  %s18 = scalar_select 0, %s17, %s15
  $region1: #{encoder_forward.1} parent=0
    #allocation2 [shape = 'u8[131072]{0}', space=vmem, size = 0x20000, scoped, tag = 'input window, operand 0']
    #allocation3 [shape = 's32[2]{0}', space=sflag, size = 0x8, scoped, tag = 'scoped memory for encoder_forward.1']
    #allocation4 [shape = 's32[2]{0}', space=sflag, size = 0x8, scoped, tag = 'scoped memory for encoder_forward.1']
    #allocation5 [shape = 'u8[196608]{0}', space=vmem, size = 0x30000, scoped, tag = 'input window, operand 2']
    #allocation6 [shape = 's32[2]{0}', space=sflag, size = 0x8, scoped, tag = 'scoped memory for encoder_forward.1']
    #allocation7 [shape = 'u8[3072]{0}', space=vmem, size = 0xc00, scoped, tag = 'input window, operand 3']
    #allocation8 [shape = 'u8[65536]{0}', space=vmem, size = 0x10000, scoped, tag = 'input window, operand 4']
    #allocation9 [shape = 's32[2]{0}', space=sflag, size = 0x8, scoped, tag = 'scoped memory for encoder_forward.1']
    #allocation10 [shape = 'u8[1024]{0}', space=vmem, size = 0x400, scoped, tag = 'input window, operand 5']
    #allocation11 [shape = 'u8[1024]{0}', space=vmem, size = 0x400, scoped, tag = 'input window, operand 6']
    #allocation12 [shape = 's32[2]{0}', space=sflag, size = 0x8, scoped, tag = 'scoped memory for encoder_forward.1']
    #allocation13 [shape = 'u8[1024]{0}', space=vmem, size = 0x400, scoped, tag = 'input window, operand 7']
    #allocation14 [shape = 'u8[131072]{0}', space=vmem, size = 0x20000, scoped, tag = 'input window, operand 10']
    #allocation15 [shape = 's32[2]{0}', space=sflag, size = 0x8, scoped, tag = 'scoped memory for encoder_forward.1']
    #allocation16 [shape = 'u8[1024]{0}', space=vmem, size = 0x400, scoped, tag = 'input window, operand 12']
    #allocation17 [shape = 'u8[1024]{0}', space=vmem, size = 0x400, scoped, tag = 'input window, operand 13']
    #allocation18 [shape = 's32[2]{0}', space=sflag, size = 0x8, scoped, tag = 'scoped memory for encoder_forward.1']
    #allocation19 [shape = 'u8[131072]{0}', space=vmem, size = 0x20000, scoped, tag = 'output window, operand 0']
    %19 = vsyncpa [#allocation3], 0
    %s20 = scalar_lea.sflag [#allocation3], 1
    %21 = vsyncpa %s20, 0
    %22 = vsyncpa [#allocation6], 0
    %s23 = scalar_lea.sflag [#allocation6], 1
    %24 = vsyncpa %s23, 0
    %25 = vsyncpa [#allocation9], 0
    %s26 = scalar_lea.sflag [#allocation9], 1
    %27 = vsyncpa %s26, 0
    %28 = vsyncpa [#allocation12], 0
    %s29 = scalar_lea.sflag [#allocation12], 1
    %30 = vsyncpa %s29, 0
    %31 = vsyncpa [#allocation15], 0
    %s32 = scalar_lea.sflag [#allocation15], 1
    %33 = vsyncpa %s32, 0
    %34 = vsyncpa [#allocation18], 0
    %s35 = scalar_lea.sflag [#allocation18], 1
    %36 = vsyncpa %s35, 0
    %37 = vsyncpa [#allocation4], 0
    %s38 = scalar_lea.sflag [#allocation4], 1
    %39 = vsyncpa %s38, 0
    loop: start=0, step=1, limit=8
    $region2: #{encoder_forward.1} parent=1 // loop_pre_header
      _
    $region3: #{encoder_forward.1} parent=1 // loop_header
      %s41 = sphi 0, %s45
      %p42 = scmp.ge.s32.totalorder %s41, 8
      %s48 = sphi 0, %s60
      %s49 = sphi 0, %s56
      %s50 = sphi 0, %s48
      %s51 = sphi 0, %s49
      %s52 = sphi 0, %s50
      %s53 = sphi 0, %s51
      %s63 = sphi 0, %s65
      %s66 = sphi 0, %s63
      %s67 = sphi 0, %s66
      %s83 = sphi 0, %s67
      %s89 = sphi 0, %s91
      %s92 = sphi 0, %s89
      %s93 = sphi 0, %s92
      %s109 = sphi 0, %s93
      %s115 = sphi 0, %s117
      %s118 = sphi 0, %s115
      %s119 = sphi 0, %s118
      %s135 = sphi 0, %s119
      %s141 = sphi 0, %s143
      %s144 = sphi 0, %s141
      %s145 = sphi 0, %s144
      %s161 = sphi 0, %s145
      %s167 = sphi 0, %s169
      %s170 = sphi 0, %s167
      %s171 = sphi 0, %s170
      %s187 = sphi 0, %s171
      %s193 = sphi 0, %s195
      %s196 = sphi 0, %s193
      %s197 = sphi 0, %s196
      %s213 = sphi 0, %s197
      %s219 = sphi 0, %s221
      %s222 = sphi 0, %s219
      %s223 = sphi 0, %s222
      %s239 = sphi 0, %s223
      %s245 = sphi 0, %s247
      %s248 = sphi 0, %s245
      %s249 = sphi 0, %s248
      %s265 = sphi 0, %s249
      %s271 = sphi 0, %s273
      %s274 = sphi 0, %s271
      %s275 = sphi 0, %s274
      %s291 = sphi 0, %s275
      %s297 = sphi 0, %s299
      %s300 = sphi 0, %s297
      %s301 = sphi 0, %s300
      %s317 = sphi 0, %s301
      %s323 = sphi 0, %s325
      %s326 = sphi 0, %s323
      %s327 = sphi 0, %s326
      %s343 = sphi 0, %s327
      %s349 = sphi 0, %s351
      %s352 = sphi 0, %s349
      %s353 = sphi 0, %s352
      %s369 = sphi 0, %s353
      %s375 = sphi 0, %s377
      %s378 = sphi 0, %s375
      %s379 = sphi 0, %s378
      %s395 = sphi 0, %s379
      %s401 = sphi 0, %s403
      %s404 = sphi 0, %s401
      %s405 = sphi 0, %s404
      %s421 = sphi 0, %s405
      %s427 = sphi 0, %s429
      %s430 = sphi 0, %s427
      %s431 = sphi 0, %s430
      %s447 = sphi 0, %s431
    $region4: #{encoder_forward.1} parent=1 // loop_header_branch
      %44 = sbr.rel (%p42) target = $region8
    $region5: #{encoder_forward.1} parent=1 // loop_body
      %s46 = ssub.s32 %s41, 1
      %s47 = ssub.s32 %s41, 2
      %s54 = sadd.s32 1, %s49
      %p55 = scmp.ge.s32.totalorder %s54, 3
      %s56 = scalar_select %p55, 0, %s54
      %s57 = sadd.s32 1, %s48
      %s58 = scalar_select %p55, %s57, %s48
      %p59 = scmp.ge.s32.totalorder %s58, 2
      %s60 = scalar_select %p59, 0, %s58
      %s61 = ssub.s32 %s48, %s60
      %p62 = scmp.eq.s32.totalorder %s61, 0
      %s64 = sadd.s32 %s63, 1
      %s65 = scalar_select %p62, %s63, %s64
      %p68 = pneg %p62
      %p69 = scmp.eq.s32.totalorder %s41, 5
      %p70 = por %p68, %p69
      %p71 = scmp.ne.s32.totalorder %s63, %s66
      %p72 = scmp.eq.s32.totalorder %s41, 0
      %p73 = por %p71, %p72
      %p74 = scmp.ne.s32.totalorder %s63, %s66
      %p75 = scmp.eq.s32.totalorder %s46, 5
      %p76 = por %p74, %p75
      %p77 = scmp.ne.s32.totalorder %s66, %s67
      %p78 = scmp.eq.s32.totalorder %s46, 0
      %p79 = por %p77, %p78
      %p80 = scmp.ne.s32.totalorder %s66, %s67
      %p81 = scmp.eq.s32.totalorder %s47, 5
      %p82 = por %p80, %p81
      %p84 = scmp.ne.s32.totalorder %s67, %s83
      %p85 = scmp.eq.s32.totalorder %s47, 0
      %p86 = por %p84, %p85
      %s87 = ssub.s32 %s48, %s60
      %p88 = scmp.eq.s32.totalorder %s87, 0
      %s90 = sadd.s32 %s89, 1
      %s91 = scalar_select %p88, %s89, %s90
      %p94 = pneg %p88
      %p95 = scmp.eq.s32.totalorder %s41, 5
      %p96 = por %p94, %p95
      %p97 = scmp.ne.s32.totalorder %s89, %s92
      %p98 = scmp.eq.s32.totalorder %s41, 0
      %p99 = por %p97, %p98
      %p100 = scmp.ne.s32.totalorder %s89, %s92
      %p101 = scmp.eq.s32.totalorder %s46, 5
      %p102 = por %p100, %p101
      %p103 = scmp.ne.s32.totalorder %s92, %s93
      %p104 = scmp.eq.s32.totalorder %s46, 0
      %p105 = por %p103, %p104
      %p106 = scmp.ne.s32.totalorder %s92, %s93
      %p107 = scmp.eq.s32.totalorder %s47, 5
      %p108 = por %p106, %p107
      %p110 = scmp.ne.s32.totalorder %s93, %s109
      %p111 = scmp.eq.s32.totalorder %s47, 0
      %p112 = por %p110, %p111
      %s113 = ssub.s32 %s49, %s56
      %p114 = scmp.eq.s32.totalorder %s113, 0
      %s116 = sadd.s32 %s115, 1
      %s117 = scalar_select %p114, %s115, %s116
      %p120 = pneg %p114
      %p121 = scmp.eq.s32.totalorder %s41, 5
      %p122 = por %p120, %p121
      %p123 = scmp.ne.s32.totalorder %s115, %s118
      %p124 = scmp.eq.s32.totalorder %s41, 0
      %p125 = por %p123, %p124
      %p126 = scmp.ne.s32.totalorder %s115, %s118
      %p127 = scmp.eq.s32.totalorder %s46, 5
      %p128 = por %p126, %p127
      %p129 = scmp.ne.s32.totalorder %s118, %s119
      %p130 = scmp.eq.s32.totalorder %s46, 0
      %p131 = por %p129, %p130
      %p132 = scmp.ne.s32.totalorder %s118, %s119
      %p133 = scmp.eq.s32.totalorder %s47, 5
      %p134 = por %p132, %p133
      %p136 = scmp.ne.s32.totalorder %s119, %s135
      %p137 = scmp.eq.s32.totalorder %s47, 0
      %p138 = por %p136, %p137
      %s139 = ssub.s32 %s49, %s56
      %p140 = scmp.eq.s32.totalorder %s139, 0
      %s142 = sadd.s32 %s141, 1
      %s143 = scalar_select %p140, %s141, %s142
      %p146 = pneg %p140
      %p147 = scmp.eq.s32.totalorder %s41, 5
      %p148 = por %p146, %p147
      %p149 = scmp.ne.s32.totalorder %s141, %s144
      %p150 = scmp.eq.s32.totalorder %s41, 0
      %p151 = por %p149, %p150
      %p152 = scmp.ne.s32.totalorder %s141, %s144
      %p153 = scmp.eq.s32.totalorder %s46, 5
      %p154 = por %p152, %p153
      %p155 = scmp.ne.s32.totalorder %s144, %s145
      %p156 = scmp.eq.s32.totalorder %s46, 0
      %p157 = por %p155, %p156
      %p158 = scmp.ne.s32.totalorder %s144, %s145
      %p159 = scmp.eq.s32.totalorder %s47, 5
      %p160 = por %p158, %p159
      %p162 = scmp.ne.s32.totalorder %s145, %s161
      %p163 = scmp.eq.s32.totalorder %s47, 0
      %p164 = por %p162, %p163
      %s165 = ssub.s32 %s49, %s56
      %p166 = scmp.eq.s32.totalorder %s165, 0
      %s168 = sadd.s32 %s167, 1
      %s169 = scalar_select %p166, %s167, %s168
      %p172 = pneg %p166
      %p173 = scmp.eq.s32.totalorder %s41, 5
      %p174 = por %p172, %p173
      %p175 = scmp.ne.s32.totalorder %s167, %s170
      %p176 = scmp.eq.s32.totalorder %s41, 0
      %p177 = por %p175, %p176
      %p178 = scmp.ne.s32.totalorder %s167, %s170
      %p179 = scmp.eq.s32.totalorder %s46, 5
      %p180 = por %p178, %p179
      %p181 = scmp.ne.s32.totalorder %s170, %s171
      %p182 = scmp.eq.s32.totalorder %s46, 0
      %p183 = por %p181, %p182
      %p184 = scmp.ne.s32.totalorder %s170, %s171
      %p185 = scmp.eq.s32.totalorder %s47, 5
      %p186 = por %p184, %p185
      %p188 = scmp.ne.s32.totalorder %s171, %s187
      %p189 = scmp.eq.s32.totalorder %s47, 0
      %p190 = por %p188, %p189
      %s191 = ssub.s32 %s49, %s56
      %p192 = scmp.eq.s32.totalorder %s191, 0
      %s194 = sadd.s32 %s193, 1
      %s195 = scalar_select %p192, %s193, %s194
      %p198 = pneg %p192
      %p199 = scmp.eq.s32.totalorder %s41, 5
      %p200 = por %p198, %p199
      %p201 = scmp.ne.s32.totalorder %s193, %s196
      %p202 = scmp.eq.s32.totalorder %s41, 0
      %p203 = por %p201, %p202
      %p204 = scmp.ne.s32.totalorder %s193, %s196
      %p205 = scmp.eq.s32.totalorder %s46, 5
      %p206 = por %p204, %p205
      %p207 = scmp.ne.s32.totalorder %s196, %s197
      %p208 = scmp.eq.s32.totalorder %s46, 0
      %p209 = por %p207, %p208
      %p210 = scmp.ne.s32.totalorder %s196, %s197
      %p211 = scmp.eq.s32.totalorder %s47, 5
      %p212 = por %p210, %p211
      %p214 = scmp.ne.s32.totalorder %s197, %s213
      %p215 = scmp.eq.s32.totalorder %s47, 0
      %p216 = por %p214, %p215
      %s217 = ssub.s32 %s49, %s56
      %p218 = scmp.eq.s32.totalorder %s217, 0
      %s220 = sadd.s32 %s219, 1
      %s221 = scalar_select %p218, %s219, %s220
      %p224 = pneg %p218
      %p225 = scmp.eq.s32.totalorder %s41, 5
      %p226 = por %p224, %p225
      %p227 = scmp.ne.s32.totalorder %s219, %s222
      %p228 = scmp.eq.s32.totalorder %s41, 0
      %p229 = por %p227, %p228
      %p230 = scmp.ne.s32.totalorder %s219, %s222
      %p231 = scmp.eq.s32.totalorder %s46, 5
      %p232 = por %p230, %p231
      %p233 = scmp.ne.s32.totalorder %s222, %s223
      %p234 = scmp.eq.s32.totalorder %s46, 0
      %p235 = por %p233, %p234
      %p236 = scmp.ne.s32.totalorder %s222, %s223
      %p237 = scmp.eq.s32.totalorder %s47, 5
      %p238 = por %p236, %p237
      %p240 = scmp.ne.s32.totalorder %s223, %s239
      %p241 = scmp.eq.s32.totalorder %s47, 0
      %p242 = por %p240, %p241
      %s243 = ssub.s32 %s49, %s56
      %p244 = scmp.eq.s32.totalorder %s243, 0
      %s246 = sadd.s32 %s245, 1
      %s247 = scalar_select %p244, %s245, %s246
      %p250 = pneg %p244
      %p251 = scmp.eq.s32.totalorder %s41, 5
      %p252 = por %p250, %p251
      %p253 = scmp.ne.s32.totalorder %s245, %s248
      %p254 = scmp.eq.s32.totalorder %s41, 0
      %p255 = por %p253, %p254
      %p256 = scmp.ne.s32.totalorder %s245, %s248
      %p257 = scmp.eq.s32.totalorder %s46, 5
      %p258 = por %p256, %p257
      %p259 = scmp.ne.s32.totalorder %s248, %s249
      %p260 = scmp.eq.s32.totalorder %s46, 0
      %p261 = por %p259, %p260
      %p262 = scmp.ne.s32.totalorder %s248, %s249
      %p263 = scmp.eq.s32.totalorder %s47, 5
      %p264 = por %p262, %p263
      %p266 = scmp.ne.s32.totalorder %s249, %s265
      %p267 = scmp.eq.s32.totalorder %s47, 0
      %p268 = por %p266, %p267
      %s269 = ssub.s32 %s49, %s56
      %p270 = scmp.eq.s32.totalorder %s269, 0
      %s272 = sadd.s32 %s271, 1
      %s273 = scalar_select %p270, %s271, %s272
      %p276 = pneg %p270
      %p277 = scmp.eq.s32.totalorder %s41, 5
      %p278 = por %p276, %p277
      %p279 = scmp.ne.s32.totalorder %s271, %s274
      %p280 = scmp.eq.s32.totalorder %s41, 0
      %p281 = por %p279, %p280
      %p282 = scmp.ne.s32.totalorder %s271, %s274
      %p283 = scmp.eq.s32.totalorder %s46, 5
      %p284 = por %p282, %p283
      %p285 = scmp.ne.s32.totalorder %s274, %s275
      %p286 = scmp.eq.s32.totalorder %s46, 0
      %p287 = por %p285, %p286
      %p288 = scmp.ne.s32.totalorder %s274, %s275
      %p289 = scmp.eq.s32.totalorder %s47, 5
      %p290 = por %p288, %p289
      %p292 = scmp.ne.s32.totalorder %s275, %s291
      %p293 = scmp.eq.s32.totalorder %s47, 0
      %p294 = por %p292, %p293
      %s295 = ssub.s32 %s49, %s56
      %p296 = scmp.eq.s32.totalorder %s295, 0
      %s298 = sadd.s32 %s297, 1
      %s299 = scalar_select %p296, %s297, %s298
      %p302 = pneg %p296
      %p303 = scmp.eq.s32.totalorder %s41, 5
      %p304 = por %p302, %p303
      %p305 = scmp.ne.s32.totalorder %s297, %s300
      %p306 = scmp.eq.s32.totalorder %s41, 0
      %p307 = por %p305, %p306
      %p308 = scmp.ne.s32.totalorder %s297, %s300
      %p309 = scmp.eq.s32.totalorder %s46, 5
      %p310 = por %p308, %p309
      %p311 = scmp.ne.s32.totalorder %s300, %s301
      %p312 = scmp.eq.s32.totalorder %s46, 0
      %p313 = por %p311, %p312
      %p314 = scmp.ne.s32.totalorder %s300, %s301
      %p315 = scmp.eq.s32.totalorder %s47, 5
      %p316 = por %p314, %p315
      %p318 = scmp.ne.s32.totalorder %s301, %s317
      %p319 = scmp.eq.s32.totalorder %s47, 0
      %p320 = por %p318, %p319
      %s321 = ssub.s32 %s49, %s56
      %p322 = scmp.eq.s32.totalorder %s321, 0
      %s324 = sadd.s32 %s323, 1
      %s325 = scalar_select %p322, %s323, %s324
      %p328 = pneg %p322
      %p329 = scmp.eq.s32.totalorder %s41, 5
      %p330 = por %p328, %p329
      %p331 = scmp.ne.s32.totalorder %s323, %s326
      %p332 = scmp.eq.s32.totalorder %s41, 0
      %p333 = por %p331, %p332
      %p334 = scmp.ne.s32.totalorder %s323, %s326
      %p335 = scmp.eq.s32.totalorder %s46, 5
      %p336 = por %p334, %p335
      %p337 = scmp.ne.s32.totalorder %s326, %s327
      %p338 = scmp.eq.s32.totalorder %s46, 0
      %p339 = por %p337, %p338
      %p340 = scmp.ne.s32.totalorder %s326, %s327
      %p341 = scmp.eq.s32.totalorder %s47, 5
      %p342 = por %p340, %p341
      %p344 = scmp.ne.s32.totalorder %s327, %s343
      %p345 = scmp.eq.s32.totalorder %s47, 0
      %p346 = por %p344, %p345
      %s347 = ssub.s32 %s49, %s56
      %p348 = scmp.eq.s32.totalorder %s347, 0
      %s350 = sadd.s32 %s349, 1
      %s351 = scalar_select %p348, %s349, %s350
      %p354 = pneg %p348
      %p355 = scmp.eq.s32.totalorder %s41, 5
      %p356 = por %p354, %p355
      %p357 = scmp.ne.s32.totalorder %s349, %s352
      %p358 = scmp.eq.s32.totalorder %s41, 0
      %p359 = por %p357, %p358
      %p360 = scmp.ne.s32.totalorder %s349, %s352
      %p361 = scmp.eq.s32.totalorder %s46, 5
      %p362 = por %p360, %p361
      %p363 = scmp.ne.s32.totalorder %s352, %s353
      %p364 = scmp.eq.s32.totalorder %s46, 0
      %p365 = por %p363, %p364
      %p366 = scmp.ne.s32.totalorder %s352, %s353
      %p367 = scmp.eq.s32.totalorder %s47, 5
      %p368 = por %p366, %p367
      %p370 = scmp.ne.s32.totalorder %s353, %s369
      %p371 = scmp.eq.s32.totalorder %s47, 0
      %p372 = por %p370, %p371
      %s373 = ssub.s32 %s49, %s56
      %p374 = scmp.eq.s32.totalorder %s373, 0
      %s376 = sadd.s32 %s375, 1
      %s377 = scalar_select %p374, %s375, %s376
      %p380 = pneg %p374
      %p381 = scmp.eq.s32.totalorder %s41, 5
      %p382 = por %p380, %p381
      %p383 = scmp.ne.s32.totalorder %s375, %s378
      %p384 = scmp.eq.s32.totalorder %s41, 0
      %p385 = por %p383, %p384
      %p386 = scmp.ne.s32.totalorder %s375, %s378
      %p387 = scmp.eq.s32.totalorder %s46, 5
      %p388 = por %p386, %p387
      %p389 = scmp.ne.s32.totalorder %s378, %s379
      %p390 = scmp.eq.s32.totalorder %s46, 0
      %p391 = por %p389, %p390
      %p392 = scmp.ne.s32.totalorder %s378, %s379
      %p393 = scmp.eq.s32.totalorder %s47, 5
      %p394 = por %p392, %p393
      %p396 = scmp.ne.s32.totalorder %s379, %s395
      %p397 = scmp.eq.s32.totalorder %s47, 0
      %p398 = por %p396, %p397
      %s399 = ssub.s32 %s49, %s56
      %p400 = scmp.eq.s32.totalorder %s399, 0
      %s402 = sadd.s32 %s401, 1
      %s403 = scalar_select %p400, %s401, %s402
      %p406 = pneg %p400
      %p407 = scmp.eq.s32.totalorder %s41, 5
      %p408 = por %p406, %p407
      %p409 = scmp.ne.s32.totalorder %s401, %s404
      %p410 = scmp.eq.s32.totalorder %s41, 0
      %p411 = por %p409, %p410
      %p412 = scmp.ne.s32.totalorder %s401, %s404
      %p413 = scmp.eq.s32.totalorder %s46, 5
      %p414 = por %p412, %p413
      %p415 = scmp.ne.s32.totalorder %s404, %s405
      %p416 = scmp.eq.s32.totalorder %s46, 0
      %p417 = por %p415, %p416
      %p418 = scmp.ne.s32.totalorder %s404, %s405
      %p419 = scmp.eq.s32.totalorder %s47, 5
      %p420 = por %p418, %p419
      %p422 = scmp.ne.s32.totalorder %s405, %s421
      %p423 = scmp.eq.s32.totalorder %s47, 0
      %p424 = por %p422, %p423
      %s425 = ssub.s32 %s48, %s60
      %p426 = scmp.eq.s32.totalorder %s425, 0
      %s428 = sadd.s32 %s427, 1
      %s429 = scalar_select %p426, %s427, %s428
      %p432 = pneg %p426
      %p433 = scmp.eq.s32.totalorder %s41, 5
      %p434 = por %p432, %p433
      %p435 = scmp.ne.s32.totalorder %s427, %s430
      %p436 = scmp.eq.s32.totalorder %s41, 0
      %p437 = por %p435, %p436
      %p438 = scmp.ne.s32.totalorder %s427, %s430
      %p439 = scmp.eq.s32.totalorder %s46, 5
      %p440 = por %p438, %p439
      %p441 = scmp.ne.s32.totalorder %s430, %s431
      %p442 = scmp.eq.s32.totalorder %s46, 0
      %p443 = por %p441, %p442
      %p444 = scmp.ne.s32.totalorder %s430, %s431
      %p445 = scmp.eq.s32.totalorder %s47, 5
      %p446 = por %p444, %p445
      %p448 = scmp.ne.s32.totalorder %s431, %s447
      %p449 = scmp.eq.s32.totalorder %s47, 0
      %p450 = por %p448, %p449
      %p451 = scmp.le.s32.totalorder 1, %s41
      %p452 = scmp.lt.s32.totalorder %s41, 7
      %p453 = pnand %p451, %p452
      %p454 = pneg %p453
      // Predicated region
      $region9: #{encoder_forward.1} parent=5 // pred_check
        _
      $region10: #{encoder_forward.1} parent=5 // pred_check_branch
        %456 = sbr.rel (%p453) target = $region12
      $region11: #{encoder_forward.1} parent=5 // pred_region
        %s457 = ssub.s32 %s41, 1
      $region12: #{encoder_forward.1} parent=5 // pred_fallthru
        _
      %p458 = scmp.lt.s32.totalorder %s41, 6
      // Predicated region
      $region13: #{encoder_forward.1} parent=5 // pred_check
        %p459 = pneg %p458
      $region14: #{encoder_forward.1} parent=5 // pred_check_branch
        %461 = sbr.rel (%p459) target = $region16
      $region15: #{encoder_forward.1} parent=5 // pred_region
        // Predicated region
        $region17: #{encoder_forward.1} parent=15 // pred_check
          %p462 = pneg %p73
        $region18: #{encoder_forward.1} parent=15 // pred_check_branch
          %464 = sbr.rel (%p462) target = $region20
        $region19: #{encoder_forward.1} parent=15 // pred_region
          %s465 = sand.u32 %s63, 1
          %s466 = scalar_lea.sflag [#allocation3], %s465
          %s467 = sand.u32 %s63, 1
          %s468 = smul.addr %s467, 128
          %s469 = scalar_lea.vmem [#allocation2], %s468
          %471 = vsyncadd %s466, 0
          %s472 = smul.addr %s48, 16
          %s473 = smul.addr %s472, 8
          %s474 = scalar_lea.hbm %s0, %s473
          %s475 = sshll.u32 %s474, 4
          %s476 = int_to_ptr.hbm [resolvable:$true] %s475
          %s477 = sshll.u32 %s469, 4
          %s478 = int_to_ptr.vmem [resolvable:$true] %s477
          %483 = dma.hbm_to_vmem [thread:$0]  %s476, 2048, %s478, %s466, 128, 128, 8
        $region20: #{encoder_forward.1} parent=15 // pred_fallthru
          _
        // Predicated region
        $region21: #{encoder_forward.1} parent=15 // pred_check
          %p484 = pneg %p99
        $region22: #{encoder_forward.1} parent=15 // pred_check_branch
          %486 = sbr.rel (%p484) target = $region24
        $region23: #{encoder_forward.1} parent=15 // pred_region
          %p487 = scmp.lt.s32.totalorder %s48, 1
          %s488 = scalar_select %p487, %s48, 1
          %s489 = smul.addr %s488, 16
          %s490 = smul.addr %s489, 4
          %s491 = scalar_lea.vmem %s1, %s490
        $region24: #{encoder_forward.1} parent=15 // pred_fallthru
          _
        // Predicated region
        $region25: #{encoder_forward.1} parent=15 // pred_check
          %p492 = pneg %p125
        $region26: #{encoder_forward.1} parent=15 // pred_check_branch
          %494 = sbr.rel (%p492) target = $region28
        $region27: #{encoder_forward.1} parent=15 // pred_region
          %s495 = sand.u32 %s41, 1
          %s496 = scalar_lea.sflag [#allocation6], %s495
          %s497 = sand.u32 %s115, 1
          %s498 = smul.addr %s497, 192
          %s499 = scalar_lea.vmem [#allocation5], %s498
          %501 = vsyncadd %s496, 0
          %s502 = smul.addr %s49, 48
          %s503 = smul.addr %s502, 4
          %s504 = scalar_lea.hbm %s2, %s503
          %s505 = sshll.u32 %s504, 4
          %s506 = int_to_ptr.hbm [resolvable:$true] %s505
          %s507 = sshll.u32 %s499, 4
          %s508 = int_to_ptr.vmem [resolvable:$true] %s507
          %513 = dma.hbm_to_vmem [thread:$0]  %s506, 3072, %s508, %s496, 192, 192, 12
        $region28: #{encoder_forward.1} parent=15 // pred_fallthru
          _
        // Predicated region
        $region29: #{encoder_forward.1} parent=15 // pred_check
          %p514 = pneg %p151
        $region30: #{encoder_forward.1} parent=15 // pred_check_branch
          %516 = sbr.rel (%p514) target = $region32
        $region31: #{encoder_forward.1} parent=15 // pred_region
          %s517 = sand.u32 %s41, 1
          %s518 = scalar_lea.sflag [#allocation6], %s517
          %s519 = sand.u32 %s141, 1
          %s520 = smul.addr %s519, 3
          %s521 = scalar_lea.vmem [#allocation7], %s520
          %523 = vsyncadd %s518, 0
          %s524 = smul.addr %s49, 3
          %s525 = scalar_lea.hbm %s3, %s524
          %s527 = sshll.u32 %s525, 4
          %s528 = int_to_ptr.hbm [resolvable:$true] %s527
          %s529 = sshll.u32 %s521, 4
          %s530 = int_to_ptr.vmem [resolvable:$true] %s529
          %532 = dma.hbm_to_vmem [thread:$0]  %s528, 48, %s530, %s518
        $region32: #{encoder_forward.1} parent=15 // pred_fallthru
          _
        // Predicated region
        $region33: #{encoder_forward.1} parent=15 // pred_check
          %p533 = pneg %p177
        $region34: #{encoder_forward.1} parent=15 // pred_check_branch
          %535 = sbr.rel (%p533) target = $region36
        $region35: #{encoder_forward.1} parent=15 // pred_region
          %s536 = sand.u32 %s41, 1
          %s537 = scalar_lea.sflag [#allocation9], %s536
          %s538 = sand.u32 %s167, 1
          %s539 = smul.addr %s538, 64
          %s540 = scalar_lea.vmem [#allocation8], %s539
          %542 = vsyncadd %s537, 0
          %s543 = smul.addr %s49, 16
          %s544 = smul.addr %s543, 4
          %s545 = scalar_lea.hbm %s4, %s544
          %s546 = sshll.u32 %s545, 4
          %s547 = int_to_ptr.hbm [resolvable:$true] %s546
          %s548 = sshll.u32 %s540, 4
          %s549 = int_to_ptr.vmem [resolvable:$true] %s548
          %554 = dma.hbm_to_vmem [thread:$0]  %s547, 1024, %s549, %s537, 64, 64, 4
        $region36: #{encoder_forward.1} parent=15 // pred_fallthru
          _
        // Predicated region
        $region37: #{encoder_forward.1} parent=15 // pred_check
          %p555 = pneg %p203
        $region38: #{encoder_forward.1} parent=15 // pred_check_branch
          %557 = sbr.rel (%p555) target = $region40
        $region39: #{encoder_forward.1} parent=15 // pred_region
          %s558 = sand.u32 %s41, 1
          %s559 = scalar_lea.sflag [#allocation9], %s558
          %s560 = sand.u32 %s193, 1
          %s561 = scalar_lea.vmem [#allocation10], %s560
          %563 = vsyncadd %s559, 0
          %s564 = scalar_lea.hbm %s5, %s49
          %s566 = sshll.u32 %s564, 4
          %s567 = int_to_ptr.hbm [resolvable:$true] %s566
          %s568 = sshll.u32 %s561, 4
          %s569 = int_to_ptr.vmem [resolvable:$true] %s568
          %571 = dma.hbm_to_vmem [thread:$0]  %s567, 16, %s569, %s559
        $region40: #{encoder_forward.1} parent=15 // pred_fallthru
          _
        // Predicated region
        $region41: #{encoder_forward.1} parent=15 // pred_check
          %p572 = pneg %p229
        $region42: #{encoder_forward.1} parent=15 // pred_check_branch
          %574 = sbr.rel (%p572) target = $region44
        $region43: #{encoder_forward.1} parent=15 // pred_region
          %s575 = sand.u32 %s41, 1
          %s576 = scalar_lea.sflag [#allocation12], %s575
          %s577 = sand.u32 %s219, 1
          %s578 = scalar_lea.vmem [#allocation11], %s577
          %580 = vsyncadd %s576, 0
          %s581 = scalar_lea.hbm %s6, %s49
          %s583 = sshll.u32 %s581, 4
          %s584 = int_to_ptr.hbm [resolvable:$true] %s583
          %s585 = sshll.u32 %s578, 4
          %s586 = int_to_ptr.vmem [resolvable:$true] %s585
          %588 = dma.hbm_to_vmem [thread:$0]  %s584, 16, %s586, %s576
        $region44: #{encoder_forward.1} parent=15 // pred_fallthru
          _
        // Predicated region
        $region45: #{encoder_forward.1} parent=15 // pred_check
          %p589 = pneg %p255
        $region46: #{encoder_forward.1} parent=15 // pred_check_branch
          %591 = sbr.rel (%p589) target = $region48
        $region47: #{encoder_forward.1} parent=15 // pred_region
          %s592 = sand.u32 %s41, 1
          %s593 = scalar_lea.sflag [#allocation12], %s592
          %s594 = sand.u32 %s245, 1
          %s595 = scalar_lea.vmem [#allocation13], %s594
          %597 = vsyncadd %s593, 0
          %s598 = scalar_lea.hbm %s7, %s49
          %s600 = sshll.u32 %s598, 4
          %s601 = int_to_ptr.hbm [resolvable:$true] %s600
          %s602 = sshll.u32 %s595, 4
          %s603 = int_to_ptr.vmem [resolvable:$true] %s602
          %605 = dma.hbm_to_vmem [thread:$0]  %s601, 16, %s603, %s593
        $region48: #{encoder_forward.1} parent=15 // pred_fallthru
          _
        // Predicated region
        $region49: #{encoder_forward.1} parent=15 // pred_check
          %p606 = pneg %p281
        $region50: #{encoder_forward.1} parent=15 // pred_check_branch
          %608 = sbr.rel (%p606) target = $region52
        $region51: #{encoder_forward.1} parent=15 // pred_region
          %p609 = scmp.lt.s32.totalorder %s49, 2
          %s610 = scalar_select %p609, %s49, 2
          %s611 = smul.addr %s610, 32
          %s612 = smul.addr %s611, 4
          %s613 = scalar_lea.vmem %s8, %s612
        $region52: #{encoder_forward.1} parent=15 // pred_fallthru
          _
        // Predicated region
        $region53: #{encoder_forward.1} parent=15 // pred_check
          %p614 = pneg %p307
        $region54: #{encoder_forward.1} parent=15 // pred_check_branch
          %616 = sbr.rel (%p614) target = $region56
        $region55: #{encoder_forward.1} parent=15 // pred_region
          %p617 = scmp.lt.s32.totalorder %s49, 2
          %s618 = scalar_select %p617, %s49, 2
          %s619 = smul.addr %s618, 2
          %s620 = scalar_lea.vmem %s9, %s619
        $region56: #{encoder_forward.1} parent=15 // pred_fallthru
          _
        // Predicated region
        $region57: #{encoder_forward.1} parent=15 // pred_check
          %p621 = pneg %p333
        $region58: #{encoder_forward.1} parent=15 // pred_check_branch
          %623 = sbr.rel (%p621) target = $region60
        $region59: #{encoder_forward.1} parent=15 // pred_region
          %s624 = sand.u32 %s41, 1
          %s625 = scalar_lea.sflag [#allocation15], %s624
          %s626 = sand.u32 %s323, 1
          %s627 = smul.addr %s626, 128
          %s628 = scalar_lea.vmem [#allocation14], %s627
          %630 = vsyncadd %s625, 0
          %s631 = smul.addr %s49, 32
          %s632 = smul.addr %s631, 4
          %s633 = scalar_lea.hbm %s10, %s632
          %s634 = sshll.u32 %s633, 4
          %s635 = int_to_ptr.hbm [resolvable:$true] %s634
          %s636 = sshll.u32 %s628, 4
          %s637 = int_to_ptr.vmem [resolvable:$true] %s636
          %642 = dma.hbm_to_vmem [thread:$0]  %s635, 2048, %s637, %s625, 64, 64, 4
        $region60: #{encoder_forward.1} parent=15 // pred_fallthru
          _
        // Predicated region
        $region61: #{encoder_forward.1} parent=15 // pred_check
          %p643 = pneg %p359
        $region62: #{encoder_forward.1} parent=15 // pred_check_branch
          %645 = sbr.rel (%p643) target = $region64
        $region63: #{encoder_forward.1} parent=15 // pred_region
          %p646 = scmp.lt.s32.totalorder %s49, 2
          %s647 = scalar_select %p646, %s49, 2
          %s648 = scalar_lea.vmem %s11, %s647
        $region64: #{encoder_forward.1} parent=15 // pred_fallthru
          _
        // Predicated region
        $region65: #{encoder_forward.1} parent=15 // pred_check
          %p649 = pneg %p385
        $region66: #{encoder_forward.1} parent=15 // pred_check_branch
          %651 = sbr.rel (%p649) target = $region68
        $region67: #{encoder_forward.1} parent=15 // pred_region
          %s652 = sand.u32 %s41, 1
          %s653 = scalar_lea.sflag [#allocation15], %s652
          %s654 = sand.u32 %s375, 1
          %s655 = scalar_lea.vmem [#allocation16], %s654
          %657 = vsyncadd %s653, 0
          %s658 = scalar_lea.hbm %s12, %s49
          %s660 = sshll.u32 %s658, 4
          %s661 = int_to_ptr.hbm [resolvable:$true] %s660
          %s662 = sshll.u32 %s655, 4
          %s663 = int_to_ptr.vmem [resolvable:$true] %s662
          %665 = dma.hbm_to_vmem [thread:$0]  %s661, 16, %s663, %s653
        $region68: #{encoder_forward.1} parent=15 // pred_fallthru
          _
        // Predicated region
        $region69: #{encoder_forward.1} parent=15 // pred_check
          %p666 = pneg %p411
        $region70: #{encoder_forward.1} parent=15 // pred_check_branch
          %668 = sbr.rel (%p666) target = $region72
        $region71: #{encoder_forward.1} parent=15 // pred_region
          %s669 = sand.u32 %s401, 1
          %s670 = scalar_lea.sflag [#allocation18], %s669
          %s671 = sand.u32 %s401, 1
          %s672 = scalar_lea.vmem [#allocation17], %s671
          %674 = vsyncadd %s670, 0
          %s675 = scalar_lea.hbm %s13, %s49
          %s677 = sshll.u32 %s675, 4
          %s678 = int_to_ptr.hbm [resolvable:$true] %s677
          %s679 = sshll.u32 %s672, 4
          %s680 = int_to_ptr.vmem [resolvable:$true] %s679
          %682 = dma.hbm_to_vmem [thread:$0]  %s678, 16, %s680, %s670
        $region72: #{encoder_forward.1} parent=15 // pred_fallthru
          _
      $region16: #{encoder_forward.1} parent=5 // pred_fallthru
        _
      %p683 = scmp.le.s32.totalorder 1, %s41
      %p684 = scmp.lt.s32.totalorder %s41, 7
      %p685 = pnand %p683, %p684
      %p686 = pneg %p685
      // Predicated region
      $region73: #{encoder_forward.1} parent=5 // pred_check
        _
      $region74: #{encoder_forward.1} parent=5 // pred_check_branch
        %688 = sbr.rel (%p685) target = $region76
      $region75: #{encoder_forward.1} parent=5 // pred_region
        %s689 = ssub.s32 %s41, 1
        %s690 = sand.u32 %s66, 1
        %s691 = scalar_lea.sflag [#allocation3], %s690
        %s692 = sand.u32 %s66, 1
        %s693 = smul.addr %s692, 128
        %s694 = scalar_lea.vmem [#allocation2], %s693
        // Predicated region
        $region77: #{encoder_forward.1} parent=75 // pred_check
          %p695 = pneg %p79
        $region78: #{encoder_forward.1} parent=75 // pred_check_branch
          %697 = sbr.rel (%p695) target = $region80
        $region79: #{encoder_forward.1} parent=75 // pred_region
          %699 = dma.done %s691, 2048
        $region80: #{encoder_forward.1} parent=75 // pred_fallthru
          _
        %s700 = sand.u32 %s46, 1
        %s701 = scalar_lea.sflag [#allocation6], %s700
        %s702 = sand.u32 %s118, 1
        %s703 = smul.addr %s702, 192
        %s704 = scalar_lea.vmem [#allocation5], %s703
        // Predicated region
        $region81: #{encoder_forward.1} parent=75 // pred_check
          %p705 = pneg %p131
        $region82: #{encoder_forward.1} parent=75 // pred_check_branch
          %707 = sbr.rel (%p705) target = $region84
        $region83: #{encoder_forward.1} parent=75 // pred_region
          %709 = dma.done %s701, 3072
        $region84: #{encoder_forward.1} parent=75 // pred_fallthru
          _
        %s710 = sand.u32 %s46, 1
        %s711 = scalar_lea.sflag [#allocation6], %s710
        %s712 = sand.u32 %s144, 1
        %s713 = smul.addr %s712, 3
        %s714 = scalar_lea.vmem [#allocation7], %s713
        // Predicated region
        $region85: #{encoder_forward.1} parent=75 // pred_check
          %p715 = pneg %p157
        $region86: #{encoder_forward.1} parent=75 // pred_check_branch
          %717 = sbr.rel (%p715) target = $region88
        $region87: #{encoder_forward.1} parent=75 // pred_region
          %719 = dma.done %s711, 48
        $region88: #{encoder_forward.1} parent=75 // pred_fallthru
          _
        %s720 = sand.u32 %s46, 1
        %s721 = scalar_lea.sflag [#allocation9], %s720
        %s722 = sand.u32 %s170, 1
        %s723 = smul.addr %s722, 64
        %s724 = scalar_lea.vmem [#allocation8], %s723
        // Predicated region
        $region89: #{encoder_forward.1} parent=75 // pred_check
          %p725 = pneg %p183
        $region90: #{encoder_forward.1} parent=75 // pred_check_branch
          %727 = sbr.rel (%p725) target = $region92
        $region91: #{encoder_forward.1} parent=75 // pred_region
          %729 = dma.done %s721, 1024
        $region92: #{encoder_forward.1} parent=75 // pred_fallthru
          _
        %s730 = sand.u32 %s46, 1
        %s731 = scalar_lea.sflag [#allocation9], %s730
        %s732 = sand.u32 %s196, 1
        %s733 = scalar_lea.vmem [#allocation10], %s732
        // Predicated region
        $region93: #{encoder_forward.1} parent=75 // pred_check
          %p734 = pneg %p209
        $region94: #{encoder_forward.1} parent=75 // pred_check_branch
          %736 = sbr.rel (%p734) target = $region96
        $region95: #{encoder_forward.1} parent=75 // pred_region
          %738 = dma.done %s731, 16
        $region96: #{encoder_forward.1} parent=75 // pred_fallthru
          _
        %s739 = sand.u32 %s46, 1
        %s740 = scalar_lea.sflag [#allocation12], %s739
        %s741 = sand.u32 %s222, 1
        %s742 = scalar_lea.vmem [#allocation11], %s741
        // Predicated region
        $region97: #{encoder_forward.1} parent=75 // pred_check
          %p743 = pneg %p235
        $region98: #{encoder_forward.1} parent=75 // pred_check_branch
          %745 = sbr.rel (%p743) target = $region100
        $region99: #{encoder_forward.1} parent=75 // pred_region
          %747 = dma.done %s740, 16
        $region100: #{encoder_forward.1} parent=75 // pred_fallthru
          _
        %s748 = sand.u32 %s46, 1
        %s749 = scalar_lea.sflag [#allocation12], %s748
        %s750 = sand.u32 %s248, 1
        %s751 = scalar_lea.vmem [#allocation13], %s750
        // Predicated region
        $region101: #{encoder_forward.1} parent=75 // pred_check
          %p752 = pneg %p261
        $region102: #{encoder_forward.1} parent=75 // pred_check_branch
          %754 = sbr.rel (%p752) target = $region104
        $region103: #{encoder_forward.1} parent=75 // pred_region
          %756 = dma.done %s749, 16
        $region104: #{encoder_forward.1} parent=75 // pred_fallthru
          _
        %s757 = sand.u32 %s46, 1
        %s758 = scalar_lea.sflag [#allocation15], %s757
        %s759 = sand.u32 %s326, 1
        %s760 = smul.addr %s759, 128
        %s761 = scalar_lea.vmem [#allocation14], %s760
        // Predicated region
        $region105: #{encoder_forward.1} parent=75 // pred_check
          %p762 = pneg %p339
        $region106: #{encoder_forward.1} parent=75 // pred_check_branch
          %764 = sbr.rel (%p762) target = $region108
        $region107: #{encoder_forward.1} parent=75 // pred_region
          %766 = dma.done %s758, 2048
        $region108: #{encoder_forward.1} parent=75 // pred_fallthru
          _
        %s767 = sand.u32 %s46, 1
        %s768 = scalar_lea.sflag [#allocation15], %s767
        %s769 = sand.u32 %s378, 1
        %s770 = scalar_lea.vmem [#allocation16], %s769
        // Predicated region
        $region109: #{encoder_forward.1} parent=75 // pred_check
          %p771 = pneg %p391
        $region110: #{encoder_forward.1} parent=75 // pred_check_branch
          %773 = sbr.rel (%p771) target = $region112
        $region111: #{encoder_forward.1} parent=75 // pred_region
          %775 = dma.done %s768, 16
        $region112: #{encoder_forward.1} parent=75 // pred_fallthru
          _
        %s776 = sand.u32 %s404, 1
        %s777 = scalar_lea.sflag [#allocation18], %s776
        %s778 = sand.u32 %s404, 1
        %s779 = scalar_lea.vmem [#allocation17], %s778
        // Predicated region
        $region113: #{encoder_forward.1} parent=75 // pred_check
          %p780 = pneg %p417
        $region114: #{encoder_forward.1} parent=75 // pred_check_branch
          %782 = sbr.rel (%p780) target = $region116
        $region115: #{encoder_forward.1} parent=75 // pred_region
          %784 = dma.done %s777, 16
        $region116: #{encoder_forward.1} parent=75 // pred_fallthru
          _
        %s785 = sand.u32 %s66, 1
        %s786 = scalar_lea.sflag [#allocation3], %s785
        %s787 = sand.u32 %s66, 1
        %s788 = smul.addr %s787, 128
        %s789 = scalar_lea.vmem [#allocation2], %s788
        %p790 = pneg %p79
        %p791 = pneg %p76
        %p792 = scmp.lt.s32.totalorder %s50, 1
        %s793 = scalar_select %p792, %s50, 1
        %s794 = smul.addr %s793, 16
        %s795 = smul.addr %s794, 4
        %s796 = scalar_lea.vmem %s1, %s795
        %p797 = pneg %p105
        %p798 = pneg %p102
        %s799 = sand.u32 %s46, 1
        %s800 = scalar_lea.sflag [#allocation6], %s799
        %s801 = sand.u32 %s118, 1
        %s802 = smul.addr %s801, 192
        %s803 = scalar_lea.vmem [#allocation5], %s802
        %p804 = pneg %p131
        %p805 = pneg %p128
        %s806 = sand.u32 %s46, 1
        %s807 = scalar_lea.sflag [#allocation6], %s806
        %s808 = sand.u32 %s144, 1
        %s809 = smul.addr %s808, 3
        %s810 = scalar_lea.vmem [#allocation7], %s809
        %p811 = pneg %p157
        %p812 = pneg %p154
        %s813 = sand.u32 %s46, 1
        %s814 = scalar_lea.sflag [#allocation9], %s813
        %s815 = sand.u32 %s170, 1
        %s816 = smul.addr %s815, 64
        %s817 = scalar_lea.vmem [#allocation8], %s816
        %p818 = pneg %p183
        %p819 = pneg %p180
        %s820 = sand.u32 %s46, 1
        %s821 = scalar_lea.sflag [#allocation9], %s820
        %s822 = sand.u32 %s196, 1
        %s823 = scalar_lea.vmem [#allocation10], %s822
        %p824 = pneg %p209
        %p825 = pneg %p206
        %s826 = sand.u32 %s46, 1
        %s827 = scalar_lea.sflag [#allocation12], %s826
        %s828 = sand.u32 %s222, 1
        %s829 = scalar_lea.vmem [#allocation11], %s828
        %p830 = pneg %p235
        %p831 = pneg %p232
        %s832 = sand.u32 %s46, 1
        %s833 = scalar_lea.sflag [#allocation12], %s832
        %s834 = sand.u32 %s248, 1
        %s835 = scalar_lea.vmem [#allocation13], %s834
        %p836 = pneg %p261
        %p837 = pneg %p258
        %p838 = scmp.lt.s32.totalorder %s51, 2
        %s839 = scalar_select %p838, %s51, 2
        %s840 = smul.addr %s839, 32
        %s841 = smul.addr %s840, 4
        %s842 = scalar_lea.vmem %s8, %s841
        %p843 = pneg %p287
        %p844 = pneg %p284
        %p845 = scmp.lt.s32.totalorder %s51, 2
        %s846 = scalar_select %p845, %s51, 2
        %s847 = smul.addr %s846, 2
        %s848 = scalar_lea.vmem %s9, %s847
        %p849 = pneg %p313
        %p850 = pneg %p310
        %s851 = sand.u32 %s46, 1
        %s852 = scalar_lea.sflag [#allocation15], %s851
        %s853 = sand.u32 %s326, 1
        %s854 = smul.addr %s853, 128
        %s855 = scalar_lea.vmem [#allocation14], %s854
        %p856 = pneg %p339
        %p857 = pneg %p336
        %p858 = scmp.lt.s32.totalorder %s51, 2
        %s859 = scalar_select %p858, %s51, 2
        %s860 = scalar_lea.vmem %s11, %s859
        %p861 = pneg %p365
        %p862 = pneg %p362
        %s863 = sand.u32 %s46, 1
        %s864 = scalar_lea.sflag [#allocation15], %s863
        %s865 = sand.u32 %s378, 1
        %s866 = scalar_lea.vmem [#allocation16], %s865
        %p867 = pneg %p391
        %p868 = pneg %p388
        %s869 = sand.u32 %s404, 1
        %s870 = scalar_lea.sflag [#allocation18], %s869
        %s871 = sand.u32 %s404, 1
        %s872 = scalar_lea.vmem [#allocation17], %s871
        %p873 = pneg %p417
        %p874 = pneg %p414
        %p875 = pneg %p443
        %p876 = pneg %p440
        %s877 = sand.u32 %s430, 1
        %s878 = scalar_lea.sflag [#allocation4], %s877
        %s879 = sand.u32 %s430, 1
        %s880 = smul.addr %s879, 128
        %s881 = scalar_lea.vmem [#allocation19], %s880
        %p882 = scmp.lt.s32.totalorder %s50, 1
        %s883 = scalar_select %p882, %s50, 1
        %s884 = smul.addr %s883, 16
        %s885 = smul.addr %s884, 4
        %s886 = scalar_lea.vmem %s1, %s885
        %p887 = scmp.lt.s32.totalorder %s51, 2
        %s888 = scalar_select %p887, %s51, 2
        %s889 = smul.addr %s888, 32
        %s890 = smul.addr %s889, 4
        %s891 = scalar_lea.vmem %s8, %s890
        %p892 = scmp.lt.s32.totalorder %s51, 2
        %s893 = scalar_select %p892, %s51, 2
        %s894 = smul.addr %s893, 2
        %s895 = scalar_lea.vmem %s9, %s894
        %p896 = scmp.lt.s32.totalorder %s51, 2
        %s897 = scalar_select %p896, %s51, 2
        %s898 = scalar_lea.vmem %s11, %s897
        %p899 = scmp.eq.s32.totalorder %s51, 0
        // Predicated region
        $region117: #{encoder_forward.1} parent=75 // pred_check
          %p900 = pneg %p899
        $region118: #{encoder_forward.1} parent=75 // pred_check_branch
          %902 = sbr.rel (%p900) target = $region120
        $region119: #{encoder_forward.1} parent=75 // pred_region
          %v903 = vld [vmem:[%s694] sm:$0xff]
          %v904 = vld [vmem:[%s694 + $0x8] sm:$0xff]
          %v905 = vld [vmem:[%s694 + $0x10] sm:$0xff]
          %v906 = vld [vmem:[%s694 + $0x18] sm:$0xff]
          %v907 = vld [vmem:[%s694 + $0x20] sm:$0xff]
          %v908 = vld [vmem:[%s694 + $0x28] sm:$0xff]
          %v909 = vld [vmem:[%s694 + $0x30] sm:$0xff]
          %v910 = vld [vmem:[%s694 + $0x38] sm:$0xff]
          %v911 = vld [vmem:[%s694 + $0x40] sm:$0xff]
          %v912 = vld [vmem:[%s694 + $0x48] sm:$0xff]
          %v913 = vld [vmem:[%s694 + $0x50] sm:$0xff]
          %v914 = vld [vmem:[%s694 + $0x58] sm:$0xff]
          %v915 = vld [vmem:[%s694 + $0x60] sm:$0xff]
          %v916 = vld [vmem:[%s694 + $0x68] sm:$0xff]
          %v917 = vld [vmem:[%s694 + $0x70] sm:$0xff]
          %v918 = vld [vmem:[%s694 + $0x78] sm:$0xff]
          %919 = vst [vmem:[%s881] sm:$0xff] %v903
          %920 = vst [vmem:[%s881 + $0x8] sm:$0xff] %v904
          %921 = vst [vmem:[%s881 + $0x10] sm:$0xff] %v905
          %922 = vst [vmem:[%s881 + $0x18] sm:$0xff] %v906
          %923 = vst [vmem:[%s881 + $0x20] sm:$0xff] %v907
          %924 = vst [vmem:[%s881 + $0x28] sm:$0xff] %v908
          %925 = vst [vmem:[%s881 + $0x30] sm:$0xff] %v909
          %926 = vst [vmem:[%s881 + $0x38] sm:$0xff] %v910
          %927 = vst [vmem:[%s881 + $0x40] sm:$0xff] %v911
          %928 = vst [vmem:[%s881 + $0x48] sm:$0xff] %v912
          %929 = vst [vmem:[%s881 + $0x50] sm:$0xff] %v913
          %930 = vst [vmem:[%s881 + $0x58] sm:$0xff] %v914
          %931 = vst [vmem:[%s881 + $0x60] sm:$0xff] %v915
          %932 = vst [vmem:[%s881 + $0x68] sm:$0xff] %v916
          %933 = vst [vmem:[%s881 + $0x70] sm:$0xff] %v917
          %934 = vst [vmem:[%s881 + $0x78] sm:$0xff] %v918
        $region120: #{encoder_forward.1} parent=75 // pred_fallthru
          _
        %v935 = vld [vmem:[%s881] sm:$0xff]
        %v936 = vld [vmem:[%s881 + $0x8] sm:$0xff]
        %v937 = vld [vmem:[%s881 + $0x10] sm:$0xff]
        %v938 = vld [vmem:[%s881 + $0x18] sm:$0xff]
        %v939 = vld [vmem:[%s881 + $0x20] sm:$0xff]
        %v940 = vld [vmem:[%s881 + $0x28] sm:$0xff]
        %v941 = vld [vmem:[%s881 + $0x30] sm:$0xff]
        %v942 = vld [vmem:[%s881 + $0x38] sm:$0xff]
        %v943 = vld [vmem:[%s881 + $0x40] sm:$0xff]
        %v944 = vld [vmem:[%s881 + $0x48] sm:$0xff]
        %v945 = vld [vmem:[%s881 + $0x50] sm:$0xff]
        %v946 = vld [vmem:[%s881 + $0x58] sm:$0xff]
        %v947 = vld [vmem:[%s881 + $0x60] sm:$0xff]
        %v948 = vld [vmem:[%s881 + $0x68] sm:$0xff]
        %v949 = vld [vmem:[%s881 + $0x70] sm:$0xff]
        %v950 = vld [vmem:[%s881 + $0x78] sm:$0xff]
        %v951 = vpack.c.bf16 %v936, %v935
        %v952 = vpack.c.bf16 %v938, %v937
        %v953 = vpack.c.bf16 %v940, %v939
        %v954 = vpack.c.bf16 %v942, %v941
        %v955 = vpack.c.bf16 %v944, %v943
        %v956 = vpack.c.bf16 %v946, %v945
        %v957 = vpack.c.bf16 %v948, %v947
        %v958 = vpack.c.bf16 %v950, %v949
        %v959 = vld [vmem:[%s886] sm:$0xf]
        %v960 = vld [vmem:[%s886 + $0x4] sm:$0xf]
        %v961 = vld [vmem:[%s886 + $0x8] sm:$0xf]
        %v962 = vld [vmem:[%s886 + $0xc] sm:$0xf]
        %v963 = vld [vmem:[%s886 + $0x10] sm:$0xf]
        %v964 = vld [vmem:[%s886 + $0x14] sm:$0xf]
        %v965 = vld [vmem:[%s886 + $0x18] sm:$0xf]
        %v966 = vld [vmem:[%s886 + $0x1c] sm:$0xf]
        %v967 = vld [vmem:[%s886 + $0x20] sm:$0xf]
        %v968 = vld [vmem:[%s886 + $0x24] sm:$0xf]
        %v969 = vld [vmem:[%s886 + $0x28] sm:$0xf]
        %v970 = vld [vmem:[%s886 + $0x2c] sm:$0xf]
        %v971 = vld [vmem:[%s886 + $0x30] sm:$0xf]
        %v972 = vld [vmem:[%s886 + $0x34] sm:$0xf]
        %v973 = vld [vmem:[%s886 + $0x38] sm:$0xf]
        %v974 = vld [vmem:[%s886 + $0x3c] sm:$0xf]
        %v975 = vunpack.c.l.bf16 %v959
        %v976 = vunpack.c.l.bf16 %v960
        %v977 = vunpack.c.l.bf16 %v961
        %v978 = vunpack.c.l.bf16 %v962
        %v979 = vunpack.c.l.bf16 %v963
        %v980 = vunpack.c.l.bf16 %v964
        %v981 = vunpack.c.l.bf16 %v965
        %v982 = vunpack.c.l.bf16 %v966
        %v983 = vunpack.c.l.bf16 %v967
        %v984 = vunpack.c.l.bf16 %v968
        %v985 = vunpack.c.l.bf16 %v969
        %v986 = vunpack.c.l.bf16 %v970
        %v987 = vunpack.c.l.bf16 %v971
        %v988 = vunpack.c.l.bf16 %v972
        %v989 = vunpack.c.l.bf16 %v973
        %v990 = vunpack.c.l.bf16 %v974
        %v991 = vmul.f32 %v975, -1e+32
        %v992 = vmul.f32 %v976, -1e+32
        %v993 = vmul.f32 %v977, -1e+32
        %v994 = vmul.f32 %v978, -1e+32
        %v995 = vmul.f32 %v979, -1e+32
        %v996 = vmul.f32 %v980, -1e+32
        %v997 = vmul.f32 %v981, -1e+32
        %v998 = vmul.f32 %v982, -1e+32
        %v999 = vmul.f32 %v983, -1e+32
        %v1000 = vmul.f32 %v984, -1e+32
        %v1001 = vmul.f32 %v985, -1e+32
        %v1002 = vmul.f32 %v986, -1e+32
        %v1003 = vmul.f32 %v987, -1e+32
        %v1004 = vmul.f32 %v988, -1e+32
        %v1005 = vmul.f32 %v989, -1e+32
        %v1006 = vmul.f32 %v990, -1e+32
        %v1007 = vld [vmem:[%s704] sm:$0xff]
        %v1008 = vld [vmem:[%s704 + $0x8] sm:$0xf]
        %v1009 = vld [vmem:[%s704 + $0xc] sm:$0xff]
        %v1010 = vld [vmem:[%s704 + $0x14] sm:$0xf]
        %v1011 = vld [vmem:[%s704 + $0x18] sm:$0xff]
        %v1012 = vld [vmem:[%s704 + $0x20] sm:$0xf]
        %v1013 = vld [vmem:[%s704 + $0x24] sm:$0xff]
        %v1014 = vld [vmem:[%s704 + $0x2c] sm:$0xf]
        %v1015 = vld [vmem:[%s704 + $0x30] sm:$0xff]
        %v1016 = vld [vmem:[%s704 + $0x38] sm:$0xf]
        %v1017 = vld [vmem:[%s704 + $0x3c] sm:$0xff]
        %v1018 = vld [vmem:[%s704 + $0x44] sm:$0xf]
        %v1019 = vld [vmem:[%s704 + $0x48] sm:$0xff]
        %v1020 = vld [vmem:[%s704 + $0x50] sm:$0xf]
        %v1021 = vld [vmem:[%s704 + $0x54] sm:$0xff]
        %v1022 = vld [vmem:[%s704 + $0x5c] sm:$0xf]
        %v1023 = vld [vmem:[%s704 + $0x60] sm:$0xff]
        %v1024 = vld [vmem:[%s704 + $0x68] sm:$0xf]
        %v1025 = vld [vmem:[%s704 + $0x6c] sm:$0xff]
        %v1026 = vld [vmem:[%s704 + $0x74] sm:$0xf]
        %v1027 = vld [vmem:[%s704 + $0x78] sm:$0xff]
        %v1028 = vld [vmem:[%s704 + $0x80] sm:$0xf]
        %v1029 = vld [vmem:[%s704 + $0x84] sm:$0xff]
        %v1030 = vld [vmem:[%s704 + $0x8c] sm:$0xf]
        %v1031 = vld [vmem:[%s704 + $0x90] sm:$0xff]
        %v1032 = vld [vmem:[%s704 + $0x98] sm:$0xf]
        %v1033 = vld [vmem:[%s704 + $0x9c] sm:$0xff]
        %v1034 = vld [vmem:[%s704 + $0xa4] sm:$0xf]
        %v1035 = vld [vmem:[%s704 + $0xa8] sm:$0xff]
        %v1036 = vld [vmem:[%s704 + $0xb0] sm:$0xf]
        %v1037 = vld [vmem:[%s704 + $0xb4] sm:$0xff]
        %v1038 = vld [vmem:[%s704 + $0xbc] sm:$0xf]
        %v1039 = vld [vmem:[%s714] sm:$0x7]
        %v1041 = vperm.slane %v1039, 0
        %v1042 = vperm.slane %v1039, 1
        %v1043 = vperm.slane %v1039, 2
        %v1079 = vunpack.c.l.b16 %v1007
        %v1080 = vunpack.c.h.b16 %v1007
        %v1081 = vunpack.c.l.b16 %v1008
        %v1082 = vunpack.c.l.b16 %v1009
        %v1083 = vunpack.c.h.b16 %v1009
        %v1084 = vunpack.c.l.b16 %v1010
        %v1085 = vunpack.c.l.b16 %v1011
        %v1086 = vunpack.c.h.b16 %v1011
        %v1087 = vunpack.c.l.b16 %v1012
        %v1088 = vunpack.c.l.b16 %v1013
        %v1089 = vunpack.c.h.b16 %v1013
        %v1090 = vunpack.c.l.b16 %v1014
        %v1091 = vunpack.c.l.b16 %v1015
        %v1092 = vunpack.c.h.b16 %v1015
        %v1093 = vunpack.c.l.b16 %v1016
        %v1094 = vunpack.c.l.b16 %v1017
        %v1095 = vunpack.c.h.b16 %v1017
        %v1096 = vunpack.c.l.b16 %v1018
        %v1097 = vunpack.c.l.b16 %v1019
        %v1098 = vunpack.c.h.b16 %v1019
        %v1099 = vunpack.c.l.b16 %v1020
        %v1100 = vunpack.c.l.b16 %v1021
        %v1101 = vunpack.c.h.b16 %v1021
        %v1102 = vunpack.c.l.b16 %v1022
        %v1103 = vunpack.c.l.b16 %v1023
        %v1104 = vunpack.c.h.b16 %v1023
        %v1105 = vunpack.c.l.b16 %v1024
        %v1106 = vunpack.c.l.b16 %v1025
        %v1107 = vunpack.c.h.b16 %v1025
        %v1108 = vunpack.c.l.b16 %v1026
        %v1109 = vunpack.c.l.b16 %v1027
        %v1110 = vunpack.c.h.b16 %v1027
        %v1111 = vunpack.c.l.b16 %v1028
        %v1112 = vunpack.c.l.b16 %v1029
        %v1113 = vunpack.c.h.b16 %v1029
        %v1114 = vunpack.c.l.b16 %v1030
        %v1115 = vunpack.c.l.b16 %v1031
        %v1116 = vunpack.c.h.b16 %v1031
        %v1117 = vunpack.c.l.b16 %v1032
        %v1118 = vunpack.c.l.b16 %v1033
        %v1119 = vunpack.c.h.b16 %v1033
        %v1120 = vunpack.c.l.b16 %v1034
        %v1121 = vunpack.c.l.b16 %v1035
        %v1122 = vunpack.c.h.b16 %v1035
        %v1123 = vunpack.c.l.b16 %v1036
        %v1124 = vunpack.c.l.b16 %v1037
        %v1125 = vunpack.c.h.b16 %v1037
        %v1126 = vunpack.c.l.b16 %v1038
        %v1127 = vpack.c.b16 %v1082, %v1079
        %v1128 = vpack.c.b16 %v1083, %v1080
        %v1129 = vpack.c.b16 %v1084, %v1081
        %v1130 = vpack.c.b16 %v1088, %v1085
        %v1131 = vpack.c.b16 %v1089, %v1086
        %v1132 = vpack.c.b16 %v1090, %v1087
        %v1133 = vpack.c.b16 %v1094, %v1091
        %v1134 = vpack.c.b16 %v1095, %v1092
        %v1135 = vpack.c.b16 %v1096, %v1093
        %v1136 = vpack.c.b16 %v1100, %v1097
        %v1137 = vpack.c.b16 %v1101, %v1098
        %v1138 = vpack.c.b16 %v1102, %v1099
        %v1139 = vpack.c.b16 %v1106, %v1103
        %v1140 = vpack.c.b16 %v1107, %v1104
        %v1141 = vpack.c.b16 %v1108, %v1105
        %v1142 = vpack.c.b16 %v1112, %v1109
        %v1143 = vpack.c.b16 %v1113, %v1110
        %v1144 = vpack.c.b16 %v1114, %v1111
        %v1145 = vpack.c.b16 %v1118, %v1115
        %v1146 = vpack.c.b16 %v1119, %v1116
        %v1147 = vpack.c.b16 %v1120, %v1117
        %v1148 = vpack.c.b16 %v1124, %v1121
        %v1149 = vpack.c.b16 %v1125, %v1122
        %v1150 = vpack.c.b16 %v1126, %v1123
        %1175 = vmatpush.bf16.msra.mxu0 %v1148
        %1176 = vmatpush.bf16.msra.mxu0 %v1145
        %1177 = vmatpush.bf16.msra.mxu0 %v1142
        %1178 = vmatpush.bf16.msra.mxu0 %v1139
        %1179 = vmatpush.bf16.msra.mxu0 %v1136
        %1180 = vmatpush.bf16.msra.mxu0 %v1133
        %1181 = vmatpush.bf16.msra.mxu0 %v1130
        %1182 = vmatpush.bf16.msra.mxu0 %v1127
        %1183 = vmatmul.bf16.gmra.mxu0 %v951
        %v1184 = vpop.f32.mrf.mxu0
        %v1185 = vadd.f32 %v1041, %v1184
        %v1186 = vpop.f32.mrf.mxu0
        %v1187 = vadd.f32 %v1041, %v1186
        %1188 = vmatmul.bf16.gmra.mxu0 %v952
        %v1189 = vpop.f32.mrf.mxu0
        %v1190 = vadd.f32 %v1041, %v1189
        %v1191 = vpop.f32.mrf.mxu0
        %v1192 = vadd.f32 %v1041, %v1191
        %1193 = vmatmul.bf16.gmra.mxu0 %v953
        %v1194 = vpop.f32.mrf.mxu0
        %v1195 = vadd.f32 %v1041, %v1194
        %v1196 = vpop.f32.mrf.mxu0
        %v1197 = vadd.f32 %v1041, %v1196
        %1198 = vmatmul.bf16.gmra.mxu0 %v954
        %v1199 = vpop.f32.mrf.mxu0
        %v1200 = vadd.f32 %v1041, %v1199
        %v1201 = vpop.f32.mrf.mxu0
        %v1202 = vadd.f32 %v1041, %v1201
        %1203 = vmatmul.bf16.gmra.mxu0 %v955
        %v1204 = vpop.f32.mrf.mxu0
        %v1205 = vadd.f32 %v1041, %v1204
        %v1206 = vpop.f32.mrf.mxu0
        %v1207 = vadd.f32 %v1041, %v1206
        %1208 = vmatmul.bf16.gmra.mxu0 %v956
        %v1209 = vpop.f32.mrf.mxu0
        %v1210 = vadd.f32 %v1041, %v1209
        %v1211 = vpop.f32.mrf.mxu0
        %v1212 = vadd.f32 %v1041, %v1211
        %1213 = vmatmul.bf16.gmra.mxu0 %v957
        %v1214 = vpop.f32.mrf.mxu0
        %v1215 = vadd.f32 %v1041, %v1214
        %v1216 = vpop.f32.mrf.mxu0
        %v1217 = vadd.f32 %v1041, %v1216
        %1218 = vmatmul.bf16.gmra.mxu0 %v958
        %v1219 = vpop.f32.mrf.mxu0
        %v1220 = vadd.f32 %v1041, %v1219
        %v1221 = vpop.f32.mrf.mxu0
        %v1222 = vadd.f32 %v1041, %v1221
        %1223 = vdwg.mxu0
        %1224 = vmatpush.bf16.msra.mxu0 %v1149
        %1225 = vmatpush.bf16.msra.mxu0 %v1146
        %1226 = vmatpush.bf16.msra.mxu0 %v1143
        %1227 = vmatpush.bf16.msra.mxu0 %v1140
        %1228 = vmatpush.bf16.msra.mxu0 %v1137
        %1229 = vmatpush.bf16.msra.mxu0 %v1134
        %1230 = vmatpush.bf16.msra.mxu0 %v1131
        %1231 = vmatpush.bf16.msra.mxu0 %v1128
        %1232 = vmatmul.bf16.gmra.mxu0 %v951
        %v1233 = vpop.f32.mrf.mxu0
        %v1234 = vadd.f32 %v1042, %v1233
        %v1235 = vpop.f32.mrf.mxu0
        %v1236 = vadd.f32 %v1042, %v1235
        %1237 = vmatmul.bf16.gmra.mxu0 %v952
        %v1238 = vpop.f32.mrf.mxu0
        %v1239 = vadd.f32 %v1042, %v1238
        %v1240 = vpop.f32.mrf.mxu0
        %v1241 = vadd.f32 %v1042, %v1240
        %1242 = vmatmul.bf16.gmra.mxu0 %v953
        %v1243 = vpop.f32.mrf.mxu0
        %v1244 = vadd.f32 %v1042, %v1243
        %v1245 = vpop.f32.mrf.mxu0
        %v1246 = vadd.f32 %v1042, %v1245
        %1247 = vmatmul.bf16.gmra.mxu0 %v954
        %v1248 = vpop.f32.mrf.mxu0
        %v1249 = vadd.f32 %v1042, %v1248
        %v1250 = vpop.f32.mrf.mxu0
        %v1251 = vadd.f32 %v1042, %v1250
        %1252 = vmatmul.bf16.gmra.mxu0 %v955
        %v1253 = vpop.f32.mrf.mxu0
        %v1254 = vadd.f32 %v1042, %v1253
        %v1255 = vpop.f32.mrf.mxu0
        %v1256 = vadd.f32 %v1042, %v1255
        %1257 = vmatmul.bf16.gmra.mxu0 %v956
        %v1258 = vpop.f32.mrf.mxu0
        %v1259 = vadd.f32 %v1042, %v1258
        %v1260 = vpop.f32.mrf.mxu0
        %v1261 = vadd.f32 %v1042, %v1260
        %1262 = vmatmul.bf16.gmra.mxu0 %v957
        %v1263 = vpop.f32.mrf.mxu0
        %v1264 = vadd.f32 %v1042, %v1263
        %v1265 = vpop.f32.mrf.mxu0
        %v1266 = vadd.f32 %v1042, %v1265
        %1267 = vmatmul.bf16.gmra.mxu0 %v958
        %v1268 = vpop.f32.mrf.mxu0
        %v1269 = vadd.f32 %v1042, %v1268
        %v1270 = vpop.f32.mrf.mxu0
        %v1271 = vadd.f32 %v1042, %v1270
        %1272 = vdwg.mxu0
        %1273 = vmatpush.bf16.msra.mxu0 %v1150
        %1274 = vmatpush.bf16.msra.mxu0 %v1147
        %1275 = vmatpush.bf16.msra.mxu0 %v1144
        %1276 = vmatpush.bf16.msra.mxu0 %v1141
        %1277 = vmatpush.bf16.msra.mxu0 %v1138
        %1278 = vmatpush.bf16.msra.mxu0 %v1135
        %1279 = vmatpush.bf16.msra.mxu0 %v1132
        %1280 = vmatpush.bf16.msra.mxu0 %v1129
        %1281 = vmatmul.bf16.gmra.mxu0 %v951
        %v1282 = vpop.f32.mrf.mxu0
        %v1283 = vadd.f32 %v1043, %v1282
        %v1284 = vpop.f32.mrf.mxu0
        %v1285 = vadd.f32 %v1043, %v1284
        %1286 = vmatmul.bf16.gmra.mxu0 %v952
        %v1287 = vpop.f32.mrf.mxu0
        %v1288 = vadd.f32 %v1043, %v1287
        %v1289 = vpop.f32.mrf.mxu0
        %v1290 = vadd.f32 %v1043, %v1289
        %1291 = vmatmul.bf16.gmra.mxu0 %v953
        %v1292 = vpop.f32.mrf.mxu0
        %v1293 = vadd.f32 %v1043, %v1292
        %v1294 = vpop.f32.mrf.mxu0
        %v1295 = vadd.f32 %v1043, %v1294
        %1296 = vmatmul.bf16.gmra.mxu0 %v954
        %v1297 = vpop.f32.mrf.mxu0
        %v1298 = vadd.f32 %v1043, %v1297
        %v1299 = vpop.f32.mrf.mxu0
        %v1300 = vadd.f32 %v1043, %v1299
        %1301 = vmatmul.bf16.gmra.mxu0 %v955
        %v1302 = vpop.f32.mrf.mxu0
        %v1303 = vadd.f32 %v1043, %v1302
        %v1304 = vpop.f32.mrf.mxu0
        %v1305 = vadd.f32 %v1043, %v1304
        %1306 = vmatmul.bf16.gmra.mxu0 %v956
        %v1307 = vpop.f32.mrf.mxu0
        %v1308 = vadd.f32 %v1043, %v1307
        %v1309 = vpop.f32.mrf.mxu0
        %v1310 = vadd.f32 %v1043, %v1309
        %1311 = vmatmul.bf16.gmra.mxu0 %v957
        %v1312 = vpop.f32.mrf.mxu0
        %v1313 = vadd.f32 %v1043, %v1312
        %v1314 = vpop.f32.mrf.mxu0
        %v1315 = vadd.f32 %v1043, %v1314
        %1316 = vmatmul.bf16.gmra.mxu0 %v958
        %v1317 = vpop.f32.mrf.mxu0
        %v1318 = vadd.f32 %v1043, %v1317
        %v1319 = vpop.f32.mrf.mxu0
        %v1320 = vadd.f32 %v1043, %v1319
        %1321 = vdwg.mxu0
        %v1322 = vpack.c.bf16 %v1185, %v1185
        %v1323 = vpack.c.bf16 %v1187, %v1187
        %v1324 = vpack.c.bf16 %v1190, %v1190
        %v1325 = vpack.c.bf16 %v1192, %v1192
        %v1326 = vpack.c.bf16 %v1195, %v1195
        %v1327 = vpack.c.bf16 %v1197, %v1197
        %v1328 = vpack.c.bf16 %v1200, %v1200
        %v1329 = vpack.c.bf16 %v1202, %v1202
        %v1330 = vpack.c.bf16 %v1205, %v1205
        %v1331 = vpack.c.bf16 %v1207, %v1207
        %v1332 = vpack.c.bf16 %v1210, %v1210
        %v1333 = vpack.c.bf16 %v1212, %v1212
        %v1334 = vpack.c.bf16 %v1215, %v1215
        %v1335 = vpack.c.bf16 %v1217, %v1217
        %v1336 = vpack.c.bf16 %v1220, %v1220
        %v1337 = vpack.c.bf16 %v1222, %v1222
        %v1338 = vpack.c.bf16 %v1234, %v1234
        %v1339 = vpack.c.bf16 %v1236, %v1236
        %v1340 = vpack.c.bf16 %v1239, %v1239
        %v1341 = vpack.c.bf16 %v1241, %v1241
        %v1342 = vpack.c.bf16 %v1244, %v1244
        %v1343 = vpack.c.bf16 %v1246, %v1246
        %v1344 = vpack.c.bf16 %v1249, %v1249
        %v1345 = vpack.c.bf16 %v1251, %v1251
        %v1346 = vpack.c.bf16 %v1254, %v1254
        %v1347 = vpack.c.bf16 %v1256, %v1256
        %v1348 = vpack.c.bf16 %v1259, %v1259
        %v1349 = vpack.c.bf16 %v1261, %v1261
        %v1350 = vpack.c.bf16 %v1264, %v1264
        %v1351 = vpack.c.bf16 %v1266, %v1266
        %v1352 = vpack.c.bf16 %v1269, %v1269
        %v1353 = vpack.c.bf16 %v1271, %v1271
        %v1354 = vpack.c.bf16 %v1283, %v1283
        %v1355 = vpack.c.bf16 %v1285, %v1285
        %v1356 = vpack.c.bf16 %v1288, %v1288
        %v1357 = vpack.c.bf16 %v1290, %v1290
        %v1358 = vpack.c.bf16 %v1293, %v1293
        %v1359 = vpack.c.bf16 %v1295, %v1295
        %v1360 = vpack.c.bf16 %v1298, %v1298
        %v1361 = vpack.c.bf16 %v1300, %v1300
        %v1362 = vpack.c.bf16 %v1303, %v1303
        %v1363 = vpack.c.bf16 %v1305, %v1305
        %v1364 = vpack.c.bf16 %v1308, %v1308
        %v1365 = vpack.c.bf16 %v1310, %v1310
        %v1366 = vpack.c.bf16 %v1313, %v1313
        %v1367 = vpack.c.bf16 %v1315, %v1315
        %v1368 = vpack.c.bf16 %v1318, %v1318
        %v1369 = vpack.c.bf16 %v1320, %v1320
        %v1386 = vunpack.c.l.b16 %v1322
        %v1387 = vunpack.c.l.b16 %v1323
        %v1388 = vunpack.c.l.b16 %v1324
        %v1389 = vunpack.c.l.b16 %v1325
        %v1390 = vunpack.c.l.b16 %v1326
        %v1391 = vunpack.c.l.b16 %v1327
        %v1392 = vunpack.c.l.b16 %v1328
        %v1393 = vunpack.c.l.b16 %v1329
        %v1394 = vunpack.c.l.b16 %v1330
        %v1395 = vunpack.c.l.b16 %v1331
        %v1396 = vunpack.c.l.b16 %v1332
        %v1397 = vunpack.c.l.b16 %v1333
        %v1398 = vunpack.c.l.b16 %v1334
        %v1399 = vunpack.c.l.b16 %v1335
        %v1400 = vunpack.c.l.b16 %v1336
        %v1401 = vunpack.c.l.b16 %v1337
        %v1402 = vpack.c.b16 %v1387, %v1386
        %v1403 = vpack.c.b16 %v1389, %v1388
        %v1404 = vpack.c.b16 %v1391, %v1390
        %v1405 = vpack.c.b16 %v1393, %v1392
        %v1406 = vpack.c.b16 %v1395, %v1394
        %v1407 = vpack.c.b16 %v1397, %v1396
        %v1408 = vpack.c.b16 %v1399, %v1398
        %v1409 = vpack.c.b16 %v1401, %v1400
        %v1426 = vunpack.c.l.b16 %v1338
        %v1427 = vunpack.c.l.b16 %v1339
        %v1428 = vunpack.c.l.b16 %v1340
        %v1429 = vunpack.c.l.b16 %v1341
        %v1430 = vunpack.c.l.b16 %v1342
        %v1431 = vunpack.c.l.b16 %v1343
        %v1432 = vunpack.c.l.b16 %v1344
        %v1433 = vunpack.c.l.b16 %v1345
        %v1434 = vunpack.c.l.b16 %v1346
        %v1435 = vunpack.c.l.b16 %v1347
        %v1436 = vunpack.c.l.b16 %v1348
        %v1437 = vunpack.c.l.b16 %v1349
        %v1438 = vunpack.c.l.b16 %v1350
        %v1439 = vunpack.c.l.b16 %v1351
        %v1440 = vunpack.c.l.b16 %v1352
        %v1441 = vunpack.c.l.b16 %v1353
        %v1442 = vpack.c.b16 %v1427, %v1426
        %v1443 = vpack.c.b16 %v1429, %v1428
        %v1444 = vpack.c.b16 %v1431, %v1430
        %v1445 = vpack.c.b16 %v1433, %v1432
        %v1446 = vpack.c.b16 %v1435, %v1434
        %v1447 = vpack.c.b16 %v1437, %v1436
        %v1448 = vpack.c.b16 %v1439, %v1438
        %v1449 = vpack.c.b16 %v1441, %v1440
        %vm1450 = vcmask 130048
        %v1452 = vsel %vm1450, %v1402, 0
        %v1455 = vsel %vm1450, %v1403, 0
        %v1458 = vsel %vm1450, %v1404, 0
        %v1461 = vsel %vm1450, %v1405, 0
        %v1464 = vsel %vm1450, %v1406, 0
        %v1467 = vsel %vm1450, %v1407, 0
        %v1470 = vsel %vm1450, %v1408, 0
        %v1473 = vsel %vm1450, %v1409, 0
        %v1476 = vsel %vm1450, %v1442, 0
        %v1479 = vsel %vm1450, %v1443, 0
        %v1482 = vsel %vm1450, %v1444, 0
        %v1485 = vsel %vm1450, %v1445, 0
        %v1488 = vsel %vm1450, %v1446, 0
        %v1491 = vsel %vm1450, %v1447, 0
        %v1494 = vsel %vm1450, %v1448, 0
        %v1497 = vsel %vm1450, %v1449, 0
        %1499 = vmatpush.bf16.xpose.msra.mxu0 %v1497
        %1500 = vmatpush.bf16.xpose.msra.mxu0 %v1494
        %1501 = vmatpush.bf16.xpose.msra.mxu0 %v1491
        %1502 = vmatpush.bf16.xpose.msra.mxu0 %v1488
        %1503 = vmatpush.bf16.xpose.msra.mxu0 %v1485
        %1504 = vmatpush.bf16.xpose.msra.mxu0 %v1482
        %1505 = vmatpush.bf16.xpose.msra.mxu0 %v1479
        %1506 = vmatpush.bf16.xpose.msra.mxu0 %v1476
        %1507 = vmatmul.bf16.gmra.mxu0 %v1452
        %v1508 = vpop.f32.mrf.mxu0
        %v1509 = vadd.f32 %v991, %v1508
        %v1510 = vpop.f32.mrf.mxu0
        %v1511 = vadd.f32 %v992, %v1510
        %1512 = vmatmul.bf16.gmra.mxu0 %v1455
        %v1513 = vpop.f32.mrf.mxu0
        %v1514 = vadd.f32 %v993, %v1513
        %v1515 = vpop.f32.mrf.mxu0
        %v1516 = vadd.f32 %v994, %v1515
        %1517 = vmatmul.bf16.gmra.mxu0 %v1458
        %v1518 = vpop.f32.mrf.mxu0
        %v1519 = vadd.f32 %v995, %v1518
        %v1520 = vpop.f32.mrf.mxu0
        %v1521 = vadd.f32 %v996, %v1520
        %1522 = vmatmul.bf16.gmra.mxu0 %v1461
        %v1523 = vpop.f32.mrf.mxu0
        %v1524 = vadd.f32 %v997, %v1523
        %v1525 = vpop.f32.mrf.mxu0
        %v1526 = vadd.f32 %v998, %v1525
        %1527 = vmatmul.bf16.gmra.mxu0 %v1464
        %v1528 = vpop.f32.mrf.mxu0
        %v1529 = vadd.f32 %v999, %v1528
        %v1530 = vpop.f32.mrf.mxu0
        %v1531 = vadd.f32 %v1000, %v1530
        %1532 = vmatmul.bf16.gmra.mxu0 %v1467
        %v1533 = vpop.f32.mrf.mxu0
        %v1534 = vadd.f32 %v1001, %v1533
        %v1535 = vpop.f32.mrf.mxu0
        %v1536 = vadd.f32 %v1002, %v1535
        %1537 = vmatmul.bf16.gmra.mxu0 %v1470
        %v1538 = vpop.f32.mrf.mxu0
        %v1539 = vadd.f32 %v1003, %v1538
        %v1540 = vpop.f32.mrf.mxu0
        %v1541 = vadd.f32 %v1004, %v1540
        %1542 = vmatmul.bf16.gmra.mxu0 %v1473
        %v1543 = vpop.f32.mrf.mxu0
        %v1544 = vadd.f32 %v1005, %v1543
        %v1545 = vpop.f32.mrf.mxu0
        %v1546 = vadd.f32 %v1006, %v1545
        %1547 = vdwg.mxu0
        %1548 = vmax.xlane.f32.xlu0 %v1509
        %v1549 = vpop.xlane.xlu0 %1548
        %1550 = vmax.xlane.f32.xlu0 %v1511
        %v1551 = vpop.xlane.xlu0 %1550
        %1552 = vmax.xlane.f32.xlu0 %v1514
        %v1553 = vpop.xlane.xlu0 %1552
        %1554 = vmax.xlane.f32.xlu0 %v1516
        %v1555 = vpop.xlane.xlu0 %1554
        %1556 = vmax.xlane.f32.xlu0 %v1519
        %v1557 = vpop.xlane.xlu0 %1556
        %1558 = vmax.xlane.f32.xlu0 %v1521
        %v1559 = vpop.xlane.xlu0 %1558
        %1560 = vmax.xlane.f32.xlu0 %v1524
        %v1561 = vpop.xlane.xlu0 %1560
        %1562 = vmax.xlane.f32.xlu0 %v1526
        %v1563 = vpop.xlane.xlu0 %1562
        %1564 = vmax.xlane.f32.xlu0 %v1529
        %v1565 = vpop.xlane.xlu0 %1564
        %1566 = vmax.xlane.f32.xlu0 %v1531
        %v1567 = vpop.xlane.xlu0 %1566
        %1568 = vmax.xlane.f32.xlu0 %v1534
        %v1569 = vpop.xlane.xlu0 %1568
        %1570 = vmax.xlane.f32.xlu0 %v1536
        %v1571 = vpop.xlane.xlu0 %1570
        %1572 = vmax.xlane.f32.xlu0 %v1539
        %v1573 = vpop.xlane.xlu0 %1572
        %1574 = vmax.xlane.f32.xlu0 %v1541
        %v1575 = vpop.xlane.xlu0 %1574
        %1576 = vmax.xlane.f32.xlu0 %v1544
        %v1577 = vpop.xlane.xlu0 %1576
        %1578 = vmax.xlane.f32.xlu0 %v1546
        %v1579 = vpop.xlane.xlu0 %1578
        %v1580 = vsub.f32 %v1509, %v1549
        %v1581 = vsub.f32 %v1511, %v1551
        %v1582 = vsub.f32 %v1514, %v1553
        %v1583 = vsub.f32 %v1516, %v1555
        %v1584 = vsub.f32 %v1519, %v1557
        %v1585 = vsub.f32 %v1521, %v1559
        %v1586 = vsub.f32 %v1524, %v1561
        %v1587 = vsub.f32 %v1526, %v1563
        %v1588 = vsub.f32 %v1529, %v1565
        %v1589 = vsub.f32 %v1531, %v1567
        %v1590 = vsub.f32 %v1534, %v1569
        %v1591 = vsub.f32 %v1536, %v1571
        %v1592 = vsub.f32 %v1539, %v1573
        %v1593 = vsub.f32 %v1541, %v1575
        %v1594 = vsub.f32 %v1544, %v1577
        %v1595 = vsub.f32 %v1546, %v1579
        %v1596 = vmul.f32 %v1580, 1.442695
        %v1597 = vpow.pop %v1596
        %v1598 = vmul.f32 %v1581, 1.442695
        %v1599 = vpow.pop %v1598
        %v1600 = vmul.f32 %v1582, 1.442695
        %v1601 = vpow.pop %v1600
        %v1602 = vmul.f32 %v1583, 1.442695
        %v1603 = vpow.pop %v1602
        %v1604 = vmul.f32 %v1584, 1.442695
        %v1605 = vpow.pop %v1604
        %v1606 = vmul.f32 %v1585, 1.442695
        %v1607 = vpow.pop %v1606
        %v1608 = vmul.f32 %v1586, 1.442695
        %v1609 = vpow.pop %v1608
        %v1610 = vmul.f32 %v1587, 1.442695
        %v1611 = vpow.pop %v1610
        %v1612 = vmul.f32 %v1588, 1.442695
        %v1613 = vpow.pop %v1612
        %v1614 = vmul.f32 %v1589, 1.442695
        %v1615 = vpow.pop %v1614
        %v1616 = vmul.f32 %v1590, 1.442695
        %v1617 = vpow.pop %v1616
        %v1618 = vmul.f32 %v1591, 1.442695
        %v1619 = vpow.pop %v1618
        %v1620 = vmul.f32 %v1592, 1.442695
        %v1621 = vpow.pop %v1620
        %v1622 = vmul.f32 %v1593, 1.442695
        %v1623 = vpow.pop %v1622
        %v1624 = vmul.f32 %v1594, 1.442695
        %v1625 = vpow.pop %v1624
        %v1626 = vmul.f32 %v1595, 1.442695
        %v1627 = vpow.pop %v1626
        %1628 = vadd.xlane.f32.xlu0 %v1597
        %v1629 = vpop.xlane.xlu0 %1628
        %1630 = vadd.xlane.f32.xlu0 %v1599
        %v1631 = vpop.xlane.xlu0 %1630
        %1632 = vadd.xlane.f32.xlu0 %v1601
        %v1633 = vpop.xlane.xlu0 %1632
        %1634 = vadd.xlane.f32.xlu0 %v1603
        %v1635 = vpop.xlane.xlu0 %1634
        %1636 = vadd.xlane.f32.xlu0 %v1605
        %v1637 = vpop.xlane.xlu0 %1636
        %1638 = vadd.xlane.f32.xlu0 %v1607
        %v1639 = vpop.xlane.xlu0 %1638
        %1640 = vadd.xlane.f32.xlu0 %v1609
        %v1641 = vpop.xlane.xlu0 %1640
        %1642 = vadd.xlane.f32.xlu0 %v1611
        %v1643 = vpop.xlane.xlu0 %1642
        %1644 = vadd.xlane.f32.xlu0 %v1613
        %v1645 = vpop.xlane.xlu0 %1644
        %1646 = vadd.xlane.f32.xlu0 %v1615
        %v1647 = vpop.xlane.xlu0 %1646
        %1648 = vadd.xlane.f32.xlu0 %v1617
        %v1649 = vpop.xlane.xlu0 %1648
        %1650 = vadd.xlane.f32.xlu0 %v1619
        %v1651 = vpop.xlane.xlu0 %1650
        %1652 = vadd.xlane.f32.xlu0 %v1621
        %v1653 = vpop.xlane.xlu0 %1652
        %1654 = vadd.xlane.f32.xlu0 %v1623
        %v1655 = vpop.xlane.xlu0 %1654
        %1656 = vadd.xlane.f32.xlu0 %v1625
        %v1657 = vpop.xlane.xlu0 %1656
        %1658 = vadd.xlane.f32.xlu0 %v1627
        %v1659 = vpop.xlane.xlu0 %1658
        %v1660 = vrcp.pop %v1629
        %v1661 = vrcp.pop %v1631
        %v1662 = vrcp.pop %v1633
        %v1663 = vrcp.pop %v1635
        %v1664 = vrcp.pop %v1637
        %v1665 = vrcp.pop %v1639
        %v1666 = vrcp.pop %v1641
        %v1667 = vrcp.pop %v1643
        %v1668 = vrcp.pop %v1645
        %v1669 = vrcp.pop %v1647
        %v1670 = vrcp.pop %v1649
        %v1671 = vrcp.pop %v1651
        %v1672 = vrcp.pop %v1653
        %v1673 = vrcp.pop %v1655
        %v1674 = vrcp.pop %v1657
        %v1675 = vrcp.pop %v1659
        %v1676 = vmul.f32 %v1597, %v1660
        %v1677 = vmul.f32 %v1599, %v1661
        %v1678 = vmul.f32 %v1601, %v1662
        %v1679 = vmul.f32 %v1603, %v1663
        %v1680 = vmul.f32 %v1605, %v1664
        %v1681 = vmul.f32 %v1607, %v1665
        %v1682 = vmul.f32 %v1609, %v1666
        %v1683 = vmul.f32 %v1611, %v1667
        %v1684 = vmul.f32 %v1613, %v1668
        %v1685 = vmul.f32 %v1615, %v1669
        %v1686 = vmul.f32 %v1617, %v1670
        %v1687 = vmul.f32 %v1619, %v1671
        %v1688 = vmul.f32 %v1621, %v1672
        %v1689 = vmul.f32 %v1623, %v1673
        %v1690 = vmul.f32 %v1625, %v1674
        %v1691 = vmul.f32 %v1627, %v1675
        %v1692 = vpack.c.bf16 %v1676, %v1676
        %v1693 = vpack.c.bf16 %v1677, %v1677
        %v1694 = vpack.c.bf16 %v1678, %v1678
        %v1695 = vpack.c.bf16 %v1679, %v1679
        %v1696 = vpack.c.bf16 %v1680, %v1680
        %v1697 = vpack.c.bf16 %v1681, %v1681
        %v1698 = vpack.c.bf16 %v1682, %v1682
        %v1699 = vpack.c.bf16 %v1683, %v1683
        %v1700 = vpack.c.bf16 %v1684, %v1684
        %v1701 = vpack.c.bf16 %v1685, %v1685
        %v1702 = vpack.c.bf16 %v1686, %v1686
        %v1703 = vpack.c.bf16 %v1687, %v1687
        %v1704 = vpack.c.bf16 %v1688, %v1688
        %v1705 = vpack.c.bf16 %v1689, %v1689
        %v1706 = vpack.c.bf16 %v1690, %v1690
        %v1707 = vpack.c.bf16 %v1691, %v1691
        %v1724 = vunpack.c.l.b16 %v1692
        %v1725 = vunpack.c.l.b16 %v1693
        %v1726 = vunpack.c.l.b16 %v1694
        %v1727 = vunpack.c.l.b16 %v1695
        %v1728 = vunpack.c.l.b16 %v1696
        %v1729 = vunpack.c.l.b16 %v1697
        %v1730 = vunpack.c.l.b16 %v1698
        %v1731 = vunpack.c.l.b16 %v1699
        %v1732 = vunpack.c.l.b16 %v1700
        %v1733 = vunpack.c.l.b16 %v1701
        %v1734 = vunpack.c.l.b16 %v1702
        %v1735 = vunpack.c.l.b16 %v1703
        %v1736 = vunpack.c.l.b16 %v1704
        %v1737 = vunpack.c.l.b16 %v1705
        %v1738 = vunpack.c.l.b16 %v1706
        %v1739 = vunpack.c.l.b16 %v1707
        %v1740 = vpack.c.b16 %v1725, %v1724
        %v1741 = vpack.c.b16 %v1727, %v1726
        %v1742 = vpack.c.b16 %v1729, %v1728
        %v1743 = vpack.c.b16 %v1731, %v1730
        %v1744 = vpack.c.b16 %v1733, %v1732
        %v1745 = vpack.c.b16 %v1735, %v1734
        %v1746 = vpack.c.b16 %v1737, %v1736
        %v1747 = vpack.c.b16 %v1739, %v1738
        %v1772 = vunpack.c.l.b16 %v1354
        %v1773 = vunpack.c.l.b16 %v1355
        %v1774 = vunpack.c.l.b16 %v1356
        %v1775 = vunpack.c.l.b16 %v1357
        %v1776 = vunpack.c.l.b16 %v1358
        %v1777 = vunpack.c.l.b16 %v1359
        %v1778 = vunpack.c.l.b16 %v1360
        %v1779 = vunpack.c.l.b16 %v1361
        %v1780 = vunpack.c.l.b16 %v1362
        %v1781 = vunpack.c.l.b16 %v1363
        %v1782 = vunpack.c.l.b16 %v1364
        %v1783 = vunpack.c.l.b16 %v1365
        %v1784 = vunpack.c.l.b16 %v1366
        %v1785 = vunpack.c.l.b16 %v1367
        %v1786 = vunpack.c.l.b16 %v1368
        %v1787 = vunpack.c.l.b16 %v1369
        %v1788 = vpack.c.b16 %v1773, %v1772
        %v1789 = vpack.c.b16 %v1775, %v1774
        %v1790 = vpack.c.b16 %v1777, %v1776
        %v1791 = vpack.c.b16 %v1779, %v1778
        %v1792 = vpack.c.b16 %v1781, %v1780
        %v1793 = vpack.c.b16 %v1783, %v1782
        %v1794 = vpack.c.b16 %v1785, %v1784
        %v1795 = vpack.c.b16 %v1787, %v1786
        %1804 = vmatpush.bf16.msra.mxu0 %v1795
        %1805 = vmatpush.bf16.msra.mxu0 %v1794
        %1806 = vmatpush.bf16.msra.mxu0 %v1793
        %1807 = vmatpush.bf16.msra.mxu0 %v1792
        %1808 = vmatpush.bf16.msra.mxu0 %v1791
        %1809 = vmatpush.bf16.msra.mxu0 %v1790
        %1810 = vmatpush.bf16.msra.mxu0 %v1789
        %1811 = vmatpush.bf16.msra.mxu0 %v1788
        %1812 = vmatmul.bf16.gmra.mxu0 %v1740
        %v1813 = vpop.f32.mrf.mxu0
        %v1814 = vadd.f32 0.0, %v1813
        %v1815 = vpop.f32.mrf.mxu0
        %v1816 = vadd.f32 0.0, %v1815
        %1817 = vmatmul.bf16.gmra.mxu0 %v1741
        %v1818 = vpop.f32.mrf.mxu0
        %v1819 = vadd.f32 0.0, %v1818
        %v1820 = vpop.f32.mrf.mxu0
        %v1821 = vadd.f32 0.0, %v1820
        %1822 = vmatmul.bf16.gmra.mxu0 %v1742
        %v1823 = vpop.f32.mrf.mxu0
        %v1824 = vadd.f32 0.0, %v1823
        %v1825 = vpop.f32.mrf.mxu0
        %v1826 = vadd.f32 0.0, %v1825
        %1827 = vmatmul.bf16.gmra.mxu0 %v1743
        %v1828 = vpop.f32.mrf.mxu0
        %v1829 = vadd.f32 0.0, %v1828
        %v1830 = vpop.f32.mrf.mxu0
        %v1831 = vadd.f32 0.0, %v1830
        %1832 = vmatmul.bf16.gmra.mxu0 %v1744
        %v1833 = vpop.f32.mrf.mxu0
        %v1834 = vadd.f32 0.0, %v1833
        %v1835 = vpop.f32.mrf.mxu0
        %v1836 = vadd.f32 0.0, %v1835
        %1837 = vmatmul.bf16.gmra.mxu0 %v1745
        %v1838 = vpop.f32.mrf.mxu0
        %v1839 = vadd.f32 0.0, %v1838
        %v1840 = vpop.f32.mrf.mxu0
        %v1841 = vadd.f32 0.0, %v1840
        %1842 = vmatmul.bf16.gmra.mxu0 %v1746
        %v1843 = vpop.f32.mrf.mxu0
        %v1844 = vadd.f32 0.0, %v1843
        %v1845 = vpop.f32.mrf.mxu0
        %v1846 = vadd.f32 0.0, %v1845
        %1847 = vmatmul.bf16.gmra.mxu0 %v1747
        %v1848 = vpop.f32.mrf.mxu0
        %v1849 = vadd.f32 0.0, %v1848
        %v1850 = vpop.f32.mrf.mxu0
        %v1851 = vadd.f32 0.0, %v1850
        %1852 = vdwg.mxu0
        %1853 = vrot.lane.b32.xlu0 %v1402, 112
        %v1854 = vpop.permute.xlu0 %1853
        %1855 = vrot.lane.b32.xlu0 %v1403, 112
        %v1856 = vpop.permute.xlu0 %1855
        %1857 = vrot.lane.b32.xlu0 %v1404, 112
        %v1858 = vpop.permute.xlu0 %1857
        %1859 = vrot.lane.b32.xlu0 %v1405, 112
        %v1860 = vpop.permute.xlu0 %1859
        %1861 = vrot.lane.b32.xlu0 %v1406, 112
        %v1862 = vpop.permute.xlu0 %1861
        %1863 = vrot.lane.b32.xlu0 %v1407, 112
        %v1864 = vpop.permute.xlu0 %1863
        %1865 = vrot.lane.b32.xlu0 %v1408, 112
        %v1866 = vpop.permute.xlu0 %1865
        %1867 = vrot.lane.b32.xlu0 %v1409, 112
        %v1868 = vpop.permute.xlu0 %1867
        %1869 = vrot.lane.b32.xlu0 %v1442, 112
        %v1870 = vpop.permute.xlu0 %1869
        %1871 = vrot.lane.b32.xlu0 %v1443, 112
        %v1872 = vpop.permute.xlu0 %1871
        %1873 = vrot.lane.b32.xlu0 %v1444, 112
        %v1874 = vpop.permute.xlu0 %1873
        %1875 = vrot.lane.b32.xlu0 %v1445, 112
        %v1876 = vpop.permute.xlu0 %1875
        %1877 = vrot.lane.b32.xlu0 %v1446, 112
        %v1878 = vpop.permute.xlu0 %1877
        %1879 = vrot.lane.b32.xlu0 %v1447, 112
        %v1880 = vpop.permute.xlu0 %1879
        %1881 = vrot.lane.b32.xlu0 %v1448, 112
        %v1882 = vpop.permute.xlu0 %1881
        %1883 = vrot.lane.b32.xlu0 %v1449, 112
        %v1884 = vpop.permute.xlu0 %1883
        %v1886 = vsel %vm1450, %v1854, 0
        %v1889 = vsel %vm1450, %v1856, 0
        %v1892 = vsel %vm1450, %v1858, 0
        %v1895 = vsel %vm1450, %v1860, 0
        %v1898 = vsel %vm1450, %v1862, 0
        %v1901 = vsel %vm1450, %v1864, 0
        %v1904 = vsel %vm1450, %v1866, 0
        %v1907 = vsel %vm1450, %v1868, 0
        %v1910 = vsel %vm1450, %v1870, 0
        %v1913 = vsel %vm1450, %v1872, 0
        %v1916 = vsel %vm1450, %v1874, 0
        %v1919 = vsel %vm1450, %v1876, 0
        %v1922 = vsel %vm1450, %v1878, 0
        %v1925 = vsel %vm1450, %v1880, 0
        %v1928 = vsel %vm1450, %v1882, 0
        %v1931 = vsel %vm1450, %v1884, 0
        %1933 = vmatpush.bf16.xpose.msra.mxu0 %v1931
        %1934 = vmatpush.bf16.xpose.msra.mxu0 %v1928
        %1935 = vmatpush.bf16.xpose.msra.mxu0 %v1925
        %1936 = vmatpush.bf16.xpose.msra.mxu0 %v1922
        %1937 = vmatpush.bf16.xpose.msra.mxu0 %v1919
        %1938 = vmatpush.bf16.xpose.msra.mxu0 %v1916
        %1939 = vmatpush.bf16.xpose.msra.mxu0 %v1913
        %1940 = vmatpush.bf16.xpose.msra.mxu0 %v1910
        %1941 = vmatmul.bf16.gmra.mxu0 %v1886
        %v1942 = vpop.f32.mrf.mxu0
        %v1943 = vadd.f32 %v991, %v1942
        %v1944 = vpop.f32.mrf.mxu0
        %v1945 = vadd.f32 %v992, %v1944
        %1946 = vmatmul.bf16.gmra.mxu0 %v1889
        %v1947 = vpop.f32.mrf.mxu0
        %v1948 = vadd.f32 %v993, %v1947
        %v1949 = vpop.f32.mrf.mxu0
        %v1950 = vadd.f32 %v994, %v1949
        %1951 = vmatmul.bf16.gmra.mxu0 %v1892
        %v1952 = vpop.f32.mrf.mxu0
        %v1953 = vadd.f32 %v995, %v1952
        %v1954 = vpop.f32.mrf.mxu0
        %v1955 = vadd.f32 %v996, %v1954
        %1956 = vmatmul.bf16.gmra.mxu0 %v1895
        %v1957 = vpop.f32.mrf.mxu0
        %v1958 = vadd.f32 %v997, %v1957
        %v1959 = vpop.f32.mrf.mxu0
        %v1960 = vadd.f32 %v998, %v1959
        %1961 = vmatmul.bf16.gmra.mxu0 %v1898
        %v1962 = vpop.f32.mrf.mxu0
        %v1963 = vadd.f32 %v999, %v1962
        %v1964 = vpop.f32.mrf.mxu0
        %v1965 = vadd.f32 %v1000, %v1964
        %1966 = vmatmul.bf16.gmra.mxu0 %v1901
        %v1967 = vpop.f32.mrf.mxu0
        %v1968 = vadd.f32 %v1001, %v1967
        %v1969 = vpop.f32.mrf.mxu0
        %v1970 = vadd.f32 %v1002, %v1969
        %1971 = vmatmul.bf16.gmra.mxu0 %v1904
        %v1972 = vpop.f32.mrf.mxu0
        %v1973 = vadd.f32 %v1003, %v1972
        %v1974 = vpop.f32.mrf.mxu0
        %v1975 = vadd.f32 %v1004, %v1974
        %1976 = vmatmul.bf16.gmra.mxu0 %v1907
        %v1977 = vpop.f32.mrf.mxu0
        %v1978 = vadd.f32 %v1005, %v1977
        %v1979 = vpop.f32.mrf.mxu0
        %v1980 = vadd.f32 %v1006, %v1979
        %1981 = vdwg.mxu0
        %1982 = vmax.xlane.f32.xlu0 %v1943
        %v1983 = vpop.xlane.xlu0 %1982
        %1984 = vmax.xlane.f32.xlu0 %v1945
        %v1985 = vpop.xlane.xlu0 %1984
        %1986 = vmax.xlane.f32.xlu0 %v1948
        %v1987 = vpop.xlane.xlu0 %1986
        %1988 = vmax.xlane.f32.xlu0 %v1950
        %v1989 = vpop.xlane.xlu0 %1988
        %1990 = vmax.xlane.f32.xlu0 %v1953
        %v1991 = vpop.xlane.xlu0 %1990
        %1992 = vmax.xlane.f32.xlu0 %v1955
        %v1993 = vpop.xlane.xlu0 %1992
        %1994 = vmax.xlane.f32.xlu0 %v1958
        %v1995 = vpop.xlane.xlu0 %1994
        %1996 = vmax.xlane.f32.xlu0 %v1960
        %v1997 = vpop.xlane.xlu0 %1996
        %1998 = vmax.xlane.f32.xlu0 %v1963
        %v1999 = vpop.xlane.xlu0 %1998
        %2000 = vmax.xlane.f32.xlu0 %v1965
        %v2001 = vpop.xlane.xlu0 %2000
        %2002 = vmax.xlane.f32.xlu0 %v1968
        %v2003 = vpop.xlane.xlu0 %2002
        %2004 = vmax.xlane.f32.xlu0 %v1970
        %v2005 = vpop.xlane.xlu0 %2004
        %2006 = vmax.xlane.f32.xlu0 %v1973
        %v2007 = vpop.xlane.xlu0 %2006
        %2008 = vmax.xlane.f32.xlu0 %v1975
        %v2009 = vpop.xlane.xlu0 %2008
        %2010 = vmax.xlane.f32.xlu0 %v1978
        %v2011 = vpop.xlane.xlu0 %2010
        %2012 = vmax.xlane.f32.xlu0 %v1980
        %v2013 = vpop.xlane.xlu0 %2012
        %v2014 = vsub.f32 %v1943, %v1983
        %v2015 = vsub.f32 %v1945, %v1985
        %v2016 = vsub.f32 %v1948, %v1987
        %v2017 = vsub.f32 %v1950, %v1989
        %v2018 = vsub.f32 %v1953, %v1991
        %v2019 = vsub.f32 %v1955, %v1993
        %v2020 = vsub.f32 %v1958, %v1995
        %v2021 = vsub.f32 %v1960, %v1997
        %v2022 = vsub.f32 %v1963, %v1999
        %v2023 = vsub.f32 %v1965, %v2001
        %v2024 = vsub.f32 %v1968, %v2003
        %v2025 = vsub.f32 %v1970, %v2005
        %v2026 = vsub.f32 %v1973, %v2007
        %v2027 = vsub.f32 %v1975, %v2009
        %v2028 = vsub.f32 %v1978, %v2011
        %v2029 = vsub.f32 %v1980, %v2013
        %v2030 = vmul.f32 %v2014, 1.442695
        %v2031 = vpow.pop %v2030
        %v2032 = vmul.f32 %v2015, 1.442695
        %v2033 = vpow.pop %v2032
        %v2034 = vmul.f32 %v2016, 1.442695
        %v2035 = vpow.pop %v2034
        %v2036 = vmul.f32 %v2017, 1.442695
        %v2037 = vpow.pop %v2036
        %v2038 = vmul.f32 %v2018, 1.442695
        %v2039 = vpow.pop %v2038
        %v2040 = vmul.f32 %v2019, 1.442695
        %v2041 = vpow.pop %v2040
        %v2042 = vmul.f32 %v2020, 1.442695
        %v2043 = vpow.pop %v2042
        %v2044 = vmul.f32 %v2021, 1.442695
        %v2045 = vpow.pop %v2044
        %v2046 = vmul.f32 %v2022, 1.442695
        %v2047 = vpow.pop %v2046
        %v2048 = vmul.f32 %v2023, 1.442695
        %v2049 = vpow.pop %v2048
        %v2050 = vmul.f32 %v2024, 1.442695
        %v2051 = vpow.pop %v2050
        %v2052 = vmul.f32 %v2025, 1.442695
        %v2053 = vpow.pop %v2052
        %v2054 = vmul.f32 %v2026, 1.442695
        %v2055 = vpow.pop %v2054
        %v2056 = vmul.f32 %v2027, 1.442695
        %v2057 = vpow.pop %v2056
        %v2058 = vmul.f32 %v2028, 1.442695
        %v2059 = vpow.pop %v2058
        %v2060 = vmul.f32 %v2029, 1.442695
        %v2061 = vpow.pop %v2060
        %2062 = vadd.xlane.f32.xlu0 %v2031
        %v2063 = vpop.xlane.xlu0 %2062
        %2064 = vadd.xlane.f32.xlu0 %v2033
        %v2065 = vpop.xlane.xlu0 %2064
        %2066 = vadd.xlane.f32.xlu0 %v2035
        %v2067 = vpop.xlane.xlu0 %2066
        %2068 = vadd.xlane.f32.xlu0 %v2037
        %v2069 = vpop.xlane.xlu0 %2068
        %2070 = vadd.xlane.f32.xlu0 %v2039
        %v2071 = vpop.xlane.xlu0 %2070
        %2072 = vadd.xlane.f32.xlu0 %v2041
        %v2073 = vpop.xlane.xlu0 %2072
        %2074 = vadd.xlane.f32.xlu0 %v2043
        %v2075 = vpop.xlane.xlu0 %2074
        %2076 = vadd.xlane.f32.xlu0 %v2045
        %v2077 = vpop.xlane.xlu0 %2076
        %2078 = vadd.xlane.f32.xlu0 %v2047
        %v2079 = vpop.xlane.xlu0 %2078
        %2080 = vadd.xlane.f32.xlu0 %v2049
        %v2081 = vpop.xlane.xlu0 %2080
        %2082 = vadd.xlane.f32.xlu0 %v2051
        %v2083 = vpop.xlane.xlu0 %2082
        %2084 = vadd.xlane.f32.xlu0 %v2053
        %v2085 = vpop.xlane.xlu0 %2084
        %2086 = vadd.xlane.f32.xlu0 %v2055
        %v2087 = vpop.xlane.xlu0 %2086
        %2088 = vadd.xlane.f32.xlu0 %v2057
        %v2089 = vpop.xlane.xlu0 %2088
        %2090 = vadd.xlane.f32.xlu0 %v2059
        %v2091 = vpop.xlane.xlu0 %2090
        %2092 = vadd.xlane.f32.xlu0 %v2061
        %v2093 = vpop.xlane.xlu0 %2092
        %v2094 = vrcp.pop %v2063
        %v2095 = vrcp.pop %v2065
        %v2096 = vrcp.pop %v2067
        %v2097 = vrcp.pop %v2069
        %v2098 = vrcp.pop %v2071
        %v2099 = vrcp.pop %v2073
        %v2100 = vrcp.pop %v2075
        %v2101 = vrcp.pop %v2077
        %v2102 = vrcp.pop %v2079
        %v2103 = vrcp.pop %v2081
        %v2104 = vrcp.pop %v2083
        %v2105 = vrcp.pop %v2085
        %v2106 = vrcp.pop %v2087
        %v2107 = vrcp.pop %v2089
        %v2108 = vrcp.pop %v2091
        %v2109 = vrcp.pop %v2093
        %v2110 = vmul.f32 %v2031, %v2094
        %v2111 = vmul.f32 %v2033, %v2095
        %v2112 = vmul.f32 %v2035, %v2096
        %v2113 = vmul.f32 %v2037, %v2097
        %v2114 = vmul.f32 %v2039, %v2098
        %v2115 = vmul.f32 %v2041, %v2099
        %v2116 = vmul.f32 %v2043, %v2100
        %v2117 = vmul.f32 %v2045, %v2101
        %v2118 = vmul.f32 %v2047, %v2102
        %v2119 = vmul.f32 %v2049, %v2103
        %v2120 = vmul.f32 %v2051, %v2104
        %v2121 = vmul.f32 %v2053, %v2105
        %v2122 = vmul.f32 %v2055, %v2106
        %v2123 = vmul.f32 %v2057, %v2107
        %v2124 = vmul.f32 %v2059, %v2108
        %v2125 = vmul.f32 %v2061, %v2109
        %v2126 = vpack.c.bf16 %v2110, %v2110
        %v2127 = vpack.c.bf16 %v2111, %v2111
        %v2128 = vpack.c.bf16 %v2112, %v2112
        %v2129 = vpack.c.bf16 %v2113, %v2113
        %v2130 = vpack.c.bf16 %v2114, %v2114
        %v2131 = vpack.c.bf16 %v2115, %v2115
        %v2132 = vpack.c.bf16 %v2116, %v2116
        %v2133 = vpack.c.bf16 %v2117, %v2117
        %v2134 = vpack.c.bf16 %v2118, %v2118
        %v2135 = vpack.c.bf16 %v2119, %v2119
        %v2136 = vpack.c.bf16 %v2120, %v2120
        %v2137 = vpack.c.bf16 %v2121, %v2121
        %v2138 = vpack.c.bf16 %v2122, %v2122
        %v2139 = vpack.c.bf16 %v2123, %v2123
        %v2140 = vpack.c.bf16 %v2124, %v2124
        %v2141 = vpack.c.bf16 %v2125, %v2125
        %v2158 = vunpack.c.l.b16 %v2126
        %v2159 = vunpack.c.l.b16 %v2127
        %v2160 = vunpack.c.l.b16 %v2128
        %v2161 = vunpack.c.l.b16 %v2129
        %v2162 = vunpack.c.l.b16 %v2130
        %v2163 = vunpack.c.l.b16 %v2131
        %v2164 = vunpack.c.l.b16 %v2132
        %v2165 = vunpack.c.l.b16 %v2133
        %v2166 = vunpack.c.l.b16 %v2134
        %v2167 = vunpack.c.l.b16 %v2135
        %v2168 = vunpack.c.l.b16 %v2136
        %v2169 = vunpack.c.l.b16 %v2137
        %v2170 = vunpack.c.l.b16 %v2138
        %v2171 = vunpack.c.l.b16 %v2139
        %v2172 = vunpack.c.l.b16 %v2140
        %v2173 = vunpack.c.l.b16 %v2141
        %v2174 = vpack.c.b16 %v2159, %v2158
        %v2175 = vpack.c.b16 %v2161, %v2160
        %v2176 = vpack.c.b16 %v2163, %v2162
        %v2177 = vpack.c.b16 %v2165, %v2164
        %v2178 = vpack.c.b16 %v2167, %v2166
        %v2179 = vpack.c.b16 %v2169, %v2168
        %v2180 = vpack.c.b16 %v2171, %v2170
        %v2181 = vpack.c.b16 %v2173, %v2172
        %2190 = vrot.lane.b32.xlu0 %v1788, 112
        %v2191 = vpop.permute.xlu0 %2190
        %2192 = vrot.lane.b32.xlu0 %v1789, 112
        %v2193 = vpop.permute.xlu0 %2192
        %2194 = vrot.lane.b32.xlu0 %v1790, 112
        %v2195 = vpop.permute.xlu0 %2194
        %2196 = vrot.lane.b32.xlu0 %v1791, 112
        %v2197 = vpop.permute.xlu0 %2196
        %2198 = vrot.lane.b32.xlu0 %v1792, 112
        %v2199 = vpop.permute.xlu0 %2198
        %2200 = vrot.lane.b32.xlu0 %v1793, 112
        %v2201 = vpop.permute.xlu0 %2200
        %2202 = vrot.lane.b32.xlu0 %v1794, 112
        %v2203 = vpop.permute.xlu0 %2202
        %2204 = vrot.lane.b32.xlu0 %v1795, 112
        %v2205 = vpop.permute.xlu0 %2204
        %2214 = vmatpush.bf16.msra.mxu0 %v2205
        %2215 = vmatpush.bf16.msra.mxu0 %v2203
        %2216 = vmatpush.bf16.msra.mxu0 %v2201
        %2217 = vmatpush.bf16.msra.mxu0 %v2199
        %2218 = vmatpush.bf16.msra.mxu0 %v2197
        %2219 = vmatpush.bf16.msra.mxu0 %v2195
        %2220 = vmatpush.bf16.msra.mxu0 %v2193
        %2221 = vmatpush.bf16.msra.mxu0 %v2191
        %2222 = vmatmul.bf16.gmra.mxu0 %v2174
        %v2223 = vpop.f32.mrf.mxu0
        %v2224 = vadd.f32 0.0, %v2223
        %v2225 = vpop.f32.mrf.mxu0
        %v2226 = vadd.f32 0.0, %v2225
        %2227 = vmatmul.bf16.gmra.mxu0 %v2175
        %v2228 = vpop.f32.mrf.mxu0
        %v2229 = vadd.f32 0.0, %v2228
        %v2230 = vpop.f32.mrf.mxu0
        %v2231 = vadd.f32 0.0, %v2230
        %2232 = vmatmul.bf16.gmra.mxu0 %v2176
        %v2233 = vpop.f32.mrf.mxu0
        %v2234 = vadd.f32 0.0, %v2233
        %v2235 = vpop.f32.mrf.mxu0
        %v2236 = vadd.f32 0.0, %v2235
        %2237 = vmatmul.bf16.gmra.mxu0 %v2177
        %v2238 = vpop.f32.mrf.mxu0
        %v2239 = vadd.f32 0.0, %v2238
        %v2240 = vpop.f32.mrf.mxu0
        %v2241 = vadd.f32 0.0, %v2240
        %2242 = vmatmul.bf16.gmra.mxu0 %v2178
        %v2243 = vpop.f32.mrf.mxu0
        %v2244 = vadd.f32 0.0, %v2243
        %v2245 = vpop.f32.mrf.mxu0
        %v2246 = vadd.f32 0.0, %v2245
        %2247 = vmatmul.bf16.gmra.mxu0 %v2179
        %v2248 = vpop.f32.mrf.mxu0
        %v2249 = vadd.f32 0.0, %v2248
        %v2250 = vpop.f32.mrf.mxu0
        %v2251 = vadd.f32 0.0, %v2250
        %2252 = vmatmul.bf16.gmra.mxu0 %v2180
        %v2253 = vpop.f32.mrf.mxu0
        %v2254 = vadd.f32 0.0, %v2253
        %v2255 = vpop.f32.mrf.mxu0
        %v2256 = vadd.f32 0.0, %v2255
        %2257 = vmatmul.bf16.gmra.mxu0 %v2181
        %v2258 = vpop.f32.mrf.mxu0
        %v2259 = vadd.f32 0.0, %v2258
        %v2260 = vpop.f32.mrf.mxu0
        %v2261 = vadd.f32 0.0, %v2260
        %2262 = vdwg.mxu0
        %2263 = vrot.lane.b32.xlu0 %v1402, 96
        %v2264 = vpop.permute.xlu0 %2263
        %2265 = vrot.lane.b32.xlu0 %v1403, 96
        %v2266 = vpop.permute.xlu0 %2265
        %2267 = vrot.lane.b32.xlu0 %v1404, 96
        %v2268 = vpop.permute.xlu0 %2267
        %2269 = vrot.lane.b32.xlu0 %v1405, 96
        %v2270 = vpop.permute.xlu0 %2269
        %2271 = vrot.lane.b32.xlu0 %v1406, 96
        %v2272 = vpop.permute.xlu0 %2271
        %2273 = vrot.lane.b32.xlu0 %v1407, 96
        %v2274 = vpop.permute.xlu0 %2273
        %2275 = vrot.lane.b32.xlu0 %v1408, 96
        %v2276 = vpop.permute.xlu0 %2275
        %2277 = vrot.lane.b32.xlu0 %v1409, 96
        %v2278 = vpop.permute.xlu0 %2277
        %2279 = vrot.lane.b32.xlu0 %v1442, 96
        %v2280 = vpop.permute.xlu0 %2279
        %2281 = vrot.lane.b32.xlu0 %v1443, 96
        %v2282 = vpop.permute.xlu0 %2281
        %2283 = vrot.lane.b32.xlu0 %v1444, 96
        %v2284 = vpop.permute.xlu0 %2283
        %2285 = vrot.lane.b32.xlu0 %v1445, 96
        %v2286 = vpop.permute.xlu0 %2285
        %2287 = vrot.lane.b32.xlu0 %v1446, 96
        %v2288 = vpop.permute.xlu0 %2287
        %2289 = vrot.lane.b32.xlu0 %v1447, 96
        %v2290 = vpop.permute.xlu0 %2289
        %2291 = vrot.lane.b32.xlu0 %v1448, 96
        %v2292 = vpop.permute.xlu0 %2291
        %2293 = vrot.lane.b32.xlu0 %v1449, 96
        %v2294 = vpop.permute.xlu0 %2293
        %v2296 = vsel %vm1450, %v2264, 0
        %v2299 = vsel %vm1450, %v2266, 0
        %v2302 = vsel %vm1450, %v2268, 0
        %v2305 = vsel %vm1450, %v2270, 0
        %v2308 = vsel %vm1450, %v2272, 0
        %v2311 = vsel %vm1450, %v2274, 0
        %v2314 = vsel %vm1450, %v2276, 0
        %v2317 = vsel %vm1450, %v2278, 0
        %v2320 = vsel %vm1450, %v2280, 0
        %v2323 = vsel %vm1450, %v2282, 0
        %v2326 = vsel %vm1450, %v2284, 0
        %v2329 = vsel %vm1450, %v2286, 0
        %v2332 = vsel %vm1450, %v2288, 0
        %v2335 = vsel %vm1450, %v2290, 0
        %v2338 = vsel %vm1450, %v2292, 0
        %v2341 = vsel %vm1450, %v2294, 0
        %2343 = vmatpush.bf16.xpose.msra.mxu0 %v2341
        %2344 = vmatpush.bf16.xpose.msra.mxu0 %v2338
        %2345 = vmatpush.bf16.xpose.msra.mxu0 %v2335
        %2346 = vmatpush.bf16.xpose.msra.mxu0 %v2332
        %2347 = vmatpush.bf16.xpose.msra.mxu0 %v2329
        %2348 = vmatpush.bf16.xpose.msra.mxu0 %v2326
        %2349 = vmatpush.bf16.xpose.msra.mxu0 %v2323
        %2350 = vmatpush.bf16.xpose.msra.mxu0 %v2320
        %2351 = vmatmul.bf16.gmra.mxu0 %v2296
        %v2352 = vpop.f32.mrf.mxu0
        %v2353 = vadd.f32 %v991, %v2352
        %v2354 = vpop.f32.mrf.mxu0
        %v2355 = vadd.f32 %v992, %v2354
        %2356 = vmatmul.bf16.gmra.mxu0 %v2299
        %v2357 = vpop.f32.mrf.mxu0
        %v2358 = vadd.f32 %v993, %v2357
        %v2359 = vpop.f32.mrf.mxu0
        %v2360 = vadd.f32 %v994, %v2359
        %2361 = vmatmul.bf16.gmra.mxu0 %v2302
        %v2362 = vpop.f32.mrf.mxu0
        %v2363 = vadd.f32 %v995, %v2362
        %v2364 = vpop.f32.mrf.mxu0
        %v2365 = vadd.f32 %v996, %v2364
        %2366 = vmatmul.bf16.gmra.mxu0 %v2305
        %v2367 = vpop.f32.mrf.mxu0
        %v2368 = vadd.f32 %v997, %v2367
        %v2369 = vpop.f32.mrf.mxu0
        %v2370 = vadd.f32 %v998, %v2369
        %2371 = vmatmul.bf16.gmra.mxu0 %v2308
        %v2372 = vpop.f32.mrf.mxu0
        %v2373 = vadd.f32 %v999, %v2372
        %v2374 = vpop.f32.mrf.mxu0
        %v2375 = vadd.f32 %v1000, %v2374
        %2376 = vmatmul.bf16.gmra.mxu0 %v2311
        %v2377 = vpop.f32.mrf.mxu0
        %v2378 = vadd.f32 %v1001, %v2377
        %v2379 = vpop.f32.mrf.mxu0
        %v2380 = vadd.f32 %v1002, %v2379
        %2381 = vmatmul.bf16.gmra.mxu0 %v2314
        %v2382 = vpop.f32.mrf.mxu0
        %v2383 = vadd.f32 %v1003, %v2382
        %v2384 = vpop.f32.mrf.mxu0
        %v2385 = vadd.f32 %v1004, %v2384
        %2386 = vmatmul.bf16.gmra.mxu0 %v2317
        %v2387 = vpop.f32.mrf.mxu0
        %v2388 = vadd.f32 %v1005, %v2387
        %v2389 = vpop.f32.mrf.mxu0
        %v2390 = vadd.f32 %v1006, %v2389
        %2391 = vdwg.mxu0
        %2392 = vmax.xlane.f32.xlu0 %v2353
        %v2393 = vpop.xlane.xlu0 %2392
        %2394 = vmax.xlane.f32.xlu0 %v2355
        %v2395 = vpop.xlane.xlu0 %2394
        %2396 = vmax.xlane.f32.xlu0 %v2358
        %v2397 = vpop.xlane.xlu0 %2396
        %2398 = vmax.xlane.f32.xlu0 %v2360
        %v2399 = vpop.xlane.xlu0 %2398
        %2400 = vmax.xlane.f32.xlu0 %v2363
        %v2401 = vpop.xlane.xlu0 %2400
        %2402 = vmax.xlane.f32.xlu0 %v2365
        %v2403 = vpop.xlane.xlu0 %2402
        %2404 = vmax.xlane.f32.xlu0 %v2368
        %v2405 = vpop.xlane.xlu0 %2404
        %2406 = vmax.xlane.f32.xlu0 %v2370
        %v2407 = vpop.xlane.xlu0 %2406
        %2408 = vmax.xlane.f32.xlu0 %v2373
        %v2409 = vpop.xlane.xlu0 %2408
        %2410 = vmax.xlane.f32.xlu0 %v2375
        %v2411 = vpop.xlane.xlu0 %2410
        %2412 = vmax.xlane.f32.xlu0 %v2378
        %v2413 = vpop.xlane.xlu0 %2412
        %2414 = vmax.xlane.f32.xlu0 %v2380
        %v2415 = vpop.xlane.xlu0 %2414
        %2416 = vmax.xlane.f32.xlu0 %v2383
        %v2417 = vpop.xlane.xlu0 %2416
        %2418 = vmax.xlane.f32.xlu0 %v2385
        %v2419 = vpop.xlane.xlu0 %2418
        %2420 = vmax.xlane.f32.xlu0 %v2388
        %v2421 = vpop.xlane.xlu0 %2420
        %2422 = vmax.xlane.f32.xlu0 %v2390
        %v2423 = vpop.xlane.xlu0 %2422
        %v2424 = vsub.f32 %v2353, %v2393
        %v2425 = vsub.f32 %v2355, %v2395
        %v2426 = vsub.f32 %v2358, %v2397
        %v2427 = vsub.f32 %v2360, %v2399
        %v2428 = vsub.f32 %v2363, %v2401
        %v2429 = vsub.f32 %v2365, %v2403
        %v2430 = vsub.f32 %v2368, %v2405
        %v2431 = vsub.f32 %v2370, %v2407
        %v2432 = vsub.f32 %v2373, %v2409
        %v2433 = vsub.f32 %v2375, %v2411
        %v2434 = vsub.f32 %v2378, %v2413
        %v2435 = vsub.f32 %v2380, %v2415
        %v2436 = vsub.f32 %v2383, %v2417
        %v2437 = vsub.f32 %v2385, %v2419
        %v2438 = vsub.f32 %v2388, %v2421
        %v2439 = vsub.f32 %v2390, %v2423
        %v2440 = vmul.f32 %v2424, 1.442695
        %v2441 = vpow.pop %v2440
        %v2442 = vmul.f32 %v2425, 1.442695
        %v2443 = vpow.pop %v2442
        %v2444 = vmul.f32 %v2426, 1.442695
        %v2445 = vpow.pop %v2444
        %v2446 = vmul.f32 %v2427, 1.442695
        %v2447 = vpow.pop %v2446
        %v2448 = vmul.f32 %v2428, 1.442695
        %v2449 = vpow.pop %v2448
        %v2450 = vmul.f32 %v2429, 1.442695
        %v2451 = vpow.pop %v2450
        %v2452 = vmul.f32 %v2430, 1.442695
        %v2453 = vpow.pop %v2452
        %v2454 = vmul.f32 %v2431, 1.442695
        %v2455 = vpow.pop %v2454
        %v2456 = vmul.f32 %v2432, 1.442695
        %v2457 = vpow.pop %v2456
        %v2458 = vmul.f32 %v2433, 1.442695
        %v2459 = vpow.pop %v2458
        %v2460 = vmul.f32 %v2434, 1.442695
        %v2461 = vpow.pop %v2460
        %v2462 = vmul.f32 %v2435, 1.442695
        %v2463 = vpow.pop %v2462
        %v2464 = vmul.f32 %v2436, 1.442695
        %v2465 = vpow.pop %v2464
        %v2466 = vmul.f32 %v2437, 1.442695
        %v2467 = vpow.pop %v2466
        %v2468 = vmul.f32 %v2438, 1.442695
        %v2469 = vpow.pop %v2468
        %v2470 = vmul.f32 %v2439, 1.442695
        %v2471 = vpow.pop %v2470
        %2472 = vadd.xlane.f32.xlu0 %v2441
        %v2473 = vpop.xlane.xlu0 %2472
        %2474 = vadd.xlane.f32.xlu0 %v2443
        %v2475 = vpop.xlane.xlu0 %2474
        %2476 = vadd.xlane.f32.xlu0 %v2445
        %v2477 = vpop.xlane.xlu0 %2476
        %2478 = vadd.xlane.f32.xlu0 %v2447
        %v2479 = vpop.xlane.xlu0 %2478
        %2480 = vadd.xlane.f32.xlu0 %v2449
        %v2481 = vpop.xlane.xlu0 %2480
        %2482 = vadd.xlane.f32.xlu0 %v2451
        %v2483 = vpop.xlane.xlu0 %2482
        %2484 = vadd.xlane.f32.xlu0 %v2453
        %v2485 = vpop.xlane.xlu0 %2484
        %2486 = vadd.xlane.f32.xlu0 %v2455
        %v2487 = vpop.xlane.xlu0 %2486
        %2488 = vadd.xlane.f32.xlu0 %v2457
        %v2489 = vpop.xlane.xlu0 %2488
        %2490 = vadd.xlane.f32.xlu0 %v2459
        %v2491 = vpop.xlane.xlu0 %2490
        %2492 = vadd.xlane.f32.xlu0 %v2461
        %v2493 = vpop.xlane.xlu0 %2492
        %2494 = vadd.xlane.f32.xlu0 %v2463
        %v2495 = vpop.xlane.xlu0 %2494
        %2496 = vadd.xlane.f32.xlu0 %v2465
        %v2497 = vpop.xlane.xlu0 %2496
        %2498 = vadd.xlane.f32.xlu0 %v2467
        %v2499 = vpop.xlane.xlu0 %2498
        %2500 = vadd.xlane.f32.xlu0 %v2469
        %v2501 = vpop.xlane.xlu0 %2500
        %2502 = vadd.xlane.f32.xlu0 %v2471
        %v2503 = vpop.xlane.xlu0 %2502
        %v2504 = vrcp.pop %v2473
        %v2505 = vrcp.pop %v2475
        %v2506 = vrcp.pop %v2477
        %v2507 = vrcp.pop %v2479
        %v2508 = vrcp.pop %v2481
        %v2509 = vrcp.pop %v2483
        %v2510 = vrcp.pop %v2485
        %v2511 = vrcp.pop %v2487
        %v2512 = vrcp.pop %v2489
        %v2513 = vrcp.pop %v2491
        %v2514 = vrcp.pop %v2493
        %v2515 = vrcp.pop %v2495
        %v2516 = vrcp.pop %v2497
        %v2517 = vrcp.pop %v2499
        %v2518 = vrcp.pop %v2501
        %v2519 = vrcp.pop %v2503
        %v2520 = vmul.f32 %v2441, %v2504
        %v2521 = vmul.f32 %v2443, %v2505
        %v2522 = vmul.f32 %v2445, %v2506
        %v2523 = vmul.f32 %v2447, %v2507
        %v2524 = vmul.f32 %v2449, %v2508
        %v2525 = vmul.f32 %v2451, %v2509
        %v2526 = vmul.f32 %v2453, %v2510
        %v2527 = vmul.f32 %v2455, %v2511
        %v2528 = vmul.f32 %v2457, %v2512
        %v2529 = vmul.f32 %v2459, %v2513
        %v2530 = vmul.f32 %v2461, %v2514
        %v2531 = vmul.f32 %v2463, %v2515
        %v2532 = vmul.f32 %v2465, %v2516
        %v2533 = vmul.f32 %v2467, %v2517
        %v2534 = vmul.f32 %v2469, %v2518
        %v2535 = vmul.f32 %v2471, %v2519
        %v2536 = vpack.c.bf16 %v2520, %v2520
        %v2537 = vpack.c.bf16 %v2521, %v2521
        %v2538 = vpack.c.bf16 %v2522, %v2522
        %v2539 = vpack.c.bf16 %v2523, %v2523
        %v2540 = vpack.c.bf16 %v2524, %v2524
        %v2541 = vpack.c.bf16 %v2525, %v2525
        %v2542 = vpack.c.bf16 %v2526, %v2526
        %v2543 = vpack.c.bf16 %v2527, %v2527
        %v2544 = vpack.c.bf16 %v2528, %v2528
        %v2545 = vpack.c.bf16 %v2529, %v2529
        %v2546 = vpack.c.bf16 %v2530, %v2530
        %v2547 = vpack.c.bf16 %v2531, %v2531
        %v2548 = vpack.c.bf16 %v2532, %v2532
        %v2549 = vpack.c.bf16 %v2533, %v2533
        %v2550 = vpack.c.bf16 %v2534, %v2534
        %v2551 = vpack.c.bf16 %v2535, %v2535
        %v2568 = vunpack.c.l.b16 %v2536
        %v2569 = vunpack.c.l.b16 %v2537
        %v2570 = vunpack.c.l.b16 %v2538
        %v2571 = vunpack.c.l.b16 %v2539
        %v2572 = vunpack.c.l.b16 %v2540
        %v2573 = vunpack.c.l.b16 %v2541
        %v2574 = vunpack.c.l.b16 %v2542
        %v2575 = vunpack.c.l.b16 %v2543
        %v2576 = vunpack.c.l.b16 %v2544
        %v2577 = vunpack.c.l.b16 %v2545
        %v2578 = vunpack.c.l.b16 %v2546
        %v2579 = vunpack.c.l.b16 %v2547
        %v2580 = vunpack.c.l.b16 %v2548
        %v2581 = vunpack.c.l.b16 %v2549
        %v2582 = vunpack.c.l.b16 %v2550
        %v2583 = vunpack.c.l.b16 %v2551
        %v2584 = vpack.c.b16 %v2569, %v2568
        %v2585 = vpack.c.b16 %v2571, %v2570
        %v2586 = vpack.c.b16 %v2573, %v2572
        %v2587 = vpack.c.b16 %v2575, %v2574
        %v2588 = vpack.c.b16 %v2577, %v2576
        %v2589 = vpack.c.b16 %v2579, %v2578
        %v2590 = vpack.c.b16 %v2581, %v2580
        %v2591 = vpack.c.b16 %v2583, %v2582
        %2600 = vrot.lane.b32.xlu0 %v1788, 96
        %v2601 = vpop.permute.xlu0 %2600
        %2602 = vrot.lane.b32.xlu0 %v1789, 96
        %v2603 = vpop.permute.xlu0 %2602
        %2604 = vrot.lane.b32.xlu0 %v1790, 96
        %v2605 = vpop.permute.xlu0 %2604
        %2606 = vrot.lane.b32.xlu0 %v1791, 96
        %v2607 = vpop.permute.xlu0 %2606
        %2608 = vrot.lane.b32.xlu0 %v1792, 96
        %v2609 = vpop.permute.xlu0 %2608
        %2610 = vrot.lane.b32.xlu0 %v1793, 96
        %v2611 = vpop.permute.xlu0 %2610
        %2612 = vrot.lane.b32.xlu0 %v1794, 96
        %v2613 = vpop.permute.xlu0 %2612
        %2614 = vrot.lane.b32.xlu0 %v1795, 96
        %v2615 = vpop.permute.xlu0 %2614
        %2624 = vmatpush.bf16.msra.mxu0 %v2615
        %2625 = vmatpush.bf16.msra.mxu0 %v2613
        %2626 = vmatpush.bf16.msra.mxu0 %v2611
        %2627 = vmatpush.bf16.msra.mxu0 %v2609
        %2628 = vmatpush.bf16.msra.mxu0 %v2607
        %2629 = vmatpush.bf16.msra.mxu0 %v2605
        %2630 = vmatpush.bf16.msra.mxu0 %v2603
        %2631 = vmatpush.bf16.msra.mxu0 %v2601
        %2632 = vmatmul.bf16.gmra.mxu0 %v2584
        %v2633 = vpop.f32.mrf.mxu0
        %v2634 = vadd.f32 0.0, %v2633
        %v2635 = vpop.f32.mrf.mxu0
        %v2636 = vadd.f32 0.0, %v2635
        %2637 = vmatmul.bf16.gmra.mxu0 %v2585
        %v2638 = vpop.f32.mrf.mxu0
        %v2639 = vadd.f32 0.0, %v2638
        %v2640 = vpop.f32.mrf.mxu0
        %v2641 = vadd.f32 0.0, %v2640
        %2642 = vmatmul.bf16.gmra.mxu0 %v2586
        %v2643 = vpop.f32.mrf.mxu0
        %v2644 = vadd.f32 0.0, %v2643
        %v2645 = vpop.f32.mrf.mxu0
        %v2646 = vadd.f32 0.0, %v2645
        %2647 = vmatmul.bf16.gmra.mxu0 %v2587
        %v2648 = vpop.f32.mrf.mxu0
        %v2649 = vadd.f32 0.0, %v2648
        %v2650 = vpop.f32.mrf.mxu0
        %v2651 = vadd.f32 0.0, %v2650
        %2652 = vmatmul.bf16.gmra.mxu0 %v2588
        %v2653 = vpop.f32.mrf.mxu0
        %v2654 = vadd.f32 0.0, %v2653
        %v2655 = vpop.f32.mrf.mxu0
        %v2656 = vadd.f32 0.0, %v2655
        %2657 = vmatmul.bf16.gmra.mxu0 %v2589
        %v2658 = vpop.f32.mrf.mxu0
        %v2659 = vadd.f32 0.0, %v2658
        %v2660 = vpop.f32.mrf.mxu0
        %v2661 = vadd.f32 0.0, %v2660
        %2662 = vmatmul.bf16.gmra.mxu0 %v2590
        %v2663 = vpop.f32.mrf.mxu0
        %v2664 = vadd.f32 0.0, %v2663
        %v2665 = vpop.f32.mrf.mxu0
        %v2666 = vadd.f32 0.0, %v2665
        %2667 = vmatmul.bf16.gmra.mxu0 %v2591
        %v2668 = vpop.f32.mrf.mxu0
        %v2669 = vadd.f32 0.0, %v2668
        %v2670 = vpop.f32.mrf.mxu0
        %v2671 = vadd.f32 0.0, %v2670
        %2672 = vdwg.mxu0
        %2673 = vrot.lane.b32.xlu0 %v1402, 80
        %v2674 = vpop.permute.xlu0 %2673
        %2675 = vrot.lane.b32.xlu0 %v1403, 80
        %v2676 = vpop.permute.xlu0 %2675
        %2677 = vrot.lane.b32.xlu0 %v1404, 80
        %v2678 = vpop.permute.xlu0 %2677
        %2679 = vrot.lane.b32.xlu0 %v1405, 80
        %v2680 = vpop.permute.xlu0 %2679
        %2681 = vrot.lane.b32.xlu0 %v1406, 80
        %v2682 = vpop.permute.xlu0 %2681
        %2683 = vrot.lane.b32.xlu0 %v1407, 80
        %v2684 = vpop.permute.xlu0 %2683
        %2685 = vrot.lane.b32.xlu0 %v1408, 80
        %v2686 = vpop.permute.xlu0 %2685
        %2687 = vrot.lane.b32.xlu0 %v1409, 80
        %v2688 = vpop.permute.xlu0 %2687
        %2689 = vrot.lane.b32.xlu0 %v1442, 80
        %v2690 = vpop.permute.xlu0 %2689
        %2691 = vrot.lane.b32.xlu0 %v1443, 80
        %v2692 = vpop.permute.xlu0 %2691
        %2693 = vrot.lane.b32.xlu0 %v1444, 80
        %v2694 = vpop.permute.xlu0 %2693
        %2695 = vrot.lane.b32.xlu0 %v1445, 80
        %v2696 = vpop.permute.xlu0 %2695
        %2697 = vrot.lane.b32.xlu0 %v1446, 80
        %v2698 = vpop.permute.xlu0 %2697
        %2699 = vrot.lane.b32.xlu0 %v1447, 80
        %v2700 = vpop.permute.xlu0 %2699
        %2701 = vrot.lane.b32.xlu0 %v1448, 80
        %v2702 = vpop.permute.xlu0 %2701
        %2703 = vrot.lane.b32.xlu0 %v1449, 80
        %v2704 = vpop.permute.xlu0 %2703
        %v2706 = vsel %vm1450, %v2674, 0
        %v2709 = vsel %vm1450, %v2676, 0
        %v2712 = vsel %vm1450, %v2678, 0
        %v2715 = vsel %vm1450, %v2680, 0
        %v2718 = vsel %vm1450, %v2682, 0
        %v2721 = vsel %vm1450, %v2684, 0
        %v2724 = vsel %vm1450, %v2686, 0
        %v2727 = vsel %vm1450, %v2688, 0
        %v2730 = vsel %vm1450, %v2690, 0
        %v2733 = vsel %vm1450, %v2692, 0
        %v2736 = vsel %vm1450, %v2694, 0
        %v2739 = vsel %vm1450, %v2696, 0
        %v2742 = vsel %vm1450, %v2698, 0
        %v2745 = vsel %vm1450, %v2700, 0
        %v2748 = vsel %vm1450, %v2702, 0
        %v2751 = vsel %vm1450, %v2704, 0
        %2753 = vmatpush.bf16.xpose.msra.mxu0 %v2751
        %2754 = vmatpush.bf16.xpose.msra.mxu0 %v2748
        %2755 = vmatpush.bf16.xpose.msra.mxu0 %v2745
        %2756 = vmatpush.bf16.xpose.msra.mxu0 %v2742
        %2757 = vmatpush.bf16.xpose.msra.mxu0 %v2739
        %2758 = vmatpush.bf16.xpose.msra.mxu0 %v2736
        %2759 = vmatpush.bf16.xpose.msra.mxu0 %v2733
        %2760 = vmatpush.bf16.xpose.msra.mxu0 %v2730
        %2761 = vmatmul.bf16.gmra.mxu0 %v2706
        %v2762 = vpop.f32.mrf.mxu0
        %v2763 = vadd.f32 %v991, %v2762
        %v2764 = vpop.f32.mrf.mxu0
        %v2765 = vadd.f32 %v992, %v2764
        %2766 = vmatmul.bf16.gmra.mxu0 %v2709
        %v2767 = vpop.f32.mrf.mxu0
        %v2768 = vadd.f32 %v993, %v2767
        %v2769 = vpop.f32.mrf.mxu0
        %v2770 = vadd.f32 %v994, %v2769
        %2771 = vmatmul.bf16.gmra.mxu0 %v2712
        %v2772 = vpop.f32.mrf.mxu0
        %v2773 = vadd.f32 %v995, %v2772
        %v2774 = vpop.f32.mrf.mxu0
        %v2775 = vadd.f32 %v996, %v2774
        %2776 = vmatmul.bf16.gmra.mxu0 %v2715
        %v2777 = vpop.f32.mrf.mxu0
        %v2778 = vadd.f32 %v997, %v2777
        %v2779 = vpop.f32.mrf.mxu0
        %v2780 = vadd.f32 %v998, %v2779
        %2781 = vmatmul.bf16.gmra.mxu0 %v2718
        %v2782 = vpop.f32.mrf.mxu0
        %v2783 = vadd.f32 %v999, %v2782
        %v2784 = vpop.f32.mrf.mxu0
        %v2785 = vadd.f32 %v1000, %v2784
        %2786 = vmatmul.bf16.gmra.mxu0 %v2721
        %v2787 = vpop.f32.mrf.mxu0
        %v2788 = vadd.f32 %v1001, %v2787
        %v2789 = vpop.f32.mrf.mxu0
        %v2790 = vadd.f32 %v1002, %v2789
        %2791 = vmatmul.bf16.gmra.mxu0 %v2724
        %v2792 = vpop.f32.mrf.mxu0
        %v2793 = vadd.f32 %v1003, %v2792
        %v2794 = vpop.f32.mrf.mxu0
        %v2795 = vadd.f32 %v1004, %v2794
        %2796 = vmatmul.bf16.gmra.mxu0 %v2727
        %v2797 = vpop.f32.mrf.mxu0
        %v2798 = vadd.f32 %v1005, %v2797
        %v2799 = vpop.f32.mrf.mxu0
        %v2800 = vadd.f32 %v1006, %v2799
        %2801 = vdwg.mxu0
        %2802 = vmax.xlane.f32.xlu0 %v2763
        %v2803 = vpop.xlane.xlu0 %2802
        %2804 = vmax.xlane.f32.xlu0 %v2765
        %v2805 = vpop.xlane.xlu0 %2804
        %2806 = vmax.xlane.f32.xlu0 %v2768
        %v2807 = vpop.xlane.xlu0 %2806
        %2808 = vmax.xlane.f32.xlu0 %v2770
        %v2809 = vpop.xlane.xlu0 %2808
        %2810 = vmax.xlane.f32.xlu0 %v2773
        %v2811 = vpop.xlane.xlu0 %2810
        %2812 = vmax.xlane.f32.xlu0 %v2775
        %v2813 = vpop.xlane.xlu0 %2812
        %2814 = vmax.xlane.f32.xlu0 %v2778
        %v2815 = vpop.xlane.xlu0 %2814
        %2816 = vmax.xlane.f32.xlu0 %v2780
        %v2817 = vpop.xlane.xlu0 %2816
        %2818 = vmax.xlane.f32.xlu0 %v2783
        %v2819 = vpop.xlane.xlu0 %2818
        %2820 = vmax.xlane.f32.xlu0 %v2785
        %v2821 = vpop.xlane.xlu0 %2820
        %2822 = vmax.xlane.f32.xlu0 %v2788
        %v2823 = vpop.xlane.xlu0 %2822
        %2824 = vmax.xlane.f32.xlu0 %v2790
        %v2825 = vpop.xlane.xlu0 %2824
        %2826 = vmax.xlane.f32.xlu0 %v2793
        %v2827 = vpop.xlane.xlu0 %2826
        %2828 = vmax.xlane.f32.xlu0 %v2795
        %v2829 = vpop.xlane.xlu0 %2828
        %2830 = vmax.xlane.f32.xlu0 %v2798
        %v2831 = vpop.xlane.xlu0 %2830
        %2832 = vmax.xlane.f32.xlu0 %v2800
        %v2833 = vpop.xlane.xlu0 %2832
        %v2834 = vsub.f32 %v2763, %v2803
        %v2835 = vsub.f32 %v2765, %v2805
        %v2836 = vsub.f32 %v2768, %v2807
        %v2837 = vsub.f32 %v2770, %v2809
        %v2838 = vsub.f32 %v2773, %v2811
        %v2839 = vsub.f32 %v2775, %v2813
        %v2840 = vsub.f32 %v2778, %v2815
        %v2841 = vsub.f32 %v2780, %v2817
        %v2842 = vsub.f32 %v2783, %v2819
        %v2843 = vsub.f32 %v2785, %v2821
        %v2844 = vsub.f32 %v2788, %v2823
        %v2845 = vsub.f32 %v2790, %v2825
        %v2846 = vsub.f32 %v2793, %v2827
        %v2847 = vsub.f32 %v2795, %v2829
        %v2848 = vsub.f32 %v2798, %v2831
        %v2849 = vsub.f32 %v2800, %v2833
        %v2850 = vmul.f32 %v2834, 1.442695
        %v2851 = vpow.pop %v2850
        %v2852 = vmul.f32 %v2835, 1.442695
        %v2853 = vpow.pop %v2852
        %v2854 = vmul.f32 %v2836, 1.442695
        %v2855 = vpow.pop %v2854
        %v2856 = vmul.f32 %v2837, 1.442695
        %v2857 = vpow.pop %v2856
        %v2858 = vmul.f32 %v2838, 1.442695
        %v2859 = vpow.pop %v2858
        %v2860 = vmul.f32 %v2839, 1.442695
        %v2861 = vpow.pop %v2860
        %v2862 = vmul.f32 %v2840, 1.442695
        %v2863 = vpow.pop %v2862
        %v2864 = vmul.f32 %v2841, 1.442695
        %v2865 = vpow.pop %v2864
        %v2866 = vmul.f32 %v2842, 1.442695
        %v2867 = vpow.pop %v2866
        %v2868 = vmul.f32 %v2843, 1.442695
        %v2869 = vpow.pop %v2868
        %v2870 = vmul.f32 %v2844, 1.442695
        %v2871 = vpow.pop %v2870
        %v2872 = vmul.f32 %v2845, 1.442695
        %v2873 = vpow.pop %v2872
        %v2874 = vmul.f32 %v2846, 1.442695
        %v2875 = vpow.pop %v2874
        %v2876 = vmul.f32 %v2847, 1.442695
        %v2877 = vpow.pop %v2876
        %v2878 = vmul.f32 %v2848, 1.442695
        %v2879 = vpow.pop %v2878
        %v2880 = vmul.f32 %v2849, 1.442695
        %v2881 = vpow.pop %v2880
        %2882 = vadd.xlane.f32.xlu0 %v2851
        %v2883 = vpop.xlane.xlu0 %2882
        %2884 = vadd.xlane.f32.xlu0 %v2853
        %v2885 = vpop.xlane.xlu0 %2884
        %2886 = vadd.xlane.f32.xlu0 %v2855
        %v2887 = vpop.xlane.xlu0 %2886
        %2888 = vadd.xlane.f32.xlu0 %v2857
        %v2889 = vpop.xlane.xlu0 %2888
        %2890 = vadd.xlane.f32.xlu0 %v2859
        %v2891 = vpop.xlane.xlu0 %2890
        %2892 = vadd.xlane.f32.xlu0 %v2861
        %v2893 = vpop.xlane.xlu0 %2892
        %2894 = vadd.xlane.f32.xlu0 %v2863
        %v2895 = vpop.xlane.xlu0 %2894
        %2896 = vadd.xlane.f32.xlu0 %v2865
        %v2897 = vpop.xlane.xlu0 %2896
        %2898 = vadd.xlane.f32.xlu0 %v2867
        %v2899 = vpop.xlane.xlu0 %2898
        %2900 = vadd.xlane.f32.xlu0 %v2869
        %v2901 = vpop.xlane.xlu0 %2900
        %2902 = vadd.xlane.f32.xlu0 %v2871
        %v2903 = vpop.xlane.xlu0 %2902
        %2904 = vadd.xlane.f32.xlu0 %v2873
        %v2905 = vpop.xlane.xlu0 %2904
        %2906 = vadd.xlane.f32.xlu0 %v2875
        %v2907 = vpop.xlane.xlu0 %2906
        %2908 = vadd.xlane.f32.xlu0 %v2877
        %v2909 = vpop.xlane.xlu0 %2908
        %2910 = vadd.xlane.f32.xlu0 %v2879
        %v2911 = vpop.xlane.xlu0 %2910
        %2912 = vadd.xlane.f32.xlu0 %v2881
        %v2913 = vpop.xlane.xlu0 %2912
        %v2914 = vrcp.pop %v2883
        %v2915 = vrcp.pop %v2885
        %v2916 = vrcp.pop %v2887
        %v2917 = vrcp.pop %v2889
        %v2918 = vrcp.pop %v2891
        %v2919 = vrcp.pop %v2893
        %v2920 = vrcp.pop %v2895
        %v2921 = vrcp.pop %v2897
        %v2922 = vrcp.pop %v2899
        %v2923 = vrcp.pop %v2901
        %v2924 = vrcp.pop %v2903
        %v2925 = vrcp.pop %v2905
        %v2926 = vrcp.pop %v2907
        %v2927 = vrcp.pop %v2909
        %v2928 = vrcp.pop %v2911
        %v2929 = vrcp.pop %v2913
        %v2930 = vmul.f32 %v2851, %v2914
        %v2931 = vmul.f32 %v2853, %v2915
        %v2932 = vmul.f32 %v2855, %v2916
        %v2933 = vmul.f32 %v2857, %v2917
        %v2934 = vmul.f32 %v2859, %v2918
        %v2935 = vmul.f32 %v2861, %v2919
        %v2936 = vmul.f32 %v2863, %v2920
        %v2937 = vmul.f32 %v2865, %v2921
        %v2938 = vmul.f32 %v2867, %v2922
        %v2939 = vmul.f32 %v2869, %v2923
        %v2940 = vmul.f32 %v2871, %v2924
        %v2941 = vmul.f32 %v2873, %v2925
        %v2942 = vmul.f32 %v2875, %v2926
        %v2943 = vmul.f32 %v2877, %v2927
        %v2944 = vmul.f32 %v2879, %v2928
        %v2945 = vmul.f32 %v2881, %v2929
        %v2946 = vpack.c.bf16 %v2930, %v2930
        %v2947 = vpack.c.bf16 %v2931, %v2931
        %v2948 = vpack.c.bf16 %v2932, %v2932
        %v2949 = vpack.c.bf16 %v2933, %v2933
        %v2950 = vpack.c.bf16 %v2934, %v2934
        %v2951 = vpack.c.bf16 %v2935, %v2935
        %v2952 = vpack.c.bf16 %v2936, %v2936
        %v2953 = vpack.c.bf16 %v2937, %v2937
        %v2954 = vpack.c.bf16 %v2938, %v2938
        %v2955 = vpack.c.bf16 %v2939, %v2939
        %v2956 = vpack.c.bf16 %v2940, %v2940
        %v2957 = vpack.c.bf16 %v2941, %v2941
        %v2958 = vpack.c.bf16 %v2942, %v2942
        %v2959 = vpack.c.bf16 %v2943, %v2943
        %v2960 = vpack.c.bf16 %v2944, %v2944
        %v2961 = vpack.c.bf16 %v2945, %v2945
        %v2978 = vunpack.c.l.b16 %v2946
        %v2979 = vunpack.c.l.b16 %v2947
        %v2980 = vunpack.c.l.b16 %v2948
        %v2981 = vunpack.c.l.b16 %v2949
        %v2982 = vunpack.c.l.b16 %v2950
        %v2983 = vunpack.c.l.b16 %v2951
        %v2984 = vunpack.c.l.b16 %v2952
        %v2985 = vunpack.c.l.b16 %v2953
        %v2986 = vunpack.c.l.b16 %v2954
        %v2987 = vunpack.c.l.b16 %v2955
        %v2988 = vunpack.c.l.b16 %v2956
        %v2989 = vunpack.c.l.b16 %v2957
        %v2990 = vunpack.c.l.b16 %v2958
        %v2991 = vunpack.c.l.b16 %v2959
        %v2992 = vunpack.c.l.b16 %v2960
        %v2993 = vunpack.c.l.b16 %v2961
        %v2994 = vpack.c.b16 %v2979, %v2978
        %v2995 = vpack.c.b16 %v2981, %v2980
        %v2996 = vpack.c.b16 %v2983, %v2982
        %v2997 = vpack.c.b16 %v2985, %v2984
        %v2998 = vpack.c.b16 %v2987, %v2986
        %v2999 = vpack.c.b16 %v2989, %v2988
        %v3000 = vpack.c.b16 %v2991, %v2990
        %v3001 = vpack.c.b16 %v2993, %v2992
        %3010 = vrot.lane.b32.xlu0 %v1788, 80
        %v3011 = vpop.permute.xlu0 %3010
        %3012 = vrot.lane.b32.xlu0 %v1789, 80
        %v3013 = vpop.permute.xlu0 %3012
        %3014 = vrot.lane.b32.xlu0 %v1790, 80
        %v3015 = vpop.permute.xlu0 %3014
        %3016 = vrot.lane.b32.xlu0 %v1791, 80
        %v3017 = vpop.permute.xlu0 %3016
        %3018 = vrot.lane.b32.xlu0 %v1792, 80
        %v3019 = vpop.permute.xlu0 %3018
        %3020 = vrot.lane.b32.xlu0 %v1793, 80
        %v3021 = vpop.permute.xlu0 %3020
        %3022 = vrot.lane.b32.xlu0 %v1794, 80
        %v3023 = vpop.permute.xlu0 %3022
        %3024 = vrot.lane.b32.xlu0 %v1795, 80
        %v3025 = vpop.permute.xlu0 %3024
        %3034 = vmatpush.bf16.msra.mxu0 %v3025
        %3035 = vmatpush.bf16.msra.mxu0 %v3023
        %3036 = vmatpush.bf16.msra.mxu0 %v3021
        %3037 = vmatpush.bf16.msra.mxu0 %v3019
        %3038 = vmatpush.bf16.msra.mxu0 %v3017
        %3039 = vmatpush.bf16.msra.mxu0 %v3015
        %3040 = vmatpush.bf16.msra.mxu0 %v3013
        %3041 = vmatpush.bf16.msra.mxu0 %v3011
        %3042 = vmatmul.bf16.gmra.mxu0 %v2994
        %v3043 = vpop.f32.mrf.mxu0
        %v3044 = vadd.f32 0.0, %v3043
        %v3045 = vpop.f32.mrf.mxu0
        %v3046 = vadd.f32 0.0, %v3045
        %3047 = vmatmul.bf16.gmra.mxu0 %v2995
        %v3048 = vpop.f32.mrf.mxu0
        %v3049 = vadd.f32 0.0, %v3048
        %v3050 = vpop.f32.mrf.mxu0
        %v3051 = vadd.f32 0.0, %v3050
        %3052 = vmatmul.bf16.gmra.mxu0 %v2996
        %v3053 = vpop.f32.mrf.mxu0
        %v3054 = vadd.f32 0.0, %v3053
        %v3055 = vpop.f32.mrf.mxu0
        %v3056 = vadd.f32 0.0, %v3055
        %3057 = vmatmul.bf16.gmra.mxu0 %v2997
        %v3058 = vpop.f32.mrf.mxu0
        %v3059 = vadd.f32 0.0, %v3058
        %v3060 = vpop.f32.mrf.mxu0
        %v3061 = vadd.f32 0.0, %v3060
        %3062 = vmatmul.bf16.gmra.mxu0 %v2998
        %v3063 = vpop.f32.mrf.mxu0
        %v3064 = vadd.f32 0.0, %v3063
        %v3065 = vpop.f32.mrf.mxu0
        %v3066 = vadd.f32 0.0, %v3065
        %3067 = vmatmul.bf16.gmra.mxu0 %v2999
        %v3068 = vpop.f32.mrf.mxu0
        %v3069 = vadd.f32 0.0, %v3068
        %v3070 = vpop.f32.mrf.mxu0
        %v3071 = vadd.f32 0.0, %v3070
        %3072 = vmatmul.bf16.gmra.mxu0 %v3000
        %v3073 = vpop.f32.mrf.mxu0
        %v3074 = vadd.f32 0.0, %v3073
        %v3075 = vpop.f32.mrf.mxu0
        %v3076 = vadd.f32 0.0, %v3075
        %3077 = vmatmul.bf16.gmra.mxu0 %v3001
        %v3078 = vpop.f32.mrf.mxu0
        %v3079 = vadd.f32 0.0, %v3078
        %v3080 = vpop.f32.mrf.mxu0
        %v3081 = vadd.f32 0.0, %v3080
        %3082 = vdwg.mxu0
        %3083 = vrot.lane.b32.xlu0 %v1402, 64
        %v3084 = vpop.permute.xlu0 %3083
        %3085 = vrot.lane.b32.xlu0 %v1403, 64
        %v3086 = vpop.permute.xlu0 %3085
        %3087 = vrot.lane.b32.xlu0 %v1404, 64
        %v3088 = vpop.permute.xlu0 %3087
        %3089 = vrot.lane.b32.xlu0 %v1405, 64
        %v3090 = vpop.permute.xlu0 %3089
        %3091 = vrot.lane.b32.xlu0 %v1406, 64
        %v3092 = vpop.permute.xlu0 %3091
        %3093 = vrot.lane.b32.xlu0 %v1407, 64
        %v3094 = vpop.permute.xlu0 %3093
        %3095 = vrot.lane.b32.xlu0 %v1408, 64
        %v3096 = vpop.permute.xlu0 %3095
        %3097 = vrot.lane.b32.xlu0 %v1409, 64
        %v3098 = vpop.permute.xlu0 %3097
        %3099 = vrot.lane.b32.xlu0 %v1442, 64
        %v3100 = vpop.permute.xlu0 %3099
        %3101 = vrot.lane.b32.xlu0 %v1443, 64
        %v3102 = vpop.permute.xlu0 %3101
        %3103 = vrot.lane.b32.xlu0 %v1444, 64
        %v3104 = vpop.permute.xlu0 %3103
        %3105 = vrot.lane.b32.xlu0 %v1445, 64
        %v3106 = vpop.permute.xlu0 %3105
        %3107 = vrot.lane.b32.xlu0 %v1446, 64
        %v3108 = vpop.permute.xlu0 %3107
        %3109 = vrot.lane.b32.xlu0 %v1447, 64
        %v3110 = vpop.permute.xlu0 %3109
        %3111 = vrot.lane.b32.xlu0 %v1448, 64
        %v3112 = vpop.permute.xlu0 %3111
        %3113 = vrot.lane.b32.xlu0 %v1449, 64
        %v3114 = vpop.permute.xlu0 %3113
        %v3116 = vsel %vm1450, %v3084, 0
        %v3119 = vsel %vm1450, %v3086, 0
        %v3122 = vsel %vm1450, %v3088, 0
        %v3125 = vsel %vm1450, %v3090, 0
        %v3128 = vsel %vm1450, %v3092, 0
        %v3131 = vsel %vm1450, %v3094, 0
        %v3134 = vsel %vm1450, %v3096, 0
        %v3137 = vsel %vm1450, %v3098, 0
        %v3140 = vsel %vm1450, %v3100, 0
        %v3143 = vsel %vm1450, %v3102, 0
        %v3146 = vsel %vm1450, %v3104, 0
        %v3149 = vsel %vm1450, %v3106, 0
        %v3152 = vsel %vm1450, %v3108, 0
        %v3155 = vsel %vm1450, %v3110, 0
        %v3158 = vsel %vm1450, %v3112, 0
        %v3161 = vsel %vm1450, %v3114, 0
        %3163 = vmatpush.bf16.xpose.msra.mxu0 %v3161
        %3164 = vmatpush.bf16.xpose.msra.mxu0 %v3158
        %3165 = vmatpush.bf16.xpose.msra.mxu0 %v3155
        %3166 = vmatpush.bf16.xpose.msra.mxu0 %v3152
        %3167 = vmatpush.bf16.xpose.msra.mxu0 %v3149
        %3168 = vmatpush.bf16.xpose.msra.mxu0 %v3146
        %3169 = vmatpush.bf16.xpose.msra.mxu0 %v3143
        %3170 = vmatpush.bf16.xpose.msra.mxu0 %v3140
        %3171 = vmatmul.bf16.gmra.mxu0 %v3116
        %v3172 = vpop.f32.mrf.mxu0
        %v3173 = vadd.f32 %v991, %v3172
        %v3174 = vpop.f32.mrf.mxu0
        %v3175 = vadd.f32 %v992, %v3174
        %3176 = vmatmul.bf16.gmra.mxu0 %v3119
        %v3177 = vpop.f32.mrf.mxu0
        %v3178 = vadd.f32 %v993, %v3177
        %v3179 = vpop.f32.mrf.mxu0
        %v3180 = vadd.f32 %v994, %v3179
        %3181 = vmatmul.bf16.gmra.mxu0 %v3122
        %v3182 = vpop.f32.mrf.mxu0
        %v3183 = vadd.f32 %v995, %v3182
        %v3184 = vpop.f32.mrf.mxu0
        %v3185 = vadd.f32 %v996, %v3184
        %3186 = vmatmul.bf16.gmra.mxu0 %v3125
        %v3187 = vpop.f32.mrf.mxu0
        %v3188 = vadd.f32 %v997, %v3187
        %v3189 = vpop.f32.mrf.mxu0
        %v3190 = vadd.f32 %v998, %v3189
        %3191 = vmatmul.bf16.gmra.mxu0 %v3128
        %v3192 = vpop.f32.mrf.mxu0
        %v3193 = vadd.f32 %v999, %v3192
        %v3194 = vpop.f32.mrf.mxu0
        %v3195 = vadd.f32 %v1000, %v3194
        %3196 = vmatmul.bf16.gmra.mxu0 %v3131
        %v3197 = vpop.f32.mrf.mxu0
        %v3198 = vadd.f32 %v1001, %v3197
        %v3199 = vpop.f32.mrf.mxu0
        %v3200 = vadd.f32 %v1002, %v3199
        %3201 = vmatmul.bf16.gmra.mxu0 %v3134
        %v3202 = vpop.f32.mrf.mxu0
        %v3203 = vadd.f32 %v1003, %v3202
        %v3204 = vpop.f32.mrf.mxu0
        %v3205 = vadd.f32 %v1004, %v3204
        %3206 = vmatmul.bf16.gmra.mxu0 %v3137
        %v3207 = vpop.f32.mrf.mxu0
        %v3208 = vadd.f32 %v1005, %v3207
        %v3209 = vpop.f32.mrf.mxu0
        %v3210 = vadd.f32 %v1006, %v3209
        %3211 = vdwg.mxu0
        %3212 = vmax.xlane.f32.xlu0 %v3173
        %v3213 = vpop.xlane.xlu0 %3212
        %3214 = vmax.xlane.f32.xlu0 %v3175
        %v3215 = vpop.xlane.xlu0 %3214
        %3216 = vmax.xlane.f32.xlu0 %v3178
        %v3217 = vpop.xlane.xlu0 %3216
        %3218 = vmax.xlane.f32.xlu0 %v3180
        %v3219 = vpop.xlane.xlu0 %3218
        %3220 = vmax.xlane.f32.xlu0 %v3183
        %v3221 = vpop.xlane.xlu0 %3220
        %3222 = vmax.xlane.f32.xlu0 %v3185
        %v3223 = vpop.xlane.xlu0 %3222
        %3224 = vmax.xlane.f32.xlu0 %v3188
        %v3225 = vpop.xlane.xlu0 %3224
        %3226 = vmax.xlane.f32.xlu0 %v3190
        %v3227 = vpop.xlane.xlu0 %3226
        %3228 = vmax.xlane.f32.xlu0 %v3193
        %v3229 = vpop.xlane.xlu0 %3228
        %3230 = vmax.xlane.f32.xlu0 %v3195
        %v3231 = vpop.xlane.xlu0 %3230
        %3232 = vmax.xlane.f32.xlu0 %v3198
        %v3233 = vpop.xlane.xlu0 %3232
        %3234 = vmax.xlane.f32.xlu0 %v3200
        %v3235 = vpop.xlane.xlu0 %3234
        %3236 = vmax.xlane.f32.xlu0 %v3203
        %v3237 = vpop.xlane.xlu0 %3236
        %3238 = vmax.xlane.f32.xlu0 %v3205
        %v3239 = vpop.xlane.xlu0 %3238
        %3240 = vmax.xlane.f32.xlu0 %v3208
        %v3241 = vpop.xlane.xlu0 %3240
        %3242 = vmax.xlane.f32.xlu0 %v3210
        %v3243 = vpop.xlane.xlu0 %3242
        %v3244 = vsub.f32 %v3173, %v3213
        %v3245 = vsub.f32 %v3175, %v3215
        %v3246 = vsub.f32 %v3178, %v3217
        %v3247 = vsub.f32 %v3180, %v3219
        %v3248 = vsub.f32 %v3183, %v3221
        %v3249 = vsub.f32 %v3185, %v3223
        %v3250 = vsub.f32 %v3188, %v3225
        %v3251 = vsub.f32 %v3190, %v3227
        %v3252 = vsub.f32 %v3193, %v3229
        %v3253 = vsub.f32 %v3195, %v3231
        %v3254 = vsub.f32 %v3198, %v3233
        %v3255 = vsub.f32 %v3200, %v3235
        %v3256 = vsub.f32 %v3203, %v3237
        %v3257 = vsub.f32 %v3205, %v3239
        %v3258 = vsub.f32 %v3208, %v3241
        %v3259 = vsub.f32 %v3210, %v3243
        %v3260 = vmul.f32 %v3244, 1.442695
        %v3261 = vpow.pop %v3260
        %v3262 = vmul.f32 %v3245, 1.442695
        %v3263 = vpow.pop %v3262
        %v3264 = vmul.f32 %v3246, 1.442695
        %v3265 = vpow.pop %v3264
        %v3266 = vmul.f32 %v3247, 1.442695
        %v3267 = vpow.pop %v3266
        %v3268 = vmul.f32 %v3248, 1.442695
        %v3269 = vpow.pop %v3268
        %v3270 = vmul.f32 %v3249, 1.442695
        %v3271 = vpow.pop %v3270
        %v3272 = vmul.f32 %v3250, 1.442695
        %v3273 = vpow.pop %v3272
        %v3274 = vmul.f32 %v3251, 1.442695
        %v3275 = vpow.pop %v3274
        %v3276 = vmul.f32 %v3252, 1.442695
        %v3277 = vpow.pop %v3276
        %v3278 = vmul.f32 %v3253, 1.442695
        %v3279 = vpow.pop %v3278
        %v3280 = vmul.f32 %v3254, 1.442695
        %v3281 = vpow.pop %v3280
        %v3282 = vmul.f32 %v3255, 1.442695
        %v3283 = vpow.pop %v3282
        %v3284 = vmul.f32 %v3256, 1.442695
        %v3285 = vpow.pop %v3284
        %v3286 = vmul.f32 %v3257, 1.442695
        %v3287 = vpow.pop %v3286
        %v3288 = vmul.f32 %v3258, 1.442695
        %v3289 = vpow.pop %v3288
        %v3290 = vmul.f32 %v3259, 1.442695
        %v3291 = vpow.pop %v3290
        %3292 = vadd.xlane.f32.xlu0 %v3261
        %v3293 = vpop.xlane.xlu0 %3292
        %3294 = vadd.xlane.f32.xlu0 %v3263
        %v3295 = vpop.xlane.xlu0 %3294
        %3296 = vadd.xlane.f32.xlu0 %v3265
        %v3297 = vpop.xlane.xlu0 %3296
        %3298 = vadd.xlane.f32.xlu0 %v3267
        %v3299 = vpop.xlane.xlu0 %3298
        %3300 = vadd.xlane.f32.xlu0 %v3269
        %v3301 = vpop.xlane.xlu0 %3300
        %3302 = vadd.xlane.f32.xlu0 %v3271
        %v3303 = vpop.xlane.xlu0 %3302
        %3304 = vadd.xlane.f32.xlu0 %v3273
        %v3305 = vpop.xlane.xlu0 %3304
        %3306 = vadd.xlane.f32.xlu0 %v3275
        %v3307 = vpop.xlane.xlu0 %3306
        %3308 = vadd.xlane.f32.xlu0 %v3277
        %v3309 = vpop.xlane.xlu0 %3308
        %3310 = vadd.xlane.f32.xlu0 %v3279
        %v3311 = vpop.xlane.xlu0 %3310
        %3312 = vadd.xlane.f32.xlu0 %v3281
        %v3313 = vpop.xlane.xlu0 %3312
        %3314 = vadd.xlane.f32.xlu0 %v3283
        %v3315 = vpop.xlane.xlu0 %3314
        %3316 = vadd.xlane.f32.xlu0 %v3285
        %v3317 = vpop.xlane.xlu0 %3316
        %3318 = vadd.xlane.f32.xlu0 %v3287
        %v3319 = vpop.xlane.xlu0 %3318
        %3320 = vadd.xlane.f32.xlu0 %v3289
        %v3321 = vpop.xlane.xlu0 %3320
        %3322 = vadd.xlane.f32.xlu0 %v3291
        %v3323 = vpop.xlane.xlu0 %3322
        %v3324 = vrcp.pop %v3293
        %v3325 = vrcp.pop %v3295
        %v3326 = vrcp.pop %v3297
        %v3327 = vrcp.pop %v3299
        %v3328 = vrcp.pop %v3301
        %v3329 = vrcp.pop %v3303
        %v3330 = vrcp.pop %v3305
        %v3331 = vrcp.pop %v3307
        %v3332 = vrcp.pop %v3309
        %v3333 = vrcp.pop %v3311
        %v3334 = vrcp.pop %v3313
        %v3335 = vrcp.pop %v3315
        %v3336 = vrcp.pop %v3317
        %v3337 = vrcp.pop %v3319
        %v3338 = vrcp.pop %v3321
        %v3339 = vrcp.pop %v3323
        %v3340 = vmul.f32 %v3261, %v3324
        %v3341 = vmul.f32 %v3263, %v3325
        %v3342 = vmul.f32 %v3265, %v3326
        %v3343 = vmul.f32 %v3267, %v3327
        %v3344 = vmul.f32 %v3269, %v3328
        %v3345 = vmul.f32 %v3271, %v3329
        %v3346 = vmul.f32 %v3273, %v3330
        %v3347 = vmul.f32 %v3275, %v3331
        %v3348 = vmul.f32 %v3277, %v3332
        %v3349 = vmul.f32 %v3279, %v3333
        %v3350 = vmul.f32 %v3281, %v3334
        %v3351 = vmul.f32 %v3283, %v3335
        %v3352 = vmul.f32 %v3285, %v3336
        %v3353 = vmul.f32 %v3287, %v3337
        %v3354 = vmul.f32 %v3289, %v3338
        %v3355 = vmul.f32 %v3291, %v3339
        %v3356 = vpack.c.bf16 %v3340, %v3340
        %v3357 = vpack.c.bf16 %v3341, %v3341
        %v3358 = vpack.c.bf16 %v3342, %v3342
        %v3359 = vpack.c.bf16 %v3343, %v3343
        %v3360 = vpack.c.bf16 %v3344, %v3344
        %v3361 = vpack.c.bf16 %v3345, %v3345
        %v3362 = vpack.c.bf16 %v3346, %v3346
        %v3363 = vpack.c.bf16 %v3347, %v3347
        %v3364 = vpack.c.bf16 %v3348, %v3348
        %v3365 = vpack.c.bf16 %v3349, %v3349
        %v3366 = vpack.c.bf16 %v3350, %v3350
        %v3367 = vpack.c.bf16 %v3351, %v3351
        %v3368 = vpack.c.bf16 %v3352, %v3352
        %v3369 = vpack.c.bf16 %v3353, %v3353
        %v3370 = vpack.c.bf16 %v3354, %v3354
        %v3371 = vpack.c.bf16 %v3355, %v3355
        %v3388 = vunpack.c.l.b16 %v3356
        %v3389 = vunpack.c.l.b16 %v3357
        %v3390 = vunpack.c.l.b16 %v3358
        %v3391 = vunpack.c.l.b16 %v3359
        %v3392 = vunpack.c.l.b16 %v3360
        %v3393 = vunpack.c.l.b16 %v3361
        %v3394 = vunpack.c.l.b16 %v3362
        %v3395 = vunpack.c.l.b16 %v3363
        %v3396 = vunpack.c.l.b16 %v3364
        %v3397 = vunpack.c.l.b16 %v3365
        %v3398 = vunpack.c.l.b16 %v3366
        %v3399 = vunpack.c.l.b16 %v3367
        %v3400 = vunpack.c.l.b16 %v3368
        %v3401 = vunpack.c.l.b16 %v3369
        %v3402 = vunpack.c.l.b16 %v3370
        %v3403 = vunpack.c.l.b16 %v3371
        %v3404 = vpack.c.b16 %v3389, %v3388
        %v3405 = vpack.c.b16 %v3391, %v3390
        %v3406 = vpack.c.b16 %v3393, %v3392
        %v3407 = vpack.c.b16 %v3395, %v3394
        %v3408 = vpack.c.b16 %v3397, %v3396
        %v3409 = vpack.c.b16 %v3399, %v3398
        %v3410 = vpack.c.b16 %v3401, %v3400
        %v3411 = vpack.c.b16 %v3403, %v3402
        %3420 = vrot.lane.b32.xlu0 %v1788, 64
        %v3421 = vpop.permute.xlu0 %3420
        %3422 = vrot.lane.b32.xlu0 %v1789, 64
        %v3423 = vpop.permute.xlu0 %3422
        %3424 = vrot.lane.b32.xlu0 %v1790, 64
        %v3425 = vpop.permute.xlu0 %3424
        %3426 = vrot.lane.b32.xlu0 %v1791, 64
        %v3427 = vpop.permute.xlu0 %3426
        %3428 = vrot.lane.b32.xlu0 %v1792, 64
        %v3429 = vpop.permute.xlu0 %3428
        %3430 = vrot.lane.b32.xlu0 %v1793, 64
        %v3431 = vpop.permute.xlu0 %3430
        %3432 = vrot.lane.b32.xlu0 %v1794, 64
        %v3433 = vpop.permute.xlu0 %3432
        %3434 = vrot.lane.b32.xlu0 %v1795, 64
        %v3435 = vpop.permute.xlu0 %3434
        %3444 = vmatpush.bf16.msra.mxu0 %v3435
        %3445 = vmatpush.bf16.msra.mxu0 %v3433
        %3446 = vmatpush.bf16.msra.mxu0 %v3431
        %3447 = vmatpush.bf16.msra.mxu0 %v3429
        %3448 = vmatpush.bf16.msra.mxu0 %v3427
        %3449 = vmatpush.bf16.msra.mxu0 %v3425
        %3450 = vmatpush.bf16.msra.mxu0 %v3423
        %3451 = vmatpush.bf16.msra.mxu0 %v3421
        %3452 = vmatmul.bf16.gmra.mxu0 %v3404
        %v3453 = vpop.f32.mrf.mxu0
        %v3454 = vadd.f32 0.0, %v3453
        %v3455 = vpop.f32.mrf.mxu0
        %v3456 = vadd.f32 0.0, %v3455
        %3457 = vmatmul.bf16.gmra.mxu0 %v3405
        %v3458 = vpop.f32.mrf.mxu0
        %v3459 = vadd.f32 0.0, %v3458
        %v3460 = vpop.f32.mrf.mxu0
        %v3461 = vadd.f32 0.0, %v3460
        %3462 = vmatmul.bf16.gmra.mxu0 %v3406
        %v3463 = vpop.f32.mrf.mxu0
        %v3464 = vadd.f32 0.0, %v3463
        %v3465 = vpop.f32.mrf.mxu0
        %v3466 = vadd.f32 0.0, %v3465
        %3467 = vmatmul.bf16.gmra.mxu0 %v3407
        %v3468 = vpop.f32.mrf.mxu0
        %v3469 = vadd.f32 0.0, %v3468
        %v3470 = vpop.f32.mrf.mxu0
        %v3471 = vadd.f32 0.0, %v3470
        %3472 = vmatmul.bf16.gmra.mxu0 %v3408
        %v3473 = vpop.f32.mrf.mxu0
        %v3474 = vadd.f32 0.0, %v3473
        %v3475 = vpop.f32.mrf.mxu0
        %v3476 = vadd.f32 0.0, %v3475
        %3477 = vmatmul.bf16.gmra.mxu0 %v3409
        %v3478 = vpop.f32.mrf.mxu0
        %v3479 = vadd.f32 0.0, %v3478
        %v3480 = vpop.f32.mrf.mxu0
        %v3481 = vadd.f32 0.0, %v3480
        %3482 = vmatmul.bf16.gmra.mxu0 %v3410
        %v3483 = vpop.f32.mrf.mxu0
        %v3484 = vadd.f32 0.0, %v3483
        %v3485 = vpop.f32.mrf.mxu0
        %v3486 = vadd.f32 0.0, %v3485
        %3487 = vmatmul.bf16.gmra.mxu0 %v3411
        %v3488 = vpop.f32.mrf.mxu0
        %v3489 = vadd.f32 0.0, %v3488
        %v3490 = vpop.f32.mrf.mxu0
        %v3491 = vadd.f32 0.0, %v3490
        %3492 = vdwg.mxu0
        %3493 = vrot.lane.b32.xlu0 %v1402, 48
        %v3494 = vpop.permute.xlu0 %3493
        %3495 = vrot.lane.b32.xlu0 %v1403, 48
        %v3496 = vpop.permute.xlu0 %3495
        %3497 = vrot.lane.b32.xlu0 %v1404, 48
        %v3498 = vpop.permute.xlu0 %3497
        %3499 = vrot.lane.b32.xlu0 %v1405, 48
        %v3500 = vpop.permute.xlu0 %3499
        %3501 = vrot.lane.b32.xlu0 %v1406, 48
        %v3502 = vpop.permute.xlu0 %3501
        %3503 = vrot.lane.b32.xlu0 %v1407, 48
        %v3504 = vpop.permute.xlu0 %3503
        %3505 = vrot.lane.b32.xlu0 %v1408, 48
        %v3506 = vpop.permute.xlu0 %3505
        %3507 = vrot.lane.b32.xlu0 %v1409, 48
        %v3508 = vpop.permute.xlu0 %3507
        %3509 = vrot.lane.b32.xlu0 %v1442, 48
        %v3510 = vpop.permute.xlu0 %3509
        %3511 = vrot.lane.b32.xlu0 %v1443, 48
        %v3512 = vpop.permute.xlu0 %3511
        %3513 = vrot.lane.b32.xlu0 %v1444, 48
        %v3514 = vpop.permute.xlu0 %3513
        %3515 = vrot.lane.b32.xlu0 %v1445, 48
        %v3516 = vpop.permute.xlu0 %3515
        %3517 = vrot.lane.b32.xlu0 %v1446, 48
        %v3518 = vpop.permute.xlu0 %3517
        %3519 = vrot.lane.b32.xlu0 %v1447, 48
        %v3520 = vpop.permute.xlu0 %3519
        %3521 = vrot.lane.b32.xlu0 %v1448, 48
        %v3522 = vpop.permute.xlu0 %3521
        %3523 = vrot.lane.b32.xlu0 %v1449, 48
        %v3524 = vpop.permute.xlu0 %3523
        %v3526 = vsel %vm1450, %v3494, 0
        %v3529 = vsel %vm1450, %v3496, 0
        %v3532 = vsel %vm1450, %v3498, 0
        %v3535 = vsel %vm1450, %v3500, 0
        %v3538 = vsel %vm1450, %v3502, 0
        %v3541 = vsel %vm1450, %v3504, 0
        %v3544 = vsel %vm1450, %v3506, 0
        %v3547 = vsel %vm1450, %v3508, 0
        %v3550 = vsel %vm1450, %v3510, 0
        %v3553 = vsel %vm1450, %v3512, 0
        %v3556 = vsel %vm1450, %v3514, 0
        %v3559 = vsel %vm1450, %v3516, 0
        %v3562 = vsel %vm1450, %v3518, 0
        %v3565 = vsel %vm1450, %v3520, 0
        %v3568 = vsel %vm1450, %v3522, 0
        %v3571 = vsel %vm1450, %v3524, 0
        %3573 = vmatpush.bf16.xpose.msra.mxu0 %v3571
        %3574 = vmatpush.bf16.xpose.msra.mxu0 %v3568
        %3575 = vmatpush.bf16.xpose.msra.mxu0 %v3565
        %3576 = vmatpush.bf16.xpose.msra.mxu0 %v3562
        %3577 = vmatpush.bf16.xpose.msra.mxu0 %v3559
        %3578 = vmatpush.bf16.xpose.msra.mxu0 %v3556
        %3579 = vmatpush.bf16.xpose.msra.mxu0 %v3553
        %3580 = vmatpush.bf16.xpose.msra.mxu0 %v3550
        %3581 = vmatmul.bf16.gmra.mxu0 %v3526
        %v3582 = vpop.f32.mrf.mxu0
        %v3583 = vadd.f32 %v991, %v3582
        %v3584 = vpop.f32.mrf.mxu0
        %v3585 = vadd.f32 %v992, %v3584
        %3586 = vmatmul.bf16.gmra.mxu0 %v3529
        %v3587 = vpop.f32.mrf.mxu0
        %v3588 = vadd.f32 %v993, %v3587
        %v3589 = vpop.f32.mrf.mxu0
        %v3590 = vadd.f32 %v994, %v3589
        %3591 = vmatmul.bf16.gmra.mxu0 %v3532
        %v3592 = vpop.f32.mrf.mxu0
        %v3593 = vadd.f32 %v995, %v3592
        %v3594 = vpop.f32.mrf.mxu0
        %v3595 = vadd.f32 %v996, %v3594
        %3596 = vmatmul.bf16.gmra.mxu0 %v3535
        %v3597 = vpop.f32.mrf.mxu0
        %v3598 = vadd.f32 %v997, %v3597
        %v3599 = vpop.f32.mrf.mxu0
        %v3600 = vadd.f32 %v998, %v3599
        %3601 = vmatmul.bf16.gmra.mxu0 %v3538
        %v3602 = vpop.f32.mrf.mxu0
        %v3603 = vadd.f32 %v999, %v3602
        %v3604 = vpop.f32.mrf.mxu0
        %v3605 = vadd.f32 %v1000, %v3604
        %3606 = vmatmul.bf16.gmra.mxu0 %v3541
        %v3607 = vpop.f32.mrf.mxu0
        %v3608 = vadd.f32 %v1001, %v3607
        %v3609 = vpop.f32.mrf.mxu0
        %v3610 = vadd.f32 %v1002, %v3609
        %3611 = vmatmul.bf16.gmra.mxu0 %v3544
        %v3612 = vpop.f32.mrf.mxu0
        %v3613 = vadd.f32 %v1003, %v3612
        %v3614 = vpop.f32.mrf.mxu0
        %v3615 = vadd.f32 %v1004, %v3614
        %3616 = vmatmul.bf16.gmra.mxu0 %v3547
        %v3617 = vpop.f32.mrf.mxu0
        %v3618 = vadd.f32 %v1005, %v3617
        %v3619 = vpop.f32.mrf.mxu0
        %v3620 = vadd.f32 %v1006, %v3619
        %3621 = vdwg.mxu0
        %3622 = vmax.xlane.f32.xlu0 %v3583
        %v3623 = vpop.xlane.xlu0 %3622
        %3624 = vmax.xlane.f32.xlu0 %v3585
        %v3625 = vpop.xlane.xlu0 %3624
        %3626 = vmax.xlane.f32.xlu0 %v3588
        %v3627 = vpop.xlane.xlu0 %3626
        %3628 = vmax.xlane.f32.xlu0 %v3590
        %v3629 = vpop.xlane.xlu0 %3628
        %3630 = vmax.xlane.f32.xlu0 %v3593
        %v3631 = vpop.xlane.xlu0 %3630
        %3632 = vmax.xlane.f32.xlu0 %v3595
        %v3633 = vpop.xlane.xlu0 %3632
        %3634 = vmax.xlane.f32.xlu0 %v3598
        %v3635 = vpop.xlane.xlu0 %3634
        %3636 = vmax.xlane.f32.xlu0 %v3600
        %v3637 = vpop.xlane.xlu0 %3636
        %3638 = vmax.xlane.f32.xlu0 %v3603
        %v3639 = vpop.xlane.xlu0 %3638
        %3640 = vmax.xlane.f32.xlu0 %v3605
        %v3641 = vpop.xlane.xlu0 %3640
        %3642 = vmax.xlane.f32.xlu0 %v3608
        %v3643 = vpop.xlane.xlu0 %3642
        %3644 = vmax.xlane.f32.xlu0 %v3610
        %v3645 = vpop.xlane.xlu0 %3644
        %3646 = vmax.xlane.f32.xlu0 %v3613
        %v3647 = vpop.xlane.xlu0 %3646
        %3648 = vmax.xlane.f32.xlu0 %v3615
        %v3649 = vpop.xlane.xlu0 %3648
        %3650 = vmax.xlane.f32.xlu0 %v3618
        %v3651 = vpop.xlane.xlu0 %3650
        %3652 = vmax.xlane.f32.xlu0 %v3620
        %v3653 = vpop.xlane.xlu0 %3652
        %v3654 = vsub.f32 %v3583, %v3623
        %v3655 = vsub.f32 %v3585, %v3625
        %v3656 = vsub.f32 %v3588, %v3627
        %v3657 = vsub.f32 %v3590, %v3629
        %v3658 = vsub.f32 %v3593, %v3631
        %v3659 = vsub.f32 %v3595, %v3633
        %v3660 = vsub.f32 %v3598, %v3635
        %v3661 = vsub.f32 %v3600, %v3637
        %v3662 = vsub.f32 %v3603, %v3639
        %v3663 = vsub.f32 %v3605, %v3641
        %v3664 = vsub.f32 %v3608, %v3643
        %v3665 = vsub.f32 %v3610, %v3645
        %v3666 = vsub.f32 %v3613, %v3647
        %v3667 = vsub.f32 %v3615, %v3649
        %v3668 = vsub.f32 %v3618, %v3651
        %v3669 = vsub.f32 %v3620, %v3653
        %v3670 = vmul.f32 %v3654, 1.442695
        %v3671 = vpow.pop %v3670
        %v3672 = vmul.f32 %v3655, 1.442695
        %v3673 = vpow.pop %v3672
        %v3674 = vmul.f32 %v3656, 1.442695
        %v3675 = vpow.pop %v3674
        %v3676 = vmul.f32 %v3657, 1.442695
        %v3677 = vpow.pop %v3676
        %v3678 = vmul.f32 %v3658, 1.442695
        %v3679 = vpow.pop %v3678
        %v3680 = vmul.f32 %v3659, 1.442695
        %v3681 = vpow.pop %v3680
        %v3682 = vmul.f32 %v3660, 1.442695
        %v3683 = vpow.pop %v3682
        %v3684 = vmul.f32 %v3661, 1.442695
        %v3685 = vpow.pop %v3684
        %v3686 = vmul.f32 %v3662, 1.442695
        %v3687 = vpow.pop %v3686
        %v3688 = vmul.f32 %v3663, 1.442695
        %v3689 = vpow.pop %v3688
        %v3690 = vmul.f32 %v3664, 1.442695
        %v3691 = vpow.pop %v3690
        %v3692 = vmul.f32 %v3665, 1.442695
        %v3693 = vpow.pop %v3692
        %v3694 = vmul.f32 %v3666, 1.442695
        %v3695 = vpow.pop %v3694
        %v3696 = vmul.f32 %v3667, 1.442695
        %v3697 = vpow.pop %v3696
        %v3698 = vmul.f32 %v3668, 1.442695
        %v3699 = vpow.pop %v3698
        %v3700 = vmul.f32 %v3669, 1.442695
        %v3701 = vpow.pop %v3700
        %3702 = vadd.xlane.f32.xlu0 %v3671
        %v3703 = vpop.xlane.xlu0 %3702
        %3704 = vadd.xlane.f32.xlu0 %v3673
        %v3705 = vpop.xlane.xlu0 %3704
        %3706 = vadd.xlane.f32.xlu0 %v3675
        %v3707 = vpop.xlane.xlu0 %3706
        %3708 = vadd.xlane.f32.xlu0 %v3677
        %v3709 = vpop.xlane.xlu0 %3708
        %3710 = vadd.xlane.f32.xlu0 %v3679
        %v3711 = vpop.xlane.xlu0 %3710
        %3712 = vadd.xlane.f32.xlu0 %v3681
        %v3713 = vpop.xlane.xlu0 %3712
        %3714 = vadd.xlane.f32.xlu0 %v3683
        %v3715 = vpop.xlane.xlu0 %3714
        %3716 = vadd.xlane.f32.xlu0 %v3685
        %v3717 = vpop.xlane.xlu0 %3716
        %3718 = vadd.xlane.f32.xlu0 %v3687
        %v3719 = vpop.xlane.xlu0 %3718
        %3720 = vadd.xlane.f32.xlu0 %v3689
        %v3721 = vpop.xlane.xlu0 %3720
        %3722 = vadd.xlane.f32.xlu0 %v3691
        %v3723 = vpop.xlane.xlu0 %3722
        %3724 = vadd.xlane.f32.xlu0 %v3693
        %v3725 = vpop.xlane.xlu0 %3724
        %3726 = vadd.xlane.f32.xlu0 %v3695
        %v3727 = vpop.xlane.xlu0 %3726
        %3728 = vadd.xlane.f32.xlu0 %v3697
        %v3729 = vpop.xlane.xlu0 %3728
        %3730 = vadd.xlane.f32.xlu0 %v3699
        %v3731 = vpop.xlane.xlu0 %3730
        %3732 = vadd.xlane.f32.xlu0 %v3701
        %v3733 = vpop.xlane.xlu0 %3732
        %v3734 = vrcp.pop %v3703
        %v3735 = vrcp.pop %v3705
        %v3736 = vrcp.pop %v3707
        %v3737 = vrcp.pop %v3709
        %v3738 = vrcp.pop %v3711
        %v3739 = vrcp.pop %v3713
        %v3740 = vrcp.pop %v3715
        %v3741 = vrcp.pop %v3717
        %v3742 = vrcp.pop %v3719
        %v3743 = vrcp.pop %v3721
        %v3744 = vrcp.pop %v3723
        %v3745 = vrcp.pop %v3725
        %v3746 = vrcp.pop %v3727
        %v3747 = vrcp.pop %v3729
        %v3748 = vrcp.pop %v3731
        %v3749 = vrcp.pop %v3733
        %v3750 = vmul.f32 %v3671, %v3734
        %v3751 = vmul.f32 %v3673, %v3735
        %v3752 = vmul.f32 %v3675, %v3736
        %v3753 = vmul.f32 %v3677, %v3737
        %v3754 = vmul.f32 %v3679, %v3738
        %v3755 = vmul.f32 %v3681, %v3739
        %v3756 = vmul.f32 %v3683, %v3740
        %v3757 = vmul.f32 %v3685, %v3741
        %v3758 = vmul.f32 %v3687, %v3742
        %v3759 = vmul.f32 %v3689, %v3743
        %v3760 = vmul.f32 %v3691, %v3744
        %v3761 = vmul.f32 %v3693, %v3745
        %v3762 = vmul.f32 %v3695, %v3746
        %v3763 = vmul.f32 %v3697, %v3747
        %v3764 = vmul.f32 %v3699, %v3748
        %v3765 = vmul.f32 %v3701, %v3749
        %v3766 = vpack.c.bf16 %v3750, %v3750
        %v3767 = vpack.c.bf16 %v3751, %v3751
        %v3768 = vpack.c.bf16 %v3752, %v3752
        %v3769 = vpack.c.bf16 %v3753, %v3753
        %v3770 = vpack.c.bf16 %v3754, %v3754
        %v3771 = vpack.c.bf16 %v3755, %v3755
        %v3772 = vpack.c.bf16 %v3756, %v3756
        %v3773 = vpack.c.bf16 %v3757, %v3757
        %v3774 = vpack.c.bf16 %v3758, %v3758
        %v3775 = vpack.c.bf16 %v3759, %v3759
        %v3776 = vpack.c.bf16 %v3760, %v3760
        %v3777 = vpack.c.bf16 %v3761, %v3761
        %v3778 = vpack.c.bf16 %v3762, %v3762
        %v3779 = vpack.c.bf16 %v3763, %v3763
        %v3780 = vpack.c.bf16 %v3764, %v3764
        %v3781 = vpack.c.bf16 %v3765, %v3765
        %v3798 = vunpack.c.l.b16 %v3766
        %v3799 = vunpack.c.l.b16 %v3767
        %v3800 = vunpack.c.l.b16 %v3768
        %v3801 = vunpack.c.l.b16 %v3769
        %v3802 = vunpack.c.l.b16 %v3770
        %v3803 = vunpack.c.l.b16 %v3771
        %v3804 = vunpack.c.l.b16 %v3772
        %v3805 = vunpack.c.l.b16 %v3773
        %v3806 = vunpack.c.l.b16 %v3774
        %v3807 = vunpack.c.l.b16 %v3775
        %v3808 = vunpack.c.l.b16 %v3776
        %v3809 = vunpack.c.l.b16 %v3777
        %v3810 = vunpack.c.l.b16 %v3778
        %v3811 = vunpack.c.l.b16 %v3779
        %v3812 = vunpack.c.l.b16 %v3780
        %v3813 = vunpack.c.l.b16 %v3781
        %v3814 = vpack.c.b16 %v3799, %v3798
        %v3815 = vpack.c.b16 %v3801, %v3800
        %v3816 = vpack.c.b16 %v3803, %v3802
        %v3817 = vpack.c.b16 %v3805, %v3804
        %v3818 = vpack.c.b16 %v3807, %v3806
        %v3819 = vpack.c.b16 %v3809, %v3808
        %v3820 = vpack.c.b16 %v3811, %v3810
        %v3821 = vpack.c.b16 %v3813, %v3812
        %3830 = vrot.lane.b32.xlu0 %v1788, 48
        %v3831 = vpop.permute.xlu0 %3830
        %3832 = vrot.lane.b32.xlu0 %v1789, 48
        %v3833 = vpop.permute.xlu0 %3832
        %3834 = vrot.lane.b32.xlu0 %v1790, 48
        %v3835 = vpop.permute.xlu0 %3834
        %3836 = vrot.lane.b32.xlu0 %v1791, 48
        %v3837 = vpop.permute.xlu0 %3836
        %3838 = vrot.lane.b32.xlu0 %v1792, 48
        %v3839 = vpop.permute.xlu0 %3838
        %3840 = vrot.lane.b32.xlu0 %v1793, 48
        %v3841 = vpop.permute.xlu0 %3840
        %3842 = vrot.lane.b32.xlu0 %v1794, 48
        %v3843 = vpop.permute.xlu0 %3842
        %3844 = vrot.lane.b32.xlu0 %v1795, 48
        %v3845 = vpop.permute.xlu0 %3844
        %3854 = vmatpush.bf16.msra.mxu0 %v3845
        %3855 = vmatpush.bf16.msra.mxu0 %v3843
        %3856 = vmatpush.bf16.msra.mxu0 %v3841
        %3857 = vmatpush.bf16.msra.mxu0 %v3839
        %3858 = vmatpush.bf16.msra.mxu0 %v3837
        %3859 = vmatpush.bf16.msra.mxu0 %v3835
        %3860 = vmatpush.bf16.msra.mxu0 %v3833
        %3861 = vmatpush.bf16.msra.mxu0 %v3831
        %3862 = vmatmul.bf16.gmra.mxu0 %v3814
        %v3863 = vpop.f32.mrf.mxu0
        %v3864 = vadd.f32 0.0, %v3863
        %v3865 = vpop.f32.mrf.mxu0
        %v3866 = vadd.f32 0.0, %v3865
        %3867 = vmatmul.bf16.gmra.mxu0 %v3815
        %v3868 = vpop.f32.mrf.mxu0
        %v3869 = vadd.f32 0.0, %v3868
        %v3870 = vpop.f32.mrf.mxu0
        %v3871 = vadd.f32 0.0, %v3870
        %3872 = vmatmul.bf16.gmra.mxu0 %v3816
        %v3873 = vpop.f32.mrf.mxu0
        %v3874 = vadd.f32 0.0, %v3873
        %v3875 = vpop.f32.mrf.mxu0
        %v3876 = vadd.f32 0.0, %v3875
        %3877 = vmatmul.bf16.gmra.mxu0 %v3817
        %v3878 = vpop.f32.mrf.mxu0
        %v3879 = vadd.f32 0.0, %v3878
        %v3880 = vpop.f32.mrf.mxu0
        %v3881 = vadd.f32 0.0, %v3880
        %3882 = vmatmul.bf16.gmra.mxu0 %v3818
        %v3883 = vpop.f32.mrf.mxu0
        %v3884 = vadd.f32 0.0, %v3883
        %v3885 = vpop.f32.mrf.mxu0
        %v3886 = vadd.f32 0.0, %v3885
        %3887 = vmatmul.bf16.gmra.mxu0 %v3819
        %v3888 = vpop.f32.mrf.mxu0
        %v3889 = vadd.f32 0.0, %v3888
        %v3890 = vpop.f32.mrf.mxu0
        %v3891 = vadd.f32 0.0, %v3890
        %3892 = vmatmul.bf16.gmra.mxu0 %v3820
        %v3893 = vpop.f32.mrf.mxu0
        %v3894 = vadd.f32 0.0, %v3893
        %v3895 = vpop.f32.mrf.mxu0
        %v3896 = vadd.f32 0.0, %v3895
        %3897 = vmatmul.bf16.gmra.mxu0 %v3821
        %v3898 = vpop.f32.mrf.mxu0
        %v3899 = vadd.f32 0.0, %v3898
        %v3900 = vpop.f32.mrf.mxu0
        %v3901 = vadd.f32 0.0, %v3900
        %3902 = vdwg.mxu0
        %3903 = vrot.lane.b32.xlu0 %v1402, 32
        %v3904 = vpop.permute.xlu0 %3903
        %3905 = vrot.lane.b32.xlu0 %v1403, 32
        %v3906 = vpop.permute.xlu0 %3905
        %3907 = vrot.lane.b32.xlu0 %v1404, 32
        %v3908 = vpop.permute.xlu0 %3907
        %3909 = vrot.lane.b32.xlu0 %v1405, 32
        %v3910 = vpop.permute.xlu0 %3909
        %3911 = vrot.lane.b32.xlu0 %v1406, 32
        %v3912 = vpop.permute.xlu0 %3911
        %3913 = vrot.lane.b32.xlu0 %v1407, 32
        %v3914 = vpop.permute.xlu0 %3913
        %3915 = vrot.lane.b32.xlu0 %v1408, 32
        %v3916 = vpop.permute.xlu0 %3915
        %3917 = vrot.lane.b32.xlu0 %v1409, 32
        %v3918 = vpop.permute.xlu0 %3917
        %3919 = vrot.lane.b32.xlu0 %v1442, 32
        %v3920 = vpop.permute.xlu0 %3919
        %3921 = vrot.lane.b32.xlu0 %v1443, 32
        %v3922 = vpop.permute.xlu0 %3921
        %3923 = vrot.lane.b32.xlu0 %v1444, 32
        %v3924 = vpop.permute.xlu0 %3923
        %3925 = vrot.lane.b32.xlu0 %v1445, 32
        %v3926 = vpop.permute.xlu0 %3925
        %3927 = vrot.lane.b32.xlu0 %v1446, 32
        %v3928 = vpop.permute.xlu0 %3927
        %3929 = vrot.lane.b32.xlu0 %v1447, 32
        %v3930 = vpop.permute.xlu0 %3929
        %3931 = vrot.lane.b32.xlu0 %v1448, 32
        %v3932 = vpop.permute.xlu0 %3931
        %3933 = vrot.lane.b32.xlu0 %v1449, 32
        %v3934 = vpop.permute.xlu0 %3933
        %v3936 = vsel %vm1450, %v3904, 0
        %v3939 = vsel %vm1450, %v3906, 0
        %v3942 = vsel %vm1450, %v3908, 0
        %v3945 = vsel %vm1450, %v3910, 0
        %v3948 = vsel %vm1450, %v3912, 0
        %v3951 = vsel %vm1450, %v3914, 0
        %v3954 = vsel %vm1450, %v3916, 0
        %v3957 = vsel %vm1450, %v3918, 0
        %v3960 = vsel %vm1450, %v3920, 0
        %v3963 = vsel %vm1450, %v3922, 0
        %v3966 = vsel %vm1450, %v3924, 0
        %v3969 = vsel %vm1450, %v3926, 0
        %v3972 = vsel %vm1450, %v3928, 0
        %v3975 = vsel %vm1450, %v3930, 0
        %v3978 = vsel %vm1450, %v3932, 0
        %v3981 = vsel %vm1450, %v3934, 0
        %3983 = vmatpush.bf16.xpose.msra.mxu0 %v3981
        %3984 = vmatpush.bf16.xpose.msra.mxu0 %v3978
        %3985 = vmatpush.bf16.xpose.msra.mxu0 %v3975
        %3986 = vmatpush.bf16.xpose.msra.mxu0 %v3972
        %3987 = vmatpush.bf16.xpose.msra.mxu0 %v3969
        %3988 = vmatpush.bf16.xpose.msra.mxu0 %v3966
        %3989 = vmatpush.bf16.xpose.msra.mxu0 %v3963
        %3990 = vmatpush.bf16.xpose.msra.mxu0 %v3960
        %3991 = vmatmul.bf16.gmra.mxu0 %v3936
        %v3992 = vpop.f32.mrf.mxu0
        %v3993 = vadd.f32 %v991, %v3992
        %v3994 = vpop.f32.mrf.mxu0
        %v3995 = vadd.f32 %v992, %v3994
        %3996 = vmatmul.bf16.gmra.mxu0 %v3939
        %v3997 = vpop.f32.mrf.mxu0
        %v3998 = vadd.f32 %v993, %v3997
        %v3999 = vpop.f32.mrf.mxu0
        %v4000 = vadd.f32 %v994, %v3999
        %4001 = vmatmul.bf16.gmra.mxu0 %v3942
        %v4002 = vpop.f32.mrf.mxu0
        %v4003 = vadd.f32 %v995, %v4002
        %v4004 = vpop.f32.mrf.mxu0
        %v4005 = vadd.f32 %v996, %v4004
        %4006 = vmatmul.bf16.gmra.mxu0 %v3945
        %v4007 = vpop.f32.mrf.mxu0
        %v4008 = vadd.f32 %v997, %v4007
        %v4009 = vpop.f32.mrf.mxu0
        %v4010 = vadd.f32 %v998, %v4009
        %4011 = vmatmul.bf16.gmra.mxu0 %v3948
        %v4012 = vpop.f32.mrf.mxu0
        %v4013 = vadd.f32 %v999, %v4012
        %v4014 = vpop.f32.mrf.mxu0
        %v4015 = vadd.f32 %v1000, %v4014
        %4016 = vmatmul.bf16.gmra.mxu0 %v3951
        %v4017 = vpop.f32.mrf.mxu0
        %v4018 = vadd.f32 %v1001, %v4017
        %v4019 = vpop.f32.mrf.mxu0
        %v4020 = vadd.f32 %v1002, %v4019
        %4021 = vmatmul.bf16.gmra.mxu0 %v3954
        %v4022 = vpop.f32.mrf.mxu0
        %v4023 = vadd.f32 %v1003, %v4022
        %v4024 = vpop.f32.mrf.mxu0
        %v4025 = vadd.f32 %v1004, %v4024
        %4026 = vmatmul.bf16.gmra.mxu0 %v3957
        %v4027 = vpop.f32.mrf.mxu0
        %v4028 = vadd.f32 %v1005, %v4027
        %v4029 = vpop.f32.mrf.mxu0
        %v4030 = vadd.f32 %v1006, %v4029
        %4031 = vdwg.mxu0
        %4032 = vmax.xlane.f32.xlu0 %v3993
        %v4033 = vpop.xlane.xlu0 %4032
        %4034 = vmax.xlane.f32.xlu0 %v3995
        %v4035 = vpop.xlane.xlu0 %4034
        %4036 = vmax.xlane.f32.xlu0 %v3998
        %v4037 = vpop.xlane.xlu0 %4036
        %4038 = vmax.xlane.f32.xlu0 %v4000
        %v4039 = vpop.xlane.xlu0 %4038
        %4040 = vmax.xlane.f32.xlu0 %v4003
        %v4041 = vpop.xlane.xlu0 %4040
        %4042 = vmax.xlane.f32.xlu0 %v4005
        %v4043 = vpop.xlane.xlu0 %4042
        %4044 = vmax.xlane.f32.xlu0 %v4008
        %v4045 = vpop.xlane.xlu0 %4044
        %4046 = vmax.xlane.f32.xlu0 %v4010
        %v4047 = vpop.xlane.xlu0 %4046
        %4048 = vmax.xlane.f32.xlu0 %v4013
        %v4049 = vpop.xlane.xlu0 %4048
        %4050 = vmax.xlane.f32.xlu0 %v4015
        %v4051 = vpop.xlane.xlu0 %4050
        %4052 = vmax.xlane.f32.xlu0 %v4018
        %v4053 = vpop.xlane.xlu0 %4052
        %4054 = vmax.xlane.f32.xlu0 %v4020
        %v4055 = vpop.xlane.xlu0 %4054
        %4056 = vmax.xlane.f32.xlu0 %v4023
        %v4057 = vpop.xlane.xlu0 %4056
        %4058 = vmax.xlane.f32.xlu0 %v4025
        %v4059 = vpop.xlane.xlu0 %4058
        %4060 = vmax.xlane.f32.xlu0 %v4028
        %v4061 = vpop.xlane.xlu0 %4060
        %4062 = vmax.xlane.f32.xlu0 %v4030
        %v4063 = vpop.xlane.xlu0 %4062
        %v4064 = vsub.f32 %v3993, %v4033
        %v4065 = vsub.f32 %v3995, %v4035
        %v4066 = vsub.f32 %v3998, %v4037
        %v4067 = vsub.f32 %v4000, %v4039
        %v4068 = vsub.f32 %v4003, %v4041
        %v4069 = vsub.f32 %v4005, %v4043
        %v4070 = vsub.f32 %v4008, %v4045
        %v4071 = vsub.f32 %v4010, %v4047
        %v4072 = vsub.f32 %v4013, %v4049
        %v4073 = vsub.f32 %v4015, %v4051
        %v4074 = vsub.f32 %v4018, %v4053
        %v4075 = vsub.f32 %v4020, %v4055
        %v4076 = vsub.f32 %v4023, %v4057
        %v4077 = vsub.f32 %v4025, %v4059
        %v4078 = vsub.f32 %v4028, %v4061
        %v4079 = vsub.f32 %v4030, %v4063
        %v4080 = vmul.f32 %v4064, 1.442695
        %v4081 = vpow.pop %v4080
        %v4082 = vmul.f32 %v4065, 1.442695
        %v4083 = vpow.pop %v4082
        %v4084 = vmul.f32 %v4066, 1.442695
        %v4085 = vpow.pop %v4084
        %v4086 = vmul.f32 %v4067, 1.442695
        %v4087 = vpow.pop %v4086
        %v4088 = vmul.f32 %v4068, 1.442695
        %v4089 = vpow.pop %v4088
        %v4090 = vmul.f32 %v4069, 1.442695
        %v4091 = vpow.pop %v4090
        %v4092 = vmul.f32 %v4070, 1.442695
        %v4093 = vpow.pop %v4092
        %v4094 = vmul.f32 %v4071, 1.442695
        %v4095 = vpow.pop %v4094
        %v4096 = vmul.f32 %v4072, 1.442695
        %v4097 = vpow.pop %v4096
        %v4098 = vmul.f32 %v4073, 1.442695
        %v4099 = vpow.pop %v4098
        %v4100 = vmul.f32 %v4074, 1.442695
        %v4101 = vpow.pop %v4100
        %v4102 = vmul.f32 %v4075, 1.442695
        %v4103 = vpow.pop %v4102
        %v4104 = vmul.f32 %v4076, 1.442695
        %v4105 = vpow.pop %v4104
        %v4106 = vmul.f32 %v4077, 1.442695
        %v4107 = vpow.pop %v4106
        %v4108 = vmul.f32 %v4078, 1.442695
        %v4109 = vpow.pop %v4108
        %v4110 = vmul.f32 %v4079, 1.442695
        %v4111 = vpow.pop %v4110
        %4112 = vadd.xlane.f32.xlu0 %v4081
        %v4113 = vpop.xlane.xlu0 %4112
        %4114 = vadd.xlane.f32.xlu0 %v4083
        %v4115 = vpop.xlane.xlu0 %4114
        %4116 = vadd.xlane.f32.xlu0 %v4085
        %v4117 = vpop.xlane.xlu0 %4116
        %4118 = vadd.xlane.f32.xlu0 %v4087
        %v4119 = vpop.xlane.xlu0 %4118
        %4120 = vadd.xlane.f32.xlu0 %v4089
        %v4121 = vpop.xlane.xlu0 %4120
        %4122 = vadd.xlane.f32.xlu0 %v4091
        %v4123 = vpop.xlane.xlu0 %4122
        %4124 = vadd.xlane.f32.xlu0 %v4093
        %v4125 = vpop.xlane.xlu0 %4124
        %4126 = vadd.xlane.f32.xlu0 %v4095
        %v4127 = vpop.xlane.xlu0 %4126
        %4128 = vadd.xlane.f32.xlu0 %v4097
        %v4129 = vpop.xlane.xlu0 %4128
        %4130 = vadd.xlane.f32.xlu0 %v4099
        %v4131 = vpop.xlane.xlu0 %4130
        %4132 = vadd.xlane.f32.xlu0 %v4101
        %v4133 = vpop.xlane.xlu0 %4132
        %4134 = vadd.xlane.f32.xlu0 %v4103
        %v4135 = vpop.xlane.xlu0 %4134
        %4136 = vadd.xlane.f32.xlu0 %v4105
        %v4137 = vpop.xlane.xlu0 %4136
        %4138 = vadd.xlane.f32.xlu0 %v4107
        %v4139 = vpop.xlane.xlu0 %4138
        %4140 = vadd.xlane.f32.xlu0 %v4109
        %v4141 = vpop.xlane.xlu0 %4140
        %4142 = vadd.xlane.f32.xlu0 %v4111
        %v4143 = vpop.xlane.xlu0 %4142
        %v4144 = vrcp.pop %v4113
        %v4145 = vrcp.pop %v4115
        %v4146 = vrcp.pop %v4117
        %v4147 = vrcp.pop %v4119
        %v4148 = vrcp.pop %v4121
        %v4149 = vrcp.pop %v4123
        %v4150 = vrcp.pop %v4125
        %v4151 = vrcp.pop %v4127
        %v4152 = vrcp.pop %v4129
        %v4153 = vrcp.pop %v4131
        %v4154 = vrcp.pop %v4133
        %v4155 = vrcp.pop %v4135
        %v4156 = vrcp.pop %v4137
        %v4157 = vrcp.pop %v4139
        %v4158 = vrcp.pop %v4141
        %v4159 = vrcp.pop %v4143
        %v4160 = vmul.f32 %v4081, %v4144
        %v4161 = vmul.f32 %v4083, %v4145
        %v4162 = vmul.f32 %v4085, %v4146
        %v4163 = vmul.f32 %v4087, %v4147
        %v4164 = vmul.f32 %v4089, %v4148
        %v4165 = vmul.f32 %v4091, %v4149
        %v4166 = vmul.f32 %v4093, %v4150
        %v4167 = vmul.f32 %v4095, %v4151
        %v4168 = vmul.f32 %v4097, %v4152
        %v4169 = vmul.f32 %v4099, %v4153
        %v4170 = vmul.f32 %v4101, %v4154
        %v4171 = vmul.f32 %v4103, %v4155
        %v4172 = vmul.f32 %v4105, %v4156
        %v4173 = vmul.f32 %v4107, %v4157
        %v4174 = vmul.f32 %v4109, %v4158
        %v4175 = vmul.f32 %v4111, %v4159
        %v4176 = vpack.c.bf16 %v4160, %v4160
        %v4177 = vpack.c.bf16 %v4161, %v4161
        %v4178 = vpack.c.bf16 %v4162, %v4162
        %v4179 = vpack.c.bf16 %v4163, %v4163
        %v4180 = vpack.c.bf16 %v4164, %v4164
        %v4181 = vpack.c.bf16 %v4165, %v4165
        %v4182 = vpack.c.bf16 %v4166, %v4166
        %v4183 = vpack.c.bf16 %v4167, %v4167
        %v4184 = vpack.c.bf16 %v4168, %v4168
        %v4185 = vpack.c.bf16 %v4169, %v4169
        %v4186 = vpack.c.bf16 %v4170, %v4170
        %v4187 = vpack.c.bf16 %v4171, %v4171
        %v4188 = vpack.c.bf16 %v4172, %v4172
        %v4189 = vpack.c.bf16 %v4173, %v4173
        %v4190 = vpack.c.bf16 %v4174, %v4174
        %v4191 = vpack.c.bf16 %v4175, %v4175
        %v4208 = vunpack.c.l.b16 %v4176
        %v4209 = vunpack.c.l.b16 %v4177
        %v4210 = vunpack.c.l.b16 %v4178
        %v4211 = vunpack.c.l.b16 %v4179
        %v4212 = vunpack.c.l.b16 %v4180
        %v4213 = vunpack.c.l.b16 %v4181
        %v4214 = vunpack.c.l.b16 %v4182
        %v4215 = vunpack.c.l.b16 %v4183
        %v4216 = vunpack.c.l.b16 %v4184
        %v4217 = vunpack.c.l.b16 %v4185
        %v4218 = vunpack.c.l.b16 %v4186
        %v4219 = vunpack.c.l.b16 %v4187
        %v4220 = vunpack.c.l.b16 %v4188
        %v4221 = vunpack.c.l.b16 %v4189
        %v4222 = vunpack.c.l.b16 %v4190
        %v4223 = vunpack.c.l.b16 %v4191
        %v4224 = vpack.c.b16 %v4209, %v4208
        %v4225 = vpack.c.b16 %v4211, %v4210
        %v4226 = vpack.c.b16 %v4213, %v4212
        %v4227 = vpack.c.b16 %v4215, %v4214
        %v4228 = vpack.c.b16 %v4217, %v4216
        %v4229 = vpack.c.b16 %v4219, %v4218
        %v4230 = vpack.c.b16 %v4221, %v4220
        %v4231 = vpack.c.b16 %v4223, %v4222
        %4240 = vrot.lane.b32.xlu0 %v1788, 32
        %v4241 = vpop.permute.xlu0 %4240
        %4242 = vrot.lane.b32.xlu0 %v1789, 32
        %v4243 = vpop.permute.xlu0 %4242
        %4244 = vrot.lane.b32.xlu0 %v1790, 32
        %v4245 = vpop.permute.xlu0 %4244
        %4246 = vrot.lane.b32.xlu0 %v1791, 32
        %v4247 = vpop.permute.xlu0 %4246
        %4248 = vrot.lane.b32.xlu0 %v1792, 32
        %v4249 = vpop.permute.xlu0 %4248
        %4250 = vrot.lane.b32.xlu0 %v1793, 32
        %v4251 = vpop.permute.xlu0 %4250
        %4252 = vrot.lane.b32.xlu0 %v1794, 32
        %v4253 = vpop.permute.xlu0 %4252
        %4254 = vrot.lane.b32.xlu0 %v1795, 32
        %v4255 = vpop.permute.xlu0 %4254
        %4264 = vmatpush.bf16.msra.mxu0 %v4255
        %4265 = vmatpush.bf16.msra.mxu0 %v4253
        %4266 = vmatpush.bf16.msra.mxu0 %v4251
        %4267 = vmatpush.bf16.msra.mxu0 %v4249
        %4268 = vmatpush.bf16.msra.mxu0 %v4247
        %4269 = vmatpush.bf16.msra.mxu0 %v4245
        %4270 = vmatpush.bf16.msra.mxu0 %v4243
        %4271 = vmatpush.bf16.msra.mxu0 %v4241
        %4272 = vmatmul.bf16.gmra.mxu0 %v4224
        %v4273 = vpop.f32.mrf.mxu0
        %v4274 = vadd.f32 0.0, %v4273
        %v4275 = vpop.f32.mrf.mxu0
        %v4276 = vadd.f32 0.0, %v4275
        %4277 = vmatmul.bf16.gmra.mxu0 %v4225
        %v4278 = vpop.f32.mrf.mxu0
        %v4279 = vadd.f32 0.0, %v4278
        %v4280 = vpop.f32.mrf.mxu0
        %v4281 = vadd.f32 0.0, %v4280
        %4282 = vmatmul.bf16.gmra.mxu0 %v4226
        %v4283 = vpop.f32.mrf.mxu0
        %v4284 = vadd.f32 0.0, %v4283
        %v4285 = vpop.f32.mrf.mxu0
        %v4286 = vadd.f32 0.0, %v4285
        %4287 = vmatmul.bf16.gmra.mxu0 %v4227
        %v4288 = vpop.f32.mrf.mxu0
        %v4289 = vadd.f32 0.0, %v4288
        %v4290 = vpop.f32.mrf.mxu0
        %v4291 = vadd.f32 0.0, %v4290
        %4292 = vmatmul.bf16.gmra.mxu0 %v4228
        %v4293 = vpop.f32.mrf.mxu0
        %v4294 = vadd.f32 0.0, %v4293
        %v4295 = vpop.f32.mrf.mxu0
        %v4296 = vadd.f32 0.0, %v4295
        %4297 = vmatmul.bf16.gmra.mxu0 %v4229
        %v4298 = vpop.f32.mrf.mxu0
        %v4299 = vadd.f32 0.0, %v4298
        %v4300 = vpop.f32.mrf.mxu0
        %v4301 = vadd.f32 0.0, %v4300
        %4302 = vmatmul.bf16.gmra.mxu0 %v4230
        %v4303 = vpop.f32.mrf.mxu0
        %v4304 = vadd.f32 0.0, %v4303
        %v4305 = vpop.f32.mrf.mxu0
        %v4306 = vadd.f32 0.0, %v4305
        %4307 = vmatmul.bf16.gmra.mxu0 %v4231
        %v4308 = vpop.f32.mrf.mxu0
        %v4309 = vadd.f32 0.0, %v4308
        %v4310 = vpop.f32.mrf.mxu0
        %v4311 = vadd.f32 0.0, %v4310
        %4312 = vdwg.mxu0
        %4313 = vrot.lane.b32.xlu0 %v1402, 16
        %v4314 = vpop.permute.xlu0 %4313
        %4315 = vrot.lane.b32.xlu0 %v1403, 16
        %v4316 = vpop.permute.xlu0 %4315
        %4317 = vrot.lane.b32.xlu0 %v1404, 16
        %v4318 = vpop.permute.xlu0 %4317
        %4319 = vrot.lane.b32.xlu0 %v1405, 16
        %v4320 = vpop.permute.xlu0 %4319
        %4321 = vrot.lane.b32.xlu0 %v1406, 16
        %v4322 = vpop.permute.xlu0 %4321
        %4323 = vrot.lane.b32.xlu0 %v1407, 16
        %v4324 = vpop.permute.xlu0 %4323
        %4325 = vrot.lane.b32.xlu0 %v1408, 16
        %v4326 = vpop.permute.xlu0 %4325
        %4327 = vrot.lane.b32.xlu0 %v1409, 16
        %v4328 = vpop.permute.xlu0 %4327
        %4329 = vrot.lane.b32.xlu0 %v1442, 16
        %v4330 = vpop.permute.xlu0 %4329
        %4331 = vrot.lane.b32.xlu0 %v1443, 16
        %v4332 = vpop.permute.xlu0 %4331
        %4333 = vrot.lane.b32.xlu0 %v1444, 16
        %v4334 = vpop.permute.xlu0 %4333
        %4335 = vrot.lane.b32.xlu0 %v1445, 16
        %v4336 = vpop.permute.xlu0 %4335
        %4337 = vrot.lane.b32.xlu0 %v1446, 16
        %v4338 = vpop.permute.xlu0 %4337
        %4339 = vrot.lane.b32.xlu0 %v1447, 16
        %v4340 = vpop.permute.xlu0 %4339
        %4341 = vrot.lane.b32.xlu0 %v1448, 16
        %v4342 = vpop.permute.xlu0 %4341
        %4343 = vrot.lane.b32.xlu0 %v1449, 16
        %v4344 = vpop.permute.xlu0 %4343
        %v4346 = vsel %vm1450, %v4314, 0
        %v4349 = vsel %vm1450, %v4316, 0
        %v4352 = vsel %vm1450, %v4318, 0
        %v4355 = vsel %vm1450, %v4320, 0
        %v4358 = vsel %vm1450, %v4322, 0
        %v4361 = vsel %vm1450, %v4324, 0
        %v4364 = vsel %vm1450, %v4326, 0
        %v4367 = vsel %vm1450, %v4328, 0
        %v4370 = vsel %vm1450, %v4330, 0
        %v4373 = vsel %vm1450, %v4332, 0
        %v4376 = vsel %vm1450, %v4334, 0
        %v4379 = vsel %vm1450, %v4336, 0
        %v4382 = vsel %vm1450, %v4338, 0
        %v4385 = vsel %vm1450, %v4340, 0
        %v4388 = vsel %vm1450, %v4342, 0
        %v4391 = vsel %vm1450, %v4344, 0
        %4393 = vmatpush.bf16.xpose.msra.mxu0 %v4391
        %4394 = vmatpush.bf16.xpose.msra.mxu0 %v4388
        %4395 = vmatpush.bf16.xpose.msra.mxu0 %v4385
        %4396 = vmatpush.bf16.xpose.msra.mxu0 %v4382
        %4397 = vmatpush.bf16.xpose.msra.mxu0 %v4379
        %4398 = vmatpush.bf16.xpose.msra.mxu0 %v4376
        %4399 = vmatpush.bf16.xpose.msra.mxu0 %v4373
        %4400 = vmatpush.bf16.xpose.msra.mxu0 %v4370
        %4401 = vmatmul.bf16.gmra.mxu0 %v4346
        %v4402 = vpop.f32.mrf.mxu0
        %v4403 = vadd.f32 %v991, %v4402
        %v4404 = vpop.f32.mrf.mxu0
        %v4405 = vadd.f32 %v992, %v4404
        %4406 = vmatmul.bf16.gmra.mxu0 %v4349
        %v4407 = vpop.f32.mrf.mxu0
        %v4408 = vadd.f32 %v993, %v4407
        %v4409 = vpop.f32.mrf.mxu0
        %v4410 = vadd.f32 %v994, %v4409
        %4411 = vmatmul.bf16.gmra.mxu0 %v4352
        %v4412 = vpop.f32.mrf.mxu0
        %v4413 = vadd.f32 %v995, %v4412
        %v4414 = vpop.f32.mrf.mxu0
        %v4415 = vadd.f32 %v996, %v4414
        %4416 = vmatmul.bf16.gmra.mxu0 %v4355
        %v4417 = vpop.f32.mrf.mxu0
        %v4418 = vadd.f32 %v997, %v4417
        %v4419 = vpop.f32.mrf.mxu0
        %v4420 = vadd.f32 %v998, %v4419
        %4421 = vmatmul.bf16.gmra.mxu0 %v4358
        %v4422 = vpop.f32.mrf.mxu0
        %v4423 = vadd.f32 %v999, %v4422
        %v4424 = vpop.f32.mrf.mxu0
        %v4425 = vadd.f32 %v1000, %v4424
        %4426 = vmatmul.bf16.gmra.mxu0 %v4361
        %v4427 = vpop.f32.mrf.mxu0
        %v4428 = vadd.f32 %v1001, %v4427
        %v4429 = vpop.f32.mrf.mxu0
        %v4430 = vadd.f32 %v1002, %v4429
        %4431 = vmatmul.bf16.gmra.mxu0 %v4364
        %v4432 = vpop.f32.mrf.mxu0
        %v4433 = vadd.f32 %v1003, %v4432
        %v4434 = vpop.f32.mrf.mxu0
        %v4435 = vadd.f32 %v1004, %v4434
        %4436 = vmatmul.bf16.gmra.mxu0 %v4367
        %v4437 = vpop.f32.mrf.mxu0
        %v4438 = vadd.f32 %v1005, %v4437
        %v4439 = vpop.f32.mrf.mxu0
        %v4440 = vadd.f32 %v1006, %v4439
        %4441 = vdwg.mxu0
        %4442 = vmax.xlane.f32.xlu0 %v4403
        %v4443 = vpop.xlane.xlu0 %4442
        %4444 = vmax.xlane.f32.xlu0 %v4405
        %v4445 = vpop.xlane.xlu0 %4444
        %4446 = vmax.xlane.f32.xlu0 %v4408
        %v4447 = vpop.xlane.xlu0 %4446
        %4448 = vmax.xlane.f32.xlu0 %v4410
        %v4449 = vpop.xlane.xlu0 %4448
        %4450 = vmax.xlane.f32.xlu0 %v4413
        %v4451 = vpop.xlane.xlu0 %4450
        %4452 = vmax.xlane.f32.xlu0 %v4415
        %v4453 = vpop.xlane.xlu0 %4452
        %4454 = vmax.xlane.f32.xlu0 %v4418
        %v4455 = vpop.xlane.xlu0 %4454
        %4456 = vmax.xlane.f32.xlu0 %v4420
        %v4457 = vpop.xlane.xlu0 %4456
        %4458 = vmax.xlane.f32.xlu0 %v4423
        %v4459 = vpop.xlane.xlu0 %4458
        %4460 = vmax.xlane.f32.xlu0 %v4425
        %v4461 = vpop.xlane.xlu0 %4460
        %4462 = vmax.xlane.f32.xlu0 %v4428
        %v4463 = vpop.xlane.xlu0 %4462
        %4464 = vmax.xlane.f32.xlu0 %v4430
        %v4465 = vpop.xlane.xlu0 %4464
        %4466 = vmax.xlane.f32.xlu0 %v4433
        %v4467 = vpop.xlane.xlu0 %4466
        %4468 = vmax.xlane.f32.xlu0 %v4435
        %v4469 = vpop.xlane.xlu0 %4468
        %4470 = vmax.xlane.f32.xlu0 %v4438
        %v4471 = vpop.xlane.xlu0 %4470
        %4472 = vmax.xlane.f32.xlu0 %v4440
        %v4473 = vpop.xlane.xlu0 %4472
        %v4474 = vsub.f32 %v4403, %v4443
        %v4475 = vsub.f32 %v4405, %v4445
        %v4476 = vsub.f32 %v4408, %v4447
        %v4477 = vsub.f32 %v4410, %v4449
        %v4478 = vsub.f32 %v4413, %v4451
        %v4479 = vsub.f32 %v4415, %v4453
        %v4480 = vsub.f32 %v4418, %v4455
        %v4481 = vsub.f32 %v4420, %v4457
        %v4482 = vsub.f32 %v4423, %v4459
        %v4483 = vsub.f32 %v4425, %v4461
        %v4484 = vsub.f32 %v4428, %v4463
        %v4485 = vsub.f32 %v4430, %v4465
        %v4486 = vsub.f32 %v4433, %v4467
        %v4487 = vsub.f32 %v4435, %v4469
        %v4488 = vsub.f32 %v4438, %v4471
        %v4489 = vsub.f32 %v4440, %v4473
        %v4490 = vmul.f32 %v4474, 1.442695
        %v4491 = vpow.pop %v4490
        %v4492 = vmul.f32 %v4475, 1.442695
        %v4493 = vpow.pop %v4492
        %v4494 = vmul.f32 %v4476, 1.442695
        %v4495 = vpow.pop %v4494
        %v4496 = vmul.f32 %v4477, 1.442695
        %v4497 = vpow.pop %v4496
        %v4498 = vmul.f32 %v4478, 1.442695
        %v4499 = vpow.pop %v4498
        %v4500 = vmul.f32 %v4479, 1.442695
        %v4501 = vpow.pop %v4500
        %v4502 = vmul.f32 %v4480, 1.442695
        %v4503 = vpow.pop %v4502
        %v4504 = vmul.f32 %v4481, 1.442695
        %v4505 = vpow.pop %v4504
        %v4506 = vmul.f32 %v4482, 1.442695
        %v4507 = vpow.pop %v4506
        %v4508 = vmul.f32 %v4483, 1.442695
        %v4509 = vpow.pop %v4508
        %v4510 = vmul.f32 %v4484, 1.442695
        %v4511 = vpow.pop %v4510
        %v4512 = vmul.f32 %v4485, 1.442695
        %v4513 = vpow.pop %v4512
        %v4514 = vmul.f32 %v4486, 1.442695
        %v4515 = vpow.pop %v4514
        %v4516 = vmul.f32 %v4487, 1.442695
        %v4517 = vpow.pop %v4516
        %v4518 = vmul.f32 %v4488, 1.442695
        %v4519 = vpow.pop %v4518
        %v4520 = vmul.f32 %v4489, 1.442695
        %v4521 = vpow.pop %v4520
        %4522 = vadd.xlane.f32.xlu0 %v4491
        %v4523 = vpop.xlane.xlu0 %4522
        %4524 = vadd.xlane.f32.xlu0 %v4493
        %v4525 = vpop.xlane.xlu0 %4524
        %4526 = vadd.xlane.f32.xlu0 %v4495
        %v4527 = vpop.xlane.xlu0 %4526
        %4528 = vadd.xlane.f32.xlu0 %v4497
        %v4529 = vpop.xlane.xlu0 %4528
        %4530 = vadd.xlane.f32.xlu0 %v4499
        %v4531 = vpop.xlane.xlu0 %4530
        %4532 = vadd.xlane.f32.xlu0 %v4501
        %v4533 = vpop.xlane.xlu0 %4532
        %4534 = vadd.xlane.f32.xlu0 %v4503
        %v4535 = vpop.xlane.xlu0 %4534
        %4536 = vadd.xlane.f32.xlu0 %v4505
        %v4537 = vpop.xlane.xlu0 %4536
        %4538 = vadd.xlane.f32.xlu0 %v4507
        %v4539 = vpop.xlane.xlu0 %4538
        %4540 = vadd.xlane.f32.xlu0 %v4509
        %v4541 = vpop.xlane.xlu0 %4540
        %4542 = vadd.xlane.f32.xlu0 %v4511
        %v4543 = vpop.xlane.xlu0 %4542
        %4544 = vadd.xlane.f32.xlu0 %v4513
        %v4545 = vpop.xlane.xlu0 %4544
        %4546 = vadd.xlane.f32.xlu0 %v4515
        %v4547 = vpop.xlane.xlu0 %4546
        %4548 = vadd.xlane.f32.xlu0 %v4517
        %v4549 = vpop.xlane.xlu0 %4548
        %4550 = vadd.xlane.f32.xlu0 %v4519
        %v4551 = vpop.xlane.xlu0 %4550
        %4552 = vadd.xlane.f32.xlu0 %v4521
        %v4553 = vpop.xlane.xlu0 %4552
        %v4554 = vrcp.pop %v4523
        %v4555 = vrcp.pop %v4525
        %v4556 = vrcp.pop %v4527
        %v4557 = vrcp.pop %v4529
        %v4558 = vrcp.pop %v4531
        %v4559 = vrcp.pop %v4533
        %v4560 = vrcp.pop %v4535
        %v4561 = vrcp.pop %v4537
        %v4562 = vrcp.pop %v4539
        %v4563 = vrcp.pop %v4541
        %v4564 = vrcp.pop %v4543
        %v4565 = vrcp.pop %v4545
        %v4566 = vrcp.pop %v4547
        %v4567 = vrcp.pop %v4549
        %v4568 = vrcp.pop %v4551
        %v4569 = vrcp.pop %v4553
        %v4570 = vmul.f32 %v4491, %v4554
        %v4571 = vmul.f32 %v4493, %v4555
        %v4572 = vmul.f32 %v4495, %v4556
        %v4573 = vmul.f32 %v4497, %v4557
        %v4574 = vmul.f32 %v4499, %v4558
        %v4575 = vmul.f32 %v4501, %v4559
        %v4576 = vmul.f32 %v4503, %v4560
        %v4577 = vmul.f32 %v4505, %v4561
        %v4578 = vmul.f32 %v4507, %v4562
        %v4579 = vmul.f32 %v4509, %v4563
        %v4580 = vmul.f32 %v4511, %v4564
        %v4581 = vmul.f32 %v4513, %v4565
        %v4582 = vmul.f32 %v4515, %v4566
        %v4583 = vmul.f32 %v4517, %v4567
        %v4584 = vmul.f32 %v4519, %v4568
        %v4585 = vmul.f32 %v4521, %v4569
        %v4586 = vpack.c.bf16 %v4570, %v4570
        %v4587 = vpack.c.bf16 %v4571, %v4571
        %v4588 = vpack.c.bf16 %v4572, %v4572
        %v4589 = vpack.c.bf16 %v4573, %v4573
        %v4590 = vpack.c.bf16 %v4574, %v4574
        %v4591 = vpack.c.bf16 %v4575, %v4575
        %v4592 = vpack.c.bf16 %v4576, %v4576
        %v4593 = vpack.c.bf16 %v4577, %v4577
        %v4594 = vpack.c.bf16 %v4578, %v4578
        %v4595 = vpack.c.bf16 %v4579, %v4579
        %v4596 = vpack.c.bf16 %v4580, %v4580
        %v4597 = vpack.c.bf16 %v4581, %v4581
        %v4598 = vpack.c.bf16 %v4582, %v4582
        %v4599 = vpack.c.bf16 %v4583, %v4583
        %v4600 = vpack.c.bf16 %v4584, %v4584
        %v4601 = vpack.c.bf16 %v4585, %v4585
        %v4618 = vunpack.c.l.b16 %v4586
        %v4619 = vunpack.c.l.b16 %v4587
        %v4620 = vunpack.c.l.b16 %v4588
        %v4621 = vunpack.c.l.b16 %v4589
        %v4622 = vunpack.c.l.b16 %v4590
        %v4623 = vunpack.c.l.b16 %v4591
        %v4624 = vunpack.c.l.b16 %v4592
        %v4625 = vunpack.c.l.b16 %v4593
        %v4626 = vunpack.c.l.b16 %v4594
        %v4627 = vunpack.c.l.b16 %v4595
        %v4628 = vunpack.c.l.b16 %v4596
        %v4629 = vunpack.c.l.b16 %v4597
        %v4630 = vunpack.c.l.b16 %v4598
        %v4631 = vunpack.c.l.b16 %v4599
        %v4632 = vunpack.c.l.b16 %v4600
        %v4633 = vunpack.c.l.b16 %v4601
        %v4634 = vpack.c.b16 %v4619, %v4618
        %v4635 = vpack.c.b16 %v4621, %v4620
        %v4636 = vpack.c.b16 %v4623, %v4622
        %v4637 = vpack.c.b16 %v4625, %v4624
        %v4638 = vpack.c.b16 %v4627, %v4626
        %v4639 = vpack.c.b16 %v4629, %v4628
        %v4640 = vpack.c.b16 %v4631, %v4630
        %v4641 = vpack.c.b16 %v4633, %v4632
        %4650 = vrot.lane.b32.xlu0 %v1788, 16
        %v4651 = vpop.permute.xlu0 %4650
        %4652 = vrot.lane.b32.xlu0 %v1789, 16
        %v4653 = vpop.permute.xlu0 %4652
        %4654 = vrot.lane.b32.xlu0 %v1790, 16
        %v4655 = vpop.permute.xlu0 %4654
        %4656 = vrot.lane.b32.xlu0 %v1791, 16
        %v4657 = vpop.permute.xlu0 %4656
        %4658 = vrot.lane.b32.xlu0 %v1792, 16
        %v4659 = vpop.permute.xlu0 %4658
        %4660 = vrot.lane.b32.xlu0 %v1793, 16
        %v4661 = vpop.permute.xlu0 %4660
        %4662 = vrot.lane.b32.xlu0 %v1794, 16
        %v4663 = vpop.permute.xlu0 %4662
        %4664 = vrot.lane.b32.xlu0 %v1795, 16
        %v4665 = vpop.permute.xlu0 %4664
        %4674 = vmatpush.bf16.msra.mxu0 %v4665
        %4675 = vmatpush.bf16.msra.mxu0 %v4663
        %4676 = vmatpush.bf16.msra.mxu0 %v4661
        %4677 = vmatpush.bf16.msra.mxu0 %v4659
        %4678 = vmatpush.bf16.msra.mxu0 %v4657
        %4679 = vmatpush.bf16.msra.mxu0 %v4655
        %4680 = vmatpush.bf16.msra.mxu0 %v4653
        %4681 = vmatpush.bf16.msra.mxu0 %v4651
        %4682 = vmatmul.bf16.gmra.mxu0 %v4634
        %v4683 = vpop.f32.mrf.mxu0
        %v4684 = vadd.f32 0.0, %v4683
        %v4685 = vpop.f32.mrf.mxu0
        %v4686 = vadd.f32 0.0, %v4685
        %4687 = vmatmul.bf16.gmra.mxu0 %v4635
        %v4688 = vpop.f32.mrf.mxu0
        %v4689 = vadd.f32 0.0, %v4688
        %v4690 = vpop.f32.mrf.mxu0
        %v4691 = vadd.f32 0.0, %v4690
        %4692 = vmatmul.bf16.gmra.mxu0 %v4636
        %v4693 = vpop.f32.mrf.mxu0
        %v4694 = vadd.f32 0.0, %v4693
        %v4695 = vpop.f32.mrf.mxu0
        %v4696 = vadd.f32 0.0, %v4695
        %4697 = vmatmul.bf16.gmra.mxu0 %v4637
        %v4698 = vpop.f32.mrf.mxu0
        %v4699 = vadd.f32 0.0, %v4698
        %v4700 = vpop.f32.mrf.mxu0
        %v4701 = vadd.f32 0.0, %v4700
        %4702 = vmatmul.bf16.gmra.mxu0 %v4638
        %v4703 = vpop.f32.mrf.mxu0
        %v4704 = vadd.f32 0.0, %v4703
        %v4705 = vpop.f32.mrf.mxu0
        %v4706 = vadd.f32 0.0, %v4705
        %4707 = vmatmul.bf16.gmra.mxu0 %v4639
        %v4708 = vpop.f32.mrf.mxu0
        %v4709 = vadd.f32 0.0, %v4708
        %v4710 = vpop.f32.mrf.mxu0
        %v4711 = vadd.f32 0.0, %v4710
        %4712 = vmatmul.bf16.gmra.mxu0 %v4640
        %v4713 = vpop.f32.mrf.mxu0
        %v4714 = vadd.f32 0.0, %v4713
        %v4715 = vpop.f32.mrf.mxu0
        %v4716 = vadd.f32 0.0, %v4715
        %4717 = vmatmul.bf16.gmra.mxu0 %v4641
        %v4718 = vpop.f32.mrf.mxu0
        %v4719 = vadd.f32 0.0, %v4718
        %v4720 = vpop.f32.mrf.mxu0
        %v4721 = vadd.f32 0.0, %v4720
        %4722 = vdwg.mxu0
        %4739 = vrot.lane.b32.xlu0 %v2224, 16
        %v4740 = vpop.permute.xlu0 %4739
        %4741 = vrot.lane.b32.xlu0 %v2226, 16
        %v4742 = vpop.permute.xlu0 %4741
        %4743 = vrot.lane.b32.xlu0 %v2229, 16
        %v4744 = vpop.permute.xlu0 %4743
        %4745 = vrot.lane.b32.xlu0 %v2231, 16
        %v4746 = vpop.permute.xlu0 %4745
        %4747 = vrot.lane.b32.xlu0 %v2234, 16
        %v4748 = vpop.permute.xlu0 %4747
        %4749 = vrot.lane.b32.xlu0 %v2236, 16
        %v4750 = vpop.permute.xlu0 %4749
        %4751 = vrot.lane.b32.xlu0 %v2239, 16
        %v4752 = vpop.permute.xlu0 %4751
        %4753 = vrot.lane.b32.xlu0 %v2241, 16
        %v4754 = vpop.permute.xlu0 %4753
        %4755 = vrot.lane.b32.xlu0 %v2244, 16
        %v4756 = vpop.permute.xlu0 %4755
        %4757 = vrot.lane.b32.xlu0 %v2246, 16
        %v4758 = vpop.permute.xlu0 %4757
        %4759 = vrot.lane.b32.xlu0 %v2249, 16
        %v4760 = vpop.permute.xlu0 %4759
        %4761 = vrot.lane.b32.xlu0 %v2251, 16
        %v4762 = vpop.permute.xlu0 %4761
        %4763 = vrot.lane.b32.xlu0 %v2254, 16
        %v4764 = vpop.permute.xlu0 %4763
        %4765 = vrot.lane.b32.xlu0 %v2256, 16
        %v4766 = vpop.permute.xlu0 %4765
        %4767 = vrot.lane.b32.xlu0 %v2259, 16
        %v4768 = vpop.permute.xlu0 %4767
        %4769 = vrot.lane.b32.xlu0 %v2261, 16
        %v4770 = vpop.permute.xlu0 %4769
        %4803 = vrot.lane.b32.xlu0 %v2634, 32
        %v4804 = vpop.permute.xlu0 %4803
        %4805 = vrot.lane.b32.xlu0 %v2636, 32
        %v4806 = vpop.permute.xlu0 %4805
        %4807 = vrot.lane.b32.xlu0 %v2639, 32
        %v4808 = vpop.permute.xlu0 %4807
        %4809 = vrot.lane.b32.xlu0 %v2641, 32
        %v4810 = vpop.permute.xlu0 %4809
        %4811 = vrot.lane.b32.xlu0 %v2644, 32
        %v4812 = vpop.permute.xlu0 %4811
        %4813 = vrot.lane.b32.xlu0 %v2646, 32
        %v4814 = vpop.permute.xlu0 %4813
        %4815 = vrot.lane.b32.xlu0 %v2649, 32
        %v4816 = vpop.permute.xlu0 %4815
        %4817 = vrot.lane.b32.xlu0 %v2651, 32
        %v4818 = vpop.permute.xlu0 %4817
        %4819 = vrot.lane.b32.xlu0 %v2654, 32
        %v4820 = vpop.permute.xlu0 %4819
        %4821 = vrot.lane.b32.xlu0 %v2656, 32
        %v4822 = vpop.permute.xlu0 %4821
        %4823 = vrot.lane.b32.xlu0 %v2659, 32
        %v4824 = vpop.permute.xlu0 %4823
        %4825 = vrot.lane.b32.xlu0 %v2661, 32
        %v4826 = vpop.permute.xlu0 %4825
        %4827 = vrot.lane.b32.xlu0 %v2664, 32
        %v4828 = vpop.permute.xlu0 %4827
        %4829 = vrot.lane.b32.xlu0 %v2666, 32
        %v4830 = vpop.permute.xlu0 %4829
        %4831 = vrot.lane.b32.xlu0 %v2669, 32
        %v4832 = vpop.permute.xlu0 %4831
        %4833 = vrot.lane.b32.xlu0 %v2671, 32
        %v4834 = vpop.permute.xlu0 %4833
        %4867 = vrot.lane.b32.xlu0 %v3044, 48
        %v4868 = vpop.permute.xlu0 %4867
        %4869 = vrot.lane.b32.xlu0 %v3046, 48
        %v4870 = vpop.permute.xlu0 %4869
        %4871 = vrot.lane.b32.xlu0 %v3049, 48
        %v4872 = vpop.permute.xlu0 %4871
        %4873 = vrot.lane.b32.xlu0 %v3051, 48
        %v4874 = vpop.permute.xlu0 %4873
        %4875 = vrot.lane.b32.xlu0 %v3054, 48
        %v4876 = vpop.permute.xlu0 %4875
        %4877 = vrot.lane.b32.xlu0 %v3056, 48
        %v4878 = vpop.permute.xlu0 %4877
        %4879 = vrot.lane.b32.xlu0 %v3059, 48
        %v4880 = vpop.permute.xlu0 %4879
        %4881 = vrot.lane.b32.xlu0 %v3061, 48
        %v4882 = vpop.permute.xlu0 %4881
        %4883 = vrot.lane.b32.xlu0 %v3064, 48
        %v4884 = vpop.permute.xlu0 %4883
        %4885 = vrot.lane.b32.xlu0 %v3066, 48
        %v4886 = vpop.permute.xlu0 %4885
        %4887 = vrot.lane.b32.xlu0 %v3069, 48
        %v4888 = vpop.permute.xlu0 %4887
        %4889 = vrot.lane.b32.xlu0 %v3071, 48
        %v4890 = vpop.permute.xlu0 %4889
        %4891 = vrot.lane.b32.xlu0 %v3074, 48
        %v4892 = vpop.permute.xlu0 %4891
        %4893 = vrot.lane.b32.xlu0 %v3076, 48
        %v4894 = vpop.permute.xlu0 %4893
        %4895 = vrot.lane.b32.xlu0 %v3079, 48
        %v4896 = vpop.permute.xlu0 %4895
        %4897 = vrot.lane.b32.xlu0 %v3081, 48
        %v4898 = vpop.permute.xlu0 %4897
        %4931 = vrot.lane.b32.xlu0 %v3454, 64
        %v4932 = vpop.permute.xlu0 %4931
        %4933 = vrot.lane.b32.xlu0 %v3456, 64
        %v4934 = vpop.permute.xlu0 %4933
        %4935 = vrot.lane.b32.xlu0 %v3459, 64
        %v4936 = vpop.permute.xlu0 %4935
        %4937 = vrot.lane.b32.xlu0 %v3461, 64
        %v4938 = vpop.permute.xlu0 %4937
        %4939 = vrot.lane.b32.xlu0 %v3464, 64
        %v4940 = vpop.permute.xlu0 %4939
        %4941 = vrot.lane.b32.xlu0 %v3466, 64
        %v4942 = vpop.permute.xlu0 %4941
        %4943 = vrot.lane.b32.xlu0 %v3469, 64
        %v4944 = vpop.permute.xlu0 %4943
        %4945 = vrot.lane.b32.xlu0 %v3471, 64
        %v4946 = vpop.permute.xlu0 %4945
        %4947 = vrot.lane.b32.xlu0 %v3474, 64
        %v4948 = vpop.permute.xlu0 %4947
        %4949 = vrot.lane.b32.xlu0 %v3476, 64
        %v4950 = vpop.permute.xlu0 %4949
        %4951 = vrot.lane.b32.xlu0 %v3479, 64
        %v4952 = vpop.permute.xlu0 %4951
        %4953 = vrot.lane.b32.xlu0 %v3481, 64
        %v4954 = vpop.permute.xlu0 %4953
        %4955 = vrot.lane.b32.xlu0 %v3484, 64
        %v4956 = vpop.permute.xlu0 %4955
        %4957 = vrot.lane.b32.xlu0 %v3486, 64
        %v4958 = vpop.permute.xlu0 %4957
        %4959 = vrot.lane.b32.xlu0 %v3489, 64
        %v4960 = vpop.permute.xlu0 %4959
        %4961 = vrot.lane.b32.xlu0 %v3491, 64
        %v4962 = vpop.permute.xlu0 %4961
        %4995 = vrot.lane.b32.xlu0 %v3864, 80
        %v4996 = vpop.permute.xlu0 %4995
        %4997 = vrot.lane.b32.xlu0 %v3866, 80
        %v4998 = vpop.permute.xlu0 %4997
        %4999 = vrot.lane.b32.xlu0 %v3869, 80
        %v5000 = vpop.permute.xlu0 %4999
        %5001 = vrot.lane.b32.xlu0 %v3871, 80
        %v5002 = vpop.permute.xlu0 %5001
        %5003 = vrot.lane.b32.xlu0 %v3874, 80
        %v5004 = vpop.permute.xlu0 %5003
        %5005 = vrot.lane.b32.xlu0 %v3876, 80
        %v5006 = vpop.permute.xlu0 %5005
        %5007 = vrot.lane.b32.xlu0 %v3879, 80
        %v5008 = vpop.permute.xlu0 %5007
        %5009 = vrot.lane.b32.xlu0 %v3881, 80
        %v5010 = vpop.permute.xlu0 %5009
        %5011 = vrot.lane.b32.xlu0 %v3884, 80
        %v5012 = vpop.permute.xlu0 %5011
        %5013 = vrot.lane.b32.xlu0 %v3886, 80
        %v5014 = vpop.permute.xlu0 %5013
        %5015 = vrot.lane.b32.xlu0 %v3889, 80
        %v5016 = vpop.permute.xlu0 %5015
        %5017 = vrot.lane.b32.xlu0 %v3891, 80
        %v5018 = vpop.permute.xlu0 %5017
        %5019 = vrot.lane.b32.xlu0 %v3894, 80
        %v5020 = vpop.permute.xlu0 %5019
        %5021 = vrot.lane.b32.xlu0 %v3896, 80
        %v5022 = vpop.permute.xlu0 %5021
        %5023 = vrot.lane.b32.xlu0 %v3899, 80
        %v5024 = vpop.permute.xlu0 %5023
        %5025 = vrot.lane.b32.xlu0 %v3901, 80
        %v5026 = vpop.permute.xlu0 %5025
        %5059 = vrot.lane.b32.xlu0 %v4274, 96
        %v5060 = vpop.permute.xlu0 %5059
        %5061 = vrot.lane.b32.xlu0 %v4276, 96
        %v5062 = vpop.permute.xlu0 %5061
        %5063 = vrot.lane.b32.xlu0 %v4279, 96
        %v5064 = vpop.permute.xlu0 %5063
        %5065 = vrot.lane.b32.xlu0 %v4281, 96
        %v5066 = vpop.permute.xlu0 %5065
        %5067 = vrot.lane.b32.xlu0 %v4284, 96
        %v5068 = vpop.permute.xlu0 %5067
        %5069 = vrot.lane.b32.xlu0 %v4286, 96
        %v5070 = vpop.permute.xlu0 %5069
        %5071 = vrot.lane.b32.xlu0 %v4289, 96
        %v5072 = vpop.permute.xlu0 %5071
        %5073 = vrot.lane.b32.xlu0 %v4291, 96
        %v5074 = vpop.permute.xlu0 %5073
        %5075 = vrot.lane.b32.xlu0 %v4294, 96
        %v5076 = vpop.permute.xlu0 %5075
        %5077 = vrot.lane.b32.xlu0 %v4296, 96
        %v5078 = vpop.permute.xlu0 %5077
        %5079 = vrot.lane.b32.xlu0 %v4299, 96
        %v5080 = vpop.permute.xlu0 %5079
        %5081 = vrot.lane.b32.xlu0 %v4301, 96
        %v5082 = vpop.permute.xlu0 %5081
        %5083 = vrot.lane.b32.xlu0 %v4304, 96
        %v5084 = vpop.permute.xlu0 %5083
        %5085 = vrot.lane.b32.xlu0 %v4306, 96
        %v5086 = vpop.permute.xlu0 %5085
        %5087 = vrot.lane.b32.xlu0 %v4309, 96
        %v5088 = vpop.permute.xlu0 %5087
        %5089 = vrot.lane.b32.xlu0 %v4311, 96
        %v5090 = vpop.permute.xlu0 %5089
        %5123 = vrot.lane.b32.xlu0 %v4684, 112
        %v5124 = vpop.permute.xlu0 %5123
        %5125 = vrot.lane.b32.xlu0 %v4686, 112
        %v5126 = vpop.permute.xlu0 %5125
        %5127 = vrot.lane.b32.xlu0 %v4689, 112
        %v5128 = vpop.permute.xlu0 %5127
        %5129 = vrot.lane.b32.xlu0 %v4691, 112
        %v5130 = vpop.permute.xlu0 %5129
        %5131 = vrot.lane.b32.xlu0 %v4694, 112
        %v5132 = vpop.permute.xlu0 %5131
        %5133 = vrot.lane.b32.xlu0 %v4696, 112
        %v5134 = vpop.permute.xlu0 %5133
        %5135 = vrot.lane.b32.xlu0 %v4699, 112
        %v5136 = vpop.permute.xlu0 %5135
        %5137 = vrot.lane.b32.xlu0 %v4701, 112
        %v5138 = vpop.permute.xlu0 %5137
        %5139 = vrot.lane.b32.xlu0 %v4704, 112
        %v5140 = vpop.permute.xlu0 %5139
        %5141 = vrot.lane.b32.xlu0 %v4706, 112
        %v5142 = vpop.permute.xlu0 %5141
        %5143 = vrot.lane.b32.xlu0 %v4709, 112
        %v5144 = vpop.permute.xlu0 %5143
        %5145 = vrot.lane.b32.xlu0 %v4711, 112
        %v5146 = vpop.permute.xlu0 %5145
        %5147 = vrot.lane.b32.xlu0 %v4714, 112
        %v5148 = vpop.permute.xlu0 %5147
        %5149 = vrot.lane.b32.xlu0 %v4716, 112
        %v5150 = vpop.permute.xlu0 %5149
        %5151 = vrot.lane.b32.xlu0 %v4719, 112
        %v5152 = vpop.permute.xlu0 %5151
        %5153 = vrot.lane.b32.xlu0 %v4721, 112
        %v5154 = vpop.permute.xlu0 %5153
        %v5171 = vsel %vm1450, %v1814, %v4740
        %v5172 = vsel %vm1450, %v1816, %v4742
        %v5173 = vsel %vm1450, %v1819, %v4744
        %v5174 = vsel %vm1450, %v1821, %v4746
        %v5175 = vsel %vm1450, %v1824, %v4748
        %v5176 = vsel %vm1450, %v1826, %v4750
        %v5177 = vsel %vm1450, %v1829, %v4752
        %v5178 = vsel %vm1450, %v1831, %v4754
        %v5179 = vsel %vm1450, %v1834, %v4756
        %v5180 = vsel %vm1450, %v1836, %v4758
        %v5181 = vsel %vm1450, %v1839, %v4760
        %v5182 = vsel %vm1450, %v1841, %v4762
        %v5183 = vsel %vm1450, %v1844, %v4764
        %v5184 = vsel %vm1450, %v1846, %v4766
        %v5185 = vsel %vm1450, %v1849, %v4768
        %v5186 = vsel %vm1450, %v1851, %v4770
        %vm5187 = vcmask 261120
        %v5188 = vsel %vm5187, %v5171, %v4804
        %v5189 = vsel %vm5187, %v5172, %v4806
        %v5190 = vsel %vm5187, %v5173, %v4808
        %v5191 = vsel %vm5187, %v5174, %v4810
        %v5192 = vsel %vm5187, %v5175, %v4812
        %v5193 = vsel %vm5187, %v5176, %v4814
        %v5194 = vsel %vm5187, %v5177, %v4816
        %v5195 = vsel %vm5187, %v5178, %v4818
        %v5196 = vsel %vm5187, %v5179, %v4820
        %v5197 = vsel %vm5187, %v5180, %v4822
        %v5198 = vsel %vm5187, %v5181, %v4824
        %v5199 = vsel %vm5187, %v5182, %v4826
        %v5200 = vsel %vm5187, %v5183, %v4828
        %v5201 = vsel %vm5187, %v5184, %v4830
        %v5202 = vsel %vm5187, %v5185, %v4832
        %v5203 = vsel %vm5187, %v5186, %v4834
        %vm5204 = vcmask 392192
        %v5205 = vsel %vm5204, %v5188, %v4868
        %v5206 = vsel %vm5204, %v5189, %v4870
        %v5207 = vsel %vm5204, %v5190, %v4872
        %v5208 = vsel %vm5204, %v5191, %v4874
        %v5209 = vsel %vm5204, %v5192, %v4876
        %v5210 = vsel %vm5204, %v5193, %v4878
        %v5211 = vsel %vm5204, %v5194, %v4880
        %v5212 = vsel %vm5204, %v5195, %v4882
        %v5213 = vsel %vm5204, %v5196, %v4884
        %v5214 = vsel %vm5204, %v5197, %v4886
        %v5215 = vsel %vm5204, %v5198, %v4888
        %v5216 = vsel %vm5204, %v5199, %v4890
        %v5217 = vsel %vm5204, %v5200, %v4892
        %v5218 = vsel %vm5204, %v5201, %v4894
        %v5219 = vsel %vm5204, %v5202, %v4896
        %v5220 = vsel %vm5204, %v5203, %v4898
        %vm5221 = vcmask 523264
        %v5222 = vsel %vm5221, %v5205, %v4932
        %v5223 = vsel %vm5221, %v5206, %v4934
        %v5224 = vsel %vm5221, %v5207, %v4936
        %v5225 = vsel %vm5221, %v5208, %v4938
        %v5226 = vsel %vm5221, %v5209, %v4940
        %v5227 = vsel %vm5221, %v5210, %v4942
        %v5228 = vsel %vm5221, %v5211, %v4944
        %v5229 = vsel %vm5221, %v5212, %v4946
        %v5230 = vsel %vm5221, %v5213, %v4948
        %v5231 = vsel %vm5221, %v5214, %v4950
        %v5232 = vsel %vm5221, %v5215, %v4952
        %v5233 = vsel %vm5221, %v5216, %v4954
        %v5234 = vsel %vm5221, %v5217, %v4956
        %v5235 = vsel %vm5221, %v5218, %v4958
        %v5236 = vsel %vm5221, %v5219, %v4960
        %v5237 = vsel %vm5221, %v5220, %v4962
        %vm5238 = vcmask 654336
        %v5239 = vsel %vm5238, %v5222, %v4996
        %v5240 = vsel %vm5238, %v5223, %v4998
        %v5241 = vsel %vm5238, %v5224, %v5000
        %v5242 = vsel %vm5238, %v5225, %v5002
        %v5243 = vsel %vm5238, %v5226, %v5004
        %v5244 = vsel %vm5238, %v5227, %v5006
        %v5245 = vsel %vm5238, %v5228, %v5008
        %v5246 = vsel %vm5238, %v5229, %v5010
        %v5247 = vsel %vm5238, %v5230, %v5012
        %v5248 = vsel %vm5238, %v5231, %v5014
        %v5249 = vsel %vm5238, %v5232, %v5016
        %v5250 = vsel %vm5238, %v5233, %v5018
        %v5251 = vsel %vm5238, %v5234, %v5020
        %v5252 = vsel %vm5238, %v5235, %v5022
        %v5253 = vsel %vm5238, %v5236, %v5024
        %v5254 = vsel %vm5238, %v5237, %v5026
        %vm5255 = vcmask 785408
        %v5256 = vsel %vm5255, %v5239, %v5060
        %v5257 = vsel %vm5255, %v5240, %v5062
        %v5258 = vsel %vm5255, %v5241, %v5064
        %v5259 = vsel %vm5255, %v5242, %v5066
        %v5260 = vsel %vm5255, %v5243, %v5068
        %v5261 = vsel %vm5255, %v5244, %v5070
        %v5262 = vsel %vm5255, %v5245, %v5072
        %v5263 = vsel %vm5255, %v5246, %v5074
        %v5264 = vsel %vm5255, %v5247, %v5076
        %v5265 = vsel %vm5255, %v5248, %v5078
        %v5266 = vsel %vm5255, %v5249, %v5080
        %v5267 = vsel %vm5255, %v5250, %v5082
        %v5268 = vsel %vm5255, %v5251, %v5084
        %v5269 = vsel %vm5255, %v5252, %v5086
        %v5270 = vsel %vm5255, %v5253, %v5088
        %v5271 = vsel %vm5255, %v5254, %v5090
        %vm5272 = vcmask 916480
        %v5273 = vsel %vm5272, %v5256, %v5124
        %v5274 = vsel %vm5272, %v5257, %v5126
        %v5275 = vsel %vm5272, %v5258, %v5128
        %v5276 = vsel %vm5272, %v5259, %v5130
        %v5277 = vsel %vm5272, %v5260, %v5132
        %v5278 = vsel %vm5272, %v5261, %v5134
        %v5279 = vsel %vm5272, %v5262, %v5136
        %v5280 = vsel %vm5272, %v5263, %v5138
        %v5281 = vsel %vm5272, %v5264, %v5140
        %v5282 = vsel %vm5272, %v5265, %v5142
        %v5283 = vsel %vm5272, %v5266, %v5144
        %v5284 = vsel %vm5272, %v5267, %v5146
        %v5285 = vsel %vm5272, %v5268, %v5148
        %v5286 = vsel %vm5272, %v5269, %v5150
        %v5287 = vsel %vm5272, %v5270, %v5152
        %v5288 = vsel %vm5272, %v5271, %v5154
        %v5289 = vpack.c.bf16 %v5274, %v5273
        %v5290 = vpack.c.bf16 %v5276, %v5275
        %v5291 = vpack.c.bf16 %v5278, %v5277
        %v5292 = vpack.c.bf16 %v5280, %v5279
        %v5293 = vpack.c.bf16 %v5282, %v5281
        %v5294 = vpack.c.bf16 %v5284, %v5283
        %v5295 = vpack.c.bf16 %v5286, %v5285
        %v5296 = vpack.c.bf16 %v5288, %v5287
        %v5297 = vld [vmem:[%s724] sm:$0xf]
        %v5298 = vld [vmem:[%s724 + $0x4] sm:$0xf]
        %v5299 = vld [vmem:[%s724 + $0x8] sm:$0xf]
        %v5300 = vld [vmem:[%s724 + $0xc] sm:$0xf]
        %v5301 = vld [vmem:[%s724 + $0x10] sm:$0xf]
        %v5302 = vld [vmem:[%s724 + $0x14] sm:$0xf]
        %v5303 = vld [vmem:[%s724 + $0x18] sm:$0xf]
        %v5304 = vld [vmem:[%s724 + $0x1c] sm:$0xf]
        %v5305 = vld [vmem:[%s724 + $0x20] sm:$0xf]
        %v5306 = vld [vmem:[%s724 + $0x24] sm:$0xf]
        %v5307 = vld [vmem:[%s724 + $0x28] sm:$0xf]
        %v5308 = vld [vmem:[%s724 + $0x2c] sm:$0xf]
        %v5309 = vld [vmem:[%s724 + $0x30] sm:$0xf]
        %v5310 = vld [vmem:[%s724 + $0x34] sm:$0xf]
        %v5311 = vld [vmem:[%s724 + $0x38] sm:$0xf]
        %v5312 = vld [vmem:[%s724 + $0x3c] sm:$0xf]
        %v5313 = vld [vmem:[%s733] sm:$0x1]
        %v5315 = vperm.slane %v5313, 0
        %v5333 = vunpack.c.l.b16 %v5297
        %v5334 = vunpack.c.l.b16 %v5298
        %v5335 = vunpack.c.l.b16 %v5299
        %v5336 = vunpack.c.l.b16 %v5300
        %v5337 = vunpack.c.l.b16 %v5301
        %v5338 = vunpack.c.l.b16 %v5302
        %v5339 = vunpack.c.l.b16 %v5303
        %v5340 = vunpack.c.l.b16 %v5304
        %v5341 = vunpack.c.l.b16 %v5305
        %v5342 = vunpack.c.l.b16 %v5306
        %v5343 = vunpack.c.l.b16 %v5307
        %v5344 = vunpack.c.l.b16 %v5308
        %v5345 = vunpack.c.l.b16 %v5309
        %v5346 = vunpack.c.l.b16 %v5310
        %v5347 = vunpack.c.l.b16 %v5311
        %v5348 = vunpack.c.l.b16 %v5312
        %v5349 = vpack.c.b16 %v5334, %v5333
        %v5350 = vpack.c.b16 %v5336, %v5335
        %v5351 = vpack.c.b16 %v5338, %v5337
        %v5352 = vpack.c.b16 %v5340, %v5339
        %v5353 = vpack.c.b16 %v5342, %v5341
        %v5354 = vpack.c.b16 %v5344, %v5343
        %v5355 = vpack.c.b16 %v5346, %v5345
        %v5356 = vpack.c.b16 %v5348, %v5347
        %5365 = vmatpush.bf16.msra.mxu0 %v5356
        %5366 = vmatpush.bf16.msra.mxu0 %v5355
        %5367 = vmatpush.bf16.msra.mxu0 %v5354
        %5368 = vmatpush.bf16.msra.mxu0 %v5353
        %5369 = vmatpush.bf16.msra.mxu0 %v5352
        %5370 = vmatpush.bf16.msra.mxu0 %v5351
        %5371 = vmatpush.bf16.msra.mxu0 %v5350
        %5372 = vmatpush.bf16.msra.mxu0 %v5349
        %5373 = vmatmul.bf16.gmra.mxu0 %v5289
        %v5374 = vpop.f32.mrf.mxu0
        %v5375 = vadd.f32 %v5315, %v5374
        %v5376 = vpop.f32.mrf.mxu0
        %v5377 = vadd.f32 %v5315, %v5376
        %5378 = vmatmul.bf16.gmra.mxu0 %v5290
        %v5379 = vpop.f32.mrf.mxu0
        %v5380 = vadd.f32 %v5315, %v5379
        %v5381 = vpop.f32.mrf.mxu0
        %v5382 = vadd.f32 %v5315, %v5381
        %5383 = vmatmul.bf16.gmra.mxu0 %v5291
        %v5384 = vpop.f32.mrf.mxu0
        %v5385 = vadd.f32 %v5315, %v5384
        %v5386 = vpop.f32.mrf.mxu0
        %v5387 = vadd.f32 %v5315, %v5386
        %5388 = vmatmul.bf16.gmra.mxu0 %v5292
        %v5389 = vpop.f32.mrf.mxu0
        %v5390 = vadd.f32 %v5315, %v5389
        %v5391 = vpop.f32.mrf.mxu0
        %v5392 = vadd.f32 %v5315, %v5391
        %5393 = vmatmul.bf16.gmra.mxu0 %v5293
        %v5394 = vpop.f32.mrf.mxu0
        %v5395 = vadd.f32 %v5315, %v5394
        %v5396 = vpop.f32.mrf.mxu0
        %v5397 = vadd.f32 %v5315, %v5396
        %5398 = vmatmul.bf16.gmra.mxu0 %v5294
        %v5399 = vpop.f32.mrf.mxu0
        %v5400 = vadd.f32 %v5315, %v5399
        %v5401 = vpop.f32.mrf.mxu0
        %v5402 = vadd.f32 %v5315, %v5401
        %5403 = vmatmul.bf16.gmra.mxu0 %v5295
        %v5404 = vpop.f32.mrf.mxu0
        %v5405 = vadd.f32 %v5315, %v5404
        %v5406 = vpop.f32.mrf.mxu0
        %v5407 = vadd.f32 %v5315, %v5406
        %5408 = vmatmul.bf16.gmra.mxu0 %v5296
        %v5409 = vpop.f32.mrf.mxu0
        %v5410 = vadd.f32 %v5315, %v5409
        %v5411 = vpop.f32.mrf.mxu0
        %v5412 = vadd.f32 %v5315, %v5411
        %5413 = vdwg.mxu0
        %v5414 = vadd.f32 %v935, %v5375
        %v5415 = vadd.f32 %v936, %v5377
        %v5416 = vadd.f32 %v937, %v5380
        %v5417 = vadd.f32 %v938, %v5382
        %v5418 = vadd.f32 %v939, %v5385
        %v5419 = vadd.f32 %v940, %v5387
        %v5420 = vadd.f32 %v941, %v5390
        %v5421 = vadd.f32 %v942, %v5392
        %v5422 = vadd.f32 %v943, %v5395
        %v5423 = vadd.f32 %v944, %v5397
        %v5424 = vadd.f32 %v945, %v5400
        %v5425 = vadd.f32 %v946, %v5402
        %v5426 = vadd.f32 %v947, %v5405
        %v5427 = vadd.f32 %v948, %v5407
        %v5428 = vadd.f32 %v949, %v5410
        %v5429 = vadd.f32 %v950, %v5412
        %v5430 = vld [vmem:[%s742] sm:$0x1]
        %v5431 = vld [vmem:[%s751] sm:$0x1]
        %5432 = vadd.xlane.f32.xlu0 %v5414
        %v5433 = vpop.xlane.xlu0 %5432
        %5434 = vadd.xlane.f32.xlu0 %v5415
        %v5435 = vpop.xlane.xlu0 %5434
        %5436 = vadd.xlane.f32.xlu0 %v5416
        %v5437 = vpop.xlane.xlu0 %5436
        %5438 = vadd.xlane.f32.xlu0 %v5417
        %v5439 = vpop.xlane.xlu0 %5438
        %5440 = vadd.xlane.f32.xlu0 %v5418
        %v5441 = vpop.xlane.xlu0 %5440
        %5442 = vadd.xlane.f32.xlu0 %v5419
        %v5443 = vpop.xlane.xlu0 %5442
        %5444 = vadd.xlane.f32.xlu0 %v5420
        %v5445 = vpop.xlane.xlu0 %5444
        %5446 = vadd.xlane.f32.xlu0 %v5421
        %v5447 = vpop.xlane.xlu0 %5446
        %5448 = vadd.xlane.f32.xlu0 %v5422
        %v5449 = vpop.xlane.xlu0 %5448
        %5450 = vadd.xlane.f32.xlu0 %v5423
        %v5451 = vpop.xlane.xlu0 %5450
        %5452 = vadd.xlane.f32.xlu0 %v5424
        %v5453 = vpop.xlane.xlu0 %5452
        %5454 = vadd.xlane.f32.xlu0 %v5425
        %v5455 = vpop.xlane.xlu0 %5454
        %5456 = vadd.xlane.f32.xlu0 %v5426
        %v5457 = vpop.xlane.xlu0 %5456
        %5458 = vadd.xlane.f32.xlu0 %v5427
        %v5459 = vpop.xlane.xlu0 %5458
        %5460 = vadd.xlane.f32.xlu0 %v5428
        %v5461 = vpop.xlane.xlu0 %5460
        %5462 = vadd.xlane.f32.xlu0 %v5429
        %v5463 = vpop.xlane.xlu0 %5462
        %v5464 = vrcp.pop 128.0
        %v5465 = vmul.f32 128.0, %v5464
        %v5466 = vsub.f32 1.0, %v5465
        %v5467 = vmul.f32 %v5464, %v5466
        %v5468 = vadd.f32 %v5464, %v5467
        %vm5469 = vweird.f32 %v5464
        %v5470 = vsel %vm5469, %v5464, %v5468
        %v5471 = vmul.f32 %v5433, %v5470
        %v5472 = vmul.f32 %v5435, %v5470
        %v5473 = vmul.f32 %v5437, %v5470
        %v5474 = vmul.f32 %v5439, %v5470
        %v5475 = vmul.f32 %v5441, %v5470
        %v5476 = vmul.f32 %v5443, %v5470
        %v5477 = vmul.f32 %v5445, %v5470
        %v5478 = vmul.f32 %v5447, %v5470
        %v5479 = vmul.f32 %v5449, %v5470
        %v5480 = vmul.f32 %v5451, %v5470
        %v5481 = vmul.f32 %v5453, %v5470
        %v5482 = vmul.f32 %v5455, %v5470
        %v5483 = vmul.f32 %v5457, %v5470
        %v5484 = vmul.f32 %v5459, %v5470
        %v5485 = vmul.f32 %v5461, %v5470
        %v5486 = vmul.f32 %v5463, %v5470
        %v5487 = vsub.f32 %v5414, %v5471
        %v5488 = vsub.f32 %v5415, %v5472
        %v5489 = vsub.f32 %v5416, %v5473
        %v5490 = vsub.f32 %v5417, %v5474
        %v5491 = vsub.f32 %v5418, %v5475
        %v5492 = vsub.f32 %v5419, %v5476
        %v5493 = vsub.f32 %v5420, %v5477
        %v5494 = vsub.f32 %v5421, %v5478
        %v5495 = vsub.f32 %v5422, %v5479
        %v5496 = vsub.f32 %v5423, %v5480
        %v5497 = vsub.f32 %v5424, %v5481
        %v5498 = vsub.f32 %v5425, %v5482
        %v5499 = vsub.f32 %v5426, %v5483
        %v5500 = vsub.f32 %v5427, %v5484
        %v5501 = vsub.f32 %v5428, %v5485
        %v5502 = vsub.f32 %v5429, %v5486
        %v5503 = vmul.f32 %v5487, %v5487
        %v5504 = vmul.f32 %v5488, %v5488
        %v5505 = vmul.f32 %v5489, %v5489
        %v5506 = vmul.f32 %v5490, %v5490
        %v5507 = vmul.f32 %v5491, %v5491
        %v5508 = vmul.f32 %v5492, %v5492
        %v5509 = vmul.f32 %v5493, %v5493
        %v5510 = vmul.f32 %v5494, %v5494
        %v5511 = vmul.f32 %v5495, %v5495
        %v5512 = vmul.f32 %v5496, %v5496
        %v5513 = vmul.f32 %v5497, %v5497
        %v5514 = vmul.f32 %v5498, %v5498
        %v5515 = vmul.f32 %v5499, %v5499
        %v5516 = vmul.f32 %v5500, %v5500
        %v5517 = vmul.f32 %v5501, %v5501
        %v5518 = vmul.f32 %v5502, %v5502
        %5519 = vadd.xlane.f32.xlu0 %v5503
        %v5520 = vpop.xlane.xlu0 %5519
        %5521 = vadd.xlane.f32.xlu0 %v5504
        %v5522 = vpop.xlane.xlu0 %5521
        %5523 = vadd.xlane.f32.xlu0 %v5505
        %v5524 = vpop.xlane.xlu0 %5523
        %5525 = vadd.xlane.f32.xlu0 %v5506
        %v5526 = vpop.xlane.xlu0 %5525
        %5527 = vadd.xlane.f32.xlu0 %v5507
        %v5528 = vpop.xlane.xlu0 %5527
        %5529 = vadd.xlane.f32.xlu0 %v5508
        %v5530 = vpop.xlane.xlu0 %5529
        %5531 = vadd.xlane.f32.xlu0 %v5509
        %v5532 = vpop.xlane.xlu0 %5531
        %5533 = vadd.xlane.f32.xlu0 %v5510
        %v5534 = vpop.xlane.xlu0 %5533
        %5535 = vadd.xlane.f32.xlu0 %v5511
        %v5536 = vpop.xlane.xlu0 %5535
        %5537 = vadd.xlane.f32.xlu0 %v5512
        %v5538 = vpop.xlane.xlu0 %5537
        %5539 = vadd.xlane.f32.xlu0 %v5513
        %v5540 = vpop.xlane.xlu0 %5539
        %5541 = vadd.xlane.f32.xlu0 %v5514
        %v5542 = vpop.xlane.xlu0 %5541
        %5543 = vadd.xlane.f32.xlu0 %v5515
        %v5544 = vpop.xlane.xlu0 %5543
        %5545 = vadd.xlane.f32.xlu0 %v5516
        %v5546 = vpop.xlane.xlu0 %5545
        %5547 = vadd.xlane.f32.xlu0 %v5517
        %v5548 = vpop.xlane.xlu0 %5547
        %5549 = vadd.xlane.f32.xlu0 %v5518
        %v5550 = vpop.xlane.xlu0 %5549
        %v5551 = vmul.f32 %v5520, %v5470
        %v5552 = vmul.f32 %v5522, %v5470
        %v5553 = vmul.f32 %v5524, %v5470
        %v5554 = vmul.f32 %v5526, %v5470
        %v5555 = vmul.f32 %v5528, %v5470
        %v5556 = vmul.f32 %v5530, %v5470
        %v5557 = vmul.f32 %v5532, %v5470
        %v5558 = vmul.f32 %v5534, %v5470
        %v5559 = vmul.f32 %v5536, %v5470
        %v5560 = vmul.f32 %v5538, %v5470
        %v5561 = vmul.f32 %v5540, %v5470
        %v5562 = vmul.f32 %v5542, %v5470
        %v5563 = vmul.f32 %v5544, %v5470
        %v5564 = vmul.f32 %v5546, %v5470
        %v5565 = vmul.f32 %v5548, %v5470
        %v5566 = vmul.f32 %v5550, %v5470
        %v5567 = vadd.f32 %v5551, 1e-05
        %v5568 = vadd.f32 %v5552, 1e-05
        %v5569 = vadd.f32 %v5553, 1e-05
        %v5570 = vadd.f32 %v5554, 1e-05
        %v5571 = vadd.f32 %v5555, 1e-05
        %v5572 = vadd.f32 %v5556, 1e-05
        %v5573 = vadd.f32 %v5557, 1e-05
        %v5574 = vadd.f32 %v5558, 1e-05
        %v5575 = vadd.f32 %v5559, 1e-05
        %v5576 = vadd.f32 %v5560, 1e-05
        %v5577 = vadd.f32 %v5561, 1e-05
        %v5578 = vadd.f32 %v5562, 1e-05
        %v5579 = vadd.f32 %v5563, 1e-05
        %v5580 = vadd.f32 %v5564, 1e-05
        %v5581 = vadd.f32 %v5565, 1e-05
        %v5582 = vadd.f32 %v5566, 1e-05
        %v5583 = vrsqrt.pop %v5567
        %v5584 = vmul.f32 %v5583, %v5567
        %v5585 = vmul.f32 %v5584, %v5583
        %v5586 = vmul.f32 0.5, %v5585
        %v5587 = vsub.f32 1.5, %v5586
        %v5588 = vmul.f32 %v5583, %v5587
        %vm5589 = vweird.f32 %v5567
        %vm5590 = vweird.f32 %v5583
        %vm5591 = vmor %vm5589, %vm5590
        %v5592 = vsel %vm5591, %v5583, %v5588
        %v5593 = vrsqrt.pop %v5568
        %v5594 = vmul.f32 %v5593, %v5568
        %v5595 = vmul.f32 %v5594, %v5593
        %v5596 = vmul.f32 0.5, %v5595
        %v5597 = vsub.f32 1.5, %v5596
        %v5598 = vmul.f32 %v5593, %v5597
        %vm5599 = vweird.f32 %v5568
        %vm5600 = vweird.f32 %v5593
        %vm5601 = vmor %vm5599, %vm5600
        %v5602 = vsel %vm5601, %v5593, %v5598
        %v5603 = vrsqrt.pop %v5569
        %v5604 = vmul.f32 %v5603, %v5569
        %v5605 = vmul.f32 %v5604, %v5603
        %v5606 = vmul.f32 0.5, %v5605
        %v5607 = vsub.f32 1.5, %v5606
        %v5608 = vmul.f32 %v5603, %v5607
        %vm5609 = vweird.f32 %v5569
        %vm5610 = vweird.f32 %v5603
        %vm5611 = vmor %vm5609, %vm5610
        %v5612 = vsel %vm5611, %v5603, %v5608
        %v5613 = vrsqrt.pop %v5570
        %v5614 = vmul.f32 %v5613, %v5570
        %v5615 = vmul.f32 %v5614, %v5613
        %v5616 = vmul.f32 0.5, %v5615
        %v5617 = vsub.f32 1.5, %v5616
        %v5618 = vmul.f32 %v5613, %v5617
        %vm5619 = vweird.f32 %v5570
        %vm5620 = vweird.f32 %v5613
        %vm5621 = vmor %vm5619, %vm5620
        %v5622 = vsel %vm5621, %v5613, %v5618
        %v5623 = vrsqrt.pop %v5571
        %v5624 = vmul.f32 %v5623, %v5571
        %v5625 = vmul.f32 %v5624, %v5623
        %v5626 = vmul.f32 0.5, %v5625
        %v5627 = vsub.f32 1.5, %v5626
        %v5628 = vmul.f32 %v5623, %v5627
        %vm5629 = vweird.f32 %v5571
        %vm5630 = vweird.f32 %v5623
        %vm5631 = vmor %vm5629, %vm5630
        %v5632 = vsel %vm5631, %v5623, %v5628
        %v5633 = vrsqrt.pop %v5572
        %v5634 = vmul.f32 %v5633, %v5572
        %v5635 = vmul.f32 %v5634, %v5633
        %v5636 = vmul.f32 0.5, %v5635
        %v5637 = vsub.f32 1.5, %v5636
        %v5638 = vmul.f32 %v5633, %v5637
        %vm5639 = vweird.f32 %v5572
        %vm5640 = vweird.f32 %v5633
        %vm5641 = vmor %vm5639, %vm5640
        %v5642 = vsel %vm5641, %v5633, %v5638
        %v5643 = vrsqrt.pop %v5573
        %v5644 = vmul.f32 %v5643, %v5573
        %v5645 = vmul.f32 %v5644, %v5643
        %v5646 = vmul.f32 0.5, %v5645
        %v5647 = vsub.f32 1.5, %v5646
        %v5648 = vmul.f32 %v5643, %v5647
        %vm5649 = vweird.f32 %v5573
        %vm5650 = vweird.f32 %v5643
        %vm5651 = vmor %vm5649, %vm5650
        %v5652 = vsel %vm5651, %v5643, %v5648
        %v5653 = vrsqrt.pop %v5574
        %v5654 = vmul.f32 %v5653, %v5574
        %v5655 = vmul.f32 %v5654, %v5653
        %v5656 = vmul.f32 0.5, %v5655
        %v5657 = vsub.f32 1.5, %v5656
        %v5658 = vmul.f32 %v5653, %v5657
        %vm5659 = vweird.f32 %v5574
        %vm5660 = vweird.f32 %v5653
        %vm5661 = vmor %vm5659, %vm5660
        %v5662 = vsel %vm5661, %v5653, %v5658
        %v5663 = vrsqrt.pop %v5575
        %v5664 = vmul.f32 %v5663, %v5575
        %v5665 = vmul.f32 %v5664, %v5663
        %v5666 = vmul.f32 0.5, %v5665
        %v5667 = vsub.f32 1.5, %v5666
        %v5668 = vmul.f32 %v5663, %v5667
        %vm5669 = vweird.f32 %v5575
        %vm5670 = vweird.f32 %v5663
        %vm5671 = vmor %vm5669, %vm5670
        %v5672 = vsel %vm5671, %v5663, %v5668
        %v5673 = vrsqrt.pop %v5576
        %v5674 = vmul.f32 %v5673, %v5576
        %v5675 = vmul.f32 %v5674, %v5673
        %v5676 = vmul.f32 0.5, %v5675
        %v5677 = vsub.f32 1.5, %v5676
        %v5678 = vmul.f32 %v5673, %v5677
        %vm5679 = vweird.f32 %v5576
        %vm5680 = vweird.f32 %v5673
        %vm5681 = vmor %vm5679, %vm5680
        %v5682 = vsel %vm5681, %v5673, %v5678
        %v5683 = vrsqrt.pop %v5577
        %v5684 = vmul.f32 %v5683, %v5577
        %v5685 = vmul.f32 %v5684, %v5683
        %v5686 = vmul.f32 0.5, %v5685
        %v5687 = vsub.f32 1.5, %v5686
        %v5688 = vmul.f32 %v5683, %v5687
        %vm5689 = vweird.f32 %v5577
        %vm5690 = vweird.f32 %v5683
        %vm5691 = vmor %vm5689, %vm5690
        %v5692 = vsel %vm5691, %v5683, %v5688
        %v5693 = vrsqrt.pop %v5578
        %v5694 = vmul.f32 %v5693, %v5578
        %v5695 = vmul.f32 %v5694, %v5693
        %v5696 = vmul.f32 0.5, %v5695
        %v5697 = vsub.f32 1.5, %v5696
        %v5698 = vmul.f32 %v5693, %v5697
        %vm5699 = vweird.f32 %v5578
        %vm5700 = vweird.f32 %v5693
        %vm5701 = vmor %vm5699, %vm5700
        %v5702 = vsel %vm5701, %v5693, %v5698
        %v5703 = vrsqrt.pop %v5579
        %v5704 = vmul.f32 %v5703, %v5579
        %v5705 = vmul.f32 %v5704, %v5703
        %v5706 = vmul.f32 0.5, %v5705
        %v5707 = vsub.f32 1.5, %v5706
        %v5708 = vmul.f32 %v5703, %v5707
        %vm5709 = vweird.f32 %v5579
        %vm5710 = vweird.f32 %v5703
        %vm5711 = vmor %vm5709, %vm5710
        %v5712 = vsel %vm5711, %v5703, %v5708
        %v5713 = vrsqrt.pop %v5580
        %v5714 = vmul.f32 %v5713, %v5580
        %v5715 = vmul.f32 %v5714, %v5713
        %v5716 = vmul.f32 0.5, %v5715
        %v5717 = vsub.f32 1.5, %v5716
        %v5718 = vmul.f32 %v5713, %v5717
        %vm5719 = vweird.f32 %v5580
        %vm5720 = vweird.f32 %v5713
        %vm5721 = vmor %vm5719, %vm5720
        %v5722 = vsel %vm5721, %v5713, %v5718
        %v5723 = vrsqrt.pop %v5581
        %v5724 = vmul.f32 %v5723, %v5581
        %v5725 = vmul.f32 %v5724, %v5723
        %v5726 = vmul.f32 0.5, %v5725
        %v5727 = vsub.f32 1.5, %v5726
        %v5728 = vmul.f32 %v5723, %v5727
        %vm5729 = vweird.f32 %v5581
        %vm5730 = vweird.f32 %v5723
        %vm5731 = vmor %vm5729, %vm5730
        %v5732 = vsel %vm5731, %v5723, %v5728
        %v5733 = vrsqrt.pop %v5582
        %v5734 = vmul.f32 %v5733, %v5582
        %v5735 = vmul.f32 %v5734, %v5733
        %v5736 = vmul.f32 0.5, %v5735
        %v5737 = vsub.f32 1.5, %v5736
        %v5738 = vmul.f32 %v5733, %v5737
        %vm5739 = vweird.f32 %v5582
        %vm5740 = vweird.f32 %v5733
        %vm5741 = vmor %vm5739, %vm5740
        %v5742 = vsel %vm5741, %v5733, %v5738
        %v5743 = vmul.f32 %v5487, %v5592
        %v5744 = vmul.f32 %v5488, %v5602
        %v5745 = vmul.f32 %v5489, %v5612
        %v5746 = vmul.f32 %v5490, %v5622
        %v5747 = vmul.f32 %v5491, %v5632
        %v5748 = vmul.f32 %v5492, %v5642
        %v5749 = vmul.f32 %v5493, %v5652
        %v5750 = vmul.f32 %v5494, %v5662
        %v5751 = vmul.f32 %v5495, %v5672
        %v5752 = vmul.f32 %v5496, %v5682
        %v5753 = vmul.f32 %v5497, %v5692
        %v5754 = vmul.f32 %v5498, %v5702
        %v5755 = vmul.f32 %v5499, %v5712
        %v5756 = vmul.f32 %v5500, %v5722
        %v5757 = vmul.f32 %v5501, %v5732
        %v5758 = vmul.f32 %v5502, %v5742
        %v5760 = vperm.slane %v5430, 0
        %v5762 = vmul.f32 %v5743, %v5760
        %v5763 = vmul.f32 %v5744, %v5760
        %v5764 = vmul.f32 %v5745, %v5760
        %v5765 = vmul.f32 %v5746, %v5760
        %v5766 = vmul.f32 %v5747, %v5760
        %v5767 = vmul.f32 %v5748, %v5760
        %v5768 = vmul.f32 %v5749, %v5760
        %v5769 = vmul.f32 %v5750, %v5760
        %v5770 = vmul.f32 %v5751, %v5760
        %v5771 = vmul.f32 %v5752, %v5760
        %v5772 = vmul.f32 %v5753, %v5760
        %v5773 = vmul.f32 %v5754, %v5760
        %v5774 = vmul.f32 %v5755, %v5760
        %v5775 = vmul.f32 %v5756, %v5760
        %v5776 = vmul.f32 %v5757, %v5760
        %v5777 = vmul.f32 %v5758, %v5760
        %v5779 = vperm.slane %v5431, 0
        %v5781 = vadd.f32 %v5762, %v5779
        %v5782 = vadd.f32 %v5763, %v5779
        %v5783 = vadd.f32 %v5764, %v5779
        %v5784 = vadd.f32 %v5765, %v5779
        %v5785 = vadd.f32 %v5766, %v5779
        %v5786 = vadd.f32 %v5767, %v5779
        %v5787 = vadd.f32 %v5768, %v5779
        %v5788 = vadd.f32 %v5769, %v5779
        %v5789 = vadd.f32 %v5770, %v5779
        %v5790 = vadd.f32 %v5771, %v5779
        %v5791 = vadd.f32 %v5772, %v5779
        %v5792 = vadd.f32 %v5773, %v5779
        %v5793 = vadd.f32 %v5774, %v5779
        %v5794 = vadd.f32 %v5775, %v5779
        %v5795 = vadd.f32 %v5776, %v5779
        %v5796 = vadd.f32 %v5777, %v5779
        %v5797 = vpack.c.bf16 %v5782, %v5781
        %v5798 = vpack.c.bf16 %v5784, %v5783
        %v5799 = vpack.c.bf16 %v5786, %v5785
        %v5800 = vpack.c.bf16 %v5788, %v5787
        %v5801 = vpack.c.bf16 %v5790, %v5789
        %v5802 = vpack.c.bf16 %v5792, %v5791
        %v5803 = vpack.c.bf16 %v5794, %v5793
        %v5804 = vpack.c.bf16 %v5796, %v5795
        %v5805 = vld [vmem:[%s891] sm:$0xff]
        %v5806 = vld [vmem:[%s891 + $0x8] sm:$0xff]
        %v5807 = vld [vmem:[%s891 + $0x10] sm:$0xff]
        %v5808 = vld [vmem:[%s891 + $0x18] sm:$0xff]
        %v5809 = vld [vmem:[%s891 + $0x20] sm:$0xff]
        %v5810 = vld [vmem:[%s891 + $0x28] sm:$0xff]
        %v5811 = vld [vmem:[%s891 + $0x30] sm:$0xff]
        %v5812 = vld [vmem:[%s891 + $0x38] sm:$0xff]
        %v5813 = vld [vmem:[%s891 + $0x40] sm:$0xff]
        %v5814 = vld [vmem:[%s891 + $0x48] sm:$0xff]
        %v5815 = vld [vmem:[%s891 + $0x50] sm:$0xff]
        %v5816 = vld [vmem:[%s891 + $0x58] sm:$0xff]
        %v5817 = vld [vmem:[%s891 + $0x60] sm:$0xff]
        %v5818 = vld [vmem:[%s891 + $0x68] sm:$0xff]
        %v5819 = vld [vmem:[%s891 + $0x70] sm:$0xff]
        %v5820 = vld [vmem:[%s891 + $0x78] sm:$0xff]
        %v5821 = vld [vmem:[%s895] sm:$0x3]
        %v5823 = vperm.slane %v5821, 0
        %v5824 = vperm.slane %v5821, 1
        %v5843 = vunpack.c.l.b16 %v5805
        %v5844 = vunpack.c.h.b16 %v5805
        %v5845 = vunpack.c.l.b16 %v5806
        %v5846 = vunpack.c.h.b16 %v5806
        %v5847 = vunpack.c.l.b16 %v5807
        %v5848 = vunpack.c.h.b16 %v5807
        %v5849 = vunpack.c.l.b16 %v5808
        %v5850 = vunpack.c.h.b16 %v5808
        %v5851 = vunpack.c.l.b16 %v5809
        %v5852 = vunpack.c.h.b16 %v5809
        %v5853 = vunpack.c.l.b16 %v5810
        %v5854 = vunpack.c.h.b16 %v5810
        %v5855 = vunpack.c.l.b16 %v5811
        %v5856 = vunpack.c.h.b16 %v5811
        %v5857 = vunpack.c.l.b16 %v5812
        %v5858 = vunpack.c.h.b16 %v5812
        %v5859 = vunpack.c.l.b16 %v5813
        %v5860 = vunpack.c.h.b16 %v5813
        %v5861 = vunpack.c.l.b16 %v5814
        %v5862 = vunpack.c.h.b16 %v5814
        %v5863 = vunpack.c.l.b16 %v5815
        %v5864 = vunpack.c.h.b16 %v5815
        %v5865 = vunpack.c.l.b16 %v5816
        %v5866 = vunpack.c.h.b16 %v5816
        %v5867 = vunpack.c.l.b16 %v5817
        %v5868 = vunpack.c.h.b16 %v5817
        %v5869 = vunpack.c.l.b16 %v5818
        %v5870 = vunpack.c.h.b16 %v5818
        %v5871 = vunpack.c.l.b16 %v5819
        %v5872 = vunpack.c.h.b16 %v5819
        %v5873 = vunpack.c.l.b16 %v5820
        %v5874 = vunpack.c.h.b16 %v5820
        %v5875 = vpack.c.b16 %v5845, %v5843
        %v5876 = vpack.c.b16 %v5846, %v5844
        %v5877 = vpack.c.b16 %v5849, %v5847
        %v5878 = vpack.c.b16 %v5850, %v5848
        %v5879 = vpack.c.b16 %v5853, %v5851
        %v5880 = vpack.c.b16 %v5854, %v5852
        %v5881 = vpack.c.b16 %v5857, %v5855
        %v5882 = vpack.c.b16 %v5858, %v5856
        %v5883 = vpack.c.b16 %v5861, %v5859
        %v5884 = vpack.c.b16 %v5862, %v5860
        %v5885 = vpack.c.b16 %v5865, %v5863
        %v5886 = vpack.c.b16 %v5866, %v5864
        %v5887 = vpack.c.b16 %v5869, %v5867
        %v5888 = vpack.c.b16 %v5870, %v5868
        %v5889 = vpack.c.b16 %v5873, %v5871
        %v5890 = vpack.c.b16 %v5874, %v5872
        %5907 = vmatpush.bf16.msra.mxu0 %v5889
        %5908 = vmatpush.bf16.msra.mxu0 %v5887
        %5909 = vmatpush.bf16.msra.mxu0 %v5885
        %5910 = vmatpush.bf16.msra.mxu0 %v5883
        %5911 = vmatpush.bf16.msra.mxu0 %v5881
        %5912 = vmatpush.bf16.msra.mxu0 %v5879
        %5913 = vmatpush.bf16.msra.mxu0 %v5877
        %5914 = vmatpush.bf16.msra.mxu0 %v5875
        %5915 = vmatmul.bf16.gmra.mxu0 %v5797
        %v5916 = vpop.f32.mrf.mxu0
        %v5917 = vadd.f32 %v5823, %v5916
        %v5918 = vpop.f32.mrf.mxu0
        %v5919 = vadd.f32 %v5823, %v5918
        %5920 = vmatmul.bf16.gmra.mxu0 %v5798
        %v5921 = vpop.f32.mrf.mxu0
        %v5922 = vadd.f32 %v5823, %v5921
        %v5923 = vpop.f32.mrf.mxu0
        %v5924 = vadd.f32 %v5823, %v5923
        %5925 = vmatmul.bf16.gmra.mxu0 %v5799
        %v5926 = vpop.f32.mrf.mxu0
        %v5927 = vadd.f32 %v5823, %v5926
        %v5928 = vpop.f32.mrf.mxu0
        %v5929 = vadd.f32 %v5823, %v5928
        %5930 = vmatmul.bf16.gmra.mxu0 %v5800
        %v5931 = vpop.f32.mrf.mxu0
        %v5932 = vadd.f32 %v5823, %v5931
        %v5933 = vpop.f32.mrf.mxu0
        %v5934 = vadd.f32 %v5823, %v5933
        %5935 = vmatmul.bf16.gmra.mxu0 %v5801
        %v5936 = vpop.f32.mrf.mxu0
        %v5937 = vadd.f32 %v5823, %v5936
        %v5938 = vpop.f32.mrf.mxu0
        %v5939 = vadd.f32 %v5823, %v5938
        %5940 = vmatmul.bf16.gmra.mxu0 %v5802
        %v5941 = vpop.f32.mrf.mxu0
        %v5942 = vadd.f32 %v5823, %v5941
        %v5943 = vpop.f32.mrf.mxu0
        %v5944 = vadd.f32 %v5823, %v5943
        %5945 = vmatmul.bf16.gmra.mxu0 %v5803
        %v5946 = vpop.f32.mrf.mxu0
        %v5947 = vadd.f32 %v5823, %v5946
        %v5948 = vpop.f32.mrf.mxu0
        %v5949 = vadd.f32 %v5823, %v5948
        %5950 = vmatmul.bf16.gmra.mxu0 %v5804
        %v5951 = vpop.f32.mrf.mxu0
        %v5952 = vadd.f32 %v5823, %v5951
        %v5953 = vpop.f32.mrf.mxu0
        %v5954 = vadd.f32 %v5823, %v5953
        %5955 = vdwg.mxu0
        %5956 = vmatpush.bf16.msra.mxu0 %v5890
        %5957 = vmatpush.bf16.msra.mxu0 %v5888
        %5958 = vmatpush.bf16.msra.mxu0 %v5886
        %5959 = vmatpush.bf16.msra.mxu0 %v5884
        %5960 = vmatpush.bf16.msra.mxu0 %v5882
        %5961 = vmatpush.bf16.msra.mxu0 %v5880
        %5962 = vmatpush.bf16.msra.mxu0 %v5878
        %5963 = vmatpush.bf16.msra.mxu0 %v5876
        %5964 = vmatmul.bf16.gmra.mxu0 %v5797
        %v5965 = vpop.f32.mrf.mxu0
        %v5966 = vadd.f32 %v5824, %v5965
        %v5967 = vpop.f32.mrf.mxu0
        %v5968 = vadd.f32 %v5824, %v5967
        %5969 = vmatmul.bf16.gmra.mxu0 %v5798
        %v5970 = vpop.f32.mrf.mxu0
        %v5971 = vadd.f32 %v5824, %v5970
        %v5972 = vpop.f32.mrf.mxu0
        %v5973 = vadd.f32 %v5824, %v5972
        %5974 = vmatmul.bf16.gmra.mxu0 %v5799
        %v5975 = vpop.f32.mrf.mxu0
        %v5976 = vadd.f32 %v5824, %v5975
        %v5977 = vpop.f32.mrf.mxu0
        %v5978 = vadd.f32 %v5824, %v5977
        %5979 = vmatmul.bf16.gmra.mxu0 %v5800
        %v5980 = vpop.f32.mrf.mxu0
        %v5981 = vadd.f32 %v5824, %v5980
        %v5982 = vpop.f32.mrf.mxu0
        %v5983 = vadd.f32 %v5824, %v5982
        %5984 = vmatmul.bf16.gmra.mxu0 %v5801
        %v5985 = vpop.f32.mrf.mxu0
        %v5986 = vadd.f32 %v5824, %v5985
        %v5987 = vpop.f32.mrf.mxu0
        %v5988 = vadd.f32 %v5824, %v5987
        %5989 = vmatmul.bf16.gmra.mxu0 %v5802
        %v5990 = vpop.f32.mrf.mxu0
        %v5991 = vadd.f32 %v5824, %v5990
        %v5992 = vpop.f32.mrf.mxu0
        %v5993 = vadd.f32 %v5824, %v5992
        %5994 = vmatmul.bf16.gmra.mxu0 %v5803
        %v5995 = vpop.f32.mrf.mxu0
        %v5996 = vadd.f32 %v5824, %v5995
        %v5997 = vpop.f32.mrf.mxu0
        %v5998 = vadd.f32 %v5824, %v5997
        %5999 = vmatmul.bf16.gmra.mxu0 %v5804
        %v6000 = vpop.f32.mrf.mxu0
        %v6001 = vadd.f32 %v5824, %v6000
        %v6002 = vpop.f32.mrf.mxu0
        %v6003 = vadd.f32 %v5824, %v6002
        %6004 = vdwg.mxu0
        %v6005 = vmul.f32 %v5917, 0.5
        %v6006 = vmul.f32 %v5966, 0.5
        %v6007 = vmul.f32 %v5919, 0.5
        %v6008 = vmul.f32 %v5968, 0.5
        %v6009 = vmul.f32 %v5922, 0.5
        %v6010 = vmul.f32 %v5971, 0.5
        %v6011 = vmul.f32 %v5924, 0.5
        %v6012 = vmul.f32 %v5973, 0.5
        %v6013 = vmul.f32 %v5927, 0.5
        %v6014 = vmul.f32 %v5976, 0.5
        %v6015 = vmul.f32 %v5929, 0.5
        %v6016 = vmul.f32 %v5978, 0.5
        %v6017 = vmul.f32 %v5932, 0.5
        %v6018 = vmul.f32 %v5981, 0.5
        %v6019 = vmul.f32 %v5934, 0.5
        %v6020 = vmul.f32 %v5983, 0.5
        %v6021 = vmul.f32 %v5937, 0.5
        %v6022 = vmul.f32 %v5986, 0.5
        %v6023 = vmul.f32 %v5939, 0.5
        %v6024 = vmul.f32 %v5988, 0.5
        %v6025 = vmul.f32 %v5942, 0.5
        %v6026 = vmul.f32 %v5991, 0.5
        %v6027 = vmul.f32 %v5944, 0.5
        %v6028 = vmul.f32 %v5993, 0.5
        %v6029 = vmul.f32 %v5947, 0.5
        %v6030 = vmul.f32 %v5996, 0.5
        %v6031 = vmul.f32 %v5949, 0.5
        %v6032 = vmul.f32 %v5998, 0.5
        %v6033 = vmul.f32 %v5952, 0.5
        %v6034 = vmul.f32 %v6001, 0.5
        %v6035 = vmul.f32 %v5954, 0.5
        %v6036 = vmul.f32 %v6003, 0.5
        %v6037 = vmul.f32 %v5917, 0.044715
        %v6038 = vmul.f32 %v5966, 0.044715
        %v6039 = vmul.f32 %v5919, 0.044715
        %v6040 = vmul.f32 %v5968, 0.044715
        %v6041 = vmul.f32 %v5922, 0.044715
        %v6042 = vmul.f32 %v5971, 0.044715
        %v6043 = vmul.f32 %v5924, 0.044715
        %v6044 = vmul.f32 %v5973, 0.044715
        %v6045 = vmul.f32 %v5927, 0.044715
        %v6046 = vmul.f32 %v5976, 0.044715
        %v6047 = vmul.f32 %v5929, 0.044715
        %v6048 = vmul.f32 %v5978, 0.044715
        %v6049 = vmul.f32 %v5932, 0.044715
        %v6050 = vmul.f32 %v5981, 0.044715
        %v6051 = vmul.f32 %v5934, 0.044715
        %v6052 = vmul.f32 %v5983, 0.044715
        %v6053 = vmul.f32 %v5937, 0.044715
        %v6054 = vmul.f32 %v5986, 0.044715
        %v6055 = vmul.f32 %v5939, 0.044715
        %v6056 = vmul.f32 %v5988, 0.044715
        %v6057 = vmul.f32 %v5942, 0.044715
        %v6058 = vmul.f32 %v5991, 0.044715
        %v6059 = vmul.f32 %v5944, 0.044715
        %v6060 = vmul.f32 %v5993, 0.044715
        %v6061 = vmul.f32 %v5947, 0.044715
        %v6062 = vmul.f32 %v5996, 0.044715
        %v6063 = vmul.f32 %v5949, 0.044715
        %v6064 = vmul.f32 %v5998, 0.044715
        %v6065 = vmul.f32 %v5952, 0.044715
        %v6066 = vmul.f32 %v6001, 0.044715
        %v6067 = vmul.f32 %v5954, 0.044715
        %v6068 = vmul.f32 %v6003, 0.044715
        %v6069 = vmul.f32 %v6037, %v5917
        %v6070 = vmul.f32 %v6038, %v5966
        %v6071 = vmul.f32 %v6039, %v5919
        %v6072 = vmul.f32 %v6040, %v5968
        %v6073 = vmul.f32 %v6041, %v5922
        %v6074 = vmul.f32 %v6042, %v5971
        %v6075 = vmul.f32 %v6043, %v5924
        %v6076 = vmul.f32 %v6044, %v5973
        %v6077 = vmul.f32 %v6045, %v5927
        %v6078 = vmul.f32 %v6046, %v5976
        %v6079 = vmul.f32 %v6047, %v5929
        %v6080 = vmul.f32 %v6048, %v5978
        %v6081 = vmul.f32 %v6049, %v5932
        %v6082 = vmul.f32 %v6050, %v5981
        %v6083 = vmul.f32 %v6051, %v5934
        %v6084 = vmul.f32 %v6052, %v5983
        %v6085 = vmul.f32 %v6053, %v5937
        %v6086 = vmul.f32 %v6054, %v5986
        %v6087 = vmul.f32 %v6055, %v5939
        %v6088 = vmul.f32 %v6056, %v5988
        %v6089 = vmul.f32 %v6057, %v5942
        %v6090 = vmul.f32 %v6058, %v5991
        %v6091 = vmul.f32 %v6059, %v5944
        %v6092 = vmul.f32 %v6060, %v5993
        %v6093 = vmul.f32 %v6061, %v5947
        %v6094 = vmul.f32 %v6062, %v5996
        %v6095 = vmul.f32 %v6063, %v5949
        %v6096 = vmul.f32 %v6064, %v5998
        %v6097 = vmul.f32 %v6065, %v5952
        %v6098 = vmul.f32 %v6066, %v6001
        %v6099 = vmul.f32 %v6067, %v5954
        %v6100 = vmul.f32 %v6068, %v6003
        %v6101 = vmul.f32 %v6069, %v5917
        %v6102 = vmul.f32 %v6070, %v5966
        %v6103 = vmul.f32 %v6071, %v5919
        %v6104 = vmul.f32 %v6072, %v5968
        %v6105 = vmul.f32 %v6073, %v5922
        %v6106 = vmul.f32 %v6074, %v5971
        %v6107 = vmul.f32 %v6075, %v5924
        %v6108 = vmul.f32 %v6076, %v5973
        %v6109 = vmul.f32 %v6077, %v5927
        %v6110 = vmul.f32 %v6078, %v5976
        %v6111 = vmul.f32 %v6079, %v5929
        %v6112 = vmul.f32 %v6080, %v5978
        %v6113 = vmul.f32 %v6081, %v5932
        %v6114 = vmul.f32 %v6082, %v5981
        %v6115 = vmul.f32 %v6083, %v5934
        %v6116 = vmul.f32 %v6084, %v5983
        %v6117 = vmul.f32 %v6085, %v5937
        %v6118 = vmul.f32 %v6086, %v5986
        %v6119 = vmul.f32 %v6087, %v5939
        %v6120 = vmul.f32 %v6088, %v5988
        %v6121 = vmul.f32 %v6089, %v5942
        %v6122 = vmul.f32 %v6090, %v5991
        %v6123 = vmul.f32 %v6091, %v5944
        %v6124 = vmul.f32 %v6092, %v5993
        %v6125 = vmul.f32 %v6093, %v5947
        %v6126 = vmul.f32 %v6094, %v5996
        %v6127 = vmul.f32 %v6095, %v5949
        %v6128 = vmul.f32 %v6096, %v5998
        %v6129 = vmul.f32 %v6097, %v5952
        %v6130 = vmul.f32 %v6098, %v6001
        %v6131 = vmul.f32 %v6099, %v5954
        %v6132 = vmul.f32 %v6100, %v6003
        %v6133 = vadd.f32 %v5917, %v6101
        %v6134 = vadd.f32 %v5966, %v6102
        %v6135 = vadd.f32 %v5919, %v6103
        %v6136 = vadd.f32 %v5968, %v6104
        %v6137 = vadd.f32 %v5922, %v6105
        %v6138 = vadd.f32 %v5971, %v6106
        %v6139 = vadd.f32 %v5924, %v6107
        %v6140 = vadd.f32 %v5973, %v6108
        %v6141 = vadd.f32 %v5927, %v6109
        %v6142 = vadd.f32 %v5976, %v6110
        %v6143 = vadd.f32 %v5929, %v6111
        %v6144 = vadd.f32 %v5978, %v6112
        %v6145 = vadd.f32 %v5932, %v6113
        %v6146 = vadd.f32 %v5981, %v6114
        %v6147 = vadd.f32 %v5934, %v6115
        %v6148 = vadd.f32 %v5983, %v6116
        %v6149 = vadd.f32 %v5937, %v6117
        %v6150 = vadd.f32 %v5986, %v6118
        %v6151 = vadd.f32 %v5939, %v6119
        %v6152 = vadd.f32 %v5988, %v6120
        %v6153 = vadd.f32 %v5942, %v6121
        %v6154 = vadd.f32 %v5991, %v6122
        %v6155 = vadd.f32 %v5944, %v6123
        %v6156 = vadd.f32 %v5993, %v6124
        %v6157 = vadd.f32 %v5947, %v6125
        %v6158 = vadd.f32 %v5996, %v6126
        %v6159 = vadd.f32 %v5949, %v6127
        %v6160 = vadd.f32 %v5998, %v6128
        %v6161 = vadd.f32 %v5952, %v6129
        %v6162 = vadd.f32 %v6001, %v6130
        %v6163 = vadd.f32 %v5954, %v6131
        %v6164 = vadd.f32 %v6003, %v6132
        %v6165 = vmul.f32 %v6133, 0.7978846
        %v6166 = vmul.f32 %v6134, 0.7978846
        %v6167 = vmul.f32 %v6135, 0.7978846
        %v6168 = vmul.f32 %v6136, 0.7978846
        %v6169 = vmul.f32 %v6137, 0.7978846
        %v6170 = vmul.f32 %v6138, 0.7978846
        %v6171 = vmul.f32 %v6139, 0.7978846
        %v6172 = vmul.f32 %v6140, 0.7978846
        %v6173 = vmul.f32 %v6141, 0.7978846
        %v6174 = vmul.f32 %v6142, 0.7978846
        %v6175 = vmul.f32 %v6143, 0.7978846
        %v6176 = vmul.f32 %v6144, 0.7978846
        %v6177 = vmul.f32 %v6145, 0.7978846
        %v6178 = vmul.f32 %v6146, 0.7978846
        %v6179 = vmul.f32 %v6147, 0.7978846
        %v6180 = vmul.f32 %v6148, 0.7978846
        %v6181 = vmul.f32 %v6149, 0.7978846
        %v6182 = vmul.f32 %v6150, 0.7978846
        %v6183 = vmul.f32 %v6151, 0.7978846
        %v6184 = vmul.f32 %v6152, 0.7978846
        %v6185 = vmul.f32 %v6153, 0.7978846
        %v6186 = vmul.f32 %v6154, 0.7978846
        %v6187 = vmul.f32 %v6155, 0.7978846
        %v6188 = vmul.f32 %v6156, 0.7978846
        %v6189 = vmul.f32 %v6157, 0.7978846
        %v6190 = vmul.f32 %v6158, 0.7978846
        %v6191 = vmul.f32 %v6159, 0.7978846
        %v6192 = vmul.f32 %v6160, 0.7978846
        %v6193 = vmul.f32 %v6161, 0.7978846
        %v6194 = vmul.f32 %v6162, 0.7978846
        %v6195 = vmul.f32 %v6163, 0.7978846
        %v6196 = vmul.f32 %v6164, 0.7978846
        %v6197 = vtanh.pop %v6165
        %v6198 = vtanh.pop %v6166
        %v6199 = vtanh.pop %v6167
        %v6200 = vtanh.pop %v6168
        %v6201 = vtanh.pop %v6169
        %v6202 = vtanh.pop %v6170
        %v6203 = vtanh.pop %v6171
        %v6204 = vtanh.pop %v6172
        %v6205 = vtanh.pop %v6173
        %v6206 = vtanh.pop %v6174
        %v6207 = vtanh.pop %v6175
        %v6208 = vtanh.pop %v6176
        %v6209 = vtanh.pop %v6177
        %v6210 = vtanh.pop %v6178
        %v6211 = vtanh.pop %v6179
        %v6212 = vtanh.pop %v6180
        %v6213 = vtanh.pop %v6181
        %v6214 = vtanh.pop %v6182
        %v6215 = vtanh.pop %v6183
        %v6216 = vtanh.pop %v6184
        %v6217 = vtanh.pop %v6185
        %v6218 = vtanh.pop %v6186
        %v6219 = vtanh.pop %v6187
        %v6220 = vtanh.pop %v6188
        %v6221 = vtanh.pop %v6189
        %v6222 = vtanh.pop %v6190
        %v6223 = vtanh.pop %v6191
        %v6224 = vtanh.pop %v6192
        %v6225 = vtanh.pop %v6193
        %v6226 = vtanh.pop %v6194
        %v6227 = vtanh.pop %v6195
        %v6228 = vtanh.pop %v6196
        %v6229 = vadd.f32 %v6197, 1.0
        %v6230 = vadd.f32 %v6198, 1.0
        %v6231 = vadd.f32 %v6199, 1.0
        %v6232 = vadd.f32 %v6200, 1.0
        %v6233 = vadd.f32 %v6201, 1.0
        %v6234 = vadd.f32 %v6202, 1.0
        %v6235 = vadd.f32 %v6203, 1.0
        %v6236 = vadd.f32 %v6204, 1.0
        %v6237 = vadd.f32 %v6205, 1.0
        %v6238 = vadd.f32 %v6206, 1.0
        %v6239 = vadd.f32 %v6207, 1.0
        %v6240 = vadd.f32 %v6208, 1.0
        %v6241 = vadd.f32 %v6209, 1.0
        %v6242 = vadd.f32 %v6210, 1.0
        %v6243 = vadd.f32 %v6211, 1.0
        %v6244 = vadd.f32 %v6212, 1.0
        %v6245 = vadd.f32 %v6213, 1.0
        %v6246 = vadd.f32 %v6214, 1.0
        %v6247 = vadd.f32 %v6215, 1.0
        %v6248 = vadd.f32 %v6216, 1.0
        %v6249 = vadd.f32 %v6217, 1.0
        %v6250 = vadd.f32 %v6218, 1.0
        %v6251 = vadd.f32 %v6219, 1.0
        %v6252 = vadd.f32 %v6220, 1.0
        %v6253 = vadd.f32 %v6221, 1.0
        %v6254 = vadd.f32 %v6222, 1.0
        %v6255 = vadd.f32 %v6223, 1.0
        %v6256 = vadd.f32 %v6224, 1.0
        %v6257 = vadd.f32 %v6225, 1.0
        %v6258 = vadd.f32 %v6226, 1.0
        %v6259 = vadd.f32 %v6227, 1.0
        %v6260 = vadd.f32 %v6228, 1.0
        %v6261 = vmul.f32 %v6005, %v6229
        %v6262 = vmul.f32 %v6006, %v6230
        %v6263 = vmul.f32 %v6007, %v6231
        %v6264 = vmul.f32 %v6008, %v6232
        %v6265 = vmul.f32 %v6009, %v6233
        %v6266 = vmul.f32 %v6010, %v6234
        %v6267 = vmul.f32 %v6011, %v6235
        %v6268 = vmul.f32 %v6012, %v6236
        %v6269 = vmul.f32 %v6013, %v6237
        %v6270 = vmul.f32 %v6014, %v6238
        %v6271 = vmul.f32 %v6015, %v6239
        %v6272 = vmul.f32 %v6016, %v6240
        %v6273 = vmul.f32 %v6017, %v6241
        %v6274 = vmul.f32 %v6018, %v6242
        %v6275 = vmul.f32 %v6019, %v6243
        %v6276 = vmul.f32 %v6020, %v6244
        %v6277 = vmul.f32 %v6021, %v6245
        %v6278 = vmul.f32 %v6022, %v6246
        %v6279 = vmul.f32 %v6023, %v6247
        %v6280 = vmul.f32 %v6024, %v6248
        %v6281 = vmul.f32 %v6025, %v6249
        %v6282 = vmul.f32 %v6026, %v6250
        %v6283 = vmul.f32 %v6027, %v6251
        %v6284 = vmul.f32 %v6028, %v6252
        %v6285 = vmul.f32 %v6029, %v6253
        %v6286 = vmul.f32 %v6030, %v6254
        %v6287 = vmul.f32 %v6031, %v6255
        %v6288 = vmul.f32 %v6032, %v6256
        %v6289 = vmul.f32 %v6033, %v6257
        %v6290 = vmul.f32 %v6034, %v6258
        %v6291 = vmul.f32 %v6035, %v6259
        %v6292 = vmul.f32 %v6036, %v6260
        %v6293 = vpack.c.bf16 %v6263, %v6261
        %v6294 = vpack.c.bf16 %v6264, %v6262
        %v6295 = vpack.c.bf16 %v6267, %v6265
        %v6296 = vpack.c.bf16 %v6268, %v6266
        %v6297 = vpack.c.bf16 %v6271, %v6269
        %v6298 = vpack.c.bf16 %v6272, %v6270
        %v6299 = vpack.c.bf16 %v6275, %v6273
        %v6300 = vpack.c.bf16 %v6276, %v6274
        %v6301 = vpack.c.bf16 %v6279, %v6277
        %v6302 = vpack.c.bf16 %v6280, %v6278
        %v6303 = vpack.c.bf16 %v6283, %v6281
        %v6304 = vpack.c.bf16 %v6284, %v6282
        %v6305 = vpack.c.bf16 %v6287, %v6285
        %v6306 = vpack.c.bf16 %v6288, %v6286
        %v6307 = vpack.c.bf16 %v6291, %v6289
        %v6308 = vpack.c.bf16 %v6292, %v6290
        %v6309 = vld [vmem:[%s761] sm:$0xf]
        %v6310 = vld [vmem:[%s761 + $0x4] sm:$0xf]
        %v6311 = vld [vmem:[%s761 + $0x8] sm:$0xf]
        %v6312 = vld [vmem:[%s761 + $0xc] sm:$0xf]
        %v6313 = vld [vmem:[%s761 + $0x10] sm:$0xf]
        %v6314 = vld [vmem:[%s761 + $0x14] sm:$0xf]
        %v6315 = vld [vmem:[%s761 + $0x18] sm:$0xf]
        %v6316 = vld [vmem:[%s761 + $0x1c] sm:$0xf]
        %v6317 = vld [vmem:[%s761 + $0x20] sm:$0xf]
        %v6318 = vld [vmem:[%s761 + $0x24] sm:$0xf]
        %v6319 = vld [vmem:[%s761 + $0x28] sm:$0xf]
        %v6320 = vld [vmem:[%s761 + $0x2c] sm:$0xf]
        %v6321 = vld [vmem:[%s761 + $0x30] sm:$0xf]
        %v6322 = vld [vmem:[%s761 + $0x34] sm:$0xf]
        %v6323 = vld [vmem:[%s761 + $0x38] sm:$0xf]
        %v6324 = vld [vmem:[%s761 + $0x3c] sm:$0xf]
        %v6325 = vld [vmem:[%s761 + $0x40] sm:$0xf]
        %v6326 = vld [vmem:[%s761 + $0x44] sm:$0xf]
        %v6327 = vld [vmem:[%s761 + $0x48] sm:$0xf]
        %v6328 = vld [vmem:[%s761 + $0x4c] sm:$0xf]
        %v6329 = vld [vmem:[%s761 + $0x50] sm:$0xf]
        %v6330 = vld [vmem:[%s761 + $0x54] sm:$0xf]
        %v6331 = vld [vmem:[%s761 + $0x58] sm:$0xf]
        %v6332 = vld [vmem:[%s761 + $0x5c] sm:$0xf]
        %v6333 = vld [vmem:[%s761 + $0x60] sm:$0xf]
        %v6334 = vld [vmem:[%s761 + $0x64] sm:$0xf]
        %v6335 = vld [vmem:[%s761 + $0x68] sm:$0xf]
        %v6336 = vld [vmem:[%s761 + $0x6c] sm:$0xf]
        %v6337 = vld [vmem:[%s761 + $0x70] sm:$0xf]
        %v6338 = vld [vmem:[%s761 + $0x74] sm:$0xf]
        %v6339 = vld [vmem:[%s761 + $0x78] sm:$0xf]
        %v6340 = vld [vmem:[%s761 + $0x7c] sm:$0xf]
        %v6341 = vld [vmem:[%s898] sm:$0x1]
        %v6343 = vperm.slane %v6341, 0
        %v6377 = vunpack.c.l.b16 %v6309
        %v6378 = vunpack.c.l.b16 %v6310
        %v6379 = vunpack.c.l.b16 %v6311
        %v6380 = vunpack.c.l.b16 %v6312
        %v6381 = vunpack.c.l.b16 %v6313
        %v6382 = vunpack.c.l.b16 %v6314
        %v6383 = vunpack.c.l.b16 %v6315
        %v6384 = vunpack.c.l.b16 %v6316
        %v6385 = vunpack.c.l.b16 %v6317
        %v6386 = vunpack.c.l.b16 %v6318
        %v6387 = vunpack.c.l.b16 %v6319
        %v6388 = vunpack.c.l.b16 %v6320
        %v6389 = vunpack.c.l.b16 %v6321
        %v6390 = vunpack.c.l.b16 %v6322
        %v6391 = vunpack.c.l.b16 %v6323
        %v6392 = vunpack.c.l.b16 %v6324
        %v6393 = vunpack.c.l.b16 %v6325
        %v6394 = vunpack.c.l.b16 %v6326
        %v6395 = vunpack.c.l.b16 %v6327
        %v6396 = vunpack.c.l.b16 %v6328
        %v6397 = vunpack.c.l.b16 %v6329
        %v6398 = vunpack.c.l.b16 %v6330
        %v6399 = vunpack.c.l.b16 %v6331
        %v6400 = vunpack.c.l.b16 %v6332
        %v6401 = vunpack.c.l.b16 %v6333
        %v6402 = vunpack.c.l.b16 %v6334
        %v6403 = vunpack.c.l.b16 %v6335
        %v6404 = vunpack.c.l.b16 %v6336
        %v6405 = vunpack.c.l.b16 %v6337
        %v6406 = vunpack.c.l.b16 %v6338
        %v6407 = vunpack.c.l.b16 %v6339
        %v6408 = vunpack.c.l.b16 %v6340
        %v6409 = vpack.c.b16 %v6378, %v6377
        %v6410 = vpack.c.b16 %v6380, %v6379
        %v6411 = vpack.c.b16 %v6382, %v6381
        %v6412 = vpack.c.b16 %v6384, %v6383
        %v6413 = vpack.c.b16 %v6386, %v6385
        %v6414 = vpack.c.b16 %v6388, %v6387
        %v6415 = vpack.c.b16 %v6390, %v6389
        %v6416 = vpack.c.b16 %v6392, %v6391
        %v6417 = vpack.c.b16 %v6394, %v6393
        %v6418 = vpack.c.b16 %v6396, %v6395
        %v6419 = vpack.c.b16 %v6398, %v6397
        %v6420 = vpack.c.b16 %v6400, %v6399
        %v6421 = vpack.c.b16 %v6402, %v6401
        %v6422 = vpack.c.b16 %v6404, %v6403
        %v6423 = vpack.c.b16 %v6406, %v6405
        %v6424 = vpack.c.b16 %v6408, %v6407
        %6441 = vmatpush.bf16.msra.mxu0 %v6416
        %6442 = vmatpush.bf16.msra.mxu0 %v6415
        %6443 = vmatpush.bf16.msra.mxu0 %v6414
        %6444 = vmatpush.bf16.msra.mxu0 %v6413
        %6445 = vmatpush.bf16.msra.mxu0 %v6412
        %6446 = vmatpush.bf16.msra.mxu0 %v6411
        %6447 = vmatpush.bf16.msra.mxu0 %v6410
        %6448 = vmatpush.bf16.msra.mxu0 %v6409
        %6449 = vmatmul.bf16.gmra.mxu0 %v6293
        %v6450 = vpop.f32.mrf.mxu0
        %v6451 = vadd.f32 %v6343, %v6450
        %v6452 = vpop.f32.mrf.mxu0
        %v6453 = vadd.f32 %v6343, %v6452
        %6454 = vmatmul.bf16.gmra.mxu0 %v6295
        %v6455 = vpop.f32.mrf.mxu0
        %v6456 = vadd.f32 %v6343, %v6455
        %v6457 = vpop.f32.mrf.mxu0
        %v6458 = vadd.f32 %v6343, %v6457
        %6459 = vmatmul.bf16.gmra.mxu0 %v6297
        %v6460 = vpop.f32.mrf.mxu0
        %v6461 = vadd.f32 %v6343, %v6460
        %v6462 = vpop.f32.mrf.mxu0
        %v6463 = vadd.f32 %v6343, %v6462
        %6464 = vmatmul.bf16.gmra.mxu0 %v6299
        %v6465 = vpop.f32.mrf.mxu0
        %v6466 = vadd.f32 %v6343, %v6465
        %v6467 = vpop.f32.mrf.mxu0
        %v6468 = vadd.f32 %v6343, %v6467
        %6469 = vmatmul.bf16.gmra.mxu0 %v6301
        %v6470 = vpop.f32.mrf.mxu0
        %v6471 = vadd.f32 %v6343, %v6470
        %v6472 = vpop.f32.mrf.mxu0
        %v6473 = vadd.f32 %v6343, %v6472
        %6474 = vmatmul.bf16.gmra.mxu0 %v6303
        %v6475 = vpop.f32.mrf.mxu0
        %v6476 = vadd.f32 %v6343, %v6475
        %v6477 = vpop.f32.mrf.mxu0
        %v6478 = vadd.f32 %v6343, %v6477
        %6479 = vmatmul.bf16.gmra.mxu0 %v6305
        %v6480 = vpop.f32.mrf.mxu0
        %v6481 = vadd.f32 %v6343, %v6480
        %v6482 = vpop.f32.mrf.mxu0
        %v6483 = vadd.f32 %v6343, %v6482
        %6484 = vmatmul.bf16.gmra.mxu0 %v6307
        %v6485 = vpop.f32.mrf.mxu0
        %v6486 = vadd.f32 %v6343, %v6485
        %v6487 = vpop.f32.mrf.mxu0
        %v6488 = vadd.f32 %v6343, %v6487
        %6489 = vdwg.mxu0
        %6490 = vmatpush.bf16.msra.mxu0 %v6424
        %6491 = vmatpush.bf16.msra.mxu0 %v6423
        %6492 = vmatpush.bf16.msra.mxu0 %v6422
        %6493 = vmatpush.bf16.msra.mxu0 %v6421
        %6494 = vmatpush.bf16.msra.mxu0 %v6420
        %6495 = vmatpush.bf16.msra.mxu0 %v6419
        %6496 = vmatpush.bf16.msra.mxu0 %v6418
        %6497 = vmatpush.bf16.msra.mxu0 %v6417
        %6498 = vmatmul.bf16.gmra.mxu0 %v6294
        %v6499 = vpop.f32.mrf.mxu0
        %v6500 = vadd.f32 %v6451, %v6499
        %v6501 = vpop.f32.mrf.mxu0
        %v6502 = vadd.f32 %v6453, %v6501
        %6503 = vmatmul.bf16.gmra.mxu0 %v6296
        %v6504 = vpop.f32.mrf.mxu0
        %v6505 = vadd.f32 %v6456, %v6504
        %v6506 = vpop.f32.mrf.mxu0
        %v6507 = vadd.f32 %v6458, %v6506
        %6508 = vmatmul.bf16.gmra.mxu0 %v6298
        %v6509 = vpop.f32.mrf.mxu0
        %v6510 = vadd.f32 %v6461, %v6509
        %v6511 = vpop.f32.mrf.mxu0
        %v6512 = vadd.f32 %v6463, %v6511
        %6513 = vmatmul.bf16.gmra.mxu0 %v6300
        %v6514 = vpop.f32.mrf.mxu0
        %v6515 = vadd.f32 %v6466, %v6514
        %v6516 = vpop.f32.mrf.mxu0
        %v6517 = vadd.f32 %v6468, %v6516
        %6518 = vmatmul.bf16.gmra.mxu0 %v6302
        %v6519 = vpop.f32.mrf.mxu0
        %v6520 = vadd.f32 %v6471, %v6519
        %v6521 = vpop.f32.mrf.mxu0
        %v6522 = vadd.f32 %v6473, %v6521
        %6523 = vmatmul.bf16.gmra.mxu0 %v6304
        %v6524 = vpop.f32.mrf.mxu0
        %v6525 = vadd.f32 %v6476, %v6524
        %v6526 = vpop.f32.mrf.mxu0
        %v6527 = vadd.f32 %v6478, %v6526
        %6528 = vmatmul.bf16.gmra.mxu0 %v6306
        %v6529 = vpop.f32.mrf.mxu0
        %v6530 = vadd.f32 %v6481, %v6529
        %v6531 = vpop.f32.mrf.mxu0
        %v6532 = vadd.f32 %v6483, %v6531
        %6533 = vmatmul.bf16.gmra.mxu0 %v6308
        %v6534 = vpop.f32.mrf.mxu0
        %v6535 = vadd.f32 %v6486, %v6534
        %v6536 = vpop.f32.mrf.mxu0
        %v6537 = vadd.f32 %v6488, %v6536
        %6538 = vdwg.mxu0
        %v6539 = vadd.f32 %v5781, %v6500
        %v6540 = vadd.f32 %v5782, %v6502
        %v6541 = vadd.f32 %v5783, %v6505
        %v6542 = vadd.f32 %v5784, %v6507
        %v6543 = vadd.f32 %v5785, %v6510
        %v6544 = vadd.f32 %v5786, %v6512
        %v6545 = vadd.f32 %v5787, %v6515
        %v6546 = vadd.f32 %v5788, %v6517
        %v6547 = vadd.f32 %v5789, %v6520
        %v6548 = vadd.f32 %v5790, %v6522
        %v6549 = vadd.f32 %v5791, %v6525
        %v6550 = vadd.f32 %v5792, %v6527
        %v6551 = vadd.f32 %v5793, %v6530
        %v6552 = vadd.f32 %v5794, %v6532
        %v6553 = vadd.f32 %v5795, %v6535
        %v6554 = vadd.f32 %v5796, %v6537
        %v6555 = vld [vmem:[%s770] sm:$0x1]
        %v6556 = vld [vmem:[%s779] sm:$0x1]
        %6557 = vadd.xlane.f32.xlu0 %v6539
        %v6558 = vpop.xlane.xlu0 %6557
        %6559 = vadd.xlane.f32.xlu0 %v6540
        %v6560 = vpop.xlane.xlu0 %6559
        %6561 = vadd.xlane.f32.xlu0 %v6541
        %v6562 = vpop.xlane.xlu0 %6561
        %6563 = vadd.xlane.f32.xlu0 %v6542
        %v6564 = vpop.xlane.xlu0 %6563
        %6565 = vadd.xlane.f32.xlu0 %v6543
        %v6566 = vpop.xlane.xlu0 %6565
        %6567 = vadd.xlane.f32.xlu0 %v6544
        %v6568 = vpop.xlane.xlu0 %6567
        %6569 = vadd.xlane.f32.xlu0 %v6545
        %v6570 = vpop.xlane.xlu0 %6569
        %6571 = vadd.xlane.f32.xlu0 %v6546
        %v6572 = vpop.xlane.xlu0 %6571
        %6573 = vadd.xlane.f32.xlu0 %v6547
        %v6574 = vpop.xlane.xlu0 %6573
        %6575 = vadd.xlane.f32.xlu0 %v6548
        %v6576 = vpop.xlane.xlu0 %6575
        %6577 = vadd.xlane.f32.xlu0 %v6549
        %v6578 = vpop.xlane.xlu0 %6577
        %6579 = vadd.xlane.f32.xlu0 %v6550
        %v6580 = vpop.xlane.xlu0 %6579
        %6581 = vadd.xlane.f32.xlu0 %v6551
        %v6582 = vpop.xlane.xlu0 %6581
        %6583 = vadd.xlane.f32.xlu0 %v6552
        %v6584 = vpop.xlane.xlu0 %6583
        %6585 = vadd.xlane.f32.xlu0 %v6553
        %v6586 = vpop.xlane.xlu0 %6585
        %6587 = vadd.xlane.f32.xlu0 %v6554
        %v6588 = vpop.xlane.xlu0 %6587
        %v6589 = vmul.f32 %v6558, %v5470
        %v6590 = vmul.f32 %v6560, %v5470
        %v6591 = vmul.f32 %v6562, %v5470
        %v6592 = vmul.f32 %v6564, %v5470
        %v6593 = vmul.f32 %v6566, %v5470
        %v6594 = vmul.f32 %v6568, %v5470
        %v6595 = vmul.f32 %v6570, %v5470
        %v6596 = vmul.f32 %v6572, %v5470
        %v6597 = vmul.f32 %v6574, %v5470
        %v6598 = vmul.f32 %v6576, %v5470
        %v6599 = vmul.f32 %v6578, %v5470
        %v6600 = vmul.f32 %v6580, %v5470
        %v6601 = vmul.f32 %v6582, %v5470
        %v6602 = vmul.f32 %v6584, %v5470
        %v6603 = vmul.f32 %v6586, %v5470
        %v6604 = vmul.f32 %v6588, %v5470
        %v6605 = vsub.f32 %v6539, %v6589
        %v6606 = vsub.f32 %v6540, %v6590
        %v6607 = vsub.f32 %v6541, %v6591
        %v6608 = vsub.f32 %v6542, %v6592
        %v6609 = vsub.f32 %v6543, %v6593
        %v6610 = vsub.f32 %v6544, %v6594
        %v6611 = vsub.f32 %v6545, %v6595
        %v6612 = vsub.f32 %v6546, %v6596
        %v6613 = vsub.f32 %v6547, %v6597
        %v6614 = vsub.f32 %v6548, %v6598
        %v6615 = vsub.f32 %v6549, %v6599
        %v6616 = vsub.f32 %v6550, %v6600
        %v6617 = vsub.f32 %v6551, %v6601
        %v6618 = vsub.f32 %v6552, %v6602
        %v6619 = vsub.f32 %v6553, %v6603
        %v6620 = vsub.f32 %v6554, %v6604
        %v6621 = vmul.f32 %v6605, %v6605
        %v6622 = vmul.f32 %v6606, %v6606
        %v6623 = vmul.f32 %v6607, %v6607
        %v6624 = vmul.f32 %v6608, %v6608
        %v6625 = vmul.f32 %v6609, %v6609
        %v6626 = vmul.f32 %v6610, %v6610
        %v6627 = vmul.f32 %v6611, %v6611
        %v6628 = vmul.f32 %v6612, %v6612
        %v6629 = vmul.f32 %v6613, %v6613
        %v6630 = vmul.f32 %v6614, %v6614
        %v6631 = vmul.f32 %v6615, %v6615
        %v6632 = vmul.f32 %v6616, %v6616
        %v6633 = vmul.f32 %v6617, %v6617
        %v6634 = vmul.f32 %v6618, %v6618
        %v6635 = vmul.f32 %v6619, %v6619
        %v6636 = vmul.f32 %v6620, %v6620
        %6637 = vadd.xlane.f32.xlu0 %v6621
        %v6638 = vpop.xlane.xlu0 %6637
        %6639 = vadd.xlane.f32.xlu0 %v6622
        %v6640 = vpop.xlane.xlu0 %6639
        %6641 = vadd.xlane.f32.xlu0 %v6623
        %v6642 = vpop.xlane.xlu0 %6641
        %6643 = vadd.xlane.f32.xlu0 %v6624
        %v6644 = vpop.xlane.xlu0 %6643
        %6645 = vadd.xlane.f32.xlu0 %v6625
        %v6646 = vpop.xlane.xlu0 %6645
        %6647 = vadd.xlane.f32.xlu0 %v6626
        %v6648 = vpop.xlane.xlu0 %6647
        %6649 = vadd.xlane.f32.xlu0 %v6627
        %v6650 = vpop.xlane.xlu0 %6649
        %6651 = vadd.xlane.f32.xlu0 %v6628
        %v6652 = vpop.xlane.xlu0 %6651
        %6653 = vadd.xlane.f32.xlu0 %v6629
        %v6654 = vpop.xlane.xlu0 %6653
        %6655 = vadd.xlane.f32.xlu0 %v6630
        %v6656 = vpop.xlane.xlu0 %6655
        %6657 = vadd.xlane.f32.xlu0 %v6631
        %v6658 = vpop.xlane.xlu0 %6657
        %6659 = vadd.xlane.f32.xlu0 %v6632
        %v6660 = vpop.xlane.xlu0 %6659
        %6661 = vadd.xlane.f32.xlu0 %v6633
        %v6662 = vpop.xlane.xlu0 %6661
        %6663 = vadd.xlane.f32.xlu0 %v6634
        %v6664 = vpop.xlane.xlu0 %6663
        %6665 = vadd.xlane.f32.xlu0 %v6635
        %v6666 = vpop.xlane.xlu0 %6665
        %6667 = vadd.xlane.f32.xlu0 %v6636
        %v6668 = vpop.xlane.xlu0 %6667
        %v6669 = vmul.f32 %v6638, %v5470
        %v6670 = vmul.f32 %v6640, %v5470
        %v6671 = vmul.f32 %v6642, %v5470
        %v6672 = vmul.f32 %v6644, %v5470
        %v6673 = vmul.f32 %v6646, %v5470
        %v6674 = vmul.f32 %v6648, %v5470
        %v6675 = vmul.f32 %v6650, %v5470
        %v6676 = vmul.f32 %v6652, %v5470
        %v6677 = vmul.f32 %v6654, %v5470
        %v6678 = vmul.f32 %v6656, %v5470
        %v6679 = vmul.f32 %v6658, %v5470
        %v6680 = vmul.f32 %v6660, %v5470
        %v6681 = vmul.f32 %v6662, %v5470
        %v6682 = vmul.f32 %v6664, %v5470
        %v6683 = vmul.f32 %v6666, %v5470
        %v6684 = vmul.f32 %v6668, %v5470
        %v6685 = vadd.f32 %v6669, 1e-05
        %v6686 = vadd.f32 %v6670, 1e-05
        %v6687 = vadd.f32 %v6671, 1e-05
        %v6688 = vadd.f32 %v6672, 1e-05
        %v6689 = vadd.f32 %v6673, 1e-05
        %v6690 = vadd.f32 %v6674, 1e-05
        %v6691 = vadd.f32 %v6675, 1e-05
        %v6692 = vadd.f32 %v6676, 1e-05
        %v6693 = vadd.f32 %v6677, 1e-05
        %v6694 = vadd.f32 %v6678, 1e-05
        %v6695 = vadd.f32 %v6679, 1e-05
        %v6696 = vadd.f32 %v6680, 1e-05
        %v6697 = vadd.f32 %v6681, 1e-05
        %v6698 = vadd.f32 %v6682, 1e-05
        %v6699 = vadd.f32 %v6683, 1e-05
        %v6700 = vadd.f32 %v6684, 1e-05
        %v6701 = vrsqrt.pop %v6685
        %v6702 = vmul.f32 %v6701, %v6685
        %v6703 = vmul.f32 %v6702, %v6701
        %v6704 = vmul.f32 0.5, %v6703
        %v6705 = vsub.f32 1.5, %v6704
        %v6706 = vmul.f32 %v6701, %v6705
        %vm6707 = vweird.f32 %v6685
        %vm6708 = vweird.f32 %v6701
        %vm6709 = vmor %vm6707, %vm6708
        %v6710 = vsel %vm6709, %v6701, %v6706
        %v6711 = vrsqrt.pop %v6686
        %v6712 = vmul.f32 %v6711, %v6686
        %v6713 = vmul.f32 %v6712, %v6711
        %v6714 = vmul.f32 0.5, %v6713
        %v6715 = vsub.f32 1.5, %v6714
        %v6716 = vmul.f32 %v6711, %v6715
        %vm6717 = vweird.f32 %v6686
        %vm6718 = vweird.f32 %v6711
        %vm6719 = vmor %vm6717, %vm6718
        %v6720 = vsel %vm6719, %v6711, %v6716
        %v6721 = vrsqrt.pop %v6687
        %v6722 = vmul.f32 %v6721, %v6687
        %v6723 = vmul.f32 %v6722, %v6721
        %v6724 = vmul.f32 0.5, %v6723
        %v6725 = vsub.f32 1.5, %v6724
        %v6726 = vmul.f32 %v6721, %v6725
        %vm6727 = vweird.f32 %v6687
        %vm6728 = vweird.f32 %v6721
        %vm6729 = vmor %vm6727, %vm6728
        %v6730 = vsel %vm6729, %v6721, %v6726
        %v6731 = vrsqrt.pop %v6688
        %v6732 = vmul.f32 %v6731, %v6688
        %v6733 = vmul.f32 %v6732, %v6731
        %v6734 = vmul.f32 0.5, %v6733
        %v6735 = vsub.f32 1.5, %v6734
        %v6736 = vmul.f32 %v6731, %v6735
        %vm6737 = vweird.f32 %v6688
        %vm6738 = vweird.f32 %v6731
        %vm6739 = vmor %vm6737, %vm6738
        %v6740 = vsel %vm6739, %v6731, %v6736
        %v6741 = vrsqrt.pop %v6689
        %v6742 = vmul.f32 %v6741, %v6689
        %v6743 = vmul.f32 %v6742, %v6741
        %v6744 = vmul.f32 0.5, %v6743
        %v6745 = vsub.f32 1.5, %v6744
        %v6746 = vmul.f32 %v6741, %v6745
        %vm6747 = vweird.f32 %v6689
        %vm6748 = vweird.f32 %v6741
        %vm6749 = vmor %vm6747, %vm6748
        %v6750 = vsel %vm6749, %v6741, %v6746
        %v6751 = vrsqrt.pop %v6690
        %v6752 = vmul.f32 %v6751, %v6690
        %v6753 = vmul.f32 %v6752, %v6751
        %v6754 = vmul.f32 0.5, %v6753
        %v6755 = vsub.f32 1.5, %v6754
        %v6756 = vmul.f32 %v6751, %v6755
        %vm6757 = vweird.f32 %v6690
        %vm6758 = vweird.f32 %v6751
        %vm6759 = vmor %vm6757, %vm6758
        %v6760 = vsel %vm6759, %v6751, %v6756
        %v6761 = vrsqrt.pop %v6691
        %v6762 = vmul.f32 %v6761, %v6691
        %v6763 = vmul.f32 %v6762, %v6761
        %v6764 = vmul.f32 0.5, %v6763
        %v6765 = vsub.f32 1.5, %v6764
        %v6766 = vmul.f32 %v6761, %v6765
        %vm6767 = vweird.f32 %v6691
        %vm6768 = vweird.f32 %v6761
        %vm6769 = vmor %vm6767, %vm6768
        %v6770 = vsel %vm6769, %v6761, %v6766
        %v6771 = vrsqrt.pop %v6692
        %v6772 = vmul.f32 %v6771, %v6692
        %v6773 = vmul.f32 %v6772, %v6771
        %v6774 = vmul.f32 0.5, %v6773
        %v6775 = vsub.f32 1.5, %v6774
        %v6776 = vmul.f32 %v6771, %v6775
        %vm6777 = vweird.f32 %v6692
        %vm6778 = vweird.f32 %v6771
        %vm6779 = vmor %vm6777, %vm6778
        %v6780 = vsel %vm6779, %v6771, %v6776
        %v6781 = vrsqrt.pop %v6693
        %v6782 = vmul.f32 %v6781, %v6693
        %v6783 = vmul.f32 %v6782, %v6781
        %v6784 = vmul.f32 0.5, %v6783
        %v6785 = vsub.f32 1.5, %v6784
        %v6786 = vmul.f32 %v6781, %v6785
        %vm6787 = vweird.f32 %v6693
        %vm6788 = vweird.f32 %v6781
        %vm6789 = vmor %vm6787, %vm6788
        %v6790 = vsel %vm6789, %v6781, %v6786
        %v6791 = vrsqrt.pop %v6694
        %v6792 = vmul.f32 %v6791, %v6694
        %v6793 = vmul.f32 %v6792, %v6791
        %v6794 = vmul.f32 0.5, %v6793
        %v6795 = vsub.f32 1.5, %v6794
        %v6796 = vmul.f32 %v6791, %v6795
        %vm6797 = vweird.f32 %v6694
        %vm6798 = vweird.f32 %v6791
        %vm6799 = vmor %vm6797, %vm6798
        %v6800 = vsel %vm6799, %v6791, %v6796
        %v6801 = vrsqrt.pop %v6695
        %v6802 = vmul.f32 %v6801, %v6695
        %v6803 = vmul.f32 %v6802, %v6801
        %v6804 = vmul.f32 0.5, %v6803
        %v6805 = vsub.f32 1.5, %v6804
        %v6806 = vmul.f32 %v6801, %v6805
        %vm6807 = vweird.f32 %v6695
        %vm6808 = vweird.f32 %v6801
        %vm6809 = vmor %vm6807, %vm6808
        %v6810 = vsel %vm6809, %v6801, %v6806
        %v6811 = vrsqrt.pop %v6696
        %v6812 = vmul.f32 %v6811, %v6696
        %v6813 = vmul.f32 %v6812, %v6811
        %v6814 = vmul.f32 0.5, %v6813
        %v6815 = vsub.f32 1.5, %v6814
        %v6816 = vmul.f32 %v6811, %v6815
        %vm6817 = vweird.f32 %v6696
        %vm6818 = vweird.f32 %v6811
        %vm6819 = vmor %vm6817, %vm6818
        %v6820 = vsel %vm6819, %v6811, %v6816
        %v6821 = vrsqrt.pop %v6697
        %v6822 = vmul.f32 %v6821, %v6697
        %v6823 = vmul.f32 %v6822, %v6821
        %v6824 = vmul.f32 0.5, %v6823
        %v6825 = vsub.f32 1.5, %v6824
        %v6826 = vmul.f32 %v6821, %v6825
        %vm6827 = vweird.f32 %v6697
        %vm6828 = vweird.f32 %v6821
        %vm6829 = vmor %vm6827, %vm6828
        %v6830 = vsel %vm6829, %v6821, %v6826
        %v6831 = vrsqrt.pop %v6698
        %v6832 = vmul.f32 %v6831, %v6698
        %v6833 = vmul.f32 %v6832, %v6831
        %v6834 = vmul.f32 0.5, %v6833
        %v6835 = vsub.f32 1.5, %v6834
        %v6836 = vmul.f32 %v6831, %v6835
        %vm6837 = vweird.f32 %v6698
        %vm6838 = vweird.f32 %v6831
        %vm6839 = vmor %vm6837, %vm6838
        %v6840 = vsel %vm6839, %v6831, %v6836
        %v6841 = vrsqrt.pop %v6699
        %v6842 = vmul.f32 %v6841, %v6699
        %v6843 = vmul.f32 %v6842, %v6841
        %v6844 = vmul.f32 0.5, %v6843
        %v6845 = vsub.f32 1.5, %v6844
        %v6846 = vmul.f32 %v6841, %v6845
        %vm6847 = vweird.f32 %v6699
        %vm6848 = vweird.f32 %v6841
        %vm6849 = vmor %vm6847, %vm6848
        %v6850 = vsel %vm6849, %v6841, %v6846
        %v6851 = vrsqrt.pop %v6700
        %v6852 = vmul.f32 %v6851, %v6700
        %v6853 = vmul.f32 %v6852, %v6851
        %v6854 = vmul.f32 0.5, %v6853
        %v6855 = vsub.f32 1.5, %v6854
        %v6856 = vmul.f32 %v6851, %v6855
        %vm6857 = vweird.f32 %v6700
        %vm6858 = vweird.f32 %v6851
        %vm6859 = vmor %vm6857, %vm6858
        %v6860 = vsel %vm6859, %v6851, %v6856
        %v6861 = vmul.f32 %v6605, %v6710
        %v6862 = vmul.f32 %v6606, %v6720
        %v6863 = vmul.f32 %v6607, %v6730
        %v6864 = vmul.f32 %v6608, %v6740
        %v6865 = vmul.f32 %v6609, %v6750
        %v6866 = vmul.f32 %v6610, %v6760
        %v6867 = vmul.f32 %v6611, %v6770
        %v6868 = vmul.f32 %v6612, %v6780
        %v6869 = vmul.f32 %v6613, %v6790
        %v6870 = vmul.f32 %v6614, %v6800
        %v6871 = vmul.f32 %v6615, %v6810
        %v6872 = vmul.f32 %v6616, %v6820
        %v6873 = vmul.f32 %v6617, %v6830
        %v6874 = vmul.f32 %v6618, %v6840
        %v6875 = vmul.f32 %v6619, %v6850
        %v6876 = vmul.f32 %v6620, %v6860
        %v6878 = vperm.slane %v6555, 0
        %v6880 = vmul.f32 %v6861, %v6878
        %v6881 = vmul.f32 %v6862, %v6878
        %v6882 = vmul.f32 %v6863, %v6878
        %v6883 = vmul.f32 %v6864, %v6878
        %v6884 = vmul.f32 %v6865, %v6878
        %v6885 = vmul.f32 %v6866, %v6878
        %v6886 = vmul.f32 %v6867, %v6878
        %v6887 = vmul.f32 %v6868, %v6878
        %v6888 = vmul.f32 %v6869, %v6878
        %v6889 = vmul.f32 %v6870, %v6878
        %v6890 = vmul.f32 %v6871, %v6878
        %v6891 = vmul.f32 %v6872, %v6878
        %v6892 = vmul.f32 %v6873, %v6878
        %v6893 = vmul.f32 %v6874, %v6878
        %v6894 = vmul.f32 %v6875, %v6878
        %v6895 = vmul.f32 %v6876, %v6878
        %v6897 = vperm.slane %v6556, 0
        %v6899 = vadd.f32 %v6880, %v6897
        %v6900 = vadd.f32 %v6881, %v6897
        %v6901 = vadd.f32 %v6882, %v6897
        %v6902 = vadd.f32 %v6883, %v6897
        %v6903 = vadd.f32 %v6884, %v6897
        %v6904 = vadd.f32 %v6885, %v6897
        %v6905 = vadd.f32 %v6886, %v6897
        %v6906 = vadd.f32 %v6887, %v6897
        %v6907 = vadd.f32 %v6888, %v6897
        %v6908 = vadd.f32 %v6889, %v6897
        %v6909 = vadd.f32 %v6890, %v6897
        %v6910 = vadd.f32 %v6891, %v6897
        %v6911 = vadd.f32 %v6892, %v6897
        %v6912 = vadd.f32 %v6893, %v6897
        %v6913 = vadd.f32 %v6894, %v6897
        %v6914 = vadd.f32 %v6895, %v6897
        %6915 = vst [vmem:[%s881] sm:$0xff] %v6899
        %6916 = vst [vmem:[%s881 + $0x8] sm:$0xff] %v6900
        %6917 = vst [vmem:[%s881 + $0x10] sm:$0xff] %v6901
        %6918 = vst [vmem:[%s881 + $0x18] sm:$0xff] %v6902
        %6919 = vst [vmem:[%s881 + $0x20] sm:$0xff] %v6903
        %6920 = vst [vmem:[%s881 + $0x28] sm:$0xff] %v6904
        %6921 = vst [vmem:[%s881 + $0x30] sm:$0xff] %v6905
        %6922 = vst [vmem:[%s881 + $0x38] sm:$0xff] %v6906
        %6923 = vst [vmem:[%s881 + $0x40] sm:$0xff] %v6907
        %6924 = vst [vmem:[%s881 + $0x48] sm:$0xff] %v6908
        %6925 = vst [vmem:[%s881 + $0x50] sm:$0xff] %v6909
        %6926 = vst [vmem:[%s881 + $0x58] sm:$0xff] %v6910
        %6927 = vst [vmem:[%s881 + $0x60] sm:$0xff] %v6911
        %6928 = vst [vmem:[%s881 + $0x68] sm:$0xff] %v6912
        %6929 = vst [vmem:[%s881 + $0x70] sm:$0xff] %v6913
        %6930 = vst [vmem:[%s881 + $0x78] sm:$0xff] %v6914
        %s6931 = sand.u32 %s430, 1
        %s6932 = scalar_lea.sflag [#allocation4], %s6931
        %s6933 = sand.u32 %s430, 1
        %s6934 = smul.addr %s6933, 128
        %s6935 = scalar_lea.vmem [#allocation19], %s6934
        // Predicated region
        $region121: #{encoder_forward.1} parent=75 // pred_check
          %p6936 = pneg %p440
        $region122: #{encoder_forward.1} parent=75 // pred_check_branch
          %6938 = sbr.rel (%p6936) target = $region124
        $region123: #{encoder_forward.1} parent=75 // pred_region
          %6940 = vsyncadd %s6932, 0
          %s6941 = smul.addr %s50, 16
          %s6942 = smul.addr %s6941, 8
          %s6943 = scalar_lea.hbm %s14, %s6942
          %s6944 = sshll.u32 %s6935, 4
          %s6945 = int_to_ptr.vmem [resolvable:$true] %s6944
          %s6946 = sshll.u32 %s6943, 4
          %s6947 = int_to_ptr.hbm [resolvable:$true] %s6946
          %6952 = dma.vmem_to_hbm [thread:$0]  %s6945, 2048, %s6947, %s6932, 128, 128, 8
        $region124: #{encoder_forward.1} parent=75 // pred_fallthru
          _
      $region76: #{encoder_forward.1} parent=5 // pred_fallthru
        _
      %p6953 = scmp.le.s32.totalorder 2, %s41
      // Predicated region
      $region125: #{encoder_forward.1} parent=5 // pred_check
        %p6954 = pneg %p6953
      $region126: #{encoder_forward.1} parent=5 // pred_check_branch
        %6956 = sbr.rel (%p6954) target = $region128
      $region127: #{encoder_forward.1} parent=5 // pred_region
        %s6957 = ssub.s32 %s41, 2
        // Predicated region
        $region129: #{encoder_forward.1} parent=127 // pred_check
          %p6958 = pneg %p446
        $region130: #{encoder_forward.1} parent=127 // pred_check_branch
          %6960 = sbr.rel (%p6958) target = $region132
        $region131: #{encoder_forward.1} parent=127 // pred_region
          %s6961 = sand.u32 %s431, 1
          %s6962 = scalar_lea.sflag [#allocation4], %s6961
          %s6963 = sand.u32 %s431, 1
          %s6964 = smul.addr %s6963, 128
          %s6965 = scalar_lea.vmem [#allocation19], %s6964
          %6967 = dma.done %s6962, 2048
        $region132: #{encoder_forward.1} parent=127 // pred_fallthru
          _
      $region128: #{encoder_forward.1} parent=5 // pred_fallthru
        _
    $region6: #{encoder_forward.1} parent=1 // loop_footer
      %s45 = sadd.s32 1, %s41
    $region7: #{encoder_forward.1} parent=1 // loop_footer_branch
      %40 = sbr.rel target = $region3
    $region8: #{encoder_forward.1} parent=1 // loop_exit
      _
    %6968 = vsyncpa [#allocation3], 1
    %s6969 = scalar_lea.sflag [#allocation3], 1
    %6970 = vsyncpa %s6969, 1
    %6971 = vsyncpa [#allocation6], 1
    %s6972 = scalar_lea.sflag [#allocation6], 1
    %6973 = vsyncpa %s6972, 1
    %6974 = vsyncpa [#allocation9], 1
    %s6975 = scalar_lea.sflag [#allocation9], 1
    %6976 = vsyncpa %s6975, 1
    %6977 = vsyncpa [#allocation12], 1
    %s6978 = scalar_lea.sflag [#allocation12], 1
    %6979 = vsyncpa %s6978, 1
    %6980 = vsyncpa [#allocation15], 1
    %s6981 = scalar_lea.sflag [#allocation15], 1
    %6982 = vsyncpa %s6981, 1
    %6983 = vsyncpa [#allocation18], 1
    %s6984 = scalar_lea.sflag [#allocation18], 1
    %6985 = vsyncpa %s6984, 1
    %6986 = vsyncpa [#allocation4], 1
    %s6987 = scalar_lea.sflag [#allocation4], 1
    %6988 = vsyncpa %s6987, 1

</llo_original>
